<compile_context>
chip_gen: v5e
topology: v5e:2x2
jax: 0.10.0
libtpu: 0.0.40
codegen_flags: <defaults>
</compile_context>

<pallas_src>
import functools

import jax
import jax.numpy as jnp
from jax import lax
from jax.experimental import pallas as pl
from jax.experimental.pallas import tpu as pltpu


def _round_up(x, m):
    return ((x + m - 1) // m) * m


# ---------------------------------------------------------------------------
# Pallas kernel: in-kernel tap formation + 27 shifted matmuls + bias + ReLU
# ---------------------------------------------------------------------------
def _conv_bn_relu_kernel(x_ref, w_ref, b_ref, o_ref, *, bases, out_len):
    # x_ref: (Cin, Lx)        bf16  zero-padded volume, flattened (D+2,H+2,W+2) row-major
    # w_ref: (27, Coutp, Cin) bf16  per-tap weights, BN scale pre-folded
    # b_ref: (Coutp, 1)       f32   folded conv-bias + BN shift
    # o_ref: (Coutp, out_len) bf16/f32, lane-dense (out_len multiple of 128)
    x = x_ref[...]                                   # whole padded block, read once from VMEM
    acc = jnp.zeros(o_ref.shape, jnp.float32)        # in-register accumulator (no scratch)
    for t, base in enumerate(bases):                  # 27 static, unrolled shifted matmuls
        acc = acc + jnp.dot(w_ref[t], x[:, base:base + out_len],
                            preferred_element_type=jnp.float32)
    y = acc + b_ref[...]
    o_ref[...] = jnp.maximum(y, 0.0).astype(o_ref.dtype)


def conv3d_bn_relu(x, p, cout, out_dtype):
    """x: (N, Cin, D, H, W) bf16 -> (N, cout, D, H, W) out_dtype. 3x3x3 'same' conv + folded BN + ReLU."""
    n, cin, d, h, w = x.shape
    coutp = p["w"].shape[1]                            # Cout padded to sublane tile (8)
    dp, hp, wp = d + 2, h + 2, w + 2

    out_len = _round_up(d * hp * wp, 128)              # lane-dense kernel output length
    max_base = 2 * hp * wp + 2 * wp + 2                # largest tap offset
    lx = _round_up(out_len + max_base, 128)            # padded flattened input length

    # Pad (+1 each spatial side) and flatten; ~1.3-2x input bytes, all bf16 — replaces the
    # old 27x im2col materialization.
    xp = jnp.pad(x, ((0, 0), (0, 0), (1, 1), (1, 1), (1, 1)))
    xf = xp.reshape(n, cin, dp * hp * wp)
    xf = jnp.pad(xf, ((0, 0), (0, 0), (0, lx - dp * hp * wp)))

    bases = tuple(kd * hp * wp + kh * wp + kw
                  for kd in range(3) for kh in range(3) for kw in range(3))
    kernel = functools.partial(_conv_bn_relu_kernel, bases=bases, out_len=out_len)

    out_bytes = n * coutp * out_len * jnp.dtype(out_dtype).itemsize
    cost = pl.CostEstimate(
        flops=2 * n * 27 * coutp * cin * out_len,
        transcendentals=0,
        bytes_accessed=int(xf.size * 2 + p["w"].size * 2 + p["bias"].size * 4 + out_bytes),
    )

    # TODO(synk): for large volumes / channel counts, add a spatial tile axis (halo'd D-tiles
    # via manual DMA) and fuse conv1+conv2 into one call keeping the intermediate in VMEM;
    # at these decoder sizes the whole padded volume fits VMEM per batch item.
    out = pl.pallas_call(
        kernel,
        out_shape=jax.ShapeDtypeStruct((n, coutp, out_len), out_dtype),
        grid=(n,),
        in_specs=[
            pl.BlockSpec((None, cin, lx), lambda b: (b, 0, 0)),     # padded volume, read once
            pl.BlockSpec((27, coutp, cin), lambda b: (0, 0, 0)),    # resident weights
            pl.BlockSpec((coutp, 1), lambda b: (0, 0)),             # folded bias
        ],
        out_specs=pl.BlockSpec((None, coutp, out_len), lambda b: (b, 0, 0)),
        compiler_params=pltpu.CompilerParams(
            dimension_semantics=("parallel",),                      # one batch per core
            vmem_limit_bytes=40 * 1024 * 1024,                      # safe on v5e/v6e/v7x
        ),
        cost_estimate=cost,
    )(xf, p["w"], p["bias"])

    # Strip junk lanes / padded channels: (N, Coutp, out_len) -> (N, cout, D, H, W).
    out = out[:, :cout, :d * hp * wp].reshape(n, cout, d, hp, wp)[:, :, :, :h, :w]
    return out


# ---------------------------------------------------------------------------
# JAX glue: single-pass trilinear x2 upsample (align_corners=False), params
# ---------------------------------------------------------------------------
def _shifted(v, axis, parity):
    """Clamped neighbor along `axis`: previous for even output parity, next for odd."""
    m = v.shape[axis]
    if parity == 0:
        edge = lax.slice_in_dim(v, 0, 1, axis=axis)
        body = lax.slice_in_dim(v, 0, m - 1, axis=axis)
        return jnp.concatenate([edge, body], axis=axis)
    edge = lax.slice_in_dim(v, m - 1, m, axis=axis)
    body = lax.slice_in_dim(v, 1, m, axis=axis)
    return jnp.concatenate([body, edge], axis=axis)


def upsample2x_trilinear_ncdhw(x):
    """nn.Upsample(scale_factor=2, mode='trilinear', align_corners=False), fused single pass."""
    n, c, d, h, w = x.shape
    parts = []
    for pd in (0, 1):
        a = 0.75 * x + 0.25 * _shifted(x, 2, pd)
        for ph in (0, 1):
            b = 0.75 * a + 0.25 * _shifted(a, 3, ph)
            for pw in (0, 1):
                parts.append(0.75 * b + 0.25 * _shifted(b, 4, pw))
    y = jnp.stack(parts, axis=2)                      # (N, C, 8, D, H, W), index = pd*4+ph*2+pw
    y = y.reshape(n, c, 2, 2, 2, d, h, w)
    y = jnp.transpose(y, (0, 1, 5, 2, 6, 3, 7, 4))     # (N, C, D, pd, H, ph, W, pw)
    return y.reshape(n, c, 2 * d, 2 * h, 2 * w)


def _channel_config(in_channels, out_channels):
    total_in = in_channels + in_channels // 2
    insert = out_channels if total_in > out_channels else out_channels // 2
    return total_in, insert


def _init_conv_bn(key, cin, cout):
    kw_, kb, kg, kbeta, km, kv = jax.random.split(key, 6)
    w = jax.random.normal(kw_, (cout, cin, 3, 3, 3), jnp.float32) * 0.1   # PyTorch Conv3d layout
    b = jax.random.normal(kb, (cout,), jnp.float32) * 0.1
    gamma = jax.random.uniform(kg, (cout,), jnp.float32, minval=0.5, maxval=1.5)
    beta = jax.random.normal(kbeta, (cout,), jnp.float32) * 0.1
    running_mean = jax.random.normal(km, (cout,), jnp.float32) * 0.1
    running_var = jax.random.uniform(kv, (cout,), jnp.float32, minval=0.5, maxval=1.5)
    eps = 1e-5
    scale = gamma / jnp.sqrt(running_var + eps)                 # inference-BN scale
    bias = beta + (b - running_mean) * scale                    # folded conv-bias + BN shift
    # Precision note: BN scale is folded into the weights *before* the bf16 cast and the MXU
    # operands are bf16 (f32 accumulation) — a documented deviation from PyTorch's f32 Conv3d.
    w = w * scale[:, None, None, None, None]
    coutp = _round_up(cout, 8)                                  # sublane-pad output channels
    w_t = jnp.transpose(w, (2, 3, 4, 0, 1)).reshape(27, cout, cin)   # tap t = kd*9 + kh*3 + kw
    w_t = jnp.pad(w_t, ((0, 0), (0, coutp - cout), (0, 0)))
    bias_p = jnp.pad(bias, (0, coutp - cout)).reshape(coutp, 1)
    return {"w": w_t.astype(jnp.bfloat16), "bias": bias_p}


def init_unet_up_3d(key, in_channels, out_channels):
    total_in, insert = _channel_config(in_channels, out_channels)
    k1, k2 = jax.random.split(key)
    return {"conv1": _init_conv_bn(k1, total_in, insert),
            "conv2": _init_conv_bn(k2, insert, out_channels)}


def make_unet_up_3d(in_channels, out_channels):
    """UnetUp3D.forward (up_sample=True), NCDHW end-to-end, bf16 intermediates."""
    _, insert = _channel_config(in_channels, out_channels)

    @jax.jit
    def forward(params, x1_ncdhw, x2_ncdhw):
        x1 = x1_ncdhw.astype(jnp.bfloat16)                        # bf16 before upsample/concat
        x2 = x2_ncdhw.astype(jnp.bfloat16)
        x1 = upsample2x_trilinear_ncdhw(x1)                       # self.up(x1)
        x = jnp.concatenate([x1, x2], axis=1)                     # torch.cat(dim=1)
        x = conv3d_bn_relu(x, params["conv1"], insert, jnp.bfloat16)      # Conv3d+BN+ReLU (bf16 out)
        x = conv3d_bn_relu(x, params["conv2"], out_channels, jnp.float32)  # Conv3d+BN+ReLU (f32 out)
        # TODO(synk): the reference forward ends with `self.Conv2d(x1)`, which is not defined on
        # UnetUp3D (and UnetConv3D defines no forward); we return the UnetConv3D block output,
        # the only sensible interpretation.
        return x

    return forward


if __name__ == "__main__":
    key = jax.random.PRNGKey(0)
    k_param, k_x1, k_x2 = jax.random.split(key, 3)

    N = 2
    in_channels = 8
    out_channels = 4
    D = H = W = 4

    params = init_unet_up_3d(k_param, in_channels, out_channels)
    forward = make_unet_up_3d(in_channels, out_channels)

    # PyTorch NCDHW inputs: x1 is the low-res decoder feature, x2 the skip connection.
    x1 = jax.random.normal(k_x1, (N, in_channels, D, H, W), jnp.float32)
    x2 = jax.random.normal(k_x2, (N, in_channels // 2, 2 * D, 2 * H, 2 * W), jnp.float32)

    y = forward(params, x1, x2)
    jax.block_until_ready(y)

    assert y.shape == (N, out_channels, 2 * D, 2 * H, 2 * W), y.shape
    assert y.dtype == jnp.float32
    print("KERNEL_OK")
</pallas_src>

<mosaic_0001>
module attributes {stable_mosaic.version = 11 : i64} {
  func.func @_conv_bn_relu_kernel(%arg0: i32, %arg1: memref<1x12x1152xbf16, #tpu.memory_space<vmem>>, %arg2: memref<27x8x12xbf16, #tpu.memory_space<vmem>>, %arg3: memref<8x1xf32, #tpu.memory_space<vmem>>, %arg4: memref<1x8x896xbf16, #tpu.memory_space<vmem>>) attributes {dimension_semantics = [#tpu.dimension_semantics<parallel>], iteration_bounds = array<i64: 2>, scalar_prefetch = 0 : i64, scratch_operands = 0 : i64, tpu.core_type = #tpu.core_type<tc>, window_params = [{transform_indices = @transform_0, window_bounds = array<i64: 1, 12, 1152>}, {pipeline_mode = #tpu.pipeline_mode<synchronous>, transform_indices = @transform_1, window_bounds = array<i64: 27, 8, 12>}, {pipeline_mode = #tpu.pipeline_mode<synchronous>, transform_indices = @transform_2, window_bounds = array<i64: 8, 1>}, {transform_indices = @transform_3, window_bounds = array<i64: 1, 8, 896>}]} {
    %c0 = arith.constant 0 : index
    %c0_0 = arith.constant 0 : index
    %c0_1 = arith.constant 0 : index
    %0 = vector.load %arg1[%c0, %c0_0, %c0_1] : memref<1x12x1152xbf16, #tpu.memory_space<vmem>>, vector<1x12x1152xbf16>
    %1 = vector.shape_cast %0 : vector<1x12x1152xbf16> to vector<12x1152xbf16>
    %cst = arith.constant 0.000000e+00 : f32
    %2 = vector.broadcast %cst : f32 to vector<8x896xf32>
    %c0_2 = arith.constant 0 : index
    %c0_3 = arith.constant 0 : index
    %c0_4 = arith.constant 0 : index
    %3 = vector.load %arg2[%c0_2, %c0_3, %c0_4] : memref<27x8x12xbf16, #tpu.memory_space<vmem>>, vector<1x8x12xbf16>
    %4 = vector.shape_cast %3 : vector<1x8x12xbf16> to vector<8x12xbf16>
    %5 = vector.extract_strided_slice %1 {offsets = [0, 0], sizes = [12, 896], strides = [1, 1]} : vector<12x1152xbf16> to vector<12x896xbf16>
    %cst_5 = arith.constant dense<0.000000e+00> : vector<8x896xf32>
    %6 = tpu.matmul %4, %5, %cst_5 {dimension_numbers = #tpu.dot_dimension_numbers<[1], [0], [0], [1], [0, 0, 1, 1], [], []>} : vector<8x12xbf16>, vector<12x896xbf16>, vector<8x896xf32> -> vector<8x896xf32>
    %7 = arith.addf %2, %6 : vector<8x896xf32>
    %c1 = arith.constant 1 : index
    %c0_6 = arith.constant 0 : index
    %c0_7 = arith.constant 0 : index
    %8 = vector.load %arg2[%c1, %c0_6, %c0_7] : memref<27x8x12xbf16, #tpu.memory_space<vmem>>, vector<1x8x12xbf16>
    %9 = vector.shape_cast %8 : vector<1x8x12xbf16> to vector<8x12xbf16>
    %10 = vector.extract_strided_slice %1 {offsets = [0, 1], sizes = [12, 896], strides = [1, 1]} : vector<12x1152xbf16> to vector<12x896xbf16>
    %cst_8 = arith.constant dense<0.000000e+00> : vector<8x896xf32>
    %11 = tpu.matmul %9, %10, %cst_8 {dimension_numbers = #tpu.dot_dimension_numbers<[1], [0], [0], [1], [0, 0, 1, 1], [], []>} : vector<8x12xbf16>, vector<12x896xbf16>, vector<8x896xf32> -> vector<8x896xf32>
    %12 = arith.addf %7, %11 : vector<8x896xf32>
    %c2 = arith.constant 2 : index
    %c0_9 = arith.constant 0 : index
    %c0_10 = arith.constant 0 : index
    %13 = vector.load %arg2[%c2, %c0_9, %c0_10] : memref<27x8x12xbf16, #tpu.memory_space<vmem>>, vector<1x8x12xbf16>
    %14 = vector.shape_cast %13 : vector<1x8x12xbf16> to vector<8x12xbf16>
    %15 = vector.extract_strided_slice %1 {offsets = [0, 2], sizes = [12, 896], strides = [1, 1]} : vector<12x1152xbf16> to vector<12x896xbf16>
    %cst_11 = arith.constant dense<0.000000e+00> : vector<8x896xf32>
    %16 = tpu.matmul %14, %15, %cst_11 {dimension_numbers = #tpu.dot_dimension_numbers<[1], [0], [0], [1], [0, 0, 1, 1], [], []>} : vector<8x12xbf16>, vector<12x896xbf16>, vector<8x896xf32> -> vector<8x896xf32>
    %17 = arith.addf %12, %16 : vector<8x896xf32>
    %c3 = arith.constant 3 : index
    %c0_12 = arith.constant 0 : index
    %c0_13 = arith.constant 0 : index
    %18 = vector.load %arg2[%c3, %c0_12, %c0_13] : memref<27x8x12xbf16, #tpu.memory_space<vmem>>, vector<1x8x12xbf16>
    %19 = vector.shape_cast %18 : vector<1x8x12xbf16> to vector<8x12xbf16>
    %20 = vector.extract_strided_slice %1 {offsets = [0, 10], sizes = [12, 896], strides = [1, 1]} : vector<12x1152xbf16> to vector<12x896xbf16>
    %cst_14 = arith.constant dense<0.000000e+00> : vector<8x896xf32>
    %21 = tpu.matmul %19, %20, %cst_14 {dimension_numbers = #tpu.dot_dimension_numbers<[1], [0], [0], [1], [0, 0, 1, 1], [], []>} : vector<8x12xbf16>, vector<12x896xbf16>, vector<8x896xf32> -> vector<8x896xf32>
    %22 = arith.addf %17, %21 : vector<8x896xf32>
    %c4 = arith.constant 4 : index
    %c0_15 = arith.constant 0 : index
    %c0_16 = arith.constant 0 : index
    %23 = vector.load %arg2[%c4, %c0_15, %c0_16] : memref<27x8x12xbf16, #tpu.memory_space<vmem>>, vector<1x8x12xbf16>
    %24 = vector.shape_cast %23 : vector<1x8x12xbf16> to vector<8x12xbf16>
    %25 = vector.extract_strided_slice %1 {offsets = [0, 11], sizes = [12, 896], strides = [1, 1]} : vector<12x1152xbf16> to vector<12x896xbf16>
    %cst_17 = arith.constant dense<0.000000e+00> : vector<8x896xf32>
    %26 = tpu.matmul %24, %25, %cst_17 {dimension_numbers = #tpu.dot_dimension_numbers<[1], [0], [0], [1], [0, 0, 1, 1], [], []>} : vector<8x12xbf16>, vector<12x896xbf16>, vector<8x896xf32> -> vector<8x896xf32>
    %27 = arith.addf %22, %26 : vector<8x896xf32>
    %c5 = arith.constant 5 : index
    %c0_18 = arith.constant 0 : index
    %c0_19 = arith.constant 0 : index
    %28 = vector.load %arg2[%c5, %c0_18, %c0_19] : memref<27x8x12xbf16, #tpu.memory_space<vmem>>, vector<1x8x12xbf16>
    %29 = vector.shape_cast %28 : vector<1x8x12xbf16> to vector<8x12xbf16>
    %30 = vector.extract_strided_slice %1 {offsets = [0, 12], sizes = [12, 896], strides = [1, 1]} : vector<12x1152xbf16> to vector<12x896xbf16>
    %cst_20 = arith.constant dense<0.000000e+00> : vector<8x896xf32>
    %31 = tpu.matmul %29, %30, %cst_20 {dimension_numbers = #tpu.dot_dimension_numbers<[1], [0], [0], [1], [0, 0, 1, 1], [], []>} : vector<8x12xbf16>, vector<12x896xbf16>, vector<8x896xf32> -> vector<8x896xf32>
    %32 = arith.addf %27, %31 : vector<8x896xf32>
    %c6 = arith.constant 6 : index
    %c0_21 = arith.constant 0 : index
    %c0_22 = arith.constant 0 : index
    %33 = vector.load %arg2[%c6, %c0_21, %c0_22] : memref<27x8x12xbf16, #tpu.memory_space<vmem>>, vector<1x8x12xbf16>
    %34 = vector.shape_cast %33 : vector<1x8x12xbf16> to vector<8x12xbf16>
    %35 = vector.extract_strided_slice %1 {offsets = [0, 20], sizes = [12, 896], strides = [1, 1]} : vector<12x1152xbf16> to vector<12x896xbf16>
    %cst_23 = arith.constant dense<0.000000e+00> : vector<8x896xf32>
    %36 = tpu.matmul %34, %35, %cst_23 {dimension_numbers = #tpu.dot_dimension_numbers<[1], [0], [0], [1], [0, 0, 1, 1], [], []>} : vector<8x12xbf16>, vector<12x896xbf16>, vector<8x896xf32> -> vector<8x896xf32>
    %37 = arith.addf %32, %36 : vector<8x896xf32>
    %c7 = arith.constant 7 : index
    %c0_24 = arith.constant 0 : index
    %c0_25 = arith.constant 0 : index
    %38 = vector.load %arg2[%c7, %c0_24, %c0_25] : memref<27x8x12xbf16, #tpu.memory_space<vmem>>, vector<1x8x12xbf16>
    %39 = vector.shape_cast %38 : vector<1x8x12xbf16> to vector<8x12xbf16>
    %40 = vector.extract_strided_slice %1 {offsets = [0, 21], sizes = [12, 896], strides = [1, 1]} : vector<12x1152xbf16> to vector<12x896xbf16>
    %cst_26 = arith.constant dense<0.000000e+00> : vector<8x896xf32>
    %41 = tpu.matmul %39, %40, %cst_26 {dimension_numbers = #tpu.dot_dimension_numbers<[1], [0], [0], [1], [0, 0, 1, 1], [], []>} : vector<8x12xbf16>, vector<12x896xbf16>, vector<8x896xf32> -> vector<8x896xf32>
    %42 = arith.addf %37, %41 : vector<8x896xf32>
    %c8 = arith.constant 8 : index
    %c0_27 = arith.constant 0 : index
    %c0_28 = arith.constant 0 : index
    %43 = vector.load %arg2[%c8, %c0_27, %c0_28] : memref<27x8x12xbf16, #tpu.memory_space<vmem>>, vector<1x8x12xbf16>
    %44 = vector.shape_cast %43 : vector<1x8x12xbf16> to vector<8x12xbf16>
    %45 = vector.extract_strided_slice %1 {offsets = [0, 22], sizes = [12, 896], strides = [1, 1]} : vector<12x1152xbf16> to vector<12x896xbf16>
    %cst_29 = arith.constant dense<0.000000e+00> : vector<8x896xf32>
    %46 = tpu.matmul %44, %45, %cst_29 {dimension_numbers = #tpu.dot_dimension_numbers<[1], [0], [0], [1], [0, 0, 1, 1], [], []>} : vector<8x12xbf16>, vector<12x896xbf16>, vector<8x896xf32> -> vector<8x896xf32>
    %47 = arith.addf %42, %46 : vector<8x896xf32>
    %c9 = arith.constant 9 : index
    %c0_30 = arith.constant 0 : index
    %c0_31 = arith.constant 0 : index
    %48 = vector.load %arg2[%c9, %c0_30, %c0_31] : memref<27x8x12xbf16, #tpu.memory_space<vmem>>, vector<1x8x12xbf16>
    %49 = vector.shape_cast %48 : vector<1x8x12xbf16> to vector<8x12xbf16>
    %50 = vector.extract_strided_slice %1 {offsets = [0, 100], sizes = [12, 896], strides = [1, 1]} : vector<12x1152xbf16> to vector<12x896xbf16>
    %cst_32 = arith.constant dense<0.000000e+00> : vector<8x896xf32>
    %51 = tpu.matmul %49, %50, %cst_32 {dimension_numbers = #tpu.dot_dimension_numbers<[1], [0], [0], [1], [0, 0, 1, 1], [], []>} : vector<8x12xbf16>, vector<12x896xbf16>, vector<8x896xf32> -> vector<8x896xf32>
    %52 = arith.addf %47, %51 : vector<8x896xf32>
    %c10 = arith.constant 10 : index
    %c0_33 = arith.constant 0 : index
    %c0_34 = arith.constant 0 : index
    %53 = vector.load %arg2[%c10, %c0_33, %c0_34] : memref<27x8x12xbf16, #tpu.memory_space<vmem>>, vector<1x8x12xbf16>
    %54 = vector.shape_cast %53 : vector<1x8x12xbf16> to vector<8x12xbf16>
    %55 = vector.extract_strided_slice %1 {offsets = [0, 101], sizes = [12, 896], strides = [1, 1]} : vector<12x1152xbf16> to vector<12x896xbf16>
    %cst_35 = arith.constant dense<0.000000e+00> : vector<8x896xf32>
    %56 = tpu.matmul %54, %55, %cst_35 {dimension_numbers = #tpu.dot_dimension_numbers<[1], [0], [0], [1], [0, 0, 1, 1], [], []>} : vector<8x12xbf16>, vector<12x896xbf16>, vector<8x896xf32> -> vector<8x896xf32>
    %57 = arith.addf %52, %56 : vector<8x896xf32>
    %c11 = arith.constant 11 : index
    %c0_36 = arith.constant 0 : index
    %c0_37 = arith.constant 0 : index
    %58 = vector.load %arg2[%c11, %c0_36, %c0_37] : memref<27x8x12xbf16, #tpu.memory_space<vmem>>, vector<1x8x12xbf16>
    %59 = vector.shape_cast %58 : vector<1x8x12xbf16> to vector<8x12xbf16>
    %60 = vector.extract_strided_slice %1 {offsets = [0, 102], sizes = [12, 896], strides = [1, 1]} : vector<12x1152xbf16> to vector<12x896xbf16>
    %cst_38 = arith.constant dense<0.000000e+00> : vector<8x896xf32>
    %61 = tpu.matmul %59, %60, %cst_38 {dimension_numbers = #tpu.dot_dimension_numbers<[1], [0], [0], [1], [0, 0, 1, 1], [], []>} : vector<8x12xbf16>, vector<12x896xbf16>, vector<8x896xf32> -> vector<8x896xf32>
    %62 = arith.addf %57, %61 : vector<8x896xf32>
    %c12 = arith.constant 12 : index
    %c0_39 = arith.constant 0 : index
    %c0_40 = arith.constant 0 : index
    %63 = vector.load %arg2[%c12, %c0_39, %c0_40] : memref<27x8x12xbf16, #tpu.memory_space<vmem>>, vector<1x8x12xbf16>
    %64 = vector.shape_cast %63 : vector<1x8x12xbf16> to vector<8x12xbf16>
    %65 = vector.extract_strided_slice %1 {offsets = [0, 110], sizes = [12, 896], strides = [1, 1]} : vector<12x1152xbf16> to vector<12x896xbf16>
    %cst_41 = arith.constant dense<0.000000e+00> : vector<8x896xf32>
    %66 = tpu.matmul %64, %65, %cst_41 {dimension_numbers = #tpu.dot_dimension_numbers<[1], [0], [0], [1], [0, 0, 1, 1], [], []>} : vector<8x12xbf16>, vector<12x896xbf16>, vector<8x896xf32> -> vector<8x896xf32>
    %67 = arith.addf %62, %66 : vector<8x896xf32>
    %c13 = arith.constant 13 : index
    %c0_42 = arith.constant 0 : index
    %c0_43 = arith.constant 0 : index
    %68 = vector.load %arg2[%c13, %c0_42, %c0_43] : memref<27x8x12xbf16, #tpu.memory_space<vmem>>, vector<1x8x12xbf16>
    %69 = vector.shape_cast %68 : vector<1x8x12xbf16> to vector<8x12xbf16>
    %70 = vector.extract_strided_slice %1 {offsets = [0, 111], sizes = [12, 896], strides = [1, 1]} : vector<12x1152xbf16> to vector<12x896xbf16>
    %cst_44 = arith.constant dense<0.000000e+00> : vector<8x896xf32>
    %71 = tpu.matmul %69, %70, %cst_44 {dimension_numbers = #tpu.dot_dimension_numbers<[1], [0], [0], [1], [0, 0, 1, 1], [], []>} : vector<8x12xbf16>, vector<12x896xbf16>, vector<8x896xf32> -> vector<8x896xf32>
    %72 = arith.addf %67, %71 : vector<8x896xf32>
    %c14 = arith.constant 14 : index
    %c0_45 = arith.constant 0 : index
    %c0_46 = arith.constant 0 : index
    %73 = vector.load %arg2[%c14, %c0_45, %c0_46] : memref<27x8x12xbf16, #tpu.memory_space<vmem>>, vector<1x8x12xbf16>
    %74 = vector.shape_cast %73 : vector<1x8x12xbf16> to vector<8x12xbf16>
    %75 = vector.extract_strided_slice %1 {offsets = [0, 112], sizes = [12, 896], strides = [1, 1]} : vector<12x1152xbf16> to vector<12x896xbf16>
    %cst_47 = arith.constant dense<0.000000e+00> : vector<8x896xf32>
    %76 = tpu.matmul %74, %75, %cst_47 {dimension_numbers = #tpu.dot_dimension_numbers<[1], [0], [0], [1], [0, 0, 1, 1], [], []>} : vector<8x12xbf16>, vector<12x896xbf16>, vector<8x896xf32> -> vector<8x896xf32>
    %77 = arith.addf %72, %76 : vector<8x896xf32>
    %c15 = arith.constant 15 : index
    %c0_48 = arith.constant 0 : index
    %c0_49 = arith.constant 0 : index
    %78 = vector.load %arg2[%c15, %c0_48, %c0_49] : memref<27x8x12xbf16, #tpu.memory_space<vmem>>, vector<1x8x12xbf16>
    %79 = vector.shape_cast %78 : vector<1x8x12xbf16> to vector<8x12xbf16>
    %80 = vector.extract_strided_slice %1 {offsets = [0, 120], sizes = [12, 896], strides = [1, 1]} : vector<12x1152xbf16> to vector<12x896xbf16>
    %cst_50 = arith.constant dense<0.000000e+00> : vector<8x896xf32>
    %81 = tpu.matmul %79, %80, %cst_50 {dimension_numbers = #tpu.dot_dimension_numbers<[1], [0], [0], [1], [0, 0, 1, 1], [], []>} : vector<8x12xbf16>, vector<12x896xbf16>, vector<8x896xf32> -> vector<8x896xf32>
    %82 = arith.addf %77, %81 : vector<8x896xf32>
    %c16 = arith.constant 16 : index
    %c0_51 = arith.constant 0 : index
    %c0_52 = arith.constant 0 : index
    %83 = vector.load %arg2[%c16, %c0_51, %c0_52] : memref<27x8x12xbf16, #tpu.memory_space<vmem>>, vector<1x8x12xbf16>
    %84 = vector.shape_cast %83 : vector<1x8x12xbf16> to vector<8x12xbf16>
    %85 = vector.extract_strided_slice %1 {offsets = [0, 121], sizes = [12, 896], strides = [1, 1]} : vector<12x1152xbf16> to vector<12x896xbf16>
    %cst_53 = arith.constant dense<0.000000e+00> : vector<8x896xf32>
    %86 = tpu.matmul %84, %85, %cst_53 {dimension_numbers = #tpu.dot_dimension_numbers<[1], [0], [0], [1], [0, 0, 1, 1], [], []>} : vector<8x12xbf16>, vector<12x896xbf16>, vector<8x896xf32> -> vector<8x896xf32>
    %87 = arith.addf %82, %86 : vector<8x896xf32>
    %c17 = arith.constant 17 : index
    %c0_54 = arith.constant 0 : index
    %c0_55 = arith.constant 0 : index
    %88 = vector.load %arg2[%c17, %c0_54, %c0_55] : memref<27x8x12xbf16, #tpu.memory_space<vmem>>, vector<1x8x12xbf16>
    %89 = vector.shape_cast %88 : vector<1x8x12xbf16> to vector<8x12xbf16>
    %90 = vector.extract_strided_slice %1 {offsets = [0, 122], sizes = [12, 896], strides = [1, 1]} : vector<12x1152xbf16> to vector<12x896xbf16>
    %cst_56 = arith.constant dense<0.000000e+00> : vector<8x896xf32>
    %91 = tpu.matmul %89, %90, %cst_56 {dimension_numbers = #tpu.dot_dimension_numbers<[1], [0], [0], [1], [0, 0, 1, 1], [], []>} : vector<8x12xbf16>, vector<12x896xbf16>, vector<8x896xf32> -> vector<8x896xf32>
    %92 = arith.addf %87, %91 : vector<8x896xf32>
    %c18 = arith.constant 18 : index
    %c0_57 = arith.constant 0 : index
    %c0_58 = arith.constant 0 : index
    %93 = vector.load %arg2[%c18, %c0_57, %c0_58] : memref<27x8x12xbf16, #tpu.memory_space<vmem>>, vector<1x8x12xbf16>
    %94 = vector.shape_cast %93 : vector<1x8x12xbf16> to vector<8x12xbf16>
    %95 = vector.extract_strided_slice %1 {offsets = [0, 200], sizes = [12, 896], strides = [1, 1]} : vector<12x1152xbf16> to vector<12x896xbf16>
    %cst_59 = arith.constant dense<0.000000e+00> : vector<8x896xf32>
    %96 = tpu.matmul %94, %95, %cst_59 {dimension_numbers = #tpu.dot_dimension_numbers<[1], [0], [0], [1], [0, 0, 1, 1], [], []>} : vector<8x12xbf16>, vector<12x896xbf16>, vector<8x896xf32> -> vector<8x896xf32>
    %97 = arith.addf %92, %96 : vector<8x896xf32>
    %c19 = arith.constant 19 : index
    %c0_60 = arith.constant 0 : index
    %c0_61 = arith.constant 0 : index
    %98 = vector.load %arg2[%c19, %c0_60, %c0_61] : memref<27x8x12xbf16, #tpu.memory_space<vmem>>, vector<1x8x12xbf16>
    %99 = vector.shape_cast %98 : vector<1x8x12xbf16> to vector<8x12xbf16>
    %100 = vector.extract_strided_slice %1 {offsets = [0, 201], sizes = [12, 896], strides = [1, 1]} : vector<12x1152xbf16> to vector<12x896xbf16>
    %cst_62 = arith.constant dense<0.000000e+00> : vector<8x896xf32>
    %101 = tpu.matmul %99, %100, %cst_62 {dimension_numbers = #tpu.dot_dimension_numbers<[1], [0], [0], [1], [0, 0, 1, 1], [], []>} : vector<8x12xbf16>, vector<12x896xbf16>, vector<8x896xf32> -> vector<8x896xf32>
    %102 = arith.addf %97, %101 : vector<8x896xf32>
    %c20 = arith.constant 20 : index
    %c0_63 = arith.constant 0 : index
    %c0_64 = arith.constant 0 : index
    %103 = vector.load %arg2[%c20, %c0_63, %c0_64] : memref<27x8x12xbf16, #tpu.memory_space<vmem>>, vector<1x8x12xbf16>
    %104 = vector.shape_cast %103 : vector<1x8x12xbf16> to vector<8x12xbf16>
    %105 = vector.extract_strided_slice %1 {offsets = [0, 202], sizes = [12, 896], strides = [1, 1]} : vector<12x1152xbf16> to vector<12x896xbf16>
    %cst_65 = arith.constant dense<0.000000e+00> : vector<8x896xf32>
    %106 = tpu.matmul %104, %105, %cst_65 {dimension_numbers = #tpu.dot_dimension_numbers<[1], [0], [0], [1], [0, 0, 1, 1], [], []>} : vector<8x12xbf16>, vector<12x896xbf16>, vector<8x896xf32> -> vector<8x896xf32>
    %107 = arith.addf %102, %106 : vector<8x896xf32>
    %c21 = arith.constant 21 : index
    %c0_66 = arith.constant 0 : index
    %c0_67 = arith.constant 0 : index
    %108 = vector.load %arg2[%c21, %c0_66, %c0_67] : memref<27x8x12xbf16, #tpu.memory_space<vmem>>, vector<1x8x12xbf16>
    %109 = vector.shape_cast %108 : vector<1x8x12xbf16> to vector<8x12xbf16>
    %110 = vector.extract_strided_slice %1 {offsets = [0, 210], sizes = [12, 896], strides = [1, 1]} : vector<12x1152xbf16> to vector<12x896xbf16>
    %cst_68 = arith.constant dense<0.000000e+00> : vector<8x896xf32>
    %111 = tpu.matmul %109, %110, %cst_68 {dimension_numbers = #tpu.dot_dimension_numbers<[1], [0], [0], [1], [0, 0, 1, 1], [], []>} : vector<8x12xbf16>, vector<12x896xbf16>, vector<8x896xf32> -> vector<8x896xf32>
    %112 = arith.addf %107, %111 : vector<8x896xf32>
    %c22 = arith.constant 22 : index
    %c0_69 = arith.constant 0 : index
    %c0_70 = arith.constant 0 : index
    %113 = vector.load %arg2[%c22, %c0_69, %c0_70] : memref<27x8x12xbf16, #tpu.memory_space<vmem>>, vector<1x8x12xbf16>
    %114 = vector.shape_cast %113 : vector<1x8x12xbf16> to vector<8x12xbf16>
    %115 = vector.extract_strided_slice %1 {offsets = [0, 211], sizes = [12, 896], strides = [1, 1]} : vector<12x1152xbf16> to vector<12x896xbf16>
    %cst_71 = arith.constant dense<0.000000e+00> : vector<8x896xf32>
    %116 = tpu.matmul %114, %115, %cst_71 {dimension_numbers = #tpu.dot_dimension_numbers<[1], [0], [0], [1], [0, 0, 1, 1], [], []>} : vector<8x12xbf16>, vector<12x896xbf16>, vector<8x896xf32> -> vector<8x896xf32>
    %117 = arith.addf %112, %116 : vector<8x896xf32>
    %c23 = arith.constant 23 : index
    %c0_72 = arith.constant 0 : index
    %c0_73 = arith.constant 0 : index
    %118 = vector.load %arg2[%c23, %c0_72, %c0_73] : memref<27x8x12xbf16, #tpu.memory_space<vmem>>, vector<1x8x12xbf16>
    %119 = vector.shape_cast %118 : vector<1x8x12xbf16> to vector<8x12xbf16>
    %120 = vector.extract_strided_slice %1 {offsets = [0, 212], sizes = [12, 896], strides = [1, 1]} : vector<12x1152xbf16> to vector<12x896xbf16>
    %cst_74 = arith.constant dense<0.000000e+00> : vector<8x896xf32>
    %121 = tpu.matmul %119, %120, %cst_74 {dimension_numbers = #tpu.dot_dimension_numbers<[1], [0], [0], [1], [0, 0, 1, 1], [], []>} : vector<8x12xbf16>, vector<12x896xbf16>, vector<8x896xf32> -> vector<8x896xf32>
    %122 = arith.addf %117, %121 : vector<8x896xf32>
    %c24 = arith.constant 24 : index
    %c0_75 = arith.constant 0 : index
    %c0_76 = arith.constant 0 : index
    %123 = vector.load %arg2[%c24, %c0_75, %c0_76] : memref<27x8x12xbf16, #tpu.memory_space<vmem>>, vector<1x8x12xbf16>
    %124 = vector.shape_cast %123 : vector<1x8x12xbf16> to vector<8x12xbf16>
    %125 = vector.extract_strided_slice %1 {offsets = [0, 220], sizes = [12, 896], strides = [1, 1]} : vector<12x1152xbf16> to vector<12x896xbf16>
    %cst_77 = arith.constant dense<0.000000e+00> : vector<8x896xf32>
    %126 = tpu.matmul %124, %125, %cst_77 {dimension_numbers = #tpu.dot_dimension_numbers<[1], [0], [0], [1], [0, 0, 1, 1], [], []>} : vector<8x12xbf16>, vector<12x896xbf16>, vector<8x896xf32> -> vector<8x896xf32>
    %127 = arith.addf %122, %126 : vector<8x896xf32>
    %c25 = arith.constant 25 : index
    %c0_78 = arith.constant 0 : index
    %c0_79 = arith.constant 0 : index
    %128 = vector.load %arg2[%c25, %c0_78, %c0_79] : memref<27x8x12xbf16, #tpu.memory_space<vmem>>, vector<1x8x12xbf16>
    %129 = vector.shape_cast %128 : vector<1x8x12xbf16> to vector<8x12xbf16>
    %130 = vector.extract_strided_slice %1 {offsets = [0, 221], sizes = [12, 896], strides = [1, 1]} : vector<12x1152xbf16> to vector<12x896xbf16>
    %cst_80 = arith.constant dense<0.000000e+00> : vector<8x896xf32>
    %131 = tpu.matmul %129, %130, %cst_80 {dimension_numbers = #tpu.dot_dimension_numbers<[1], [0], [0], [1], [0, 0, 1, 1], [], []>} : vector<8x12xbf16>, vector<12x896xbf16>, vector<8x896xf32> -> vector<8x896xf32>
    %132 = arith.addf %127, %131 : vector<8x896xf32>
    %c26 = arith.constant 26 : index
    %c0_81 = arith.constant 0 : index
    %c0_82 = arith.constant 0 : index
    %133 = vector.load %arg2[%c26, %c0_81, %c0_82] : memref<27x8x12xbf16, #tpu.memory_space<vmem>>, vector<1x8x12xbf16>
    %134 = vector.shape_cast %133 : vector<1x8x12xbf16> to vector<8x12xbf16>
    %135 = vector.extract_strided_slice %1 {offsets = [0, 222], sizes = [12, 896], strides = [1, 1]} : vector<12x1152xbf16> to vector<12x896xbf16>
    %cst_83 = arith.constant dense<0.000000e+00> : vector<8x896xf32>
    %136 = tpu.matmul %134, %135, %cst_83 {dimension_numbers = #tpu.dot_dimension_numbers<[1], [0], [0], [1], [0, 0, 1, 1], [], []>} : vector<8x12xbf16>, vector<12x896xbf16>, vector<8x896xf32> -> vector<8x896xf32>
    %137 = arith.addf %132, %136 : vector<8x896xf32>
    %c0_84 = arith.constant 0 : index
    %c0_85 = arith.constant 0 : index
    %138 = vector.load %arg3[%c0_84, %c0_85] : memref<8x1xf32, #tpu.memory_space<vmem>>, vector<8x1xf32>
    %139 = vector.broadcast %138 : vector<8x1xf32> to vector<8x896xf32>
    %140 = arith.addf %137, %139 : vector<8x896xf32>
    %cst_86 = arith.constant 0.000000e+00 : f32
    %141 = vector.broadcast %cst_86 : f32 to vector<8x896xf32>
    %142 = arith.maximumf %140, %141 : vector<8x896xf32>
    %143 = arith.truncf %142 : vector<8x896xf32> to vector<8x896xbf16>
    %c0_87 = arith.constant 0 : index
    %c0_88 = arith.constant 0 : index
    %c0_89 = arith.constant 0 : index
    %144 = vector.load %arg4[%c0_87, %c0_88, %c0_89] : memref<1x8x896xbf16, #tpu.memory_space<vmem>>, vector<1x8x896xbf16>
    %145 = vector.shape_cast %144 : vector<1x8x896xbf16> to vector<8x896xbf16>
    %146 = vector.shape_cast %143 : vector<8x896xbf16> to vector<1x8x896xbf16>
    tpu.vector_store %arg4[%c0_87, %c0_88, %c0_89], %146 {strides = array<i32>} : memref<1x8x896xbf16, #tpu.memory_space<vmem>>, vector<1x8x896xbf16>,
    return
  }
  func.func @transform_0(%arg0: i32) -> (i32, i32, i32) {
    %c0_i32 = arith.constant 0 : i32
    %c0_i32_0 = arith.constant 0 : i32
    %c0_i32_1 = arith.constant 0 : i32
    return %arg0, %c0_i32, %c0_i32_0 : i32, i32, i32
  }
  func.func @transform_1(%arg0: i32) -> (i32, i32, i32) {
    %c0_i32 = arith.constant 0 : i32
    %c0_i32_0 = arith.constant 0 : i32
    %c0_i32_1 = arith.constant 0 : i32
    %c0_i32_2 = arith.constant 0 : i32
    return %c0_i32, %c0_i32_0, %c0_i32_1 : i32, i32, i32
  }
  func.func @transform_2(%arg0: i32) -> (i32, i32) {
    %c0_i32 = arith.constant 0 : i32
    %c0_i32_0 = arith.constant 0 : i32
    %c0_i32_1 = arith.constant 0 : i32
    return %c0_i32, %c0_i32_0 : i32, i32
  }
  func.func @transform_3(%arg0: i32) -> (i32, i32, i32) {
    %c0_i32 = arith.constant 0 : i32
    %c0_i32_0 = arith.constant 0 : i32
    %c0_i32_1 = arith.constant 0 : i32
    return %arg0, %c0_i32, %c0_i32_0 : i32, i32, i32
  }
}

module attributes {stable_mosaic.version = 11 : i64} {
  func.func @_conv_bn_relu_kernel(%arg0: i32, %arg1: memref<1x4x1152xbf16, #tpu.memory_space<vmem>>, %arg2: memref<27x8x4xbf16, #tpu.memory_space<vmem>>, %arg3: memref<8x1xf32, #tpu.memory_space<vmem>>, %arg4: memref<1x8x896xf32, #tpu.memory_space<vmem>>) attributes {dimension_semantics = [#tpu.dimension_semantics<parallel>], iteration_bounds = array<i64: 2>, scalar_prefetch = 0 : i64, scratch_operands = 0 : i64, tpu.core_type = #tpu.core_type<tc>, window_params = [{transform_indices = @transform_0, window_bounds = array<i64: 1, 4, 1152>}, {pipeline_mode = #tpu.pipeline_mode<synchronous>, transform_indices = @transform_1, window_bounds = array<i64: 27, 8, 4>}, {pipeline_mode = #tpu.pipeline_mode<synchronous>, transform_indices = @transform_2, window_bounds = array<i64: 8, 1>}, {transform_indices = @transform_3, window_bounds = array<i64: 1, 8, 896>}]} {
    %c0 = arith.constant 0 : index
    %c0_0 = arith.constant 0 : index
    %c0_1 = arith.constant 0 : index
    %0 = vector.load %arg1[%c0, %c0_0, %c0_1] : memref<1x4x1152xbf16, #tpu.memory_space<vmem>>, vector<1x4x1152xbf16>
    %1 = vector.shape_cast %0 : vector<1x4x1152xbf16> to vector<4x1152xbf16>
    %cst = arith.constant 0.000000e+00 : f32
    %2 = vector.broadcast %cst : f32 to vector<8x896xf32>
    %c0_2 = arith.constant 0 : index
    %c0_3 = arith.constant 0 : index
    %c0_4 = arith.constant 0 : index
    %3 = vector.load %arg2[%c0_2, %c0_3, %c0_4] : memref<27x8x4xbf16, #tpu.memory_space<vmem>>, vector<1x8x4xbf16>
    %4 = vector.shape_cast %3 : vector<1x8x4xbf16> to vector<8x4xbf16>
    %5 = vector.extract_strided_slice %1 {offsets = [0, 0], sizes = [4, 896], strides = [1, 1]} : vector<4x1152xbf16> to vector<4x896xbf16>
    %cst_5 = arith.constant dense<0.000000e+00> : vector<8x896xf32>
    %6 = tpu.matmul %4, %5, %cst_5 {dimension_numbers = #tpu.dot_dimension_numbers<[1], [0], [0], [1], [0, 0, 1, 1], [], []>} : vector<8x4xbf16>, vector<4x896xbf16>, vector<8x896xf32> -> vector<8x896xf32>
    %7 = arith.addf %2, %6 : vector<8x896xf32>
    %c1 = arith.constant 1 : index
    %c0_6 = arith.constant 0 : index
    %c0_7 = arith.constant 0 : index
    %8 = vector.load %arg2[%c1, %c0_6, %c0_7] : memref<27x8x4xbf16, #tpu.memory_space<vmem>>, vector<1x8x4xbf16>
    %9 = vector.shape_cast %8 : vector<1x8x4xbf16> to vector<8x4xbf16>
    %10 = vector.extract_strided_slice %1 {offsets = [0, 1], sizes = [4, 896], strides = [1, 1]} : vector<4x1152xbf16> to vector<4x896xbf16>
    %cst_8 = arith.constant dense<0.000000e+00> : vector<8x896xf32>
    %11 = tpu.matmul %9, %10, %cst_8 {dimension_numbers = #tpu.dot_dimension_numbers<[1], [0], [0], [1], [0, 0, 1, 1], [], []>} : vector<8x4xbf16>, vector<4x896xbf16>, vector<8x896xf32> -> vector<8x896xf32>
    %12 = arith.addf %7, %11 : vector<8x896xf32>
    %c2 = arith.constant 2 : index
    %c0_9 = arith.constant 0 : index
    %c0_10 = arith.constant 0 : index
    %13 = vector.load %arg2[%c2, %c0_9, %c0_10] : memref<27x8x4xbf16, #tpu.memory_space<vmem>>, vector<1x8x4xbf16>
    %14 = vector.shape_cast %13 : vector<1x8x4xbf16> to vector<8x4xbf16>
    %15 = vector.extract_strided_slice %1 {offsets = [0, 2], sizes = [4, 896], strides = [1, 1]} : vector<4x1152xbf16> to vector<4x896xbf16>
    %cst_11 = arith.constant dense<0.000000e+00> : vector<8x896xf32>
    %16 = tpu.matmul %14, %15, %cst_11 {dimension_numbers = #tpu.dot_dimension_numbers<[1], [0], [0], [1], [0, 0, 1, 1], [], []>} : vector<8x4xbf16>, vector<4x896xbf16>, vector<8x896xf32> -> vector<8x896xf32>
    %17 = arith.addf %12, %16 : vector<8x896xf32>
    %c3 = arith.constant 3 : index
    %c0_12 = arith.constant 0 : index
    %c0_13 = arith.constant 0 : index
    %18 = vector.load %arg2[%c3, %c0_12, %c0_13] : memref<27x8x4xbf16, #tpu.memory_space<vmem>>, vector<1x8x4xbf16>
    %19 = vector.shape_cast %18 : vector<1x8x4xbf16> to vector<8x4xbf16>
    %20 = vector.extract_strided_slice %1 {offsets = [0, 10], sizes = [4, 896], strides = [1, 1]} : vector<4x1152xbf16> to vector<4x896xbf16>
    %cst_14 = arith.constant dense<0.000000e+00> : vector<8x896xf32>
    %21 = tpu.matmul %19, %20, %cst_14 {dimension_numbers = #tpu.dot_dimension_numbers<[1], [0], [0], [1], [0, 0, 1, 1], [], []>} : vector<8x4xbf16>, vector<4x896xbf16>, vector<8x896xf32> -> vector<8x896xf32>
    %22 = arith.addf %17, %21 : vector<8x896xf32>
    %c4 = arith.constant 4 : index
    %c0_15 = arith.constant 0 : index
    %c0_16 = arith.constant 0 : index
    %23 = vector.load %arg2[%c4, %c0_15, %c0_16] : memref<27x8x4xbf16, #tpu.memory_space<vmem>>, vector<1x8x4xbf16>
    %24 = vector.shape_cast %23 : vector<1x8x4xbf16> to vector<8x4xbf16>
    %25 = vector.extract_strided_slice %1 {offsets = [0, 11], sizes = [4, 896], strides = [1, 1]} : vector<4x1152xbf16> to vector<4x896xbf16>
    %cst_17 = arith.constant dense<0.000000e+00> : vector<8x896xf32>
    %26 = tpu.matmul %24, %25, %cst_17 {dimension_numbers = #tpu.dot_dimension_numbers<[1], [0], [0], [1], [0, 0, 1, 1], [], []>} : vector<8x4xbf16>, vector<4x896xbf16>, vector<8x896xf32> -> vector<8x896xf32>
    %27 = arith.addf %22, %26 : vector<8x896xf32>
    %c5 = arith.constant 5 : index
    %c0_18 = arith.constant 0 : index
    %c0_19 = arith.constant 0 : index
    %28 = vector.load %arg2[%c5, %c0_18, %c0_19] : memref<27x8x4xbf16, #tpu.memory_space<vmem>>, vector<1x8x4xbf16>
    %29 = vector.shape_cast %28 : vector<1x8x4xbf16> to vector<8x4xbf16>
    %30 = vector.extract_strided_slice %1 {offsets = [0, 12], sizes = [4, 896], strides = [1, 1]} : vector<4x1152xbf16> to vector<4x896xbf16>
    %cst_20 = arith.constant dense<0.000000e+00> : vector<8x896xf32>
    %31 = tpu.matmul %29, %30, %cst_20 {dimension_numbers = #tpu.dot_dimension_numbers<[1], [0], [0], [1], [0, 0, 1, 1], [], []>} : vector<8x4xbf16>, vector<4x896xbf16>, vector<8x896xf32> -> vector<8x896xf32>
    %32 = arith.addf %27, %31 : vector<8x896xf32>
    %c6 = arith.constant 6 : index
    %c0_21 = arith.constant 0 : index
    %c0_22 = arith.constant 0 : index
    %33 = vector.load %arg2[%c6, %c0_21, %c0_22] : memref<27x8x4xbf16, #tpu.memory_space<vmem>>, vector<1x8x4xbf16>
    %34 = vector.shape_cast %33 : vector<1x8x4xbf16> to vector<8x4xbf16>
    %35 = vector.extract_strided_slice %1 {offsets = [0, 20], sizes = [4, 896], strides = [1, 1]} : vector<4x1152xbf16> to vector<4x896xbf16>
    %cst_23 = arith.constant dense<0.000000e+00> : vector<8x896xf32>
    %36 = tpu.matmul %34, %35, %cst_23 {dimension_numbers = #tpu.dot_dimension_numbers<[1], [0], [0], [1], [0, 0, 1, 1], [], []>} : vector<8x4xbf16>, vector<4x896xbf16>, vector<8x896xf32> -> vector<8x896xf32>
    %37 = arith.addf %32, %36 : vector<8x896xf32>
    %c7 = arith.constant 7 : index
    %c0_24 = arith.constant 0 : index
    %c0_25 = arith.constant 0 : index
    %38 = vector.load %arg2[%c7, %c0_24, %c0_25] : memref<27x8x4xbf16, #tpu.memory_space<vmem>>, vector<1x8x4xbf16>
    %39 = vector.shape_cast %38 : vector<1x8x4xbf16> to vector<8x4xbf16>
    %40 = vector.extract_strided_slice %1 {offsets = [0, 21], sizes = [4, 896], strides = [1, 1]} : vector<4x1152xbf16> to vector<4x896xbf16>
    %cst_26 = arith.constant dense<0.000000e+00> : vector<8x896xf32>
    %41 = tpu.matmul %39, %40, %cst_26 {dimension_numbers = #tpu.dot_dimension_numbers<[1], [0], [0], [1], [0, 0, 1, 1], [], []>} : vector<8x4xbf16>, vector<4x896xbf16>, vector<8x896xf32> -> vector<8x896xf32>
    %42 = arith.addf %37, %41 : vector<8x896xf32>
    %c8 = arith.constant 8 : index
    %c0_27 = arith.constant 0 : index
    %c0_28 = arith.constant 0 : index
    %43 = vector.load %arg2[%c8, %c0_27, %c0_28] : memref<27x8x4xbf16, #tpu.memory_space<vmem>>, vector<1x8x4xbf16>
    %44 = vector.shape_cast %43 : vector<1x8x4xbf16> to vector<8x4xbf16>
    %45 = vector.extract_strided_slice %1 {offsets = [0, 22], sizes = [4, 896], strides = [1, 1]} : vector<4x1152xbf16> to vector<4x896xbf16>
    %cst_29 = arith.constant dense<0.000000e+00> : vector<8x896xf32>
    %46 = tpu.matmul %44, %45, %cst_29 {dimension_numbers = #tpu.dot_dimension_numbers<[1], [0], [0], [1], [0, 0, 1, 1], [], []>} : vector<8x4xbf16>, vector<4x896xbf16>, vector<8x896xf32> -> vector<8x896xf32>
    %47 = arith.addf %42, %46 : vector<8x896xf32>
    %c9 = arith.constant 9 : index
    %c0_30 = arith.constant 0 : index
    %c0_31 = arith.constant 0 : index
    %48 = vector.load %arg2[%c9, %c0_30, %c0_31] : memref<27x8x4xbf16, #tpu.memory_space<vmem>>, vector<1x8x4xbf16>
    %49 = vector.shape_cast %48 : vector<1x8x4xbf16> to vector<8x4xbf16>
    %50 = vector.extract_strided_slice %1 {offsets = [0, 100], sizes = [4, 896], strides = [1, 1]} : vector<4x1152xbf16> to vector<4x896xbf16>
    %cst_32 = arith.constant dense<0.000000e+00> : vector<8x896xf32>
    %51 = tpu.matmul %49, %50, %cst_32 {dimension_numbers = #tpu.dot_dimension_numbers<[1], [0], [0], [1], [0, 0, 1, 1], [], []>} : vector<8x4xbf16>, vector<4x896xbf16>, vector<8x896xf32> -> vector<8x896xf32>
    %52 = arith.addf %47, %51 : vector<8x896xf32>
    %c10 = arith.constant 10 : index
    %c0_33 = arith.constant 0 : index
    %c0_34 = arith.constant 0 : index
    %53 = vector.load %arg2[%c10, %c0_33, %c0_34] : memref<27x8x4xbf16, #tpu.memory_space<vmem>>, vector<1x8x4xbf16>
    %54 = vector.shape_cast %53 : vector<1x8x4xbf16> to vector<8x4xbf16>
    %55 = vector.extract_strided_slice %1 {offsets = [0, 101], sizes = [4, 896], strides = [1, 1]} : vector<4x1152xbf16> to vector<4x896xbf16>
    %cst_35 = arith.constant dense<0.000000e+00> : vector<8x896xf32>
    %56 = tpu.matmul %54, %55, %cst_35 {dimension_numbers = #tpu.dot_dimension_numbers<[1], [0], [0], [1], [0, 0, 1, 1], [], []>} : vector<8x4xbf16>, vector<4x896xbf16>, vector<8x896xf32> -> vector<8x896xf32>
    %57 = arith.addf %52, %56 : vector<8x896xf32>
    %c11 = arith.constant 11 : index
    %c0_36 = arith.constant 0 : index
    %c0_37 = arith.constant 0 : index
    %58 = vector.load %arg2[%c11, %c0_36, %c0_37] : memref<27x8x4xbf16, #tpu.memory_space<vmem>>, vector<1x8x4xbf16>
    %59 = vector.shape_cast %58 : vector<1x8x4xbf16> to vector<8x4xbf16>
    %60 = vector.extract_strided_slice %1 {offsets = [0, 102], sizes = [4, 896], strides = [1, 1]} : vector<4x1152xbf16> to vector<4x896xbf16>
    %cst_38 = arith.constant dense<0.000000e+00> : vector<8x896xf32>
    %61 = tpu.matmul %59, %60, %cst_38 {dimension_numbers = #tpu.dot_dimension_numbers<[1], [0], [0], [1], [0, 0, 1, 1], [], []>} : vector<8x4xbf16>, vector<4x896xbf16>, vector<8x896xf32> -> vector<8x896xf32>
    %62 = arith.addf %57, %61 : vector<8x896xf32>
    %c12 = arith.constant 12 : index
    %c0_39 = arith.constant 0 : index
    %c0_40 = arith.constant 0 : index
    %63 = vector.load %arg2[%c12, %c0_39, %c0_40] : memref<27x8x4xbf16, #tpu.memory_space<vmem>>, vector<1x8x4xbf16>
    %64 = vector.shape_cast %63 : vector<1x8x4xbf16> to vector<8x4xbf16>
    %65 = vector.extract_strided_slice %1 {offsets = [0, 110], sizes = [4, 896], strides = [1, 1]} : vector<4x1152xbf16> to vector<4x896xbf16>
    %cst_41 = arith.constant dense<0.000000e+00> : vector<8x896xf32>
    %66 = tpu.matmul %64, %65, %cst_41 {dimension_numbers = #tpu.dot_dimension_numbers<[1], [0], [0], [1], [0, 0, 1, 1], [], []>} : vector<8x4xbf16>, vector<4x896xbf16>, vector<8x896xf32> -> vector<8x896xf32>
    %67 = arith.addf %62, %66 : vector<8x896xf32>
    %c13 = arith.constant 13 : index
    %c0_42 = arith.constant 0 : index
    %c0_43 = arith.constant 0 : index
    %68 = vector.load %arg2[%c13, %c0_42, %c0_43] : memref<27x8x4xbf16, #tpu.memory_space<vmem>>, vector<1x8x4xbf16>
    %69 = vector.shape_cast %68 : vector<1x8x4xbf16> to vector<8x4xbf16>
    %70 = vector.extract_strided_slice %1 {offsets = [0, 111], sizes = [4, 896], strides = [1, 1]} : vector<4x1152xbf16> to vector<4x896xbf16>
    %cst_44 = arith.constant dense<0.000000e+00> : vector<8x896xf32>
    %71 = tpu.matmul %69, %70, %cst_44 {dimension_numbers = #tpu.dot_dimension_numbers<[1], [0], [0], [1], [0, 0, 1, 1], [], []>} : vector<8x4xbf16>, vector<4x896xbf16>, vector<8x896xf32> -> vector<8x896xf32>
    %72 = arith.addf %67, %71 : vector<8x896xf32>
    %c14 = arith.constant 14 : index
    %c0_45 = arith.constant 0 : index
    %c0_46 = arith.constant 0 : index
    %73 = vector.load %arg2[%c14, %c0_45, %c0_46] : memref<27x8x4xbf16, #tpu.memory_space<vmem>>, vector<1x8x4xbf16>
    %74 = vector.shape_cast %73 : vector<1x8x4xbf16> to vector<8x4xbf16>
    %75 = vector.extract_strided_slice %1 {offsets = [0, 112], sizes = [4, 896], strides = [1, 1]} : vector<4x1152xbf16> to vector<4x896xbf16>
    %cst_47 = arith.constant dense<0.000000e+00> : vector<8x896xf32>
    %76 = tpu.matmul %74, %75, %cst_47 {dimension_numbers = #tpu.dot_dimension_numbers<[1], [0], [0], [1], [0, 0, 1, 1], [], []>} : vector<8x4xbf16>, vector<4x896xbf16>, vector<8x896xf32> -> vector<8x896xf32>
    %77 = arith.addf %72, %76 : vector<8x896xf32>
    %c15 = arith.constant 15 : index
    %c0_48 = arith.constant 0 : index
    %c0_49 = arith.constant 0 : index
    %78 = vector.load %arg2[%c15, %c0_48, %c0_49] : memref<27x8x4xbf16, #tpu.memory_space<vmem>>, vector<1x8x4xbf16>
    %79 = vector.shape_cast %78 : vector<1x8x4xbf16> to vector<8x4xbf16>
    %80 = vector.extract_strided_slice %1 {offsets = [0, 120], sizes = [4, 896], strides = [1, 1]} : vector<4x1152xbf16> to vector<4x896xbf16>
    %cst_50 = arith.constant dense<0.000000e+00> : vector<8x896xf32>
    %81 = tpu.matmul %79, %80, %cst_50 {dimension_numbers = #tpu.dot_dimension_numbers<[1], [0], [0], [1], [0, 0, 1, 1], [], []>} : vector<8x4xbf16>, vector<4x896xbf16>, vector<8x896xf32> -> vector<8x896xf32>
    %82 = arith.addf %77, %81 : vector<8x896xf32>
    %c16 = arith.constant 16 : index
    %c0_51 = arith.constant 0 : index
    %c0_52 = arith.constant 0 : index
    %83 = vector.load %arg2[%c16, %c0_51, %c0_52] : memref<27x8x4xbf16, #tpu.memory_space<vmem>>, vector<1x8x4xbf16>
    %84 = vector.shape_cast %83 : vector<1x8x4xbf16> to vector<8x4xbf16>
    %85 = vector.extract_strided_slice %1 {offsets = [0, 121], sizes = [4, 896], strides = [1, 1]} : vector<4x1152xbf16> to vector<4x896xbf16>
    %cst_53 = arith.constant dense<0.000000e+00> : vector<8x896xf32>
    %86 = tpu.matmul %84, %85, %cst_53 {dimension_numbers = #tpu.dot_dimension_numbers<[1], [0], [0], [1], [0, 0, 1, 1], [], []>} : vector<8x4xbf16>, vector<4x896xbf16>, vector<8x896xf32> -> vector<8x896xf32>
    %87 = arith.addf %82, %86 : vector<8x896xf32>
    %c17 = arith.constant 17 : index
    %c0_54 = arith.constant 0 : index
    %c0_55 = arith.constant 0 : index
    %88 = vector.load %arg2[%c17, %c0_54, %c0_55] : memref<27x8x4xbf16, #tpu.memory_space<vmem>>, vector<1x8x4xbf16>
    %89 = vector.shape_cast %88 : vector<1x8x4xbf16> to vector<8x4xbf16>
    %90 = vector.extract_strided_slice %1 {offsets = [0, 122], sizes = [4, 896], strides = [1, 1]} : vector<4x1152xbf16> to vector<4x896xbf16>
    %cst_56 = arith.constant dense<0.000000e+00> : vector<8x896xf32>
    %91 = tpu.matmul %89, %90, %cst_56 {dimension_numbers = #tpu.dot_dimension_numbers<[1], [0], [0], [1], [0, 0, 1, 1], [], []>} : vector<8x4xbf16>, vector<4x896xbf16>, vector<8x896xf32> -> vector<8x896xf32>
    %92 = arith.addf %87, %91 : vector<8x896xf32>
    %c18 = arith.constant 18 : index
    %c0_57 = arith.constant 0 : index
    %c0_58 = arith.constant 0 : index
    %93 = vector.load %arg2[%c18, %c0_57, %c0_58] : memref<27x8x4xbf16, #tpu.memory_space<vmem>>, vector<1x8x4xbf16>
    %94 = vector.shape_cast %93 : vector<1x8x4xbf16> to vector<8x4xbf16>
    %95 = vector.extract_strided_slice %1 {offsets = [0, 200], sizes = [4, 896], strides = [1, 1]} : vector<4x1152xbf16> to vector<4x896xbf16>
    %cst_59 = arith.constant dense<0.000000e+00> : vector<8x896xf32>
    %96 = tpu.matmul %94, %95, %cst_59 {dimension_numbers = #tpu.dot_dimension_numbers<[1], [0], [0], [1], [0, 0, 1, 1], [], []>} : vector<8x4xbf16>, vector<4x896xbf16>, vector<8x896xf32> -> vector<8x896xf32>
    %97 = arith.addf %92, %96 : vector<8x896xf32>
    %c19 = arith.constant 19 : index
    %c0_60 = arith.constant 0 : index
    %c0_61 = arith.constant 0 : index
    %98 = vector.load %arg2[%c19, %c0_60, %c0_61] : memref<27x8x4xbf16, #tpu.memory_space<vmem>>, vector<1x8x4xbf16>
    %99 = vector.shape_cast %98 : vector<1x8x4xbf16> to vector<8x4xbf16>
    %100 = vector.extract_strided_slice %1 {offsets = [0, 201], sizes = [4, 896], strides = [1, 1]} : vector<4x1152xbf16> to vector<4x896xbf16>
    %cst_62 = arith.constant dense<0.000000e+00> : vector<8x896xf32>
    %101 = tpu.matmul %99, %100, %cst_62 {dimension_numbers = #tpu.dot_dimension_numbers<[1], [0], [0], [1], [0, 0, 1, 1], [], []>} : vector<8x4xbf16>, vector<4x896xbf16>, vector<8x896xf32> -> vector<8x896xf32>
    %102 = arith.addf %97, %101 : vector<8x896xf32>
    %c20 = arith.constant 20 : index
    %c0_63 = arith.constant 0 : index
    %c0_64 = arith.constant 0 : index
    %103 = vector.load %arg2[%c20, %c0_63, %c0_64] : memref<27x8x4xbf16, #tpu.memory_space<vmem>>, vector<1x8x4xbf16>
    %104 = vector.shape_cast %103 : vector<1x8x4xbf16> to vector<8x4xbf16>
    %105 = vector.extract_strided_slice %1 {offsets = [0, 202], sizes = [4, 896], strides = [1, 1]} : vector<4x1152xbf16> to vector<4x896xbf16>
    %cst_65 = arith.constant dense<0.000000e+00> : vector<8x896xf32>
    %106 = tpu.matmul %104, %105, %cst_65 {dimension_numbers = #tpu.dot_dimension_numbers<[1], [0], [0], [1], [0, 0, 1, 1], [], []>} : vector<8x4xbf16>, vector<4x896xbf16>, vector<8x896xf32> -> vector<8x896xf32>
    %107 = arith.addf %102, %106 : vector<8x896xf32>
    %c21 = arith.constant 21 : index
    %c0_66 = arith.constant 0 : index
    %c0_67 = arith.constant 0 : index
    %108 = vector.load %arg2[%c21, %c0_66, %c0_67] : memref<27x8x4xbf16, #tpu.memory_space<vmem>>, vector<1x8x4xbf16>
    %109 = vector.shape_cast %108 : vector<1x8x4xbf16> to vector<8x4xbf16>
    %110 = vector.extract_strided_slice %1 {offsets = [0, 210], sizes = [4, 896], strides = [1, 1]} : vector<4x1152xbf16> to vector<4x896xbf16>
    %cst_68 = arith.constant dense<0.000000e+00> : vector<8x896xf32>
    %111 = tpu.matmul %109, %110, %cst_68 {dimension_numbers = #tpu.dot_dimension_numbers<[1], [0], [0], [1], [0, 0, 1, 1], [], []>} : vector<8x4xbf16>, vector<4x896xbf16>, vector<8x896xf32> -> vector<8x896xf32>
    %112 = arith.addf %107, %111 : vector<8x896xf32>
    %c22 = arith.constant 22 : index
    %c0_69 = arith.constant 0 : index
    %c0_70 = arith.constant 0 : index
    %113 = vector.load %arg2[%c22, %c0_69, %c0_70] : memref<27x8x4xbf16, #tpu.memory_space<vmem>>, vector<1x8x4xbf16>
    %114 = vector.shape_cast %113 : vector<1x8x4xbf16> to vector<8x4xbf16>
    %115 = vector.extract_strided_slice %1 {offsets = [0, 211], sizes = [4, 896], strides = [1, 1]} : vector<4x1152xbf16> to vector<4x896xbf16>
    %cst_71 = arith.constant dense<0.000000e+00> : vector<8x896xf32>
    %116 = tpu.matmul %114, %115, %cst_71 {dimension_numbers = #tpu.dot_dimension_numbers<[1], [0], [0], [1], [0, 0, 1, 1], [], []>} : vector<8x4xbf16>, vector<4x896xbf16>, vector<8x896xf32> -> vector<8x896xf32>
    %117 = arith.addf %112, %116 : vector<8x896xf32>
    %c23 = arith.constant 23 : index
    %c0_72 = arith.constant 0 : index
    %c0_73 = arith.constant 0 : index
    %118 = vector.load %arg2[%c23, %c0_72, %c0_73] : memref<27x8x4xbf16, #tpu.memory_space<vmem>>, vector<1x8x4xbf16>
    %119 = vector.shape_cast %118 : vector<1x8x4xbf16> to vector<8x4xbf16>
    %120 = vector.extract_strided_slice %1 {offsets = [0, 212], sizes = [4, 896], strides = [1, 1]} : vector<4x1152xbf16> to vector<4x896xbf16>
    %cst_74 = arith.constant dense<0.000000e+00> : vector<8x896xf32>
    %121 = tpu.matmul %119, %120, %cst_74 {dimension_numbers = #tpu.dot_dimension_numbers<[1], [0], [0], [1], [0, 0, 1, 1], [], []>} : vector<8x4xbf16>, vector<4x896xbf16>, vector<8x896xf32> -> vector<8x896xf32>
    %122 = arith.addf %117, %121 : vector<8x896xf32>
    %c24 = arith.constant 24 : index
    %c0_75 = arith.constant 0 : index
    %c0_76 = arith.constant 0 : index
    %123 = vector.load %arg2[%c24, %c0_75, %c0_76] : memref<27x8x4xbf16, #tpu.memory_space<vmem>>, vector<1x8x4xbf16>
    %124 = vector.shape_cast %123 : vector<1x8x4xbf16> to vector<8x4xbf16>
    %125 = vector.extract_strided_slice %1 {offsets = [0, 220], sizes = [4, 896], strides = [1, 1]} : vector<4x1152xbf16> to vector<4x896xbf16>
    %cst_77 = arith.constant dense<0.000000e+00> : vector<8x896xf32>
    %126 = tpu.matmul %124, %125, %cst_77 {dimension_numbers = #tpu.dot_dimension_numbers<[1], [0], [0], [1], [0, 0, 1, 1], [], []>} : vector<8x4xbf16>, vector<4x896xbf16>, vector<8x896xf32> -> vector<8x896xf32>
    %127 = arith.addf %122, %126 : vector<8x896xf32>
    %c25 = arith.constant 25 : index
    %c0_78 = arith.constant 0 : index
    %c0_79 = arith.constant 0 : index
    %128 = vector.load %arg2[%c25, %c0_78, %c0_79] : memref<27x8x4xbf16, #tpu.memory_space<vmem>>, vector<1x8x4xbf16>
    %129 = vector.shape_cast %128 : vector<1x8x4xbf16> to vector<8x4xbf16>
    %130 = vector.extract_strided_slice %1 {offsets = [0, 221], sizes = [4, 896], strides = [1, 1]} : vector<4x1152xbf16> to vector<4x896xbf16>
    %cst_80 = arith.constant dense<0.000000e+00> : vector<8x896xf32>
    %131 = tpu.matmul %129, %130, %cst_80 {dimension_numbers = #tpu.dot_dimension_numbers<[1], [0], [0], [1], [0, 0, 1, 1], [], []>} : vector<8x4xbf16>, vector<4x896xbf16>, vector<8x896xf32> -> vector<8x896xf32>
    %132 = arith.addf %127, %131 : vector<8x896xf32>
    %c26 = arith.constant 26 : index
    %c0_81 = arith.constant 0 : index
    %c0_82 = arith.constant 0 : index
    %133 = vector.load %arg2[%c26, %c0_81, %c0_82] : memref<27x8x4xbf16, #tpu.memory_space<vmem>>, vector<1x8x4xbf16>
    %134 = vector.shape_cast %133 : vector<1x8x4xbf16> to vector<8x4xbf16>
    %135 = vector.extract_strided_slice %1 {offsets = [0, 222], sizes = [4, 896], strides = [1, 1]} : vector<4x1152xbf16> to vector<4x896xbf16>
    %cst_83 = arith.constant dense<0.000000e+00> : vector<8x896xf32>
    %136 = tpu.matmul %134, %135, %cst_83 {dimension_numbers = #tpu.dot_dimension_numbers<[1], [0], [0], [1], [0, 0, 1, 1], [], []>} : vector<8x4xbf16>, vector<4x896xbf16>, vector<8x896xf32> -> vector<8x896xf32>
    %137 = arith.addf %132, %136 : vector<8x896xf32>
    %c0_84 = arith.constant 0 : index
    %c0_85 = arith.constant 0 : index
    %138 = vector.load %arg3[%c0_84, %c0_85] : memref<8x1xf32, #tpu.memory_space<vmem>>, vector<8x1xf32>
    %139 = vector.broadcast %138 : vector<8x1xf32> to vector<8x896xf32>
    %140 = arith.addf %137, %139 : vector<8x896xf32>
    %cst_86 = arith.constant 0.000000e+00 : f32
    %141 = vector.broadcast %cst_86 : f32 to vector<8x896xf32>
    %142 = arith.maximumf %140, %141 : vector<8x896xf32>
    %c0_87 = arith.constant 0 : index
    %c0_88 = arith.constant 0 : index
    %c0_89 = arith.constant 0 : index
    %143 = vector.load %arg4[%c0_87, %c0_88, %c0_89] : memref<1x8x896xf32, #tpu.memory_space<vmem>>, vector<1x8x896xf32>
    %144 = vector.shape_cast %143 : vector<1x8x896xf32> to vector<8x896xf32>
    %145 = vector.shape_cast %142 : vector<8x896xf32> to vector<1x8x896xf32>
    tpu.vector_store %arg4[%c0_87, %c0_88, %c0_89], %145 {strides = array<i32>} : memref<1x8x896xf32, #tpu.memory_space<vmem>>, vector<1x8x896xf32>,
    return
  }
  func.func @transform_0(%arg0: i32) -> (i32, i32, i32) {
    %c0_i32 = arith.constant 0 : i32
    %c0_i32_0 = arith.constant 0 : i32
    %c0_i32_1 = arith.constant 0 : i32
    return %arg0, %c0_i32, %c0_i32_0 : i32, i32, i32
  }
  func.func @transform_1(%arg0: i32) -> (i32, i32, i32) {
    %c0_i32 = arith.constant 0 : i32
    %c0_i32_0 = arith.constant 0 : i32
    %c0_i32_1 = arith.constant 0 : i32
    %c0_i32_2 = arith.constant 0 : i32
    return %c0_i32, %c0_i32_0, %c0_i32_1 : i32, i32, i32
  }
  func.func @transform_2(%arg0: i32) -> (i32, i32) {
    %c0_i32 = arith.constant 0 : i32
    %c0_i32_0 = arith.constant 0 : i32
    %c0_i32_1 = arith.constant 0 : i32
    return %c0_i32, %c0_i32_0 : i32, i32
  }
  func.func @transform_3(%arg0: i32) -> (i32, i32, i32) {
    %c0_i32 = arith.constant 0 : i32
    %c0_i32_0 = arith.constant 0 : i32
    %c0_i32_1 = arith.constant 0 : i32
    return %arg0, %c0_i32, %c0_i32_0 : i32, i32, i32
  }
}

</mosaic_0001>

<llo_original>
// kernel: forward.2
$region0: #{forward.2}
  #allocation0 [shape = 'u32[]', space=smem, size = 0x4, offset = 0x4, fixed_abs, tag = 'smem constant byte address 0x4 - core index']
  #allocation1 [shape = 'u32[72,128]{1,0:T(1,128)}', space=vmem, size = 0x9000, scoped, tag = 'internal scratch']
  %s0 = inlined_call_operand.vmem [shape: bf16[2,12,1152], index: 0, kind: input, shape index: {}]
  %s1 = inlined_call_operand.vmem [shape: bf16[27,8,12], index: 1, kind: input, shape index: {}]
  %s2 = inlined_call_operand.vmem [shape: f32[8,1], index: 2, kind: input, shape index: {}]
  %s3 = inlined_call_operand.vmem [shape: bf16[2,8,896], index: 3, kind: output, shape index: {}]
  %s4 = sld [smem:[#allocation0]]
  $region45: #{forward.2} parent=0
    _
  %s6 = ssub.s32 1, %s4
  %s7 = scalar_select 0, %s6, %s4
  loop: start=0, step=1, limit=4
  $region2: #{forward.2} parent=0 // loop_pre_header
    _
  $region3: #{forward.2} parent=0 // loop_header
    %s9 = sphi 0, %s13
    %p10 = scmp.ge.s32.totalorder %s9, 4
    %s19 = sphi 0, %s21
    %s22 = sphi 0, %s19
    %s23 = sphi 0, %s22
    %s39 = sphi 0, %s23
    %s43 = sphi 0, %s43
    %s45 = sphi 0, %s43
    %s46 = sphi 0, %s45
    %s60 = sphi 0, %s46
    %s64 = sphi 0, %s64
    %s66 = sphi 0, %s64
    %s67 = sphi 0, %s66
    %s81 = sphi 0, %s67
    %s87 = sphi 0, %s89
    %s90 = sphi 0, %s87
    %s91 = sphi 0, %s90
    %s107 = sphi 0, %s91
  $region4: #{forward.2} parent=0 // loop_header_branch
    %12 = sbr.rel (%p10) target = $region8
  $region5: #{forward.2} parent=0 // loop_body
    %s14 = ssub.s32 %s9, 1
    %s15 = ssub.s32 %s9, 2
    %s16 = sadd.s32 %s9, 1
    %s17 = ssub.s32 %s9, %s16
    %p18 = scmp.eq.s32.totalorder %s17, 0
    %s20 = sadd.s32 %s19, 1
    %s21 = scalar_select %p18, %s19, %s20
    %p24 = pneg %p18
    %p25 = scmp.eq.s32.totalorder %s9, 1
    %p26 = por %p24, %p25
    %p27 = scmp.ne.s32.totalorder %s19, %s22
    %p28 = scmp.eq.s32.totalorder %s9, 0
    %p29 = por %p27, %p28
    %p30 = scmp.ne.s32.totalorder %s19, %s22
    %p31 = scmp.eq.s32.totalorder %s14, 1
    %p32 = por %p30, %p31
    %p33 = scmp.ne.s32.totalorder %s22, %s23
    %p34 = scmp.eq.s32.totalorder %s14, 0
    %p35 = por %p33, %p34
    %p36 = scmp.ne.s32.totalorder %s22, %s23
    %p37 = scmp.eq.s32.totalorder %s15, 1
    %p38 = por %p36, %p37
    %p40 = scmp.ne.s32.totalorder %s23, %s39
    %p41 = scmp.eq.s32.totalorder %s15, 0
    %p42 = por %p40, %p41
    %s44 = sadd.s32 %s43, 1
    %p47 = scmp.eq.s32.totalorder %s9, 1
    %p48 = scmp.ne.s32.totalorder %s43, %s45
    %p49 = scmp.eq.s32.totalorder %s9, 0
    %p50 = por %p48, %p49
    %p51 = scmp.ne.s32.totalorder %s43, %s45
    %p52 = scmp.eq.s32.totalorder %s14, 1
    %p53 = por %p51, %p52
    %p54 = scmp.ne.s32.totalorder %s45, %s46
    %p55 = scmp.eq.s32.totalorder %s14, 0
    %p56 = por %p54, %p55
    %p57 = scmp.ne.s32.totalorder %s45, %s46
    %p58 = scmp.eq.s32.totalorder %s15, 1
    %p59 = por %p57, %p58
    %p61 = scmp.ne.s32.totalorder %s46, %s60
    %p62 = scmp.eq.s32.totalorder %s15, 0
    %p63 = por %p61, %p62
    %s65 = sadd.s32 %s64, 1
    %p68 = scmp.eq.s32.totalorder %s9, 1
    %p69 = scmp.ne.s32.totalorder %s64, %s66
    %p70 = scmp.eq.s32.totalorder %s9, 0
    %p71 = por %p69, %p70
    %p72 = scmp.ne.s32.totalorder %s64, %s66
    %p73 = scmp.eq.s32.totalorder %s14, 1
    %p74 = por %p72, %p73
    %p75 = scmp.ne.s32.totalorder %s66, %s67
    %p76 = scmp.eq.s32.totalorder %s14, 0
    %p77 = por %p75, %p76
    %p78 = scmp.ne.s32.totalorder %s66, %s67
    %p79 = scmp.eq.s32.totalorder %s15, 1
    %p80 = por %p78, %p79
    %p82 = scmp.ne.s32.totalorder %s67, %s81
    %p83 = scmp.eq.s32.totalorder %s15, 0
    %p84 = por %p82, %p83
    %s85 = ssub.s32 %s9, %s16
    %p86 = scmp.eq.s32.totalorder %s85, 0
    %s88 = sadd.s32 %s87, 1
    %s89 = scalar_select %p86, %s87, %s88
    %p92 = pneg %p86
    %p93 = scmp.eq.s32.totalorder %s9, 1
    %p94 = por %p92, %p93
    %p95 = scmp.ne.s32.totalorder %s87, %s90
    %p96 = scmp.eq.s32.totalorder %s9, 0
    %p97 = por %p95, %p96
    %p98 = scmp.ne.s32.totalorder %s87, %s90
    %p99 = scmp.eq.s32.totalorder %s14, 1
    %p100 = por %p98, %p99
    %p101 = scmp.ne.s32.totalorder %s90, %s91
    %p102 = scmp.eq.s32.totalorder %s14, 0
    %p103 = por %p101, %p102
    %p104 = scmp.ne.s32.totalorder %s90, %s91
    %p105 = scmp.eq.s32.totalorder %s15, 1
    %p106 = por %p104, %p105
    %p108 = scmp.ne.s32.totalorder %s91, %s107
    %p109 = scmp.eq.s32.totalorder %s15, 0
    %p110 = por %p108, %p109
    %p111 = scmp.le.s32.totalorder 1, %s9
    %p112 = scmp.lt.s32.totalorder %s9, 3
    %p113 = pnand %p111, %p112
    %p114 = pneg %p113
    // Predicated region
    $region9: #{forward.2} parent=5 // pred_check
      _
    $region10: #{forward.2} parent=5 // pred_check_branch
      %116 = sbr.rel (%p113) target = $region12
    $region11: #{forward.2} parent=5 // pred_region
      %s117 = ssub.s32 %s9, 1
      // Predicated region
      $region13: #{forward.2} parent=11 // pred_check
        %p118 = pneg %p56
      $region14: #{forward.2} parent=11 // pred_check_branch
        %120 = sbr.rel (%p118) target = $region16
      $region15: #{forward.2} parent=11 // pred_region
        _
      $region16: #{forward.2} parent=11 // pred_fallthru
        _
      // Predicated region
      $region17: #{forward.2} parent=11 // pred_check
        %p121 = pneg %p77
      $region18: #{forward.2} parent=11 // pred_check_branch
        %123 = sbr.rel (%p121) target = $region20
      $region19: #{forward.2} parent=11 // pred_region
        _
      $region20: #{forward.2} parent=11 // pred_fallthru
        _
    $region12: #{forward.2} parent=5 // pred_fallthru
      _
    %p124 = scmp.lt.s32.totalorder %s9, 2
    // Predicated region
    $region21: #{forward.2} parent=5 // pred_check
      %p125 = pneg %p124
    $region22: #{forward.2} parent=5 // pred_check_branch
      %127 = sbr.rel (%p125) target = $region24
    $region23: #{forward.2} parent=5 // pred_region
      // Predicated region
      $region25: #{forward.2} parent=23 // pred_check
        %p128 = pneg %p29
      $region26: #{forward.2} parent=23 // pred_check_branch
        %130 = sbr.rel (%p128) target = $region28
      $region27: #{forward.2} parent=23 // pred_region
        %p131 = scmp.lt.s32.totalorder %s9, 1
        %s132 = scalar_select %p131, %s9, 1
        %s133 = smul.addr %s132, 18
        %s134 = smul.addr %s133, 4
        %s135 = scalar_lea.vmem %s0, %s134
      $region28: #{forward.2} parent=23 // pred_fallthru
        _
    $region24: #{forward.2} parent=5 // pred_fallthru
      _
    %p136 = scmp.le.s32.totalorder 1, %s9
    %p137 = scmp.lt.s32.totalorder %s9, 3
    %p138 = pnand %p136, %p137
    %p139 = pneg %p138
    // Predicated region
    $region29: #{forward.2} parent=5 // pred_check
      _
    $region30: #{forward.2} parent=5 // pred_check_branch
      %141 = sbr.rel (%p138) target = $region32
    $region31: #{forward.2} parent=5 // pred_region
      %s142 = ssub.s32 %s9, 1
      %p143 = scmp.lt.s32.totalorder %s14, 1
      %s144 = scalar_select %p143, %s14, 1
      %s145 = smul.addr %s144, 18
      %s146 = smul.addr %s145, 4
      %s147 = scalar_lea.vmem %s0, %s146
      %p148 = pneg %p35
      %p149 = pneg %p32
      %p150 = pneg %p56
      %p151 = pneg %p53
      %p152 = pneg %p77
      %p153 = pneg %p74
      %p154 = pneg %p103
      %p155 = pneg %p100
      %p156 = scmp.lt.s32.totalorder %s14, 1
      %s157 = scalar_select %p156, %s14, 1
      %s158 = smul.addr %s157, 7
      %s159 = smul.addr %s158, 4
      %s160 = scalar_lea.vmem %s3, %s159
      %p161 = scmp.lt.s32.totalorder %s14, 1
      %s162 = scalar_select %p161, %s14, 1
      %s163 = smul.addr %s162, 18
      %s164 = smul.addr %s163, 4
      %s165 = scalar_lea.vmem %s0, %s164
      %p166 = scmp.lt.s32.totalorder %s14, 1
      %s167 = scalar_select %p166, %s14, 1
      %s168 = smul.addr %s167, 7
      %s169 = smul.addr %s168, 4
      %s170 = scalar_lea.vmem %s3, %s169
      %v172 = vld [vmem:[%s165] sm:$0xff]
      %v173 = vld [vmem:[%s165 + $0x8] sm:$0xff]
      %v174 = vld [vmem:[%s165 + $0x10] sm:$0xff]
      %v175 = vld [vmem:[%s165 + $0x18] sm:$0xff]
      %v176 = vld [vmem:[%s165 + $0x20] sm:$0xf]
      %v177 = vld [vmem:[%s165 + $0x24] sm:$0x33]
      %v178 = vld [vmem:[%s165 + $0x2c] sm:$0x33]
      %v179 = vld [vmem:[%s165 + $0x34] sm:$0x33]
      %v180 = vld [vmem:[%s165 + $0x3c] sm:$0x33]
      %v181 = vld [vmem:[%s165 + $0x44] sm:$0x3]
      %v182 = vld [vmem:[%s1] sm:$0xf]
      %s183 = scalar_lea.vmem %s1, 4
      %v184 = vld [vmem:[%s183] sm:$0xf]
      %v193 = vunpack.c.l.b16 %v172
      %v194 = vunpack.c.h.b16 %v172
      %v195 = vunpack.c.l.b16 %v173
      %v196 = vunpack.c.h.b16 %v173
      %v197 = vunpack.c.l.b16 %v174
      %v198 = vunpack.c.h.b16 %v174
      %v199 = vunpack.c.l.b16 %v175
      %v200 = vunpack.c.h.b16 %v175
      %v201 = vunpack.c.l.b16 %v177
      %v202 = vunpack.c.h.b16 %v177
      %v203 = vunpack.c.l.b16 %v178
      %v204 = vunpack.c.h.b16 %v178
      %v205 = vunpack.c.l.b16 %v179
      %v206 = vunpack.c.h.b16 %v179
      %v207 = vunpack.c.l.b16 %v180
      %v208 = vunpack.c.h.b16 %v180
      %v209 = vpack.c.b16 %v201, %v193
      %v210 = vpack.c.b16 %v202, %v194
      %v211 = vpack.c.b16 %v203, %v195
      %v212 = vpack.c.b16 %v204, %v196
      %v213 = vpack.c.b16 %v205, %v197
      %v214 = vpack.c.b16 %v206, %v198
      %v215 = vpack.c.b16 %v207, %v199
      %v216 = vpack.c.b16 %v208, %v200
      %217 = vrot.lane.b32.xlu0 %v209, 127
      %v218 = vpop.permute.xlu0 %217
      %219 = vrot.lane.b32.xlu0 %v210, 127
      %v220 = vpop.permute.xlu0 %219
      %221 = vrot.lane.b32.xlu0 %v211, 127
      %v222 = vpop.permute.xlu0 %221
      %223 = vrot.lane.b32.xlu0 %v212, 127
      %v224 = vpop.permute.xlu0 %223
      %225 = vrot.lane.b32.xlu0 %v213, 127
      %v226 = vpop.permute.xlu0 %225
      %227 = vrot.lane.b32.xlu0 %v214, 127
      %v228 = vpop.permute.xlu0 %227
      %229 = vrot.lane.b32.xlu0 %v215, 127
      %v230 = vpop.permute.xlu0 %229
      %231 = vrot.lane.b32.xlu0 %v216, 127
      %v232 = vpop.permute.xlu0 %231
      %vm233 = vcmask 1039360
      %v234 = vsel %vm233, %v218, %v220
      %v235 = vsel %vm233, %v220, %v222
      %v236 = vsel %vm233, %v222, %v224
      %v237 = vsel %vm233, %v224, %v226
      %v238 = vsel %vm233, %v226, %v228
      %v239 = vsel %vm233, %v228, %v230
      %v240 = vsel %vm233, %v230, %v232
      %vm241 = vcmask 97280
      %v243 = vsel %vm241, %v184, 0
      %vm245 = vcmask 1045504
      %v247 = vsel %vm245, %v234, 0
      %v250 = vsel %vm245, %v235, 0
      %v253 = vsel %vm245, %v236, 0
      %v256 = vsel %vm245, %v237, 0
      %v259 = vsel %vm245, %v238, 0
      %v262 = vsel %vm245, %v239, 0
      %v265 = vsel %vm245, %v240, 0
      %267 = vmatpush.bf16.msra.mxu0 0
      %268 = vmatpush.bf16.msra.mxu0 0
      %269 = vmatpush.bf16.msra.mxu0 0
      %270 = vmatpush.bf16.msra.mxu0 0
      %271 = vmatpush.bf16.msra.mxu0 0
      %272 = vmatpush.bf16.msra.mxu0 0
      %273 = vmatpush.bf16.msra.mxu0 0
      %274 = vmatpush.bf16.msra.mxu0 %v247
      %275 = vmatmul.bf16.gmra.mxu0 %v243
      %v276 = vpop.f32.mrf.mxu0
      %v277 = vadd.f32 0.0, %v276
      %v278 = vpop.f32.mrf.mxu0
      %279 = vdwg.mxu0
      %280 = vmatpush.bf16.msra.mxu0 0
      %281 = vmatpush.bf16.msra.mxu0 0
      %282 = vmatpush.bf16.msra.mxu0 0
      %283 = vmatpush.bf16.msra.mxu0 0
      %284 = vmatpush.bf16.msra.mxu0 0
      %285 = vmatpush.bf16.msra.mxu0 0
      %286 = vmatpush.bf16.msra.mxu0 0
      %287 = vmatpush.bf16.msra.mxu0 %v250
      %288 = vmatmul.bf16.gmra.mxu0 %v243
      %v289 = vpop.f32.mrf.mxu0
      %v290 = vadd.f32 0.0, %v289
      %v291 = vpop.f32.mrf.mxu0
      %292 = vdwg.mxu0
      %293 = vmatpush.bf16.msra.mxu0 0
      %294 = vmatpush.bf16.msra.mxu0 0
      %295 = vmatpush.bf16.msra.mxu0 0
      %296 = vmatpush.bf16.msra.mxu0 0
      %297 = vmatpush.bf16.msra.mxu0 0
      %298 = vmatpush.bf16.msra.mxu0 0
      %299 = vmatpush.bf16.msra.mxu0 0
      %300 = vmatpush.bf16.msra.mxu0 %v253
      %301 = vmatmul.bf16.gmra.mxu0 %v243
      %v302 = vpop.f32.mrf.mxu0
      %v303 = vadd.f32 0.0, %v302
      %v304 = vpop.f32.mrf.mxu0
      %305 = vdwg.mxu0
      %306 = vmatpush.bf16.msra.mxu0 0
      %307 = vmatpush.bf16.msra.mxu0 0
      %308 = vmatpush.bf16.msra.mxu0 0
      %309 = vmatpush.bf16.msra.mxu0 0
      %310 = vmatpush.bf16.msra.mxu0 0
      %311 = vmatpush.bf16.msra.mxu0 0
      %312 = vmatpush.bf16.msra.mxu0 0
      %313 = vmatpush.bf16.msra.mxu0 %v256
      %314 = vmatmul.bf16.gmra.mxu0 %v243
      %v315 = vpop.f32.mrf.mxu0
      %v316 = vadd.f32 0.0, %v315
      %v317 = vpop.f32.mrf.mxu0
      %318 = vdwg.mxu0
      %319 = vmatpush.bf16.msra.mxu0 0
      %320 = vmatpush.bf16.msra.mxu0 0
      %321 = vmatpush.bf16.msra.mxu0 0
      %322 = vmatpush.bf16.msra.mxu0 0
      %323 = vmatpush.bf16.msra.mxu0 0
      %324 = vmatpush.bf16.msra.mxu0 0
      %325 = vmatpush.bf16.msra.mxu0 0
      %326 = vmatpush.bf16.msra.mxu0 %v259
      %327 = vmatmul.bf16.gmra.mxu0 %v243
      %v328 = vpop.f32.mrf.mxu0
      %v329 = vadd.f32 0.0, %v328
      %v330 = vpop.f32.mrf.mxu0
      %331 = vdwg.mxu0
      %332 = vmatpush.bf16.msra.mxu0 0
      %333 = vmatpush.bf16.msra.mxu0 0
      %334 = vmatpush.bf16.msra.mxu0 0
      %335 = vmatpush.bf16.msra.mxu0 0
      %336 = vmatpush.bf16.msra.mxu0 0
      %337 = vmatpush.bf16.msra.mxu0 0
      %338 = vmatpush.bf16.msra.mxu0 0
      %339 = vmatpush.bf16.msra.mxu0 %v262
      %340 = vmatmul.bf16.gmra.mxu0 %v243
      %v341 = vpop.f32.mrf.mxu0
      %v342 = vadd.f32 0.0, %v341
      %v343 = vpop.f32.mrf.mxu0
      %344 = vdwg.mxu0
      %345 = vmatpush.bf16.msra.mxu0 0
      %346 = vmatpush.bf16.msra.mxu0 0
      %347 = vmatpush.bf16.msra.mxu0 0
      %348 = vmatpush.bf16.msra.mxu0 0
      %349 = vmatpush.bf16.msra.mxu0 0
      %350 = vmatpush.bf16.msra.mxu0 0
      %351 = vmatpush.bf16.msra.mxu0 0
      %352 = vmatpush.bf16.msra.mxu0 %v265
      %353 = vmatmul.bf16.gmra.mxu0 %v243
      %v354 = vpop.f32.mrf.mxu0
      %v355 = vadd.f32 0.0, %v354
      %v356 = vpop.f32.mrf.mxu0
      %357 = vdwg.mxu0
      %v359 = vsel %vm241, %v182, 0
      %v362 = vsel %vm245, %v209, 0
      %v365 = vsel %vm245, %v210, 0
      %v368 = vsel %vm245, %v211, 0
      %v371 = vsel %vm245, %v212, 0
      %v374 = vsel %vm245, %v213, 0
      %v377 = vsel %vm245, %v214, 0
      %v380 = vsel %vm245, %v215, 0
      %382 = vmatpush.bf16.msra.mxu0 0
      %383 = vmatpush.bf16.msra.mxu0 0
      %384 = vmatpush.bf16.msra.mxu0 0
      %385 = vmatpush.bf16.msra.mxu0 0
      %386 = vmatpush.bf16.msra.mxu0 0
      %387 = vmatpush.bf16.msra.mxu0 0
      %388 = vmatpush.bf16.msra.mxu0 0
      %389 = vmatpush.bf16.msra.mxu0 %v362
      %390 = vmatmul.bf16.gmra.mxu0 %v359
      %v391 = vpop.f32.mrf.mxu0
      %v392 = vadd.f32 %v277, %v391
      %v393 = vpop.f32.mrf.mxu0
      %394 = vdwg.mxu0
      %395 = vmatpush.bf16.msra.mxu0 0
      %396 = vmatpush.bf16.msra.mxu0 0
      %397 = vmatpush.bf16.msra.mxu0 0
      %398 = vmatpush.bf16.msra.mxu0 0
      %399 = vmatpush.bf16.msra.mxu0 0
      %400 = vmatpush.bf16.msra.mxu0 0
      %401 = vmatpush.bf16.msra.mxu0 0
      %402 = vmatpush.bf16.msra.mxu0 %v365
      %403 = vmatmul.bf16.gmra.mxu0 %v359
      %v404 = vpop.f32.mrf.mxu0
      %v405 = vadd.f32 %v290, %v404
      %v406 = vpop.f32.mrf.mxu0
      %407 = vdwg.mxu0
      %408 = vmatpush.bf16.msra.mxu0 0
      %409 = vmatpush.bf16.msra.mxu0 0
      %410 = vmatpush.bf16.msra.mxu0 0
      %411 = vmatpush.bf16.msra.mxu0 0
      %412 = vmatpush.bf16.msra.mxu0 0
      %413 = vmatpush.bf16.msra.mxu0 0
      %414 = vmatpush.bf16.msra.mxu0 0
      %415 = vmatpush.bf16.msra.mxu0 %v368
      %416 = vmatmul.bf16.gmra.mxu0 %v359
      %v417 = vpop.f32.mrf.mxu0
      %v418 = vadd.f32 %v303, %v417
      %v419 = vpop.f32.mrf.mxu0
      %420 = vdwg.mxu0
      %421 = vmatpush.bf16.msra.mxu0 0
      %422 = vmatpush.bf16.msra.mxu0 0
      %423 = vmatpush.bf16.msra.mxu0 0
      %424 = vmatpush.bf16.msra.mxu0 0
      %425 = vmatpush.bf16.msra.mxu0 0
      %426 = vmatpush.bf16.msra.mxu0 0
      %427 = vmatpush.bf16.msra.mxu0 0
      %428 = vmatpush.bf16.msra.mxu0 %v371
      %429 = vmatmul.bf16.gmra.mxu0 %v359
      %v430 = vpop.f32.mrf.mxu0
      %v431 = vadd.f32 %v316, %v430
      %v432 = vpop.f32.mrf.mxu0
      %433 = vdwg.mxu0
      %434 = vmatpush.bf16.msra.mxu0 0
      %435 = vmatpush.bf16.msra.mxu0 0
      %436 = vmatpush.bf16.msra.mxu0 0
      %437 = vmatpush.bf16.msra.mxu0 0
      %438 = vmatpush.bf16.msra.mxu0 0
      %439 = vmatpush.bf16.msra.mxu0 0
      %440 = vmatpush.bf16.msra.mxu0 0
      %441 = vmatpush.bf16.msra.mxu0 %v374
      %442 = vmatmul.bf16.gmra.mxu0 %v359
      %v443 = vpop.f32.mrf.mxu0
      %v444 = vadd.f32 %v329, %v443
      %v445 = vpop.f32.mrf.mxu0
      %446 = vdwg.mxu0
      %447 = vmatpush.bf16.msra.mxu0 0
      %448 = vmatpush.bf16.msra.mxu0 0
      %449 = vmatpush.bf16.msra.mxu0 0
      %450 = vmatpush.bf16.msra.mxu0 0
      %451 = vmatpush.bf16.msra.mxu0 0
      %452 = vmatpush.bf16.msra.mxu0 0
      %453 = vmatpush.bf16.msra.mxu0 0
      %454 = vmatpush.bf16.msra.mxu0 %v377
      %455 = vmatmul.bf16.gmra.mxu0 %v359
      %v456 = vpop.f32.mrf.mxu0
      %v457 = vadd.f32 %v342, %v456
      %v458 = vpop.f32.mrf.mxu0
      %459 = vdwg.mxu0
      %460 = vmatpush.bf16.msra.mxu0 0
      %461 = vmatpush.bf16.msra.mxu0 0
      %462 = vmatpush.bf16.msra.mxu0 0
      %463 = vmatpush.bf16.msra.mxu0 0
      %464 = vmatpush.bf16.msra.mxu0 0
      %465 = vmatpush.bf16.msra.mxu0 0
      %466 = vmatpush.bf16.msra.mxu0 0
      %467 = vmatpush.bf16.msra.mxu0 %v380
      %468 = vmatmul.bf16.gmra.mxu0 %v359
      %v469 = vpop.f32.mrf.mxu0
      %v470 = vadd.f32 %v355, %v469
      %v471 = vpop.f32.mrf.mxu0
      %472 = vdwg.mxu0
      %s473 = scalar_lea.vmem %s1, 8
      %v474 = vld [vmem:[%s473] sm:$0xf]
      %475 = vrot.lane.b32.xlu0 %v209, 126
      %v476 = vpop.permute.xlu0 %475
      %477 = vrot.lane.b32.xlu0 %v210, 126
      %v478 = vpop.permute.xlu0 %477
      %479 = vrot.lane.b32.xlu0 %v211, 126
      %v480 = vpop.permute.xlu0 %479
      %481 = vrot.lane.b32.xlu0 %v212, 126
      %v482 = vpop.permute.xlu0 %481
      %483 = vrot.lane.b32.xlu0 %v213, 126
      %v484 = vpop.permute.xlu0 %483
      %485 = vrot.lane.b32.xlu0 %v214, 126
      %v486 = vpop.permute.xlu0 %485
      %487 = vrot.lane.b32.xlu0 %v215, 126
      %v488 = vpop.permute.xlu0 %487
      %489 = vrot.lane.b32.xlu0 %v216, 126
      %v490 = vpop.permute.xlu0 %489
      %vm491 = vcmask 1031168
      %v492 = vsel %vm491, %v476, %v478
      %v493 = vsel %vm491, %v478, %v480
      %v494 = vsel %vm491, %v480, %v482
      %v495 = vsel %vm491, %v482, %v484
      %v496 = vsel %vm491, %v484, %v486
      %v497 = vsel %vm491, %v486, %v488
      %v498 = vsel %vm491, %v488, %v490
      %v500 = vsel %vm241, %v474, 0
      %v503 = vsel %vm245, %v492, 0
      %v506 = vsel %vm245, %v493, 0
      %v509 = vsel %vm245, %v494, 0
      %v512 = vsel %vm245, %v495, 0
      %v515 = vsel %vm245, %v496, 0
      %v518 = vsel %vm245, %v497, 0
      %v521 = vsel %vm245, %v498, 0
      %523 = vmatpush.bf16.msra.mxu0 0
      %524 = vmatpush.bf16.msra.mxu0 0
      %525 = vmatpush.bf16.msra.mxu0 0
      %526 = vmatpush.bf16.msra.mxu0 0
      %527 = vmatpush.bf16.msra.mxu0 0
      %528 = vmatpush.bf16.msra.mxu0 0
      %529 = vmatpush.bf16.msra.mxu0 0
      %530 = vmatpush.bf16.msra.mxu0 %v503
      %531 = vmatmul.bf16.gmra.mxu0 %v500
      %v532 = vpop.f32.mrf.mxu0
      %v533 = vadd.f32 0.0, %v532
      %v534 = vpop.f32.mrf.mxu0
      %535 = vdwg.mxu0
      %536 = vmatpush.bf16.msra.mxu0 0
      %537 = vmatpush.bf16.msra.mxu0 0
      %538 = vmatpush.bf16.msra.mxu0 0
      %539 = vmatpush.bf16.msra.mxu0 0
      %540 = vmatpush.bf16.msra.mxu0 0
      %541 = vmatpush.bf16.msra.mxu0 0
      %542 = vmatpush.bf16.msra.mxu0 0
      %543 = vmatpush.bf16.msra.mxu0 %v506
      %544 = vmatmul.bf16.gmra.mxu0 %v500
      %v545 = vpop.f32.mrf.mxu0
      %v546 = vadd.f32 0.0, %v545
      %v547 = vpop.f32.mrf.mxu0
      %548 = vdwg.mxu0
      %549 = vmatpush.bf16.msra.mxu0 0
      %550 = vmatpush.bf16.msra.mxu0 0
      %551 = vmatpush.bf16.msra.mxu0 0
      %552 = vmatpush.bf16.msra.mxu0 0
      %553 = vmatpush.bf16.msra.mxu0 0
      %554 = vmatpush.bf16.msra.mxu0 0
      %555 = vmatpush.bf16.msra.mxu0 0
      %556 = vmatpush.bf16.msra.mxu0 %v509
      %557 = vmatmul.bf16.gmra.mxu0 %v500
      %v558 = vpop.f32.mrf.mxu0
      %v559 = vadd.f32 0.0, %v558
      %v560 = vpop.f32.mrf.mxu0
      %561 = vdwg.mxu0
      %562 = vmatpush.bf16.msra.mxu0 0
      %563 = vmatpush.bf16.msra.mxu0 0
      %564 = vmatpush.bf16.msra.mxu0 0
      %565 = vmatpush.bf16.msra.mxu0 0
      %566 = vmatpush.bf16.msra.mxu0 0
      %567 = vmatpush.bf16.msra.mxu0 0
      %568 = vmatpush.bf16.msra.mxu0 0
      %569 = vmatpush.bf16.msra.mxu0 %v512
      %570 = vmatmul.bf16.gmra.mxu0 %v500
      %v571 = vpop.f32.mrf.mxu0
      %v572 = vadd.f32 0.0, %v571
      %v573 = vpop.f32.mrf.mxu0
      %574 = vdwg.mxu0
      %575 = vmatpush.bf16.msra.mxu0 0
      %576 = vmatpush.bf16.msra.mxu0 0
      %577 = vmatpush.bf16.msra.mxu0 0
      %578 = vmatpush.bf16.msra.mxu0 0
      %579 = vmatpush.bf16.msra.mxu0 0
      %580 = vmatpush.bf16.msra.mxu0 0
      %581 = vmatpush.bf16.msra.mxu0 0
      %582 = vmatpush.bf16.msra.mxu0 %v515
      %583 = vmatmul.bf16.gmra.mxu0 %v500
      %v584 = vpop.f32.mrf.mxu0
      %v585 = vadd.f32 0.0, %v584
      %v586 = vpop.f32.mrf.mxu0
      %587 = vdwg.mxu0
      %588 = vmatpush.bf16.msra.mxu0 0
      %589 = vmatpush.bf16.msra.mxu0 0
      %590 = vmatpush.bf16.msra.mxu0 0
      %591 = vmatpush.bf16.msra.mxu0 0
      %592 = vmatpush.bf16.msra.mxu0 0
      %593 = vmatpush.bf16.msra.mxu0 0
      %594 = vmatpush.bf16.msra.mxu0 0
      %595 = vmatpush.bf16.msra.mxu0 %v518
      %596 = vmatmul.bf16.gmra.mxu0 %v500
      %v597 = vpop.f32.mrf.mxu0
      %v598 = vadd.f32 0.0, %v597
      %v599 = vpop.f32.mrf.mxu0
      %600 = vdwg.mxu0
      %601 = vmatpush.bf16.msra.mxu0 0
      %602 = vmatpush.bf16.msra.mxu0 0
      %603 = vmatpush.bf16.msra.mxu0 0
      %604 = vmatpush.bf16.msra.mxu0 0
      %605 = vmatpush.bf16.msra.mxu0 0
      %606 = vmatpush.bf16.msra.mxu0 0
      %607 = vmatpush.bf16.msra.mxu0 0
      %608 = vmatpush.bf16.msra.mxu0 %v521
      %609 = vmatmul.bf16.gmra.mxu0 %v500
      %v610 = vpop.f32.mrf.mxu0
      %v611 = vadd.f32 0.0, %v610
      %v612 = vpop.f32.mrf.mxu0
      %613 = vdwg.mxu0
      %v614 = vadd.f32 %v392, %v533
      %v615 = vadd.f32 %v405, %v546
      %v616 = vadd.f32 %v418, %v559
      %v617 = vadd.f32 %v431, %v572
      %v618 = vadd.f32 %v444, %v585
      %v619 = vadd.f32 %v457, %v598
      %v620 = vadd.f32 %v470, %v611
      %s621 = scalar_lea.vmem %s1, 12
      %v622 = vld [vmem:[%s621] sm:$0xf]
      %623 = vrot.lane.b32.xlu0 %v209, 118
      %v624 = vpop.permute.xlu0 %623
      %625 = vrot.lane.b32.xlu0 %v210, 118
      %v626 = vpop.permute.xlu0 %625
      %627 = vrot.lane.b32.xlu0 %v211, 118
      %v628 = vpop.permute.xlu0 %627
      %629 = vrot.lane.b32.xlu0 %v212, 118
      %v630 = vpop.permute.xlu0 %629
      %631 = vrot.lane.b32.xlu0 %v213, 118
      %v632 = vpop.permute.xlu0 %631
      %633 = vrot.lane.b32.xlu0 %v214, 118
      %v634 = vpop.permute.xlu0 %633
      %635 = vrot.lane.b32.xlu0 %v215, 118
      %v636 = vpop.permute.xlu0 %635
      %637 = vrot.lane.b32.xlu0 %v216, 118
      %v638 = vpop.permute.xlu0 %637
      %vm639 = vcmask 965632
      %v640 = vsel %vm639, %v624, %v626
      %v641 = vsel %vm639, %v626, %v628
      %v642 = vsel %vm639, %v628, %v630
      %v643 = vsel %vm639, %v630, %v632
      %v644 = vsel %vm639, %v632, %v634
      %v645 = vsel %vm639, %v634, %v636
      %v646 = vsel %vm639, %v636, %v638
      %v648 = vsel %vm241, %v622, 0
      %v651 = vsel %vm245, %v640, 0
      %v654 = vsel %vm245, %v641, 0
      %v657 = vsel %vm245, %v642, 0
      %v660 = vsel %vm245, %v643, 0
      %v663 = vsel %vm245, %v644, 0
      %v666 = vsel %vm245, %v645, 0
      %v669 = vsel %vm245, %v646, 0
      %671 = vmatpush.bf16.msra.mxu0 0
      %672 = vmatpush.bf16.msra.mxu0 0
      %673 = vmatpush.bf16.msra.mxu0 0
      %674 = vmatpush.bf16.msra.mxu0 0
      %675 = vmatpush.bf16.msra.mxu0 0
      %676 = vmatpush.bf16.msra.mxu0 0
      %677 = vmatpush.bf16.msra.mxu0 0
      %678 = vmatpush.bf16.msra.mxu0 %v651
      %679 = vmatmul.bf16.gmra.mxu0 %v648
      %v680 = vpop.f32.mrf.mxu0
      %v681 = vadd.f32 0.0, %v680
      %v682 = vpop.f32.mrf.mxu0
      %683 = vdwg.mxu0
      %684 = vmatpush.bf16.msra.mxu0 0
      %685 = vmatpush.bf16.msra.mxu0 0
      %686 = vmatpush.bf16.msra.mxu0 0
      %687 = vmatpush.bf16.msra.mxu0 0
      %688 = vmatpush.bf16.msra.mxu0 0
      %689 = vmatpush.bf16.msra.mxu0 0
      %690 = vmatpush.bf16.msra.mxu0 0
      %691 = vmatpush.bf16.msra.mxu0 %v654
      %692 = vmatmul.bf16.gmra.mxu0 %v648
      %v693 = vpop.f32.mrf.mxu0
      %v694 = vadd.f32 0.0, %v693
      %v695 = vpop.f32.mrf.mxu0
      %696 = vdwg.mxu0
      %697 = vmatpush.bf16.msra.mxu0 0
      %698 = vmatpush.bf16.msra.mxu0 0
      %699 = vmatpush.bf16.msra.mxu0 0
      %700 = vmatpush.bf16.msra.mxu0 0
      %701 = vmatpush.bf16.msra.mxu0 0
      %702 = vmatpush.bf16.msra.mxu0 0
      %703 = vmatpush.bf16.msra.mxu0 0
      %704 = vmatpush.bf16.msra.mxu0 %v657
      %705 = vmatmul.bf16.gmra.mxu0 %v648
      %v706 = vpop.f32.mrf.mxu0
      %v707 = vadd.f32 0.0, %v706
      %v708 = vpop.f32.mrf.mxu0
      %709 = vdwg.mxu0
      %710 = vmatpush.bf16.msra.mxu0 0
      %711 = vmatpush.bf16.msra.mxu0 0
      %712 = vmatpush.bf16.msra.mxu0 0
      %713 = vmatpush.bf16.msra.mxu0 0
      %714 = vmatpush.bf16.msra.mxu0 0
      %715 = vmatpush.bf16.msra.mxu0 0
      %716 = vmatpush.bf16.msra.mxu0 0
      %717 = vmatpush.bf16.msra.mxu0 %v660
      %718 = vmatmul.bf16.gmra.mxu0 %v648
      %v719 = vpop.f32.mrf.mxu0
      %v720 = vadd.f32 0.0, %v719
      %v721 = vpop.f32.mrf.mxu0
      %722 = vdwg.mxu0
      %723 = vmatpush.bf16.msra.mxu0 0
      %724 = vmatpush.bf16.msra.mxu0 0
      %725 = vmatpush.bf16.msra.mxu0 0
      %726 = vmatpush.bf16.msra.mxu0 0
      %727 = vmatpush.bf16.msra.mxu0 0
      %728 = vmatpush.bf16.msra.mxu0 0
      %729 = vmatpush.bf16.msra.mxu0 0
      %730 = vmatpush.bf16.msra.mxu0 %v663
      %731 = vmatmul.bf16.gmra.mxu0 %v648
      %v732 = vpop.f32.mrf.mxu0
      %v733 = vadd.f32 0.0, %v732
      %v734 = vpop.f32.mrf.mxu0
      %735 = vdwg.mxu0
      %736 = vmatpush.bf16.msra.mxu0 0
      %737 = vmatpush.bf16.msra.mxu0 0
      %738 = vmatpush.bf16.msra.mxu0 0
      %739 = vmatpush.bf16.msra.mxu0 0
      %740 = vmatpush.bf16.msra.mxu0 0
      %741 = vmatpush.bf16.msra.mxu0 0
      %742 = vmatpush.bf16.msra.mxu0 0
      %743 = vmatpush.bf16.msra.mxu0 %v666
      %744 = vmatmul.bf16.gmra.mxu0 %v648
      %v745 = vpop.f32.mrf.mxu0
      %v746 = vadd.f32 0.0, %v745
      %v747 = vpop.f32.mrf.mxu0
      %748 = vdwg.mxu0
      %749 = vmatpush.bf16.msra.mxu0 0
      %750 = vmatpush.bf16.msra.mxu0 0
      %751 = vmatpush.bf16.msra.mxu0 0
      %752 = vmatpush.bf16.msra.mxu0 0
      %753 = vmatpush.bf16.msra.mxu0 0
      %754 = vmatpush.bf16.msra.mxu0 0
      %755 = vmatpush.bf16.msra.mxu0 0
      %756 = vmatpush.bf16.msra.mxu0 %v669
      %757 = vmatmul.bf16.gmra.mxu0 %v648
      %v758 = vpop.f32.mrf.mxu0
      %v759 = vadd.f32 0.0, %v758
      %v760 = vpop.f32.mrf.mxu0
      %761 = vdwg.mxu0
      %v762 = vadd.f32 %v614, %v681
      %v763 = vadd.f32 %v615, %v694
      %v764 = vadd.f32 %v616, %v707
      %v765 = vadd.f32 %v617, %v720
      %v766 = vadd.f32 %v618, %v733
      %v767 = vadd.f32 %v619, %v746
      %v768 = vadd.f32 %v620, %v759
      %s769 = scalar_lea.vmem %s1, 16
      %v770 = vld [vmem:[%s769] sm:$0xf]
      %771 = vrot.lane.b32.xlu0 %v209, 117
      %v772 = vpop.permute.xlu0 %771
      %773 = vrot.lane.b32.xlu0 %v210, 117
      %v774 = vpop.permute.xlu0 %773
      %775 = vrot.lane.b32.xlu0 %v211, 117
      %v776 = vpop.permute.xlu0 %775
      %777 = vrot.lane.b32.xlu0 %v212, 117
      %v778 = vpop.permute.xlu0 %777
      %779 = vrot.lane.b32.xlu0 %v213, 117
      %v780 = vpop.permute.xlu0 %779
      %781 = vrot.lane.b32.xlu0 %v214, 117
      %v782 = vpop.permute.xlu0 %781
      %783 = vrot.lane.b32.xlu0 %v215, 117
      %v784 = vpop.permute.xlu0 %783
      %785 = vrot.lane.b32.xlu0 %v216, 117
      %v786 = vpop.permute.xlu0 %785
      %vm787 = vcmask 957440
      %v788 = vsel %vm787, %v772, %v774
      %v789 = vsel %vm787, %v774, %v776
      %v790 = vsel %vm787, %v776, %v778
      %v791 = vsel %vm787, %v778, %v780
      %v792 = vsel %vm787, %v780, %v782
      %v793 = vsel %vm787, %v782, %v784
      %v794 = vsel %vm787, %v784, %v786
      %v796 = vsel %vm241, %v770, 0
      %v799 = vsel %vm245, %v788, 0
      %v802 = vsel %vm245, %v789, 0
      %v805 = vsel %vm245, %v790, 0
      %v808 = vsel %vm245, %v791, 0
      %v811 = vsel %vm245, %v792, 0
      %v814 = vsel %vm245, %v793, 0
      %v817 = vsel %vm245, %v794, 0
      %819 = vmatpush.bf16.msra.mxu0 0
      %820 = vmatpush.bf16.msra.mxu0 0
      %821 = vmatpush.bf16.msra.mxu0 0
      %822 = vmatpush.bf16.msra.mxu0 0
      %823 = vmatpush.bf16.msra.mxu0 0
      %824 = vmatpush.bf16.msra.mxu0 0
      %825 = vmatpush.bf16.msra.mxu0 0
      %826 = vmatpush.bf16.msra.mxu0 %v799
      %827 = vmatmul.bf16.gmra.mxu0 %v796
      %v828 = vpop.f32.mrf.mxu0
      %v829 = vadd.f32 0.0, %v828
      %v830 = vpop.f32.mrf.mxu0
      %831 = vdwg.mxu0
      %832 = vmatpush.bf16.msra.mxu0 0
      %833 = vmatpush.bf16.msra.mxu0 0
      %834 = vmatpush.bf16.msra.mxu0 0
      %835 = vmatpush.bf16.msra.mxu0 0
      %836 = vmatpush.bf16.msra.mxu0 0
      %837 = vmatpush.bf16.msra.mxu0 0
      %838 = vmatpush.bf16.msra.mxu0 0
      %839 = vmatpush.bf16.msra.mxu0 %v802
      %840 = vmatmul.bf16.gmra.mxu0 %v796
      %v841 = vpop.f32.mrf.mxu0
      %v842 = vadd.f32 0.0, %v841
      %v843 = vpop.f32.mrf.mxu0
      %844 = vdwg.mxu0
      %845 = vmatpush.bf16.msra.mxu0 0
      %846 = vmatpush.bf16.msra.mxu0 0
      %847 = vmatpush.bf16.msra.mxu0 0
      %848 = vmatpush.bf16.msra.mxu0 0
      %849 = vmatpush.bf16.msra.mxu0 0
      %850 = vmatpush.bf16.msra.mxu0 0
      %851 = vmatpush.bf16.msra.mxu0 0
      %852 = vmatpush.bf16.msra.mxu0 %v805
      %853 = vmatmul.bf16.gmra.mxu0 %v796
      %v854 = vpop.f32.mrf.mxu0
      %v855 = vadd.f32 0.0, %v854
      %v856 = vpop.f32.mrf.mxu0
      %857 = vdwg.mxu0
      %858 = vmatpush.bf16.msra.mxu0 0
      %859 = vmatpush.bf16.msra.mxu0 0
      %860 = vmatpush.bf16.msra.mxu0 0
      %861 = vmatpush.bf16.msra.mxu0 0
      %862 = vmatpush.bf16.msra.mxu0 0
      %863 = vmatpush.bf16.msra.mxu0 0
      %864 = vmatpush.bf16.msra.mxu0 0
      %865 = vmatpush.bf16.msra.mxu0 %v808
      %866 = vmatmul.bf16.gmra.mxu0 %v796
      %v867 = vpop.f32.mrf.mxu0
      %v868 = vadd.f32 0.0, %v867
      %v869 = vpop.f32.mrf.mxu0
      %870 = vdwg.mxu0
      %871 = vmatpush.bf16.msra.mxu0 0
      %872 = vmatpush.bf16.msra.mxu0 0
      %873 = vmatpush.bf16.msra.mxu0 0
      %874 = vmatpush.bf16.msra.mxu0 0
      %875 = vmatpush.bf16.msra.mxu0 0
      %876 = vmatpush.bf16.msra.mxu0 0
      %877 = vmatpush.bf16.msra.mxu0 0
      %878 = vmatpush.bf16.msra.mxu0 %v811
      %879 = vmatmul.bf16.gmra.mxu0 %v796
      %v880 = vpop.f32.mrf.mxu0
      %v881 = vadd.f32 0.0, %v880
      %v882 = vpop.f32.mrf.mxu0
      %883 = vdwg.mxu0
      %884 = vmatpush.bf16.msra.mxu0 0
      %885 = vmatpush.bf16.msra.mxu0 0
      %886 = vmatpush.bf16.msra.mxu0 0
      %887 = vmatpush.bf16.msra.mxu0 0
      %888 = vmatpush.bf16.msra.mxu0 0
      %889 = vmatpush.bf16.msra.mxu0 0
      %890 = vmatpush.bf16.msra.mxu0 0
      %891 = vmatpush.bf16.msra.mxu0 %v814
      %892 = vmatmul.bf16.gmra.mxu0 %v796
      %v893 = vpop.f32.mrf.mxu0
      %v894 = vadd.f32 0.0, %v893
      %v895 = vpop.f32.mrf.mxu0
      %896 = vdwg.mxu0
      %897 = vmatpush.bf16.msra.mxu0 0
      %898 = vmatpush.bf16.msra.mxu0 0
      %899 = vmatpush.bf16.msra.mxu0 0
      %900 = vmatpush.bf16.msra.mxu0 0
      %901 = vmatpush.bf16.msra.mxu0 0
      %902 = vmatpush.bf16.msra.mxu0 0
      %903 = vmatpush.bf16.msra.mxu0 0
      %904 = vmatpush.bf16.msra.mxu0 %v817
      %905 = vmatmul.bf16.gmra.mxu0 %v796
      %v906 = vpop.f32.mrf.mxu0
      %v907 = vadd.f32 0.0, %v906
      %v908 = vpop.f32.mrf.mxu0
      %909 = vdwg.mxu0
      %v910 = vadd.f32 %v762, %v829
      %v911 = vadd.f32 %v763, %v842
      %v912 = vadd.f32 %v764, %v855
      %v913 = vadd.f32 %v765, %v868
      %v914 = vadd.f32 %v766, %v881
      %v915 = vadd.f32 %v767, %v894
      %v916 = vadd.f32 %v768, %v907
      %s917 = scalar_lea.vmem %s1, 20
      %v918 = vld [vmem:[%s917] sm:$0xf]
      %919 = vrot.lane.b32.xlu0 %v209, 116
      %v920 = vpop.permute.xlu0 %919
      %921 = vrot.lane.b32.xlu0 %v210, 116
      %v922 = vpop.permute.xlu0 %921
      %923 = vrot.lane.b32.xlu0 %v211, 116
      %v924 = vpop.permute.xlu0 %923
      %925 = vrot.lane.b32.xlu0 %v212, 116
      %v926 = vpop.permute.xlu0 %925
      %927 = vrot.lane.b32.xlu0 %v213, 116
      %v928 = vpop.permute.xlu0 %927
      %929 = vrot.lane.b32.xlu0 %v214, 116
      %v930 = vpop.permute.xlu0 %929
      %931 = vrot.lane.b32.xlu0 %v215, 116
      %v932 = vpop.permute.xlu0 %931
      %933 = vrot.lane.b32.xlu0 %v216, 116
      %v934 = vpop.permute.xlu0 %933
      %vm935 = vcmask 949248
      %v936 = vsel %vm935, %v920, %v922
      %v937 = vsel %vm935, %v922, %v924
      %v938 = vsel %vm935, %v924, %v926
      %v939 = vsel %vm935, %v926, %v928
      %v940 = vsel %vm935, %v928, %v930
      %v941 = vsel %vm935, %v930, %v932
      %v942 = vsel %vm935, %v932, %v934
      %v944 = vsel %vm241, %v918, 0
      %v947 = vsel %vm245, %v936, 0
      %v950 = vsel %vm245, %v937, 0
      %v953 = vsel %vm245, %v938, 0
      %v956 = vsel %vm245, %v939, 0
      %v959 = vsel %vm245, %v940, 0
      %v962 = vsel %vm245, %v941, 0
      %v965 = vsel %vm245, %v942, 0
      %967 = vmatpush.bf16.msra.mxu0 0
      %968 = vmatpush.bf16.msra.mxu0 0
      %969 = vmatpush.bf16.msra.mxu0 0
      %970 = vmatpush.bf16.msra.mxu0 0
      %971 = vmatpush.bf16.msra.mxu0 0
      %972 = vmatpush.bf16.msra.mxu0 0
      %973 = vmatpush.bf16.msra.mxu0 0
      %974 = vmatpush.bf16.msra.mxu0 %v947
      %975 = vmatmul.bf16.gmra.mxu0 %v944
      %v976 = vpop.f32.mrf.mxu0
      %v977 = vadd.f32 0.0, %v976
      %v978 = vpop.f32.mrf.mxu0
      %979 = vdwg.mxu0
      %980 = vmatpush.bf16.msra.mxu0 0
      %981 = vmatpush.bf16.msra.mxu0 0
      %982 = vmatpush.bf16.msra.mxu0 0
      %983 = vmatpush.bf16.msra.mxu0 0
      %984 = vmatpush.bf16.msra.mxu0 0
      %985 = vmatpush.bf16.msra.mxu0 0
      %986 = vmatpush.bf16.msra.mxu0 0
      %987 = vmatpush.bf16.msra.mxu0 %v950
      %988 = vmatmul.bf16.gmra.mxu0 %v944
      %v989 = vpop.f32.mrf.mxu0
      %v990 = vadd.f32 0.0, %v989
      %v991 = vpop.f32.mrf.mxu0
      %992 = vdwg.mxu0
      %993 = vmatpush.bf16.msra.mxu0 0
      %994 = vmatpush.bf16.msra.mxu0 0
      %995 = vmatpush.bf16.msra.mxu0 0
      %996 = vmatpush.bf16.msra.mxu0 0
      %997 = vmatpush.bf16.msra.mxu0 0
      %998 = vmatpush.bf16.msra.mxu0 0
      %999 = vmatpush.bf16.msra.mxu0 0
      %1000 = vmatpush.bf16.msra.mxu0 %v953
      %1001 = vmatmul.bf16.gmra.mxu0 %v944
      %v1002 = vpop.f32.mrf.mxu0
      %v1003 = vadd.f32 0.0, %v1002
      %v1004 = vpop.f32.mrf.mxu0
      %1005 = vdwg.mxu0
      %1006 = vmatpush.bf16.msra.mxu0 0
      %1007 = vmatpush.bf16.msra.mxu0 0
      %1008 = vmatpush.bf16.msra.mxu0 0
      %1009 = vmatpush.bf16.msra.mxu0 0
      %1010 = vmatpush.bf16.msra.mxu0 0
      %1011 = vmatpush.bf16.msra.mxu0 0
      %1012 = vmatpush.bf16.msra.mxu0 0
      %1013 = vmatpush.bf16.msra.mxu0 %v956
      %1014 = vmatmul.bf16.gmra.mxu0 %v944
      %v1015 = vpop.f32.mrf.mxu0
      %v1016 = vadd.f32 0.0, %v1015
      %v1017 = vpop.f32.mrf.mxu0
      %1018 = vdwg.mxu0
      %1019 = vmatpush.bf16.msra.mxu0 0
      %1020 = vmatpush.bf16.msra.mxu0 0
      %1021 = vmatpush.bf16.msra.mxu0 0
      %1022 = vmatpush.bf16.msra.mxu0 0
      %1023 = vmatpush.bf16.msra.mxu0 0
      %1024 = vmatpush.bf16.msra.mxu0 0
      %1025 = vmatpush.bf16.msra.mxu0 0
      %1026 = vmatpush.bf16.msra.mxu0 %v959
      %1027 = vmatmul.bf16.gmra.mxu0 %v944
      %v1028 = vpop.f32.mrf.mxu0
      %v1029 = vadd.f32 0.0, %v1028
      %v1030 = vpop.f32.mrf.mxu0
      %1031 = vdwg.mxu0
      %1032 = vmatpush.bf16.msra.mxu0 0
      %1033 = vmatpush.bf16.msra.mxu0 0
      %1034 = vmatpush.bf16.msra.mxu0 0
      %1035 = vmatpush.bf16.msra.mxu0 0
      %1036 = vmatpush.bf16.msra.mxu0 0
      %1037 = vmatpush.bf16.msra.mxu0 0
      %1038 = vmatpush.bf16.msra.mxu0 0
      %1039 = vmatpush.bf16.msra.mxu0 %v962
      %1040 = vmatmul.bf16.gmra.mxu0 %v944
      %v1041 = vpop.f32.mrf.mxu0
      %v1042 = vadd.f32 0.0, %v1041
      %v1043 = vpop.f32.mrf.mxu0
      %1044 = vdwg.mxu0
      %1045 = vmatpush.bf16.msra.mxu0 0
      %1046 = vmatpush.bf16.msra.mxu0 0
      %1047 = vmatpush.bf16.msra.mxu0 0
      %1048 = vmatpush.bf16.msra.mxu0 0
      %1049 = vmatpush.bf16.msra.mxu0 0
      %1050 = vmatpush.bf16.msra.mxu0 0
      %1051 = vmatpush.bf16.msra.mxu0 0
      %1052 = vmatpush.bf16.msra.mxu0 %v965
      %1053 = vmatmul.bf16.gmra.mxu0 %v944
      %v1054 = vpop.f32.mrf.mxu0
      %v1055 = vadd.f32 0.0, %v1054
      %v1056 = vpop.f32.mrf.mxu0
      %1057 = vdwg.mxu0
      %v1058 = vadd.f32 %v910, %v977
      %v1059 = vadd.f32 %v911, %v990
      %v1060 = vadd.f32 %v912, %v1003
      %v1061 = vadd.f32 %v913, %v1016
      %v1062 = vadd.f32 %v914, %v1029
      %v1063 = vadd.f32 %v915, %v1042
      %v1064 = vadd.f32 %v916, %v1055
      %s1065 = scalar_lea.vmem %s1, 24
      %v1066 = vld [vmem:[%s1065] sm:$0xf]
      %1067 = vrot.lane.b32.xlu0 %v209, 108
      %v1068 = vpop.permute.xlu0 %1067
      %1069 = vrot.lane.b32.xlu0 %v210, 108
      %v1070 = vpop.permute.xlu0 %1069
      %1071 = vrot.lane.b32.xlu0 %v211, 108
      %v1072 = vpop.permute.xlu0 %1071
      %1073 = vrot.lane.b32.xlu0 %v212, 108
      %v1074 = vpop.permute.xlu0 %1073
      %1075 = vrot.lane.b32.xlu0 %v213, 108
      %v1076 = vpop.permute.xlu0 %1075
      %1077 = vrot.lane.b32.xlu0 %v214, 108
      %v1078 = vpop.permute.xlu0 %1077
      %1079 = vrot.lane.b32.xlu0 %v215, 108
      %v1080 = vpop.permute.xlu0 %1079
      %1081 = vrot.lane.b32.xlu0 %v216, 108
      %v1082 = vpop.permute.xlu0 %1081
      %vm1083 = vcmask 883712
      %v1084 = vsel %vm1083, %v1068, %v1070
      %v1085 = vsel %vm1083, %v1070, %v1072
      %v1086 = vsel %vm1083, %v1072, %v1074
      %v1087 = vsel %vm1083, %v1074, %v1076
      %v1088 = vsel %vm1083, %v1076, %v1078
      %v1089 = vsel %vm1083, %v1078, %v1080
      %v1090 = vsel %vm1083, %v1080, %v1082
      %v1092 = vsel %vm241, %v1066, 0
      %v1095 = vsel %vm245, %v1084, 0
      %v1098 = vsel %vm245, %v1085, 0
      %v1101 = vsel %vm245, %v1086, 0
      %v1104 = vsel %vm245, %v1087, 0
      %v1107 = vsel %vm245, %v1088, 0
      %v1110 = vsel %vm245, %v1089, 0
      %v1113 = vsel %vm245, %v1090, 0
      %1115 = vmatpush.bf16.msra.mxu0 0
      %1116 = vmatpush.bf16.msra.mxu0 0
      %1117 = vmatpush.bf16.msra.mxu0 0
      %1118 = vmatpush.bf16.msra.mxu0 0
      %1119 = vmatpush.bf16.msra.mxu0 0
      %1120 = vmatpush.bf16.msra.mxu0 0
      %1121 = vmatpush.bf16.msra.mxu0 0
      %1122 = vmatpush.bf16.msra.mxu0 %v1095
      %1123 = vmatmul.bf16.gmra.mxu0 %v1092
      %v1124 = vpop.f32.mrf.mxu0
      %v1125 = vadd.f32 0.0, %v1124
      %v1126 = vpop.f32.mrf.mxu0
      %1127 = vdwg.mxu0
      %1128 = vmatpush.bf16.msra.mxu0 0
      %1129 = vmatpush.bf16.msra.mxu0 0
      %1130 = vmatpush.bf16.msra.mxu0 0
      %1131 = vmatpush.bf16.msra.mxu0 0
      %1132 = vmatpush.bf16.msra.mxu0 0
      %1133 = vmatpush.bf16.msra.mxu0 0
      %1134 = vmatpush.bf16.msra.mxu0 0
      %1135 = vmatpush.bf16.msra.mxu0 %v1098
      %1136 = vmatmul.bf16.gmra.mxu0 %v1092
      %v1137 = vpop.f32.mrf.mxu0
      %v1138 = vadd.f32 0.0, %v1137
      %v1139 = vpop.f32.mrf.mxu0
      %1140 = vdwg.mxu0
      %1141 = vmatpush.bf16.msra.mxu0 0
      %1142 = vmatpush.bf16.msra.mxu0 0
      %1143 = vmatpush.bf16.msra.mxu0 0
      %1144 = vmatpush.bf16.msra.mxu0 0
      %1145 = vmatpush.bf16.msra.mxu0 0
      %1146 = vmatpush.bf16.msra.mxu0 0
      %1147 = vmatpush.bf16.msra.mxu0 0
      %1148 = vmatpush.bf16.msra.mxu0 %v1101
      %1149 = vmatmul.bf16.gmra.mxu0 %v1092
      %v1150 = vpop.f32.mrf.mxu0
      %v1151 = vadd.f32 0.0, %v1150
      %v1152 = vpop.f32.mrf.mxu0
      %1153 = vdwg.mxu0
      %1154 = vmatpush.bf16.msra.mxu0 0
      %1155 = vmatpush.bf16.msra.mxu0 0
      %1156 = vmatpush.bf16.msra.mxu0 0
      %1157 = vmatpush.bf16.msra.mxu0 0
      %1158 = vmatpush.bf16.msra.mxu0 0
      %1159 = vmatpush.bf16.msra.mxu0 0
      %1160 = vmatpush.bf16.msra.mxu0 0
      %1161 = vmatpush.bf16.msra.mxu0 %v1104
      %1162 = vmatmul.bf16.gmra.mxu0 %v1092
      %v1163 = vpop.f32.mrf.mxu0
      %v1164 = vadd.f32 0.0, %v1163
      %v1165 = vpop.f32.mrf.mxu0
      %1166 = vdwg.mxu0
      %1167 = vmatpush.bf16.msra.mxu0 0
      %1168 = vmatpush.bf16.msra.mxu0 0
      %1169 = vmatpush.bf16.msra.mxu0 0
      %1170 = vmatpush.bf16.msra.mxu0 0
      %1171 = vmatpush.bf16.msra.mxu0 0
      %1172 = vmatpush.bf16.msra.mxu0 0
      %1173 = vmatpush.bf16.msra.mxu0 0
      %1174 = vmatpush.bf16.msra.mxu0 %v1107
      %1175 = vmatmul.bf16.gmra.mxu0 %v1092
      %v1176 = vpop.f32.mrf.mxu0
      %v1177 = vadd.f32 0.0, %v1176
      %v1178 = vpop.f32.mrf.mxu0
      %1179 = vdwg.mxu0
      %1180 = vmatpush.bf16.msra.mxu0 0
      %1181 = vmatpush.bf16.msra.mxu0 0
      %1182 = vmatpush.bf16.msra.mxu0 0
      %1183 = vmatpush.bf16.msra.mxu0 0
      %1184 = vmatpush.bf16.msra.mxu0 0
      %1185 = vmatpush.bf16.msra.mxu0 0
      %1186 = vmatpush.bf16.msra.mxu0 0
      %1187 = vmatpush.bf16.msra.mxu0 %v1110
      %1188 = vmatmul.bf16.gmra.mxu0 %v1092
      %v1189 = vpop.f32.mrf.mxu0
      %v1190 = vadd.f32 0.0, %v1189
      %v1191 = vpop.f32.mrf.mxu0
      %1192 = vdwg.mxu0
      %1193 = vmatpush.bf16.msra.mxu0 0
      %1194 = vmatpush.bf16.msra.mxu0 0
      %1195 = vmatpush.bf16.msra.mxu0 0
      %1196 = vmatpush.bf16.msra.mxu0 0
      %1197 = vmatpush.bf16.msra.mxu0 0
      %1198 = vmatpush.bf16.msra.mxu0 0
      %1199 = vmatpush.bf16.msra.mxu0 0
      %1200 = vmatpush.bf16.msra.mxu0 %v1113
      %1201 = vmatmul.bf16.gmra.mxu0 %v1092
      %v1202 = vpop.f32.mrf.mxu0
      %v1203 = vadd.f32 0.0, %v1202
      %v1204 = vpop.f32.mrf.mxu0
      %1205 = vdwg.mxu0
      %v1206 = vadd.f32 %v1058, %v1125
      %v1207 = vadd.f32 %v1059, %v1138
      %v1208 = vadd.f32 %v1060, %v1151
      %v1209 = vadd.f32 %v1061, %v1164
      %v1210 = vadd.f32 %v1062, %v1177
      %v1211 = vadd.f32 %v1063, %v1190
      %v1212 = vadd.f32 %v1064, %v1203
      %s1213 = scalar_lea.vmem %s1, 28
      %v1214 = vld [vmem:[%s1213] sm:$0xf]
      %1215 = vrot.lane.b32.xlu0 %v209, 107
      %v1216 = vpop.permute.xlu0 %1215
      %1217 = vrot.lane.b32.xlu0 %v210, 107
      %v1218 = vpop.permute.xlu0 %1217
      %1219 = vrot.lane.b32.xlu0 %v211, 107
      %v1220 = vpop.permute.xlu0 %1219
      %1221 = vrot.lane.b32.xlu0 %v212, 107
      %v1222 = vpop.permute.xlu0 %1221
      %1223 = vrot.lane.b32.xlu0 %v213, 107
      %v1224 = vpop.permute.xlu0 %1223
      %1225 = vrot.lane.b32.xlu0 %v214, 107
      %v1226 = vpop.permute.xlu0 %1225
      %1227 = vrot.lane.b32.xlu0 %v215, 107
      %v1228 = vpop.permute.xlu0 %1227
      %1229 = vrot.lane.b32.xlu0 %v216, 107
      %v1230 = vpop.permute.xlu0 %1229
      %vm1231 = vcmask 875520
      %v1232 = vsel %vm1231, %v1216, %v1218
      %v1233 = vsel %vm1231, %v1218, %v1220
      %v1234 = vsel %vm1231, %v1220, %v1222
      %v1235 = vsel %vm1231, %v1222, %v1224
      %v1236 = vsel %vm1231, %v1224, %v1226
      %v1237 = vsel %vm1231, %v1226, %v1228
      %v1238 = vsel %vm1231, %v1228, %v1230
      %v1240 = vsel %vm241, %v1214, 0
      %v1243 = vsel %vm245, %v1232, 0
      %v1246 = vsel %vm245, %v1233, 0
      %v1249 = vsel %vm245, %v1234, 0
      %v1252 = vsel %vm245, %v1235, 0
      %v1255 = vsel %vm245, %v1236, 0
      %v1258 = vsel %vm245, %v1237, 0
      %v1261 = vsel %vm245, %v1238, 0
      %1263 = vmatpush.bf16.msra.mxu0 0
      %1264 = vmatpush.bf16.msra.mxu0 0
      %1265 = vmatpush.bf16.msra.mxu0 0
      %1266 = vmatpush.bf16.msra.mxu0 0
      %1267 = vmatpush.bf16.msra.mxu0 0
      %1268 = vmatpush.bf16.msra.mxu0 0
      %1269 = vmatpush.bf16.msra.mxu0 0
      %1270 = vmatpush.bf16.msra.mxu0 %v1243
      %1271 = vmatmul.bf16.gmra.mxu0 %v1240
      %v1272 = vpop.f32.mrf.mxu0
      %v1273 = vadd.f32 0.0, %v1272
      %v1274 = vpop.f32.mrf.mxu0
      %1275 = vdwg.mxu0
      %1276 = vmatpush.bf16.msra.mxu0 0
      %1277 = vmatpush.bf16.msra.mxu0 0
      %1278 = vmatpush.bf16.msra.mxu0 0
      %1279 = vmatpush.bf16.msra.mxu0 0
      %1280 = vmatpush.bf16.msra.mxu0 0
      %1281 = vmatpush.bf16.msra.mxu0 0
      %1282 = vmatpush.bf16.msra.mxu0 0
      %1283 = vmatpush.bf16.msra.mxu0 %v1246
      %1284 = vmatmul.bf16.gmra.mxu0 %v1240
      %v1285 = vpop.f32.mrf.mxu0
      %v1286 = vadd.f32 0.0, %v1285
      %v1287 = vpop.f32.mrf.mxu0
      %1288 = vdwg.mxu0
      %1289 = vmatpush.bf16.msra.mxu0 0
      %1290 = vmatpush.bf16.msra.mxu0 0
      %1291 = vmatpush.bf16.msra.mxu0 0
      %1292 = vmatpush.bf16.msra.mxu0 0
      %1293 = vmatpush.bf16.msra.mxu0 0
      %1294 = vmatpush.bf16.msra.mxu0 0
      %1295 = vmatpush.bf16.msra.mxu0 0
      %1296 = vmatpush.bf16.msra.mxu0 %v1249
      %1297 = vmatmul.bf16.gmra.mxu0 %v1240
      %v1298 = vpop.f32.mrf.mxu0
      %v1299 = vadd.f32 0.0, %v1298
      %v1300 = vpop.f32.mrf.mxu0
      %1301 = vdwg.mxu0
      %1302 = vmatpush.bf16.msra.mxu0 0
      %1303 = vmatpush.bf16.msra.mxu0 0
      %1304 = vmatpush.bf16.msra.mxu0 0
      %1305 = vmatpush.bf16.msra.mxu0 0
      %1306 = vmatpush.bf16.msra.mxu0 0
      %1307 = vmatpush.bf16.msra.mxu0 0
      %1308 = vmatpush.bf16.msra.mxu0 0
      %1309 = vmatpush.bf16.msra.mxu0 %v1252
      %1310 = vmatmul.bf16.gmra.mxu0 %v1240
      %v1311 = vpop.f32.mrf.mxu0
      %v1312 = vadd.f32 0.0, %v1311
      %v1313 = vpop.f32.mrf.mxu0
      %1314 = vdwg.mxu0
      %1315 = vmatpush.bf16.msra.mxu0 0
      %1316 = vmatpush.bf16.msra.mxu0 0
      %1317 = vmatpush.bf16.msra.mxu0 0
      %1318 = vmatpush.bf16.msra.mxu0 0
      %1319 = vmatpush.bf16.msra.mxu0 0
      %1320 = vmatpush.bf16.msra.mxu0 0
      %1321 = vmatpush.bf16.msra.mxu0 0
      %1322 = vmatpush.bf16.msra.mxu0 %v1255
      %1323 = vmatmul.bf16.gmra.mxu0 %v1240
      %v1324 = vpop.f32.mrf.mxu0
      %v1325 = vadd.f32 0.0, %v1324
      %v1326 = vpop.f32.mrf.mxu0
      %1327 = vdwg.mxu0
      %1328 = vmatpush.bf16.msra.mxu0 0
      %1329 = vmatpush.bf16.msra.mxu0 0
      %1330 = vmatpush.bf16.msra.mxu0 0
      %1331 = vmatpush.bf16.msra.mxu0 0
      %1332 = vmatpush.bf16.msra.mxu0 0
      %1333 = vmatpush.bf16.msra.mxu0 0
      %1334 = vmatpush.bf16.msra.mxu0 0
      %1335 = vmatpush.bf16.msra.mxu0 %v1258
      %1336 = vmatmul.bf16.gmra.mxu0 %v1240
      %v1337 = vpop.f32.mrf.mxu0
      %v1338 = vadd.f32 0.0, %v1337
      %v1339 = vpop.f32.mrf.mxu0
      %1340 = vdwg.mxu0
      %1341 = vmatpush.bf16.msra.mxu0 0
      %1342 = vmatpush.bf16.msra.mxu0 0
      %1343 = vmatpush.bf16.msra.mxu0 0
      %1344 = vmatpush.bf16.msra.mxu0 0
      %1345 = vmatpush.bf16.msra.mxu0 0
      %1346 = vmatpush.bf16.msra.mxu0 0
      %1347 = vmatpush.bf16.msra.mxu0 0
      %1348 = vmatpush.bf16.msra.mxu0 %v1261
      %1349 = vmatmul.bf16.gmra.mxu0 %v1240
      %v1350 = vpop.f32.mrf.mxu0
      %v1351 = vadd.f32 0.0, %v1350
      %v1352 = vpop.f32.mrf.mxu0
      %1353 = vdwg.mxu0
      %v1354 = vadd.f32 %v1206, %v1273
      %v1355 = vadd.f32 %v1207, %v1286
      %v1356 = vadd.f32 %v1208, %v1299
      %v1357 = vadd.f32 %v1209, %v1312
      %v1358 = vadd.f32 %v1210, %v1325
      %v1359 = vadd.f32 %v1211, %v1338
      %v1360 = vadd.f32 %v1212, %v1351
      %s1361 = scalar_lea.vmem %s1, 32
      %v1362 = vld [vmem:[%s1361] sm:$0xf]
      %1363 = vrot.lane.b32.xlu0 %v209, 106
      %v1364 = vpop.permute.xlu0 %1363
      %1365 = vrot.lane.b32.xlu0 %v210, 106
      %v1366 = vpop.permute.xlu0 %1365
      %1367 = vrot.lane.b32.xlu0 %v211, 106
      %v1368 = vpop.permute.xlu0 %1367
      %1369 = vrot.lane.b32.xlu0 %v212, 106
      %v1370 = vpop.permute.xlu0 %1369
      %1371 = vrot.lane.b32.xlu0 %v213, 106
      %v1372 = vpop.permute.xlu0 %1371
      %1373 = vrot.lane.b32.xlu0 %v214, 106
      %v1374 = vpop.permute.xlu0 %1373
      %1375 = vrot.lane.b32.xlu0 %v215, 106
      %v1376 = vpop.permute.xlu0 %1375
      %1377 = vrot.lane.b32.xlu0 %v216, 106
      %v1378 = vpop.permute.xlu0 %1377
      %vm1379 = vcmask 867328
      %v1380 = vsel %vm1379, %v1364, %v1366
      %v1381 = vsel %vm1379, %v1366, %v1368
      %v1382 = vsel %vm1379, %v1368, %v1370
      %v1383 = vsel %vm1379, %v1370, %v1372
      %v1384 = vsel %vm1379, %v1372, %v1374
      %v1385 = vsel %vm1379, %v1374, %v1376
      %v1386 = vsel %vm1379, %v1376, %v1378
      %v1388 = vsel %vm241, %v1362, 0
      %v1391 = vsel %vm245, %v1380, 0
      %v1394 = vsel %vm245, %v1381, 0
      %v1397 = vsel %vm245, %v1382, 0
      %v1400 = vsel %vm245, %v1383, 0
      %v1403 = vsel %vm245, %v1384, 0
      %v1406 = vsel %vm245, %v1385, 0
      %v1409 = vsel %vm245, %v1386, 0
      %1411 = vmatpush.bf16.msra.mxu0 0
      %1412 = vmatpush.bf16.msra.mxu0 0
      %1413 = vmatpush.bf16.msra.mxu0 0
      %1414 = vmatpush.bf16.msra.mxu0 0
      %1415 = vmatpush.bf16.msra.mxu0 0
      %1416 = vmatpush.bf16.msra.mxu0 0
      %1417 = vmatpush.bf16.msra.mxu0 0
      %1418 = vmatpush.bf16.msra.mxu0 %v1391
      %1419 = vmatmul.bf16.gmra.mxu0 %v1388
      %v1420 = vpop.f32.mrf.mxu0
      %v1421 = vadd.f32 0.0, %v1420
      %v1422 = vpop.f32.mrf.mxu0
      %1423 = vdwg.mxu0
      %1424 = vmatpush.bf16.msra.mxu0 0
      %1425 = vmatpush.bf16.msra.mxu0 0
      %1426 = vmatpush.bf16.msra.mxu0 0
      %1427 = vmatpush.bf16.msra.mxu0 0
      %1428 = vmatpush.bf16.msra.mxu0 0
      %1429 = vmatpush.bf16.msra.mxu0 0
      %1430 = vmatpush.bf16.msra.mxu0 0
      %1431 = vmatpush.bf16.msra.mxu0 %v1394
      %1432 = vmatmul.bf16.gmra.mxu0 %v1388
      %v1433 = vpop.f32.mrf.mxu0
      %v1434 = vadd.f32 0.0, %v1433
      %v1435 = vpop.f32.mrf.mxu0
      %1436 = vdwg.mxu0
      %1437 = vmatpush.bf16.msra.mxu0 0
      %1438 = vmatpush.bf16.msra.mxu0 0
      %1439 = vmatpush.bf16.msra.mxu0 0
      %1440 = vmatpush.bf16.msra.mxu0 0
      %1441 = vmatpush.bf16.msra.mxu0 0
      %1442 = vmatpush.bf16.msra.mxu0 0
      %1443 = vmatpush.bf16.msra.mxu0 0
      %1444 = vmatpush.bf16.msra.mxu0 %v1397
      %1445 = vmatmul.bf16.gmra.mxu0 %v1388
      %v1446 = vpop.f32.mrf.mxu0
      %v1447 = vadd.f32 0.0, %v1446
      %v1448 = vpop.f32.mrf.mxu0
      %1449 = vdwg.mxu0
      %1450 = vmatpush.bf16.msra.mxu0 0
      %1451 = vmatpush.bf16.msra.mxu0 0
      %1452 = vmatpush.bf16.msra.mxu0 0
      %1453 = vmatpush.bf16.msra.mxu0 0
      %1454 = vmatpush.bf16.msra.mxu0 0
      %1455 = vmatpush.bf16.msra.mxu0 0
      %1456 = vmatpush.bf16.msra.mxu0 0
      %1457 = vmatpush.bf16.msra.mxu0 %v1400
      %1458 = vmatmul.bf16.gmra.mxu0 %v1388
      %v1459 = vpop.f32.mrf.mxu0
      %v1460 = vadd.f32 0.0, %v1459
      %v1461 = vpop.f32.mrf.mxu0
      %1462 = vdwg.mxu0
      %1463 = vmatpush.bf16.msra.mxu0 0
      %1464 = vmatpush.bf16.msra.mxu0 0
      %1465 = vmatpush.bf16.msra.mxu0 0
      %1466 = vmatpush.bf16.msra.mxu0 0
      %1467 = vmatpush.bf16.msra.mxu0 0
      %1468 = vmatpush.bf16.msra.mxu0 0
      %1469 = vmatpush.bf16.msra.mxu0 0
      %1470 = vmatpush.bf16.msra.mxu0 %v1403
      %1471 = vmatmul.bf16.gmra.mxu0 %v1388
      %v1472 = vpop.f32.mrf.mxu0
      %v1473 = vadd.f32 0.0, %v1472
      %v1474 = vpop.f32.mrf.mxu0
      %1475 = vdwg.mxu0
      %1476 = vmatpush.bf16.msra.mxu0 0
      %1477 = vmatpush.bf16.msra.mxu0 0
      %1478 = vmatpush.bf16.msra.mxu0 0
      %1479 = vmatpush.bf16.msra.mxu0 0
      %1480 = vmatpush.bf16.msra.mxu0 0
      %1481 = vmatpush.bf16.msra.mxu0 0
      %1482 = vmatpush.bf16.msra.mxu0 0
      %1483 = vmatpush.bf16.msra.mxu0 %v1406
      %1484 = vmatmul.bf16.gmra.mxu0 %v1388
      %v1485 = vpop.f32.mrf.mxu0
      %v1486 = vadd.f32 0.0, %v1485
      %v1487 = vpop.f32.mrf.mxu0
      %1488 = vdwg.mxu0
      %1489 = vmatpush.bf16.msra.mxu0 0
      %1490 = vmatpush.bf16.msra.mxu0 0
      %1491 = vmatpush.bf16.msra.mxu0 0
      %1492 = vmatpush.bf16.msra.mxu0 0
      %1493 = vmatpush.bf16.msra.mxu0 0
      %1494 = vmatpush.bf16.msra.mxu0 0
      %1495 = vmatpush.bf16.msra.mxu0 0
      %1496 = vmatpush.bf16.msra.mxu0 %v1409
      %1497 = vmatmul.bf16.gmra.mxu0 %v1388
      %v1498 = vpop.f32.mrf.mxu0
      %v1499 = vadd.f32 0.0, %v1498
      %v1500 = vpop.f32.mrf.mxu0
      %1501 = vdwg.mxu0
      %v1502 = vadd.f32 %v1354, %v1421
      %v1503 = vadd.f32 %v1355, %v1434
      %v1504 = vadd.f32 %v1356, %v1447
      %v1505 = vadd.f32 %v1357, %v1460
      %v1506 = vadd.f32 %v1358, %v1473
      %v1507 = vadd.f32 %v1359, %v1486
      %v1508 = vadd.f32 %v1360, %v1499
      %s1509 = scalar_lea.vmem %s1, 36
      %v1510 = vld [vmem:[%s1509] sm:$0xf]
      %1511 = vrot.lane.b32.xlu0 %v209, 28
      %v1512 = vpop.permute.xlu0 %1511
      %1513 = vrot.lane.b32.xlu0 %v210, 28
      %v1514 = vpop.permute.xlu0 %1513
      %1515 = vrot.lane.b32.xlu0 %v211, 28
      %v1516 = vpop.permute.xlu0 %1515
      %1517 = vrot.lane.b32.xlu0 %v212, 28
      %v1518 = vpop.permute.xlu0 %1517
      %1519 = vrot.lane.b32.xlu0 %v213, 28
      %v1520 = vpop.permute.xlu0 %1519
      %1521 = vrot.lane.b32.xlu0 %v214, 28
      %v1522 = vpop.permute.xlu0 %1521
      %1523 = vrot.lane.b32.xlu0 %v215, 28
      %v1524 = vpop.permute.xlu0 %1523
      %1525 = vrot.lane.b32.xlu0 %v216, 28
      %v1526 = vpop.permute.xlu0 %1525
      %vm1527 = vcmask 228352
      %v1528 = vsel %vm1527, %v1512, %v1514
      %v1529 = vsel %vm1527, %v1514, %v1516
      %v1530 = vsel %vm1527, %v1516, %v1518
      %v1531 = vsel %vm1527, %v1518, %v1520
      %v1532 = vsel %vm1527, %v1520, %v1522
      %v1533 = vsel %vm1527, %v1522, %v1524
      %v1534 = vsel %vm1527, %v1524, %v1526
      %v1536 = vsel %vm241, %v1510, 0
      %v1539 = vsel %vm245, %v1528, 0
      %v1542 = vsel %vm245, %v1529, 0
      %v1545 = vsel %vm245, %v1530, 0
      %v1548 = vsel %vm245, %v1531, 0
      %v1551 = vsel %vm245, %v1532, 0
      %v1554 = vsel %vm245, %v1533, 0
      %v1557 = vsel %vm245, %v1534, 0
      %1559 = vmatpush.bf16.msra.mxu0 0
      %1560 = vmatpush.bf16.msra.mxu0 0
      %1561 = vmatpush.bf16.msra.mxu0 0
      %1562 = vmatpush.bf16.msra.mxu0 0
      %1563 = vmatpush.bf16.msra.mxu0 0
      %1564 = vmatpush.bf16.msra.mxu0 0
      %1565 = vmatpush.bf16.msra.mxu0 0
      %1566 = vmatpush.bf16.msra.mxu0 %v1539
      %1567 = vmatmul.bf16.gmra.mxu0 %v1536
      %v1568 = vpop.f32.mrf.mxu0
      %v1569 = vadd.f32 0.0, %v1568
      %v1570 = vpop.f32.mrf.mxu0
      %1571 = vdwg.mxu0
      %1572 = vmatpush.bf16.msra.mxu0 0
      %1573 = vmatpush.bf16.msra.mxu0 0
      %1574 = vmatpush.bf16.msra.mxu0 0
      %1575 = vmatpush.bf16.msra.mxu0 0
      %1576 = vmatpush.bf16.msra.mxu0 0
      %1577 = vmatpush.bf16.msra.mxu0 0
      %1578 = vmatpush.bf16.msra.mxu0 0
      %1579 = vmatpush.bf16.msra.mxu0 %v1542
      %1580 = vmatmul.bf16.gmra.mxu0 %v1536
      %v1581 = vpop.f32.mrf.mxu0
      %v1582 = vadd.f32 0.0, %v1581
      %v1583 = vpop.f32.mrf.mxu0
      %1584 = vdwg.mxu0
      %1585 = vmatpush.bf16.msra.mxu0 0
      %1586 = vmatpush.bf16.msra.mxu0 0
      %1587 = vmatpush.bf16.msra.mxu0 0
      %1588 = vmatpush.bf16.msra.mxu0 0
      %1589 = vmatpush.bf16.msra.mxu0 0
      %1590 = vmatpush.bf16.msra.mxu0 0
      %1591 = vmatpush.bf16.msra.mxu0 0
      %1592 = vmatpush.bf16.msra.mxu0 %v1545
      %1593 = vmatmul.bf16.gmra.mxu0 %v1536
      %v1594 = vpop.f32.mrf.mxu0
      %v1595 = vadd.f32 0.0, %v1594
      %v1596 = vpop.f32.mrf.mxu0
      %1597 = vdwg.mxu0
      %1598 = vmatpush.bf16.msra.mxu0 0
      %1599 = vmatpush.bf16.msra.mxu0 0
      %1600 = vmatpush.bf16.msra.mxu0 0
      %1601 = vmatpush.bf16.msra.mxu0 0
      %1602 = vmatpush.bf16.msra.mxu0 0
      %1603 = vmatpush.bf16.msra.mxu0 0
      %1604 = vmatpush.bf16.msra.mxu0 0
      %1605 = vmatpush.bf16.msra.mxu0 %v1548
      %1606 = vmatmul.bf16.gmra.mxu0 %v1536
      %v1607 = vpop.f32.mrf.mxu0
      %v1608 = vadd.f32 0.0, %v1607
      %v1609 = vpop.f32.mrf.mxu0
      %1610 = vdwg.mxu0
      %1611 = vmatpush.bf16.msra.mxu0 0
      %1612 = vmatpush.bf16.msra.mxu0 0
      %1613 = vmatpush.bf16.msra.mxu0 0
      %1614 = vmatpush.bf16.msra.mxu0 0
      %1615 = vmatpush.bf16.msra.mxu0 0
      %1616 = vmatpush.bf16.msra.mxu0 0
      %1617 = vmatpush.bf16.msra.mxu0 0
      %1618 = vmatpush.bf16.msra.mxu0 %v1551
      %1619 = vmatmul.bf16.gmra.mxu0 %v1536
      %v1620 = vpop.f32.mrf.mxu0
      %v1621 = vadd.f32 0.0, %v1620
      %v1622 = vpop.f32.mrf.mxu0
      %1623 = vdwg.mxu0
      %1624 = vmatpush.bf16.msra.mxu0 0
      %1625 = vmatpush.bf16.msra.mxu0 0
      %1626 = vmatpush.bf16.msra.mxu0 0
      %1627 = vmatpush.bf16.msra.mxu0 0
      %1628 = vmatpush.bf16.msra.mxu0 0
      %1629 = vmatpush.bf16.msra.mxu0 0
      %1630 = vmatpush.bf16.msra.mxu0 0
      %1631 = vmatpush.bf16.msra.mxu0 %v1554
      %1632 = vmatmul.bf16.gmra.mxu0 %v1536
      %v1633 = vpop.f32.mrf.mxu0
      %v1634 = vadd.f32 0.0, %v1633
      %v1635 = vpop.f32.mrf.mxu0
      %1636 = vdwg.mxu0
      %1637 = vmatpush.bf16.msra.mxu0 0
      %1638 = vmatpush.bf16.msra.mxu0 0
      %1639 = vmatpush.bf16.msra.mxu0 0
      %1640 = vmatpush.bf16.msra.mxu0 0
      %1641 = vmatpush.bf16.msra.mxu0 0
      %1642 = vmatpush.bf16.msra.mxu0 0
      %1643 = vmatpush.bf16.msra.mxu0 0
      %1644 = vmatpush.bf16.msra.mxu0 %v1557
      %1645 = vmatmul.bf16.gmra.mxu0 %v1536
      %v1646 = vpop.f32.mrf.mxu0
      %v1647 = vadd.f32 0.0, %v1646
      %v1648 = vpop.f32.mrf.mxu0
      %1649 = vdwg.mxu0
      %v1650 = vadd.f32 %v1502, %v1569
      %v1651 = vadd.f32 %v1503, %v1582
      %v1652 = vadd.f32 %v1504, %v1595
      %v1653 = vadd.f32 %v1505, %v1608
      %v1654 = vadd.f32 %v1506, %v1621
      %v1655 = vadd.f32 %v1507, %v1634
      %v1656 = vadd.f32 %v1508, %v1647
      %s1657 = scalar_lea.vmem %s1, 40
      %v1658 = vld [vmem:[%s1657] sm:$0xf]
      %1659 = vrot.lane.b32.xlu0 %v209, 27
      %v1660 = vpop.permute.xlu0 %1659
      %1661 = vrot.lane.b32.xlu0 %v210, 27
      %v1662 = vpop.permute.xlu0 %1661
      %1663 = vrot.lane.b32.xlu0 %v211, 27
      %v1664 = vpop.permute.xlu0 %1663
      %1665 = vrot.lane.b32.xlu0 %v212, 27
      %v1666 = vpop.permute.xlu0 %1665
      %1667 = vrot.lane.b32.xlu0 %v213, 27
      %v1668 = vpop.permute.xlu0 %1667
      %1669 = vrot.lane.b32.xlu0 %v214, 27
      %v1670 = vpop.permute.xlu0 %1669
      %1671 = vrot.lane.b32.xlu0 %v215, 27
      %v1672 = vpop.permute.xlu0 %1671
      %1673 = vrot.lane.b32.xlu0 %v216, 27
      %v1674 = vpop.permute.xlu0 %1673
      %vm1675 = vcmask 220160
      %v1676 = vsel %vm1675, %v1660, %v1662
      %v1677 = vsel %vm1675, %v1662, %v1664
      %v1678 = vsel %vm1675, %v1664, %v1666
      %v1679 = vsel %vm1675, %v1666, %v1668
      %v1680 = vsel %vm1675, %v1668, %v1670
      %v1681 = vsel %vm1675, %v1670, %v1672
      %v1682 = vsel %vm1675, %v1672, %v1674
      %v1684 = vsel %vm241, %v1658, 0
      %v1687 = vsel %vm245, %v1676, 0
      %v1690 = vsel %vm245, %v1677, 0
      %v1693 = vsel %vm245, %v1678, 0
      %v1696 = vsel %vm245, %v1679, 0
      %v1699 = vsel %vm245, %v1680, 0
      %v1702 = vsel %vm245, %v1681, 0
      %v1705 = vsel %vm245, %v1682, 0
      %1707 = vmatpush.bf16.msra.mxu0 0
      %1708 = vmatpush.bf16.msra.mxu0 0
      %1709 = vmatpush.bf16.msra.mxu0 0
      %1710 = vmatpush.bf16.msra.mxu0 0
      %1711 = vmatpush.bf16.msra.mxu0 0
      %1712 = vmatpush.bf16.msra.mxu0 0
      %1713 = vmatpush.bf16.msra.mxu0 0
      %1714 = vmatpush.bf16.msra.mxu0 %v1687
      %1715 = vmatmul.bf16.gmra.mxu0 %v1684
      %v1716 = vpop.f32.mrf.mxu0
      %v1717 = vadd.f32 0.0, %v1716
      %v1718 = vpop.f32.mrf.mxu0
      %1719 = vdwg.mxu0
      %1720 = vmatpush.bf16.msra.mxu0 0
      %1721 = vmatpush.bf16.msra.mxu0 0
      %1722 = vmatpush.bf16.msra.mxu0 0
      %1723 = vmatpush.bf16.msra.mxu0 0
      %1724 = vmatpush.bf16.msra.mxu0 0
      %1725 = vmatpush.bf16.msra.mxu0 0
      %1726 = vmatpush.bf16.msra.mxu0 0
      %1727 = vmatpush.bf16.msra.mxu0 %v1690
      %1728 = vmatmul.bf16.gmra.mxu0 %v1684
      %v1729 = vpop.f32.mrf.mxu0
      %v1730 = vadd.f32 0.0, %v1729
      %v1731 = vpop.f32.mrf.mxu0
      %1732 = vdwg.mxu0
      %1733 = vmatpush.bf16.msra.mxu0 0
      %1734 = vmatpush.bf16.msra.mxu0 0
      %1735 = vmatpush.bf16.msra.mxu0 0
      %1736 = vmatpush.bf16.msra.mxu0 0
      %1737 = vmatpush.bf16.msra.mxu0 0
      %1738 = vmatpush.bf16.msra.mxu0 0
      %1739 = vmatpush.bf16.msra.mxu0 0
      %1740 = vmatpush.bf16.msra.mxu0 %v1693
      %1741 = vmatmul.bf16.gmra.mxu0 %v1684
      %v1742 = vpop.f32.mrf.mxu0
      %v1743 = vadd.f32 0.0, %v1742
      %v1744 = vpop.f32.mrf.mxu0
      %1745 = vdwg.mxu0
      %1746 = vmatpush.bf16.msra.mxu0 0
      %1747 = vmatpush.bf16.msra.mxu0 0
      %1748 = vmatpush.bf16.msra.mxu0 0
      %1749 = vmatpush.bf16.msra.mxu0 0
      %1750 = vmatpush.bf16.msra.mxu0 0
      %1751 = vmatpush.bf16.msra.mxu0 0
      %1752 = vmatpush.bf16.msra.mxu0 0
      %1753 = vmatpush.bf16.msra.mxu0 %v1696
      %1754 = vmatmul.bf16.gmra.mxu0 %v1684
      %v1755 = vpop.f32.mrf.mxu0
      %v1756 = vadd.f32 0.0, %v1755
      %v1757 = vpop.f32.mrf.mxu0
      %1758 = vdwg.mxu0
      %1759 = vmatpush.bf16.msra.mxu0 0
      %1760 = vmatpush.bf16.msra.mxu0 0
      %1761 = vmatpush.bf16.msra.mxu0 0
      %1762 = vmatpush.bf16.msra.mxu0 0
      %1763 = vmatpush.bf16.msra.mxu0 0
      %1764 = vmatpush.bf16.msra.mxu0 0
      %1765 = vmatpush.bf16.msra.mxu0 0
      %1766 = vmatpush.bf16.msra.mxu0 %v1699
      %1767 = vmatmul.bf16.gmra.mxu0 %v1684
      %v1768 = vpop.f32.mrf.mxu0
      %v1769 = vadd.f32 0.0, %v1768
      %v1770 = vpop.f32.mrf.mxu0
      %1771 = vdwg.mxu0
      %1772 = vmatpush.bf16.msra.mxu0 0
      %1773 = vmatpush.bf16.msra.mxu0 0
      %1774 = vmatpush.bf16.msra.mxu0 0
      %1775 = vmatpush.bf16.msra.mxu0 0
      %1776 = vmatpush.bf16.msra.mxu0 0
      %1777 = vmatpush.bf16.msra.mxu0 0
      %1778 = vmatpush.bf16.msra.mxu0 0
      %1779 = vmatpush.bf16.msra.mxu0 %v1702
      %1780 = vmatmul.bf16.gmra.mxu0 %v1684
      %v1781 = vpop.f32.mrf.mxu0
      %v1782 = vadd.f32 0.0, %v1781
      %v1783 = vpop.f32.mrf.mxu0
      %1784 = vdwg.mxu0
      %1785 = vmatpush.bf16.msra.mxu0 0
      %1786 = vmatpush.bf16.msra.mxu0 0
      %1787 = vmatpush.bf16.msra.mxu0 0
      %1788 = vmatpush.bf16.msra.mxu0 0
      %1789 = vmatpush.bf16.msra.mxu0 0
      %1790 = vmatpush.bf16.msra.mxu0 0
      %1791 = vmatpush.bf16.msra.mxu0 0
      %1792 = vmatpush.bf16.msra.mxu0 %v1705
      %1793 = vmatmul.bf16.gmra.mxu0 %v1684
      %v1794 = vpop.f32.mrf.mxu0
      %v1795 = vadd.f32 0.0, %v1794
      %v1796 = vpop.f32.mrf.mxu0
      %1797 = vdwg.mxu0
      %v1798 = vadd.f32 %v1650, %v1717
      %v1799 = vadd.f32 %v1651, %v1730
      %v1800 = vadd.f32 %v1652, %v1743
      %v1801 = vadd.f32 %v1653, %v1756
      %v1802 = vadd.f32 %v1654, %v1769
      %v1803 = vadd.f32 %v1655, %v1782
      %v1804 = vadd.f32 %v1656, %v1795
      %s1805 = scalar_lea.vmem %s1, 44
      %v1806 = vld [vmem:[%s1805] sm:$0xf]
      %1807 = vrot.lane.b32.xlu0 %v209, 26
      %v1808 = vpop.permute.xlu0 %1807
      %1809 = vrot.lane.b32.xlu0 %v210, 26
      %v1810 = vpop.permute.xlu0 %1809
      %1811 = vrot.lane.b32.xlu0 %v211, 26
      %v1812 = vpop.permute.xlu0 %1811
      %1813 = vrot.lane.b32.xlu0 %v212, 26
      %v1814 = vpop.permute.xlu0 %1813
      %1815 = vrot.lane.b32.xlu0 %v213, 26
      %v1816 = vpop.permute.xlu0 %1815
      %1817 = vrot.lane.b32.xlu0 %v214, 26
      %v1818 = vpop.permute.xlu0 %1817
      %1819 = vrot.lane.b32.xlu0 %v215, 26
      %v1820 = vpop.permute.xlu0 %1819
      %1821 = vrot.lane.b32.xlu0 %v216, 26
      %v1822 = vpop.permute.xlu0 %1821
      %vm1823 = vcmask 211968
      %v1824 = vsel %vm1823, %v1808, %v1810
      %v1825 = vsel %vm1823, %v1810, %v1812
      %v1826 = vsel %vm1823, %v1812, %v1814
      %v1827 = vsel %vm1823, %v1814, %v1816
      %v1828 = vsel %vm1823, %v1816, %v1818
      %v1829 = vsel %vm1823, %v1818, %v1820
      %v1830 = vsel %vm1823, %v1820, %v1822
      %v1832 = vsel %vm241, %v1806, 0
      %v1835 = vsel %vm245, %v1824, 0
      %v1838 = vsel %vm245, %v1825, 0
      %v1841 = vsel %vm245, %v1826, 0
      %v1844 = vsel %vm245, %v1827, 0
      %v1847 = vsel %vm245, %v1828, 0
      %v1850 = vsel %vm245, %v1829, 0
      %v1853 = vsel %vm245, %v1830, 0
      %1855 = vmatpush.bf16.msra.mxu0 0
      %1856 = vmatpush.bf16.msra.mxu0 0
      %1857 = vmatpush.bf16.msra.mxu0 0
      %1858 = vmatpush.bf16.msra.mxu0 0
      %1859 = vmatpush.bf16.msra.mxu0 0
      %1860 = vmatpush.bf16.msra.mxu0 0
      %1861 = vmatpush.bf16.msra.mxu0 0
      %1862 = vmatpush.bf16.msra.mxu0 %v1835
      %1863 = vmatmul.bf16.gmra.mxu0 %v1832
      %v1864 = vpop.f32.mrf.mxu0
      %v1865 = vadd.f32 0.0, %v1864
      %v1866 = vpop.f32.mrf.mxu0
      %1867 = vdwg.mxu0
      %1868 = vmatpush.bf16.msra.mxu0 0
      %1869 = vmatpush.bf16.msra.mxu0 0
      %1870 = vmatpush.bf16.msra.mxu0 0
      %1871 = vmatpush.bf16.msra.mxu0 0
      %1872 = vmatpush.bf16.msra.mxu0 0
      %1873 = vmatpush.bf16.msra.mxu0 0
      %1874 = vmatpush.bf16.msra.mxu0 0
      %1875 = vmatpush.bf16.msra.mxu0 %v1838
      %1876 = vmatmul.bf16.gmra.mxu0 %v1832
      %v1877 = vpop.f32.mrf.mxu0
      %v1878 = vadd.f32 0.0, %v1877
      %v1879 = vpop.f32.mrf.mxu0
      %1880 = vdwg.mxu0
      %1881 = vmatpush.bf16.msra.mxu0 0
      %1882 = vmatpush.bf16.msra.mxu0 0
      %1883 = vmatpush.bf16.msra.mxu0 0
      %1884 = vmatpush.bf16.msra.mxu0 0
      %1885 = vmatpush.bf16.msra.mxu0 0
      %1886 = vmatpush.bf16.msra.mxu0 0
      %1887 = vmatpush.bf16.msra.mxu0 0
      %1888 = vmatpush.bf16.msra.mxu0 %v1841
      %1889 = vmatmul.bf16.gmra.mxu0 %v1832
      %v1890 = vpop.f32.mrf.mxu0
      %v1891 = vadd.f32 0.0, %v1890
      %v1892 = vpop.f32.mrf.mxu0
      %1893 = vdwg.mxu0
      %1894 = vmatpush.bf16.msra.mxu0 0
      %1895 = vmatpush.bf16.msra.mxu0 0
      %1896 = vmatpush.bf16.msra.mxu0 0
      %1897 = vmatpush.bf16.msra.mxu0 0
      %1898 = vmatpush.bf16.msra.mxu0 0
      %1899 = vmatpush.bf16.msra.mxu0 0
      %1900 = vmatpush.bf16.msra.mxu0 0
      %1901 = vmatpush.bf16.msra.mxu0 %v1844
      %1902 = vmatmul.bf16.gmra.mxu0 %v1832
      %v1903 = vpop.f32.mrf.mxu0
      %v1904 = vadd.f32 0.0, %v1903
      %v1905 = vpop.f32.mrf.mxu0
      %1906 = vdwg.mxu0
      %1907 = vmatpush.bf16.msra.mxu0 0
      %1908 = vmatpush.bf16.msra.mxu0 0
      %1909 = vmatpush.bf16.msra.mxu0 0
      %1910 = vmatpush.bf16.msra.mxu0 0
      %1911 = vmatpush.bf16.msra.mxu0 0
      %1912 = vmatpush.bf16.msra.mxu0 0
      %1913 = vmatpush.bf16.msra.mxu0 0
      %1914 = vmatpush.bf16.msra.mxu0 %v1847
      %1915 = vmatmul.bf16.gmra.mxu0 %v1832
      %v1916 = vpop.f32.mrf.mxu0
      %v1917 = vadd.f32 0.0, %v1916
      %v1918 = vpop.f32.mrf.mxu0
      %1919 = vdwg.mxu0
      %1920 = vmatpush.bf16.msra.mxu0 0
      %1921 = vmatpush.bf16.msra.mxu0 0
      %1922 = vmatpush.bf16.msra.mxu0 0
      %1923 = vmatpush.bf16.msra.mxu0 0
      %1924 = vmatpush.bf16.msra.mxu0 0
      %1925 = vmatpush.bf16.msra.mxu0 0
      %1926 = vmatpush.bf16.msra.mxu0 0
      %1927 = vmatpush.bf16.msra.mxu0 %v1850
      %1928 = vmatmul.bf16.gmra.mxu0 %v1832
      %v1929 = vpop.f32.mrf.mxu0
      %v1930 = vadd.f32 0.0, %v1929
      %v1931 = vpop.f32.mrf.mxu0
      %1932 = vdwg.mxu0
      %1933 = vmatpush.bf16.msra.mxu0 0
      %1934 = vmatpush.bf16.msra.mxu0 0
      %1935 = vmatpush.bf16.msra.mxu0 0
      %1936 = vmatpush.bf16.msra.mxu0 0
      %1937 = vmatpush.bf16.msra.mxu0 0
      %1938 = vmatpush.bf16.msra.mxu0 0
      %1939 = vmatpush.bf16.msra.mxu0 0
      %1940 = vmatpush.bf16.msra.mxu0 %v1853
      %1941 = vmatmul.bf16.gmra.mxu0 %v1832
      %v1942 = vpop.f32.mrf.mxu0
      %v1943 = vadd.f32 0.0, %v1942
      %v1944 = vpop.f32.mrf.mxu0
      %1945 = vdwg.mxu0
      %v1946 = vadd.f32 %v1798, %v1865
      %v1947 = vadd.f32 %v1799, %v1878
      %v1948 = vadd.f32 %v1800, %v1891
      %v1949 = vadd.f32 %v1801, %v1904
      %v1950 = vadd.f32 %v1802, %v1917
      %v1951 = vadd.f32 %v1803, %v1930
      %v1952 = vadd.f32 %v1804, %v1943
      %s1953 = scalar_lea.vmem %s1, 48
      %v1954 = vld [vmem:[%s1953] sm:$0xf]
      %1955 = vrot.lane.b32.xlu0 %v209, 18
      %v1956 = vpop.permute.xlu0 %1955
      %1957 = vrot.lane.b32.xlu0 %v210, 18
      %v1958 = vpop.permute.xlu0 %1957
      %1959 = vrot.lane.b32.xlu0 %v211, 18
      %v1960 = vpop.permute.xlu0 %1959
      %1961 = vrot.lane.b32.xlu0 %v212, 18
      %v1962 = vpop.permute.xlu0 %1961
      %1963 = vrot.lane.b32.xlu0 %v213, 18
      %v1964 = vpop.permute.xlu0 %1963
      %1965 = vrot.lane.b32.xlu0 %v214, 18
      %v1966 = vpop.permute.xlu0 %1965
      %1967 = vrot.lane.b32.xlu0 %v215, 18
      %v1968 = vpop.permute.xlu0 %1967
      %1969 = vrot.lane.b32.xlu0 %v216, 18
      %v1970 = vpop.permute.xlu0 %1969
      %vm1971 = vcmask 146432
      %v1972 = vsel %vm1971, %v1956, %v1958
      %v1973 = vsel %vm1971, %v1958, %v1960
      %v1974 = vsel %vm1971, %v1960, %v1962
      %v1975 = vsel %vm1971, %v1962, %v1964
      %v1976 = vsel %vm1971, %v1964, %v1966
      %v1977 = vsel %vm1971, %v1966, %v1968
      %v1978 = vsel %vm1971, %v1968, %v1970
      %v1980 = vsel %vm241, %v1954, 0
      %v1983 = vsel %vm245, %v1972, 0
      %v1986 = vsel %vm245, %v1973, 0
      %v1989 = vsel %vm245, %v1974, 0
      %v1992 = vsel %vm245, %v1975, 0
      %v1995 = vsel %vm245, %v1976, 0
      %v1998 = vsel %vm245, %v1977, 0
      %v2001 = vsel %vm245, %v1978, 0
      %2003 = vmatpush.bf16.msra.mxu0 0
      %2004 = vmatpush.bf16.msra.mxu0 0
      %2005 = vmatpush.bf16.msra.mxu0 0
      %2006 = vmatpush.bf16.msra.mxu0 0
      %2007 = vmatpush.bf16.msra.mxu0 0
      %2008 = vmatpush.bf16.msra.mxu0 0
      %2009 = vmatpush.bf16.msra.mxu0 0
      %2010 = vmatpush.bf16.msra.mxu0 %v1983
      %2011 = vmatmul.bf16.gmra.mxu0 %v1980
      %v2012 = vpop.f32.mrf.mxu0
      %v2013 = vadd.f32 0.0, %v2012
      %v2014 = vpop.f32.mrf.mxu0
      %2015 = vdwg.mxu0
      %2016 = vmatpush.bf16.msra.mxu0 0
      %2017 = vmatpush.bf16.msra.mxu0 0
      %2018 = vmatpush.bf16.msra.mxu0 0
      %2019 = vmatpush.bf16.msra.mxu0 0
      %2020 = vmatpush.bf16.msra.mxu0 0
      %2021 = vmatpush.bf16.msra.mxu0 0
      %2022 = vmatpush.bf16.msra.mxu0 0
      %2023 = vmatpush.bf16.msra.mxu0 %v1986
      %2024 = vmatmul.bf16.gmra.mxu0 %v1980
      %v2025 = vpop.f32.mrf.mxu0
      %v2026 = vadd.f32 0.0, %v2025
      %v2027 = vpop.f32.mrf.mxu0
      %2028 = vdwg.mxu0
      %2029 = vmatpush.bf16.msra.mxu0 0
      %2030 = vmatpush.bf16.msra.mxu0 0
      %2031 = vmatpush.bf16.msra.mxu0 0
      %2032 = vmatpush.bf16.msra.mxu0 0
      %2033 = vmatpush.bf16.msra.mxu0 0
      %2034 = vmatpush.bf16.msra.mxu0 0
      %2035 = vmatpush.bf16.msra.mxu0 0
      %2036 = vmatpush.bf16.msra.mxu0 %v1989
      %2037 = vmatmul.bf16.gmra.mxu0 %v1980
      %v2038 = vpop.f32.mrf.mxu0
      %v2039 = vadd.f32 0.0, %v2038
      %v2040 = vpop.f32.mrf.mxu0
      %2041 = vdwg.mxu0
      %2042 = vmatpush.bf16.msra.mxu0 0
      %2043 = vmatpush.bf16.msra.mxu0 0
      %2044 = vmatpush.bf16.msra.mxu0 0
      %2045 = vmatpush.bf16.msra.mxu0 0
      %2046 = vmatpush.bf16.msra.mxu0 0
      %2047 = vmatpush.bf16.msra.mxu0 0
      %2048 = vmatpush.bf16.msra.mxu0 0
      %2049 = vmatpush.bf16.msra.mxu0 %v1992
      %2050 = vmatmul.bf16.gmra.mxu0 %v1980
      %v2051 = vpop.f32.mrf.mxu0
      %v2052 = vadd.f32 0.0, %v2051
      %v2053 = vpop.f32.mrf.mxu0
      %2054 = vdwg.mxu0
      %2055 = vmatpush.bf16.msra.mxu0 0
      %2056 = vmatpush.bf16.msra.mxu0 0
      %2057 = vmatpush.bf16.msra.mxu0 0
      %2058 = vmatpush.bf16.msra.mxu0 0
      %2059 = vmatpush.bf16.msra.mxu0 0
      %2060 = vmatpush.bf16.msra.mxu0 0
      %2061 = vmatpush.bf16.msra.mxu0 0
      %2062 = vmatpush.bf16.msra.mxu0 %v1995
      %2063 = vmatmul.bf16.gmra.mxu0 %v1980
      %v2064 = vpop.f32.mrf.mxu0
      %v2065 = vadd.f32 0.0, %v2064
      %v2066 = vpop.f32.mrf.mxu0
      %2067 = vdwg.mxu0
      %2068 = vmatpush.bf16.msra.mxu0 0
      %2069 = vmatpush.bf16.msra.mxu0 0
      %2070 = vmatpush.bf16.msra.mxu0 0
      %2071 = vmatpush.bf16.msra.mxu0 0
      %2072 = vmatpush.bf16.msra.mxu0 0
      %2073 = vmatpush.bf16.msra.mxu0 0
      %2074 = vmatpush.bf16.msra.mxu0 0
      %2075 = vmatpush.bf16.msra.mxu0 %v1998
      %2076 = vmatmul.bf16.gmra.mxu0 %v1980
      %v2077 = vpop.f32.mrf.mxu0
      %v2078 = vadd.f32 0.0, %v2077
      %v2079 = vpop.f32.mrf.mxu0
      %2080 = vdwg.mxu0
      %2081 = vmatpush.bf16.msra.mxu0 0
      %2082 = vmatpush.bf16.msra.mxu0 0
      %2083 = vmatpush.bf16.msra.mxu0 0
      %2084 = vmatpush.bf16.msra.mxu0 0
      %2085 = vmatpush.bf16.msra.mxu0 0
      %2086 = vmatpush.bf16.msra.mxu0 0
      %2087 = vmatpush.bf16.msra.mxu0 0
      %2088 = vmatpush.bf16.msra.mxu0 %v2001
      %2089 = vmatmul.bf16.gmra.mxu0 %v1980
      %v2090 = vpop.f32.mrf.mxu0
      %v2091 = vadd.f32 0.0, %v2090
      %v2092 = vpop.f32.mrf.mxu0
      %2093 = vdwg.mxu0
      %v2094 = vadd.f32 %v1946, %v2013
      %v2095 = vadd.f32 %v1947, %v2026
      %v2096 = vadd.f32 %v1948, %v2039
      %v2097 = vadd.f32 %v1949, %v2052
      %v2098 = vadd.f32 %v1950, %v2065
      %v2099 = vadd.f32 %v1951, %v2078
      %v2100 = vadd.f32 %v1952, %v2091
      %s2101 = scalar_lea.vmem %s1, 52
      %v2102 = vld [vmem:[%s2101] sm:$0xf]
      %2103 = vrot.lane.b32.xlu0 %v209, 17
      %v2104 = vpop.permute.xlu0 %2103
      %2105 = vrot.lane.b32.xlu0 %v210, 17
      %v2106 = vpop.permute.xlu0 %2105
      %2107 = vrot.lane.b32.xlu0 %v211, 17
      %v2108 = vpop.permute.xlu0 %2107
      %2109 = vrot.lane.b32.xlu0 %v212, 17
      %v2110 = vpop.permute.xlu0 %2109
      %2111 = vrot.lane.b32.xlu0 %v213, 17
      %v2112 = vpop.permute.xlu0 %2111
      %2113 = vrot.lane.b32.xlu0 %v214, 17
      %v2114 = vpop.permute.xlu0 %2113
      %2115 = vrot.lane.b32.xlu0 %v215, 17
      %v2116 = vpop.permute.xlu0 %2115
      %2117 = vrot.lane.b32.xlu0 %v216, 17
      %v2118 = vpop.permute.xlu0 %2117
      %vm2119 = vcmask 138240
      %v2120 = vsel %vm2119, %v2104, %v2106
      %v2121 = vsel %vm2119, %v2106, %v2108
      %v2122 = vsel %vm2119, %v2108, %v2110
      %v2123 = vsel %vm2119, %v2110, %v2112
      %v2124 = vsel %vm2119, %v2112, %v2114
      %v2125 = vsel %vm2119, %v2114, %v2116
      %v2126 = vsel %vm2119, %v2116, %v2118
      %v2128 = vsel %vm241, %v2102, 0
      %v2131 = vsel %vm245, %v2120, 0
      %v2134 = vsel %vm245, %v2121, 0
      %v2137 = vsel %vm245, %v2122, 0
      %v2140 = vsel %vm245, %v2123, 0
      %v2143 = vsel %vm245, %v2124, 0
      %v2146 = vsel %vm245, %v2125, 0
      %v2149 = vsel %vm245, %v2126, 0
      %2151 = vmatpush.bf16.msra.mxu0 0
      %2152 = vmatpush.bf16.msra.mxu0 0
      %2153 = vmatpush.bf16.msra.mxu0 0
      %2154 = vmatpush.bf16.msra.mxu0 0
      %2155 = vmatpush.bf16.msra.mxu0 0
      %2156 = vmatpush.bf16.msra.mxu0 0
      %2157 = vmatpush.bf16.msra.mxu0 0
      %2158 = vmatpush.bf16.msra.mxu0 %v2131
      %2159 = vmatmul.bf16.gmra.mxu0 %v2128
      %v2160 = vpop.f32.mrf.mxu0
      %v2161 = vadd.f32 0.0, %v2160
      %v2162 = vpop.f32.mrf.mxu0
      %2163 = vdwg.mxu0
      %2164 = vmatpush.bf16.msra.mxu0 0
      %2165 = vmatpush.bf16.msra.mxu0 0
      %2166 = vmatpush.bf16.msra.mxu0 0
      %2167 = vmatpush.bf16.msra.mxu0 0
      %2168 = vmatpush.bf16.msra.mxu0 0
      %2169 = vmatpush.bf16.msra.mxu0 0
      %2170 = vmatpush.bf16.msra.mxu0 0
      %2171 = vmatpush.bf16.msra.mxu0 %v2134
      %2172 = vmatmul.bf16.gmra.mxu0 %v2128
      %v2173 = vpop.f32.mrf.mxu0
      %v2174 = vadd.f32 0.0, %v2173
      %v2175 = vpop.f32.mrf.mxu0
      %2176 = vdwg.mxu0
      %2177 = vmatpush.bf16.msra.mxu0 0
      %2178 = vmatpush.bf16.msra.mxu0 0
      %2179 = vmatpush.bf16.msra.mxu0 0
      %2180 = vmatpush.bf16.msra.mxu0 0
      %2181 = vmatpush.bf16.msra.mxu0 0
      %2182 = vmatpush.bf16.msra.mxu0 0
      %2183 = vmatpush.bf16.msra.mxu0 0
      %2184 = vmatpush.bf16.msra.mxu0 %v2137
      %2185 = vmatmul.bf16.gmra.mxu0 %v2128
      %v2186 = vpop.f32.mrf.mxu0
      %v2187 = vadd.f32 0.0, %v2186
      %v2188 = vpop.f32.mrf.mxu0
      %2189 = vdwg.mxu0
      %2190 = vmatpush.bf16.msra.mxu0 0
      %2191 = vmatpush.bf16.msra.mxu0 0
      %2192 = vmatpush.bf16.msra.mxu0 0
      %2193 = vmatpush.bf16.msra.mxu0 0
      %2194 = vmatpush.bf16.msra.mxu0 0
      %2195 = vmatpush.bf16.msra.mxu0 0
      %2196 = vmatpush.bf16.msra.mxu0 0
      %2197 = vmatpush.bf16.msra.mxu0 %v2140
      %2198 = vmatmul.bf16.gmra.mxu0 %v2128
      %v2199 = vpop.f32.mrf.mxu0
      %v2200 = vadd.f32 0.0, %v2199
      %v2201 = vpop.f32.mrf.mxu0
      %2202 = vdwg.mxu0
      %2203 = vmatpush.bf16.msra.mxu0 0
      %2204 = vmatpush.bf16.msra.mxu0 0
      %2205 = vmatpush.bf16.msra.mxu0 0
      %2206 = vmatpush.bf16.msra.mxu0 0
      %2207 = vmatpush.bf16.msra.mxu0 0
      %2208 = vmatpush.bf16.msra.mxu0 0
      %2209 = vmatpush.bf16.msra.mxu0 0
      %2210 = vmatpush.bf16.msra.mxu0 %v2143
      %2211 = vmatmul.bf16.gmra.mxu0 %v2128
      %v2212 = vpop.f32.mrf.mxu0
      %v2213 = vadd.f32 0.0, %v2212
      %v2214 = vpop.f32.mrf.mxu0
      %2215 = vdwg.mxu0
      %2216 = vmatpush.bf16.msra.mxu0 0
      %2217 = vmatpush.bf16.msra.mxu0 0
      %2218 = vmatpush.bf16.msra.mxu0 0
      %2219 = vmatpush.bf16.msra.mxu0 0
      %2220 = vmatpush.bf16.msra.mxu0 0
      %2221 = vmatpush.bf16.msra.mxu0 0
      %2222 = vmatpush.bf16.msra.mxu0 0
      %2223 = vmatpush.bf16.msra.mxu0 %v2146
      %2224 = vmatmul.bf16.gmra.mxu0 %v2128
      %v2225 = vpop.f32.mrf.mxu0
      %v2226 = vadd.f32 0.0, %v2225
      %v2227 = vpop.f32.mrf.mxu0
      %2228 = vdwg.mxu0
      %2229 = vmatpush.bf16.msra.mxu0 0
      %2230 = vmatpush.bf16.msra.mxu0 0
      %2231 = vmatpush.bf16.msra.mxu0 0
      %2232 = vmatpush.bf16.msra.mxu0 0
      %2233 = vmatpush.bf16.msra.mxu0 0
      %2234 = vmatpush.bf16.msra.mxu0 0
      %2235 = vmatpush.bf16.msra.mxu0 0
      %2236 = vmatpush.bf16.msra.mxu0 %v2149
      %2237 = vmatmul.bf16.gmra.mxu0 %v2128
      %v2238 = vpop.f32.mrf.mxu0
      %v2239 = vadd.f32 0.0, %v2238
      %v2240 = vpop.f32.mrf.mxu0
      %2241 = vdwg.mxu0
      %v2242 = vadd.f32 %v2094, %v2161
      %v2243 = vadd.f32 %v2095, %v2174
      %v2244 = vadd.f32 %v2096, %v2187
      %v2245 = vadd.f32 %v2097, %v2200
      %v2246 = vadd.f32 %v2098, %v2213
      %v2247 = vadd.f32 %v2099, %v2226
      %v2248 = vadd.f32 %v2100, %v2239
      %s2249 = scalar_lea.vmem %s1, 56
      %v2250 = vld [vmem:[%s2249] sm:$0xf]
      %2251 = vrot.lane.b32.xlu0 %v209, 16
      %v2252 = vpop.permute.xlu0 %2251
      %2253 = vrot.lane.b32.xlu0 %v210, 16
      %v2254 = vpop.permute.xlu0 %2253
      %2255 = vrot.lane.b32.xlu0 %v211, 16
      %v2256 = vpop.permute.xlu0 %2255
      %2257 = vrot.lane.b32.xlu0 %v212, 16
      %v2258 = vpop.permute.xlu0 %2257
      %2259 = vrot.lane.b32.xlu0 %v213, 16
      %v2260 = vpop.permute.xlu0 %2259
      %2261 = vrot.lane.b32.xlu0 %v214, 16
      %v2262 = vpop.permute.xlu0 %2261
      %2263 = vrot.lane.b32.xlu0 %v215, 16
      %v2264 = vpop.permute.xlu0 %2263
      %2265 = vrot.lane.b32.xlu0 %v216, 16
      %v2266 = vpop.permute.xlu0 %2265
      %vm2267 = vcmask 130048
      %v2268 = vsel %vm2267, %v2252, %v2254
      %v2269 = vsel %vm2267, %v2254, %v2256
      %v2270 = vsel %vm2267, %v2256, %v2258
      %v2271 = vsel %vm2267, %v2258, %v2260
      %v2272 = vsel %vm2267, %v2260, %v2262
      %v2273 = vsel %vm2267, %v2262, %v2264
      %v2274 = vsel %vm2267, %v2264, %v2266
      %v2276 = vsel %vm241, %v2250, 0
      %v2279 = vsel %vm245, %v2268, 0
      %v2282 = vsel %vm245, %v2269, 0
      %v2285 = vsel %vm245, %v2270, 0
      %v2288 = vsel %vm245, %v2271, 0
      %v2291 = vsel %vm245, %v2272, 0
      %v2294 = vsel %vm245, %v2273, 0
      %v2297 = vsel %vm245, %v2274, 0
      %2299 = vmatpush.bf16.msra.mxu0 0
      %2300 = vmatpush.bf16.msra.mxu0 0
      %2301 = vmatpush.bf16.msra.mxu0 0
      %2302 = vmatpush.bf16.msra.mxu0 0
      %2303 = vmatpush.bf16.msra.mxu0 0
      %2304 = vmatpush.bf16.msra.mxu0 0
      %2305 = vmatpush.bf16.msra.mxu0 0
      %2306 = vmatpush.bf16.msra.mxu0 %v2279
      %2307 = vmatmul.bf16.gmra.mxu0 %v2276
      %v2308 = vpop.f32.mrf.mxu0
      %v2309 = vadd.f32 0.0, %v2308
      %v2310 = vpop.f32.mrf.mxu0
      %2311 = vdwg.mxu0
      %2312 = vmatpush.bf16.msra.mxu0 0
      %2313 = vmatpush.bf16.msra.mxu0 0
      %2314 = vmatpush.bf16.msra.mxu0 0
      %2315 = vmatpush.bf16.msra.mxu0 0
      %2316 = vmatpush.bf16.msra.mxu0 0
      %2317 = vmatpush.bf16.msra.mxu0 0
      %2318 = vmatpush.bf16.msra.mxu0 0
      %2319 = vmatpush.bf16.msra.mxu0 %v2282
      %2320 = vmatmul.bf16.gmra.mxu0 %v2276
      %v2321 = vpop.f32.mrf.mxu0
      %v2322 = vadd.f32 0.0, %v2321
      %v2323 = vpop.f32.mrf.mxu0
      %2324 = vdwg.mxu0
      %2325 = vmatpush.bf16.msra.mxu0 0
      %2326 = vmatpush.bf16.msra.mxu0 0
      %2327 = vmatpush.bf16.msra.mxu0 0
      %2328 = vmatpush.bf16.msra.mxu0 0
      %2329 = vmatpush.bf16.msra.mxu0 0
      %2330 = vmatpush.bf16.msra.mxu0 0
      %2331 = vmatpush.bf16.msra.mxu0 0
      %2332 = vmatpush.bf16.msra.mxu0 %v2285
      %2333 = vmatmul.bf16.gmra.mxu0 %v2276
      %v2334 = vpop.f32.mrf.mxu0
      %v2335 = vadd.f32 0.0, %v2334
      %v2336 = vpop.f32.mrf.mxu0
      %2337 = vdwg.mxu0
      %2338 = vmatpush.bf16.msra.mxu0 0
      %2339 = vmatpush.bf16.msra.mxu0 0
      %2340 = vmatpush.bf16.msra.mxu0 0
      %2341 = vmatpush.bf16.msra.mxu0 0
      %2342 = vmatpush.bf16.msra.mxu0 0
      %2343 = vmatpush.bf16.msra.mxu0 0
      %2344 = vmatpush.bf16.msra.mxu0 0
      %2345 = vmatpush.bf16.msra.mxu0 %v2288
      %2346 = vmatmul.bf16.gmra.mxu0 %v2276
      %v2347 = vpop.f32.mrf.mxu0
      %v2348 = vadd.f32 0.0, %v2347
      %v2349 = vpop.f32.mrf.mxu0
      %2350 = vdwg.mxu0
      %2351 = vmatpush.bf16.msra.mxu0 0
      %2352 = vmatpush.bf16.msra.mxu0 0
      %2353 = vmatpush.bf16.msra.mxu0 0
      %2354 = vmatpush.bf16.msra.mxu0 0
      %2355 = vmatpush.bf16.msra.mxu0 0
      %2356 = vmatpush.bf16.msra.mxu0 0
      %2357 = vmatpush.bf16.msra.mxu0 0
      %2358 = vmatpush.bf16.msra.mxu0 %v2291
      %2359 = vmatmul.bf16.gmra.mxu0 %v2276
      %v2360 = vpop.f32.mrf.mxu0
      %v2361 = vadd.f32 0.0, %v2360
      %v2362 = vpop.f32.mrf.mxu0
      %2363 = vdwg.mxu0
      %2364 = vmatpush.bf16.msra.mxu0 0
      %2365 = vmatpush.bf16.msra.mxu0 0
      %2366 = vmatpush.bf16.msra.mxu0 0
      %2367 = vmatpush.bf16.msra.mxu0 0
      %2368 = vmatpush.bf16.msra.mxu0 0
      %2369 = vmatpush.bf16.msra.mxu0 0
      %2370 = vmatpush.bf16.msra.mxu0 0
      %2371 = vmatpush.bf16.msra.mxu0 %v2294
      %2372 = vmatmul.bf16.gmra.mxu0 %v2276
      %v2373 = vpop.f32.mrf.mxu0
      %v2374 = vadd.f32 0.0, %v2373
      %v2375 = vpop.f32.mrf.mxu0
      %2376 = vdwg.mxu0
      %2377 = vmatpush.bf16.msra.mxu0 0
      %2378 = vmatpush.bf16.msra.mxu0 0
      %2379 = vmatpush.bf16.msra.mxu0 0
      %2380 = vmatpush.bf16.msra.mxu0 0
      %2381 = vmatpush.bf16.msra.mxu0 0
      %2382 = vmatpush.bf16.msra.mxu0 0
      %2383 = vmatpush.bf16.msra.mxu0 0
      %2384 = vmatpush.bf16.msra.mxu0 %v2297
      %2385 = vmatmul.bf16.gmra.mxu0 %v2276
      %v2386 = vpop.f32.mrf.mxu0
      %v2387 = vadd.f32 0.0, %v2386
      %v2388 = vpop.f32.mrf.mxu0
      %2389 = vdwg.mxu0
      %v2390 = vadd.f32 %v2242, %v2309
      %v2391 = vadd.f32 %v2243, %v2322
      %v2392 = vadd.f32 %v2244, %v2335
      %v2393 = vadd.f32 %v2245, %v2348
      %v2394 = vadd.f32 %v2246, %v2361
      %v2395 = vadd.f32 %v2247, %v2374
      %v2396 = vadd.f32 %v2248, %v2387
      %s2397 = scalar_lea.vmem %s1, 60
      %v2398 = vld [vmem:[%s2397] sm:$0xf]
      %2399 = vrot.lane.b32.xlu0 %v209, 8
      %v2400 = vpop.permute.xlu0 %2399
      %2401 = vrot.lane.b32.xlu0 %v210, 8
      %v2402 = vpop.permute.xlu0 %2401
      %2403 = vrot.lane.b32.xlu0 %v211, 8
      %v2404 = vpop.permute.xlu0 %2403
      %2405 = vrot.lane.b32.xlu0 %v212, 8
      %v2406 = vpop.permute.xlu0 %2405
      %2407 = vrot.lane.b32.xlu0 %v213, 8
      %v2408 = vpop.permute.xlu0 %2407
      %2409 = vrot.lane.b32.xlu0 %v214, 8
      %v2410 = vpop.permute.xlu0 %2409
      %2411 = vrot.lane.b32.xlu0 %v215, 8
      %v2412 = vpop.permute.xlu0 %2411
      %2413 = vrot.lane.b32.xlu0 %v216, 8
      %v2414 = vpop.permute.xlu0 %2413
      %vm2415 = vcmask 64512
      %v2416 = vsel %vm2415, %v2400, %v2402
      %v2417 = vsel %vm2415, %v2402, %v2404
      %v2418 = vsel %vm2415, %v2404, %v2406
      %v2419 = vsel %vm2415, %v2406, %v2408
      %v2420 = vsel %vm2415, %v2408, %v2410
      %v2421 = vsel %vm2415, %v2410, %v2412
      %v2422 = vsel %vm2415, %v2412, %v2414
      %v2424 = vsel %vm241, %v2398, 0
      %v2427 = vsel %vm245, %v2416, 0
      %v2430 = vsel %vm245, %v2417, 0
      %v2433 = vsel %vm245, %v2418, 0
      %v2436 = vsel %vm245, %v2419, 0
      %v2439 = vsel %vm245, %v2420, 0
      %v2442 = vsel %vm245, %v2421, 0
      %v2445 = vsel %vm245, %v2422, 0
      %2447 = vmatpush.bf16.msra.mxu0 0
      %2448 = vmatpush.bf16.msra.mxu0 0
      %2449 = vmatpush.bf16.msra.mxu0 0
      %2450 = vmatpush.bf16.msra.mxu0 0
      %2451 = vmatpush.bf16.msra.mxu0 0
      %2452 = vmatpush.bf16.msra.mxu0 0
      %2453 = vmatpush.bf16.msra.mxu0 0
      %2454 = vmatpush.bf16.msra.mxu0 %v2427
      %2455 = vmatmul.bf16.gmra.mxu0 %v2424
      %v2456 = vpop.f32.mrf.mxu0
      %v2457 = vadd.f32 0.0, %v2456
      %v2458 = vpop.f32.mrf.mxu0
      %2459 = vdwg.mxu0
      %2460 = vmatpush.bf16.msra.mxu0 0
      %2461 = vmatpush.bf16.msra.mxu0 0
      %2462 = vmatpush.bf16.msra.mxu0 0
      %2463 = vmatpush.bf16.msra.mxu0 0
      %2464 = vmatpush.bf16.msra.mxu0 0
      %2465 = vmatpush.bf16.msra.mxu0 0
      %2466 = vmatpush.bf16.msra.mxu0 0
      %2467 = vmatpush.bf16.msra.mxu0 %v2430
      %2468 = vmatmul.bf16.gmra.mxu0 %v2424
      %v2469 = vpop.f32.mrf.mxu0
      %v2470 = vadd.f32 0.0, %v2469
      %v2471 = vpop.f32.mrf.mxu0
      %2472 = vdwg.mxu0
      %2473 = vmatpush.bf16.msra.mxu0 0
      %2474 = vmatpush.bf16.msra.mxu0 0
      %2475 = vmatpush.bf16.msra.mxu0 0
      %2476 = vmatpush.bf16.msra.mxu0 0
      %2477 = vmatpush.bf16.msra.mxu0 0
      %2478 = vmatpush.bf16.msra.mxu0 0
      %2479 = vmatpush.bf16.msra.mxu0 0
      %2480 = vmatpush.bf16.msra.mxu0 %v2433
      %2481 = vmatmul.bf16.gmra.mxu0 %v2424
      %v2482 = vpop.f32.mrf.mxu0
      %v2483 = vadd.f32 0.0, %v2482
      %v2484 = vpop.f32.mrf.mxu0
      %2485 = vdwg.mxu0
      %2486 = vmatpush.bf16.msra.mxu0 0
      %2487 = vmatpush.bf16.msra.mxu0 0
      %2488 = vmatpush.bf16.msra.mxu0 0
      %2489 = vmatpush.bf16.msra.mxu0 0
      %2490 = vmatpush.bf16.msra.mxu0 0
      %2491 = vmatpush.bf16.msra.mxu0 0
      %2492 = vmatpush.bf16.msra.mxu0 0
      %2493 = vmatpush.bf16.msra.mxu0 %v2436
      %2494 = vmatmul.bf16.gmra.mxu0 %v2424
      %v2495 = vpop.f32.mrf.mxu0
      %v2496 = vadd.f32 0.0, %v2495
      %v2497 = vpop.f32.mrf.mxu0
      %2498 = vdwg.mxu0
      %2499 = vmatpush.bf16.msra.mxu0 0
      %2500 = vmatpush.bf16.msra.mxu0 0
      %2501 = vmatpush.bf16.msra.mxu0 0
      %2502 = vmatpush.bf16.msra.mxu0 0
      %2503 = vmatpush.bf16.msra.mxu0 0
      %2504 = vmatpush.bf16.msra.mxu0 0
      %2505 = vmatpush.bf16.msra.mxu0 0
      %2506 = vmatpush.bf16.msra.mxu0 %v2439
      %2507 = vmatmul.bf16.gmra.mxu0 %v2424
      %v2508 = vpop.f32.mrf.mxu0
      %v2509 = vadd.f32 0.0, %v2508
      %v2510 = vpop.f32.mrf.mxu0
      %2511 = vdwg.mxu0
      %2512 = vmatpush.bf16.msra.mxu0 0
      %2513 = vmatpush.bf16.msra.mxu0 0
      %2514 = vmatpush.bf16.msra.mxu0 0
      %2515 = vmatpush.bf16.msra.mxu0 0
      %2516 = vmatpush.bf16.msra.mxu0 0
      %2517 = vmatpush.bf16.msra.mxu0 0
      %2518 = vmatpush.bf16.msra.mxu0 0
      %2519 = vmatpush.bf16.msra.mxu0 %v2442
      %2520 = vmatmul.bf16.gmra.mxu0 %v2424
      %v2521 = vpop.f32.mrf.mxu0
      %v2522 = vadd.f32 0.0, %v2521
      %v2523 = vpop.f32.mrf.mxu0
      %2524 = vdwg.mxu0
      %2525 = vmatpush.bf16.msra.mxu0 0
      %2526 = vmatpush.bf16.msra.mxu0 0
      %2527 = vmatpush.bf16.msra.mxu0 0
      %2528 = vmatpush.bf16.msra.mxu0 0
      %2529 = vmatpush.bf16.msra.mxu0 0
      %2530 = vmatpush.bf16.msra.mxu0 0
      %2531 = vmatpush.bf16.msra.mxu0 0
      %2532 = vmatpush.bf16.msra.mxu0 %v2445
      %2533 = vmatmul.bf16.gmra.mxu0 %v2424
      %v2534 = vpop.f32.mrf.mxu0
      %v2535 = vadd.f32 0.0, %v2534
      %v2536 = vpop.f32.mrf.mxu0
      %2537 = vdwg.mxu0
      %v2538 = vadd.f32 %v2390, %v2457
      %v2539 = vadd.f32 %v2391, %v2470
      %v2540 = vadd.f32 %v2392, %v2483
      %v2541 = vadd.f32 %v2393, %v2496
      %v2542 = vadd.f32 %v2394, %v2509
      %v2543 = vadd.f32 %v2395, %v2522
      %v2544 = vadd.f32 %v2396, %v2535
      %s2545 = scalar_lea.vmem %s1, 64
      %v2546 = vld [vmem:[%s2545] sm:$0xf]
      %2547 = vrot.lane.b32.xlu0 %v209, 7
      %v2548 = vpop.permute.xlu0 %2547
      %2549 = vrot.lane.b32.xlu0 %v210, 7
      %v2550 = vpop.permute.xlu0 %2549
      %2551 = vrot.lane.b32.xlu0 %v211, 7
      %v2552 = vpop.permute.xlu0 %2551
      %2553 = vrot.lane.b32.xlu0 %v212, 7
      %v2554 = vpop.permute.xlu0 %2553
      %2555 = vrot.lane.b32.xlu0 %v213, 7
      %v2556 = vpop.permute.xlu0 %2555
      %2557 = vrot.lane.b32.xlu0 %v214, 7
      %v2558 = vpop.permute.xlu0 %2557
      %2559 = vrot.lane.b32.xlu0 %v215, 7
      %v2560 = vpop.permute.xlu0 %2559
      %2561 = vrot.lane.b32.xlu0 %v216, 7
      %v2562 = vpop.permute.xlu0 %2561
      %vm2563 = vcmask 56320
      %v2564 = vsel %vm2563, %v2548, %v2550
      %v2565 = vsel %vm2563, %v2550, %v2552
      %v2566 = vsel %vm2563, %v2552, %v2554
      %v2567 = vsel %vm2563, %v2554, %v2556
      %v2568 = vsel %vm2563, %v2556, %v2558
      %v2569 = vsel %vm2563, %v2558, %v2560
      %v2570 = vsel %vm2563, %v2560, %v2562
      %v2572 = vsel %vm241, %v2546, 0
      %v2575 = vsel %vm245, %v2564, 0
      %v2578 = vsel %vm245, %v2565, 0
      %v2581 = vsel %vm245, %v2566, 0
      %v2584 = vsel %vm245, %v2567, 0
      %v2587 = vsel %vm245, %v2568, 0
      %v2590 = vsel %vm245, %v2569, 0
      %v2593 = vsel %vm245, %v2570, 0
      %2595 = vmatpush.bf16.msra.mxu0 0
      %2596 = vmatpush.bf16.msra.mxu0 0
      %2597 = vmatpush.bf16.msra.mxu0 0
      %2598 = vmatpush.bf16.msra.mxu0 0
      %2599 = vmatpush.bf16.msra.mxu0 0
      %2600 = vmatpush.bf16.msra.mxu0 0
      %2601 = vmatpush.bf16.msra.mxu0 0
      %2602 = vmatpush.bf16.msra.mxu0 %v2575
      %2603 = vmatmul.bf16.gmra.mxu0 %v2572
      %v2604 = vpop.f32.mrf.mxu0
      %v2605 = vadd.f32 0.0, %v2604
      %v2606 = vpop.f32.mrf.mxu0
      %2607 = vdwg.mxu0
      %2608 = vmatpush.bf16.msra.mxu0 0
      %2609 = vmatpush.bf16.msra.mxu0 0
      %2610 = vmatpush.bf16.msra.mxu0 0
      %2611 = vmatpush.bf16.msra.mxu0 0
      %2612 = vmatpush.bf16.msra.mxu0 0
      %2613 = vmatpush.bf16.msra.mxu0 0
      %2614 = vmatpush.bf16.msra.mxu0 0
      %2615 = vmatpush.bf16.msra.mxu0 %v2578
      %2616 = vmatmul.bf16.gmra.mxu0 %v2572
      %v2617 = vpop.f32.mrf.mxu0
      %v2618 = vadd.f32 0.0, %v2617
      %v2619 = vpop.f32.mrf.mxu0
      %2620 = vdwg.mxu0
      %2621 = vmatpush.bf16.msra.mxu0 0
      %2622 = vmatpush.bf16.msra.mxu0 0
      %2623 = vmatpush.bf16.msra.mxu0 0
      %2624 = vmatpush.bf16.msra.mxu0 0
      %2625 = vmatpush.bf16.msra.mxu0 0
      %2626 = vmatpush.bf16.msra.mxu0 0
      %2627 = vmatpush.bf16.msra.mxu0 0
      %2628 = vmatpush.bf16.msra.mxu0 %v2581
      %2629 = vmatmul.bf16.gmra.mxu0 %v2572
      %v2630 = vpop.f32.mrf.mxu0
      %v2631 = vadd.f32 0.0, %v2630
      %v2632 = vpop.f32.mrf.mxu0
      %2633 = vdwg.mxu0
      %2634 = vmatpush.bf16.msra.mxu0 0
      %2635 = vmatpush.bf16.msra.mxu0 0
      %2636 = vmatpush.bf16.msra.mxu0 0
      %2637 = vmatpush.bf16.msra.mxu0 0
      %2638 = vmatpush.bf16.msra.mxu0 0
      %2639 = vmatpush.bf16.msra.mxu0 0
      %2640 = vmatpush.bf16.msra.mxu0 0
      %2641 = vmatpush.bf16.msra.mxu0 %v2584
      %2642 = vmatmul.bf16.gmra.mxu0 %v2572
      %v2643 = vpop.f32.mrf.mxu0
      %v2644 = vadd.f32 0.0, %v2643
      %v2645 = vpop.f32.mrf.mxu0
      %2646 = vdwg.mxu0
      %2647 = vmatpush.bf16.msra.mxu0 0
      %2648 = vmatpush.bf16.msra.mxu0 0
      %2649 = vmatpush.bf16.msra.mxu0 0
      %2650 = vmatpush.bf16.msra.mxu0 0
      %2651 = vmatpush.bf16.msra.mxu0 0
      %2652 = vmatpush.bf16.msra.mxu0 0
      %2653 = vmatpush.bf16.msra.mxu0 0
      %2654 = vmatpush.bf16.msra.mxu0 %v2587
      %2655 = vmatmul.bf16.gmra.mxu0 %v2572
      %v2656 = vpop.f32.mrf.mxu0
      %v2657 = vadd.f32 0.0, %v2656
      %v2658 = vpop.f32.mrf.mxu0
      %2659 = vdwg.mxu0
      %2660 = vmatpush.bf16.msra.mxu0 0
      %2661 = vmatpush.bf16.msra.mxu0 0
      %2662 = vmatpush.bf16.msra.mxu0 0
      %2663 = vmatpush.bf16.msra.mxu0 0
      %2664 = vmatpush.bf16.msra.mxu0 0
      %2665 = vmatpush.bf16.msra.mxu0 0
      %2666 = vmatpush.bf16.msra.mxu0 0
      %2667 = vmatpush.bf16.msra.mxu0 %v2590
      %2668 = vmatmul.bf16.gmra.mxu0 %v2572
      %v2669 = vpop.f32.mrf.mxu0
      %v2670 = vadd.f32 0.0, %v2669
      %v2671 = vpop.f32.mrf.mxu0
      %2672 = vdwg.mxu0
      %2673 = vmatpush.bf16.msra.mxu0 0
      %2674 = vmatpush.bf16.msra.mxu0 0
      %2675 = vmatpush.bf16.msra.mxu0 0
      %2676 = vmatpush.bf16.msra.mxu0 0
      %2677 = vmatpush.bf16.msra.mxu0 0
      %2678 = vmatpush.bf16.msra.mxu0 0
      %2679 = vmatpush.bf16.msra.mxu0 0
      %2680 = vmatpush.bf16.msra.mxu0 %v2593
      %2681 = vmatmul.bf16.gmra.mxu0 %v2572
      %v2682 = vpop.f32.mrf.mxu0
      %v2683 = vadd.f32 0.0, %v2682
      %v2684 = vpop.f32.mrf.mxu0
      %2685 = vdwg.mxu0
      %v2686 = vadd.f32 %v2538, %v2605
      %v2687 = vadd.f32 %v2539, %v2618
      %v2688 = vadd.f32 %v2540, %v2631
      %v2689 = vadd.f32 %v2541, %v2644
      %v2690 = vadd.f32 %v2542, %v2657
      %v2691 = vadd.f32 %v2543, %v2670
      %v2692 = vadd.f32 %v2544, %v2683
      %s2693 = scalar_lea.vmem %s1, 68
      %v2694 = vld [vmem:[%s2693] sm:$0xf]
      %2695 = vrot.lane.b32.xlu0 %v209, 6
      %v2696 = vpop.permute.xlu0 %2695
      %2697 = vrot.lane.b32.xlu0 %v210, 6
      %v2698 = vpop.permute.xlu0 %2697
      %2699 = vrot.lane.b32.xlu0 %v211, 6
      %v2700 = vpop.permute.xlu0 %2699
      %2701 = vrot.lane.b32.xlu0 %v212, 6
      %v2702 = vpop.permute.xlu0 %2701
      %2703 = vrot.lane.b32.xlu0 %v213, 6
      %v2704 = vpop.permute.xlu0 %2703
      %2705 = vrot.lane.b32.xlu0 %v214, 6
      %v2706 = vpop.permute.xlu0 %2705
      %2707 = vrot.lane.b32.xlu0 %v215, 6
      %v2708 = vpop.permute.xlu0 %2707
      %2709 = vrot.lane.b32.xlu0 %v216, 6
      %v2710 = vpop.permute.xlu0 %2709
      %vm2711 = vcmask 48128
      %v2712 = vsel %vm2711, %v2696, %v2698
      %v2713 = vsel %vm2711, %v2698, %v2700
      %v2714 = vsel %vm2711, %v2700, %v2702
      %v2715 = vsel %vm2711, %v2702, %v2704
      %v2716 = vsel %vm2711, %v2704, %v2706
      %v2717 = vsel %vm2711, %v2706, %v2708
      %v2718 = vsel %vm2711, %v2708, %v2710
      %v2720 = vsel %vm241, %v2694, 0
      %v2723 = vsel %vm245, %v2712, 0
      %v2726 = vsel %vm245, %v2713, 0
      %v2729 = vsel %vm245, %v2714, 0
      %v2732 = vsel %vm245, %v2715, 0
      %v2735 = vsel %vm245, %v2716, 0
      %v2738 = vsel %vm245, %v2717, 0
      %v2741 = vsel %vm245, %v2718, 0
      %2743 = vmatpush.bf16.msra.mxu0 0
      %2744 = vmatpush.bf16.msra.mxu0 0
      %2745 = vmatpush.bf16.msra.mxu0 0
      %2746 = vmatpush.bf16.msra.mxu0 0
      %2747 = vmatpush.bf16.msra.mxu0 0
      %2748 = vmatpush.bf16.msra.mxu0 0
      %2749 = vmatpush.bf16.msra.mxu0 0
      %2750 = vmatpush.bf16.msra.mxu0 %v2723
      %2751 = vmatmul.bf16.gmra.mxu0 %v2720
      %v2752 = vpop.f32.mrf.mxu0
      %v2753 = vadd.f32 0.0, %v2752
      %v2754 = vpop.f32.mrf.mxu0
      %2755 = vdwg.mxu0
      %2756 = vmatpush.bf16.msra.mxu0 0
      %2757 = vmatpush.bf16.msra.mxu0 0
      %2758 = vmatpush.bf16.msra.mxu0 0
      %2759 = vmatpush.bf16.msra.mxu0 0
      %2760 = vmatpush.bf16.msra.mxu0 0
      %2761 = vmatpush.bf16.msra.mxu0 0
      %2762 = vmatpush.bf16.msra.mxu0 0
      %2763 = vmatpush.bf16.msra.mxu0 %v2726
      %2764 = vmatmul.bf16.gmra.mxu0 %v2720
      %v2765 = vpop.f32.mrf.mxu0
      %v2766 = vadd.f32 0.0, %v2765
      %v2767 = vpop.f32.mrf.mxu0
      %2768 = vdwg.mxu0
      %2769 = vmatpush.bf16.msra.mxu0 0
      %2770 = vmatpush.bf16.msra.mxu0 0
      %2771 = vmatpush.bf16.msra.mxu0 0
      %2772 = vmatpush.bf16.msra.mxu0 0
      %2773 = vmatpush.bf16.msra.mxu0 0
      %2774 = vmatpush.bf16.msra.mxu0 0
      %2775 = vmatpush.bf16.msra.mxu0 0
      %2776 = vmatpush.bf16.msra.mxu0 %v2729
      %2777 = vmatmul.bf16.gmra.mxu0 %v2720
      %v2778 = vpop.f32.mrf.mxu0
      %v2779 = vadd.f32 0.0, %v2778
      %v2780 = vpop.f32.mrf.mxu0
      %2781 = vdwg.mxu0
      %2782 = vmatpush.bf16.msra.mxu0 0
      %2783 = vmatpush.bf16.msra.mxu0 0
      %2784 = vmatpush.bf16.msra.mxu0 0
      %2785 = vmatpush.bf16.msra.mxu0 0
      %2786 = vmatpush.bf16.msra.mxu0 0
      %2787 = vmatpush.bf16.msra.mxu0 0
      %2788 = vmatpush.bf16.msra.mxu0 0
      %2789 = vmatpush.bf16.msra.mxu0 %v2732
      %2790 = vmatmul.bf16.gmra.mxu0 %v2720
      %v2791 = vpop.f32.mrf.mxu0
      %v2792 = vadd.f32 0.0, %v2791
      %v2793 = vpop.f32.mrf.mxu0
      %2794 = vdwg.mxu0
      %2795 = vmatpush.bf16.msra.mxu0 0
      %2796 = vmatpush.bf16.msra.mxu0 0
      %2797 = vmatpush.bf16.msra.mxu0 0
      %2798 = vmatpush.bf16.msra.mxu0 0
      %2799 = vmatpush.bf16.msra.mxu0 0
      %2800 = vmatpush.bf16.msra.mxu0 0
      %2801 = vmatpush.bf16.msra.mxu0 0
      %2802 = vmatpush.bf16.msra.mxu0 %v2735
      %2803 = vmatmul.bf16.gmra.mxu0 %v2720
      %v2804 = vpop.f32.mrf.mxu0
      %v2805 = vadd.f32 0.0, %v2804
      %v2806 = vpop.f32.mrf.mxu0
      %2807 = vdwg.mxu0
      %2808 = vmatpush.bf16.msra.mxu0 0
      %2809 = vmatpush.bf16.msra.mxu0 0
      %2810 = vmatpush.bf16.msra.mxu0 0
      %2811 = vmatpush.bf16.msra.mxu0 0
      %2812 = vmatpush.bf16.msra.mxu0 0
      %2813 = vmatpush.bf16.msra.mxu0 0
      %2814 = vmatpush.bf16.msra.mxu0 0
      %2815 = vmatpush.bf16.msra.mxu0 %v2738
      %2816 = vmatmul.bf16.gmra.mxu0 %v2720
      %v2817 = vpop.f32.mrf.mxu0
      %v2818 = vadd.f32 0.0, %v2817
      %v2819 = vpop.f32.mrf.mxu0
      %2820 = vdwg.mxu0
      %2821 = vmatpush.bf16.msra.mxu0 0
      %2822 = vmatpush.bf16.msra.mxu0 0
      %2823 = vmatpush.bf16.msra.mxu0 0
      %2824 = vmatpush.bf16.msra.mxu0 0
      %2825 = vmatpush.bf16.msra.mxu0 0
      %2826 = vmatpush.bf16.msra.mxu0 0
      %2827 = vmatpush.bf16.msra.mxu0 0
      %2828 = vmatpush.bf16.msra.mxu0 %v2741
      %2829 = vmatmul.bf16.gmra.mxu0 %v2720
      %v2830 = vpop.f32.mrf.mxu0
      %v2831 = vadd.f32 0.0, %v2830
      %v2832 = vpop.f32.mrf.mxu0
      %2833 = vdwg.mxu0
      %v2834 = vadd.f32 %v2686, %v2753
      %v2835 = vadd.f32 %v2687, %v2766
      %v2836 = vadd.f32 %v2688, %v2779
      %v2837 = vadd.f32 %v2689, %v2792
      %v2838 = vadd.f32 %v2690, %v2805
      %v2839 = vadd.f32 %v2691, %v2818
      %v2840 = vadd.f32 %v2692, %v2831
      %s2841 = scalar_lea.vmem %s1, 72
      %v2842 = vld [vmem:[%s2841] sm:$0xf]
      %v2845 = vunpack.c.l.b16 %v176
      %v2846 = vunpack.c.l.b16 %v181
      %v2847 = vpack.c.b16 %v2846, %v2845
      %2848 = vrot.lane.b32.xlu0 %v210, 56
      %v2849 = vpop.permute.xlu0 %2848
      %2850 = vrot.lane.b32.xlu0 %v211, 56
      %v2851 = vpop.permute.xlu0 %2850
      %2852 = vrot.lane.b32.xlu0 %v212, 56
      %v2853 = vpop.permute.xlu0 %2852
      %2854 = vrot.lane.b32.xlu0 %v213, 56
      %v2855 = vpop.permute.xlu0 %2854
      %2856 = vrot.lane.b32.xlu0 %v214, 56
      %v2857 = vpop.permute.xlu0 %2856
      %2858 = vrot.lane.b32.xlu0 %v215, 56
      %v2859 = vpop.permute.xlu0 %2858
      %2860 = vrot.lane.b32.xlu0 %v216, 56
      %v2861 = vpop.permute.xlu0 %2860
      %2862 = vrot.lane.b32.xlu0 %v2847, 56
      %v2863 = vpop.permute.xlu0 %2862
      %vm2864 = vcmask 457728
      %v2865 = vsel %vm2864, %v2849, %v2851
      %v2866 = vsel %vm2864, %v2851, %v2853
      %v2867 = vsel %vm2864, %v2853, %v2855
      %v2868 = vsel %vm2864, %v2855, %v2857
      %v2869 = vsel %vm2864, %v2857, %v2859
      %v2870 = vsel %vm2864, %v2859, %v2861
      %v2871 = vsel %vm2864, %v2861, %v2863
      %v2873 = vsel %vm241, %v2842, 0
      %v2876 = vsel %vm245, %v2865, 0
      %v2879 = vsel %vm245, %v2866, 0
      %v2882 = vsel %vm245, %v2867, 0
      %v2885 = vsel %vm245, %v2868, 0
      %v2888 = vsel %vm245, %v2869, 0
      %v2891 = vsel %vm245, %v2870, 0
      %v2894 = vsel %vm245, %v2871, 0
      %2896 = vmatpush.bf16.msra.mxu0 0
      %2897 = vmatpush.bf16.msra.mxu0 0
      %2898 = vmatpush.bf16.msra.mxu0 0
      %2899 = vmatpush.bf16.msra.mxu0 0
      %2900 = vmatpush.bf16.msra.mxu0 0
      %2901 = vmatpush.bf16.msra.mxu0 0
      %2902 = vmatpush.bf16.msra.mxu0 0
      %2903 = vmatpush.bf16.msra.mxu0 %v2876
      %2904 = vmatmul.bf16.gmra.mxu0 %v2873
      %v2905 = vpop.f32.mrf.mxu0
      %v2906 = vadd.f32 0.0, %v2905
      %v2907 = vpop.f32.mrf.mxu0
      %2908 = vdwg.mxu0
      %2909 = vmatpush.bf16.msra.mxu0 0
      %2910 = vmatpush.bf16.msra.mxu0 0
      %2911 = vmatpush.bf16.msra.mxu0 0
      %2912 = vmatpush.bf16.msra.mxu0 0
      %2913 = vmatpush.bf16.msra.mxu0 0
      %2914 = vmatpush.bf16.msra.mxu0 0
      %2915 = vmatpush.bf16.msra.mxu0 0
      %2916 = vmatpush.bf16.msra.mxu0 %v2879
      %2917 = vmatmul.bf16.gmra.mxu0 %v2873
      %v2918 = vpop.f32.mrf.mxu0
      %v2919 = vadd.f32 0.0, %v2918
      %v2920 = vpop.f32.mrf.mxu0
      %2921 = vdwg.mxu0
      %2922 = vmatpush.bf16.msra.mxu0 0
      %2923 = vmatpush.bf16.msra.mxu0 0
      %2924 = vmatpush.bf16.msra.mxu0 0
      %2925 = vmatpush.bf16.msra.mxu0 0
      %2926 = vmatpush.bf16.msra.mxu0 0
      %2927 = vmatpush.bf16.msra.mxu0 0
      %2928 = vmatpush.bf16.msra.mxu0 0
      %2929 = vmatpush.bf16.msra.mxu0 %v2882
      %2930 = vmatmul.bf16.gmra.mxu0 %v2873
      %v2931 = vpop.f32.mrf.mxu0
      %v2932 = vadd.f32 0.0, %v2931
      %v2933 = vpop.f32.mrf.mxu0
      %2934 = vdwg.mxu0
      %2935 = vmatpush.bf16.msra.mxu0 0
      %2936 = vmatpush.bf16.msra.mxu0 0
      %2937 = vmatpush.bf16.msra.mxu0 0
      %2938 = vmatpush.bf16.msra.mxu0 0
      %2939 = vmatpush.bf16.msra.mxu0 0
      %2940 = vmatpush.bf16.msra.mxu0 0
      %2941 = vmatpush.bf16.msra.mxu0 0
      %2942 = vmatpush.bf16.msra.mxu0 %v2885
      %2943 = vmatmul.bf16.gmra.mxu0 %v2873
      %v2944 = vpop.f32.mrf.mxu0
      %v2945 = vadd.f32 0.0, %v2944
      %v2946 = vpop.f32.mrf.mxu0
      %2947 = vdwg.mxu0
      %2948 = vmatpush.bf16.msra.mxu0 0
      %2949 = vmatpush.bf16.msra.mxu0 0
      %2950 = vmatpush.bf16.msra.mxu0 0
      %2951 = vmatpush.bf16.msra.mxu0 0
      %2952 = vmatpush.bf16.msra.mxu0 0
      %2953 = vmatpush.bf16.msra.mxu0 0
      %2954 = vmatpush.bf16.msra.mxu0 0
      %2955 = vmatpush.bf16.msra.mxu0 %v2888
      %2956 = vmatmul.bf16.gmra.mxu0 %v2873
      %v2957 = vpop.f32.mrf.mxu0
      %v2958 = vadd.f32 0.0, %v2957
      %v2959 = vpop.f32.mrf.mxu0
      %2960 = vdwg.mxu0
      %2961 = vmatpush.bf16.msra.mxu0 0
      %2962 = vmatpush.bf16.msra.mxu0 0
      %2963 = vmatpush.bf16.msra.mxu0 0
      %2964 = vmatpush.bf16.msra.mxu0 0
      %2965 = vmatpush.bf16.msra.mxu0 0
      %2966 = vmatpush.bf16.msra.mxu0 0
      %2967 = vmatpush.bf16.msra.mxu0 0
      %2968 = vmatpush.bf16.msra.mxu0 %v2891
      %2969 = vmatmul.bf16.gmra.mxu0 %v2873
      %v2970 = vpop.f32.mrf.mxu0
      %v2971 = vadd.f32 0.0, %v2970
      %v2972 = vpop.f32.mrf.mxu0
      %2973 = vdwg.mxu0
      %2974 = vmatpush.bf16.msra.mxu0 0
      %2975 = vmatpush.bf16.msra.mxu0 0
      %2976 = vmatpush.bf16.msra.mxu0 0
      %2977 = vmatpush.bf16.msra.mxu0 0
      %2978 = vmatpush.bf16.msra.mxu0 0
      %2979 = vmatpush.bf16.msra.mxu0 0
      %2980 = vmatpush.bf16.msra.mxu0 0
      %2981 = vmatpush.bf16.msra.mxu0 %v2894
      %2982 = vmatmul.bf16.gmra.mxu0 %v2873
      %v2983 = vpop.f32.mrf.mxu0
      %v2984 = vadd.f32 0.0, %v2983
      %v2985 = vpop.f32.mrf.mxu0
      %2986 = vdwg.mxu0
      %v2987 = vadd.f32 %v2834, %v2906
      %v2988 = vadd.f32 %v2835, %v2919
      %v2989 = vadd.f32 %v2836, %v2932
      %v2990 = vadd.f32 %v2837, %v2945
      %v2991 = vadd.f32 %v2838, %v2958
      %v2992 = vadd.f32 %v2839, %v2971
      %v2993 = vadd.f32 %v2840, %v2984
      %s2994 = scalar_lea.vmem %s1, 76
      %v2995 = vld [vmem:[%s2994] sm:$0xf]
      %2996 = vrot.lane.b32.xlu0 %v210, 55
      %v2997 = vpop.permute.xlu0 %2996
      %2998 = vrot.lane.b32.xlu0 %v211, 55
      %v2999 = vpop.permute.xlu0 %2998
      %3000 = vrot.lane.b32.xlu0 %v212, 55
      %v3001 = vpop.permute.xlu0 %3000
      %3002 = vrot.lane.b32.xlu0 %v213, 55
      %v3003 = vpop.permute.xlu0 %3002
      %3004 = vrot.lane.b32.xlu0 %v214, 55
      %v3005 = vpop.permute.xlu0 %3004
      %3006 = vrot.lane.b32.xlu0 %v215, 55
      %v3007 = vpop.permute.xlu0 %3006
      %3008 = vrot.lane.b32.xlu0 %v216, 55
      %v3009 = vpop.permute.xlu0 %3008
      %3010 = vrot.lane.b32.xlu0 %v2847, 55
      %v3011 = vpop.permute.xlu0 %3010
      %vm3012 = vcmask 449536
      %v3013 = vsel %vm3012, %v2997, %v2999
      %v3014 = vsel %vm3012, %v2999, %v3001
      %v3015 = vsel %vm3012, %v3001, %v3003
      %v3016 = vsel %vm3012, %v3003, %v3005
      %v3017 = vsel %vm3012, %v3005, %v3007
      %v3018 = vsel %vm3012, %v3007, %v3009
      %v3019 = vsel %vm3012, %v3009, %v3011
      %v3021 = vsel %vm241, %v2995, 0
      %v3024 = vsel %vm245, %v3013, 0
      %v3027 = vsel %vm245, %v3014, 0
      %v3030 = vsel %vm245, %v3015, 0
      %v3033 = vsel %vm245, %v3016, 0
      %v3036 = vsel %vm245, %v3017, 0
      %v3039 = vsel %vm245, %v3018, 0
      %v3042 = vsel %vm245, %v3019, 0
      %3044 = vmatpush.bf16.msra.mxu0 0
      %3045 = vmatpush.bf16.msra.mxu0 0
      %3046 = vmatpush.bf16.msra.mxu0 0
      %3047 = vmatpush.bf16.msra.mxu0 0
      %3048 = vmatpush.bf16.msra.mxu0 0
      %3049 = vmatpush.bf16.msra.mxu0 0
      %3050 = vmatpush.bf16.msra.mxu0 0
      %3051 = vmatpush.bf16.msra.mxu0 %v3024
      %3052 = vmatmul.bf16.gmra.mxu0 %v3021
      %v3053 = vpop.f32.mrf.mxu0
      %v3054 = vadd.f32 0.0, %v3053
      %v3055 = vpop.f32.mrf.mxu0
      %3056 = vdwg.mxu0
      %3057 = vmatpush.bf16.msra.mxu0 0
      %3058 = vmatpush.bf16.msra.mxu0 0
      %3059 = vmatpush.bf16.msra.mxu0 0
      %3060 = vmatpush.bf16.msra.mxu0 0
      %3061 = vmatpush.bf16.msra.mxu0 0
      %3062 = vmatpush.bf16.msra.mxu0 0
      %3063 = vmatpush.bf16.msra.mxu0 0
      %3064 = vmatpush.bf16.msra.mxu0 %v3027
      %3065 = vmatmul.bf16.gmra.mxu0 %v3021
      %v3066 = vpop.f32.mrf.mxu0
      %v3067 = vadd.f32 0.0, %v3066
      %v3068 = vpop.f32.mrf.mxu0
      %3069 = vdwg.mxu0
      %3070 = vmatpush.bf16.msra.mxu0 0
      %3071 = vmatpush.bf16.msra.mxu0 0
      %3072 = vmatpush.bf16.msra.mxu0 0
      %3073 = vmatpush.bf16.msra.mxu0 0
      %3074 = vmatpush.bf16.msra.mxu0 0
      %3075 = vmatpush.bf16.msra.mxu0 0
      %3076 = vmatpush.bf16.msra.mxu0 0
      %3077 = vmatpush.bf16.msra.mxu0 %v3030
      %3078 = vmatmul.bf16.gmra.mxu0 %v3021
      %v3079 = vpop.f32.mrf.mxu0
      %v3080 = vadd.f32 0.0, %v3079
      %v3081 = vpop.f32.mrf.mxu0
      %3082 = vdwg.mxu0
      %3083 = vmatpush.bf16.msra.mxu0 0
      %3084 = vmatpush.bf16.msra.mxu0 0
      %3085 = vmatpush.bf16.msra.mxu0 0
      %3086 = vmatpush.bf16.msra.mxu0 0
      %3087 = vmatpush.bf16.msra.mxu0 0
      %3088 = vmatpush.bf16.msra.mxu0 0
      %3089 = vmatpush.bf16.msra.mxu0 0
      %3090 = vmatpush.bf16.msra.mxu0 %v3033
      %3091 = vmatmul.bf16.gmra.mxu0 %v3021
      %v3092 = vpop.f32.mrf.mxu0
      %v3093 = vadd.f32 0.0, %v3092
      %v3094 = vpop.f32.mrf.mxu0
      %3095 = vdwg.mxu0
      %3096 = vmatpush.bf16.msra.mxu0 0
      %3097 = vmatpush.bf16.msra.mxu0 0
      %3098 = vmatpush.bf16.msra.mxu0 0
      %3099 = vmatpush.bf16.msra.mxu0 0
      %3100 = vmatpush.bf16.msra.mxu0 0
      %3101 = vmatpush.bf16.msra.mxu0 0
      %3102 = vmatpush.bf16.msra.mxu0 0
      %3103 = vmatpush.bf16.msra.mxu0 %v3036
      %3104 = vmatmul.bf16.gmra.mxu0 %v3021
      %v3105 = vpop.f32.mrf.mxu0
      %v3106 = vadd.f32 0.0, %v3105
      %v3107 = vpop.f32.mrf.mxu0
      %3108 = vdwg.mxu0
      %3109 = vmatpush.bf16.msra.mxu0 0
      %3110 = vmatpush.bf16.msra.mxu0 0
      %3111 = vmatpush.bf16.msra.mxu0 0
      %3112 = vmatpush.bf16.msra.mxu0 0
      %3113 = vmatpush.bf16.msra.mxu0 0
      %3114 = vmatpush.bf16.msra.mxu0 0
      %3115 = vmatpush.bf16.msra.mxu0 0
      %3116 = vmatpush.bf16.msra.mxu0 %v3039
      %3117 = vmatmul.bf16.gmra.mxu0 %v3021
      %v3118 = vpop.f32.mrf.mxu0
      %v3119 = vadd.f32 0.0, %v3118
      %v3120 = vpop.f32.mrf.mxu0
      %3121 = vdwg.mxu0
      %3122 = vmatpush.bf16.msra.mxu0 0
      %3123 = vmatpush.bf16.msra.mxu0 0
      %3124 = vmatpush.bf16.msra.mxu0 0
      %3125 = vmatpush.bf16.msra.mxu0 0
      %3126 = vmatpush.bf16.msra.mxu0 0
      %3127 = vmatpush.bf16.msra.mxu0 0
      %3128 = vmatpush.bf16.msra.mxu0 0
      %3129 = vmatpush.bf16.msra.mxu0 %v3042
      %3130 = vmatmul.bf16.gmra.mxu0 %v3021
      %v3131 = vpop.f32.mrf.mxu0
      %v3132 = vadd.f32 0.0, %v3131
      %v3133 = vpop.f32.mrf.mxu0
      %3134 = vdwg.mxu0
      %v3135 = vadd.f32 %v2987, %v3054
      %v3136 = vadd.f32 %v2988, %v3067
      %v3137 = vadd.f32 %v2989, %v3080
      %v3138 = vadd.f32 %v2990, %v3093
      %v3139 = vadd.f32 %v2991, %v3106
      %v3140 = vadd.f32 %v2992, %v3119
      %v3141 = vadd.f32 %v2993, %v3132
      %s3142 = scalar_lea.vmem %s1, 80
      %v3143 = vld [vmem:[%s3142] sm:$0xf]
      %3144 = vrot.lane.b32.xlu0 %v210, 54
      %v3145 = vpop.permute.xlu0 %3144
      %3146 = vrot.lane.b32.xlu0 %v211, 54
      %v3147 = vpop.permute.xlu0 %3146
      %3148 = vrot.lane.b32.xlu0 %v212, 54
      %v3149 = vpop.permute.xlu0 %3148
      %3150 = vrot.lane.b32.xlu0 %v213, 54
      %v3151 = vpop.permute.xlu0 %3150
      %3152 = vrot.lane.b32.xlu0 %v214, 54
      %v3153 = vpop.permute.xlu0 %3152
      %3154 = vrot.lane.b32.xlu0 %v215, 54
      %v3155 = vpop.permute.xlu0 %3154
      %3156 = vrot.lane.b32.xlu0 %v216, 54
      %v3157 = vpop.permute.xlu0 %3156
      %3158 = vrot.lane.b32.xlu0 %v2847, 54
      %v3159 = vpop.permute.xlu0 %3158
      %vm3160 = vcmask 441344
      %v3161 = vsel %vm3160, %v3145, %v3147
      %v3162 = vsel %vm3160, %v3147, %v3149
      %v3163 = vsel %vm3160, %v3149, %v3151
      %v3164 = vsel %vm3160, %v3151, %v3153
      %v3165 = vsel %vm3160, %v3153, %v3155
      %v3166 = vsel %vm3160, %v3155, %v3157
      %v3167 = vsel %vm3160, %v3157, %v3159
      %v3169 = vsel %vm241, %v3143, 0
      %v3172 = vsel %vm245, %v3161, 0
      %v3175 = vsel %vm245, %v3162, 0
      %v3178 = vsel %vm245, %v3163, 0
      %v3181 = vsel %vm245, %v3164, 0
      %v3184 = vsel %vm245, %v3165, 0
      %v3187 = vsel %vm245, %v3166, 0
      %v3190 = vsel %vm245, %v3167, 0
      %3192 = vmatpush.bf16.msra.mxu0 0
      %3193 = vmatpush.bf16.msra.mxu0 0
      %3194 = vmatpush.bf16.msra.mxu0 0
      %3195 = vmatpush.bf16.msra.mxu0 0
      %3196 = vmatpush.bf16.msra.mxu0 0
      %3197 = vmatpush.bf16.msra.mxu0 0
      %3198 = vmatpush.bf16.msra.mxu0 0
      %3199 = vmatpush.bf16.msra.mxu0 %v3172
      %3200 = vmatmul.bf16.gmra.mxu0 %v3169
      %v3201 = vpop.f32.mrf.mxu0
      %v3202 = vadd.f32 0.0, %v3201
      %v3203 = vpop.f32.mrf.mxu0
      %3204 = vdwg.mxu0
      %3205 = vmatpush.bf16.msra.mxu0 0
      %3206 = vmatpush.bf16.msra.mxu0 0
      %3207 = vmatpush.bf16.msra.mxu0 0
      %3208 = vmatpush.bf16.msra.mxu0 0
      %3209 = vmatpush.bf16.msra.mxu0 0
      %3210 = vmatpush.bf16.msra.mxu0 0
      %3211 = vmatpush.bf16.msra.mxu0 0
      %3212 = vmatpush.bf16.msra.mxu0 %v3175
      %3213 = vmatmul.bf16.gmra.mxu0 %v3169
      %v3214 = vpop.f32.mrf.mxu0
      %v3215 = vadd.f32 0.0, %v3214
      %v3216 = vpop.f32.mrf.mxu0
      %3217 = vdwg.mxu0
      %3218 = vmatpush.bf16.msra.mxu0 0
      %3219 = vmatpush.bf16.msra.mxu0 0
      %3220 = vmatpush.bf16.msra.mxu0 0
      %3221 = vmatpush.bf16.msra.mxu0 0
      %3222 = vmatpush.bf16.msra.mxu0 0
      %3223 = vmatpush.bf16.msra.mxu0 0
      %3224 = vmatpush.bf16.msra.mxu0 0
      %3225 = vmatpush.bf16.msra.mxu0 %v3178
      %3226 = vmatmul.bf16.gmra.mxu0 %v3169
      %v3227 = vpop.f32.mrf.mxu0
      %v3228 = vadd.f32 0.0, %v3227
      %v3229 = vpop.f32.mrf.mxu0
      %3230 = vdwg.mxu0
      %3231 = vmatpush.bf16.msra.mxu0 0
      %3232 = vmatpush.bf16.msra.mxu0 0
      %3233 = vmatpush.bf16.msra.mxu0 0
      %3234 = vmatpush.bf16.msra.mxu0 0
      %3235 = vmatpush.bf16.msra.mxu0 0
      %3236 = vmatpush.bf16.msra.mxu0 0
      %3237 = vmatpush.bf16.msra.mxu0 0
      %3238 = vmatpush.bf16.msra.mxu0 %v3181
      %3239 = vmatmul.bf16.gmra.mxu0 %v3169
      %v3240 = vpop.f32.mrf.mxu0
      %v3241 = vadd.f32 0.0, %v3240
      %v3242 = vpop.f32.mrf.mxu0
      %3243 = vdwg.mxu0
      %3244 = vmatpush.bf16.msra.mxu0 0
      %3245 = vmatpush.bf16.msra.mxu0 0
      %3246 = vmatpush.bf16.msra.mxu0 0
      %3247 = vmatpush.bf16.msra.mxu0 0
      %3248 = vmatpush.bf16.msra.mxu0 0
      %3249 = vmatpush.bf16.msra.mxu0 0
      %3250 = vmatpush.bf16.msra.mxu0 0
      %3251 = vmatpush.bf16.msra.mxu0 %v3184
      %3252 = vmatmul.bf16.gmra.mxu0 %v3169
      %v3253 = vpop.f32.mrf.mxu0
      %v3254 = vadd.f32 0.0, %v3253
      %v3255 = vpop.f32.mrf.mxu0
      %3256 = vdwg.mxu0
      %3257 = vmatpush.bf16.msra.mxu0 0
      %3258 = vmatpush.bf16.msra.mxu0 0
      %3259 = vmatpush.bf16.msra.mxu0 0
      %3260 = vmatpush.bf16.msra.mxu0 0
      %3261 = vmatpush.bf16.msra.mxu0 0
      %3262 = vmatpush.bf16.msra.mxu0 0
      %3263 = vmatpush.bf16.msra.mxu0 0
      %3264 = vmatpush.bf16.msra.mxu0 %v3187
      %3265 = vmatmul.bf16.gmra.mxu0 %v3169
      %v3266 = vpop.f32.mrf.mxu0
      %v3267 = vadd.f32 0.0, %v3266
      %v3268 = vpop.f32.mrf.mxu0
      %3269 = vdwg.mxu0
      %3270 = vmatpush.bf16.msra.mxu0 0
      %3271 = vmatpush.bf16.msra.mxu0 0
      %3272 = vmatpush.bf16.msra.mxu0 0
      %3273 = vmatpush.bf16.msra.mxu0 0
      %3274 = vmatpush.bf16.msra.mxu0 0
      %3275 = vmatpush.bf16.msra.mxu0 0
      %3276 = vmatpush.bf16.msra.mxu0 0
      %3277 = vmatpush.bf16.msra.mxu0 %v3190
      %3278 = vmatmul.bf16.gmra.mxu0 %v3169
      %v3279 = vpop.f32.mrf.mxu0
      %v3280 = vadd.f32 0.0, %v3279
      %v3281 = vpop.f32.mrf.mxu0
      %3282 = vdwg.mxu0
      %v3283 = vadd.f32 %v3135, %v3202
      %v3284 = vadd.f32 %v3136, %v3215
      %v3285 = vadd.f32 %v3137, %v3228
      %v3286 = vadd.f32 %v3138, %v3241
      %v3287 = vadd.f32 %v3139, %v3254
      %v3288 = vadd.f32 %v3140, %v3267
      %v3289 = vadd.f32 %v3141, %v3280
      %s3290 = scalar_lea.vmem %s1, 84
      %v3291 = vld [vmem:[%s3290] sm:$0xf]
      %3292 = vrot.lane.b32.xlu0 %v210, 46
      %v3293 = vpop.permute.xlu0 %3292
      %3294 = vrot.lane.b32.xlu0 %v211, 46
      %v3295 = vpop.permute.xlu0 %3294
      %3296 = vrot.lane.b32.xlu0 %v212, 46
      %v3297 = vpop.permute.xlu0 %3296
      %3298 = vrot.lane.b32.xlu0 %v213, 46
      %v3299 = vpop.permute.xlu0 %3298
      %3300 = vrot.lane.b32.xlu0 %v214, 46
      %v3301 = vpop.permute.xlu0 %3300
      %3302 = vrot.lane.b32.xlu0 %v215, 46
      %v3303 = vpop.permute.xlu0 %3302
      %3304 = vrot.lane.b32.xlu0 %v216, 46
      %v3305 = vpop.permute.xlu0 %3304
      %3306 = vrot.lane.b32.xlu0 %v2847, 46
      %v3307 = vpop.permute.xlu0 %3306
      %vm3308 = vcmask 375808
      %v3309 = vsel %vm3308, %v3293, %v3295
      %v3310 = vsel %vm3308, %v3295, %v3297
      %v3311 = vsel %vm3308, %v3297, %v3299
      %v3312 = vsel %vm3308, %v3299, %v3301
      %v3313 = vsel %vm3308, %v3301, %v3303
      %v3314 = vsel %vm3308, %v3303, %v3305
      %v3315 = vsel %vm3308, %v3305, %v3307
      %v3317 = vsel %vm241, %v3291, 0
      %v3320 = vsel %vm245, %v3309, 0
      %v3323 = vsel %vm245, %v3310, 0
      %v3326 = vsel %vm245, %v3311, 0
      %v3329 = vsel %vm245, %v3312, 0
      %v3332 = vsel %vm245, %v3313, 0
      %v3335 = vsel %vm245, %v3314, 0
      %v3338 = vsel %vm245, %v3315, 0
      %3340 = vmatpush.bf16.msra.mxu0 0
      %3341 = vmatpush.bf16.msra.mxu0 0
      %3342 = vmatpush.bf16.msra.mxu0 0
      %3343 = vmatpush.bf16.msra.mxu0 0
      %3344 = vmatpush.bf16.msra.mxu0 0
      %3345 = vmatpush.bf16.msra.mxu0 0
      %3346 = vmatpush.bf16.msra.mxu0 0
      %3347 = vmatpush.bf16.msra.mxu0 %v3320
      %3348 = vmatmul.bf16.gmra.mxu0 %v3317
      %v3349 = vpop.f32.mrf.mxu0
      %v3350 = vadd.f32 0.0, %v3349
      %v3351 = vpop.f32.mrf.mxu0
      %3352 = vdwg.mxu0
      %3353 = vmatpush.bf16.msra.mxu0 0
      %3354 = vmatpush.bf16.msra.mxu0 0
      %3355 = vmatpush.bf16.msra.mxu0 0
      %3356 = vmatpush.bf16.msra.mxu0 0
      %3357 = vmatpush.bf16.msra.mxu0 0
      %3358 = vmatpush.bf16.msra.mxu0 0
      %3359 = vmatpush.bf16.msra.mxu0 0
      %3360 = vmatpush.bf16.msra.mxu0 %v3323
      %3361 = vmatmul.bf16.gmra.mxu0 %v3317
      %v3362 = vpop.f32.mrf.mxu0
      %v3363 = vadd.f32 0.0, %v3362
      %v3364 = vpop.f32.mrf.mxu0
      %3365 = vdwg.mxu0
      %3366 = vmatpush.bf16.msra.mxu0 0
      %3367 = vmatpush.bf16.msra.mxu0 0
      %3368 = vmatpush.bf16.msra.mxu0 0
      %3369 = vmatpush.bf16.msra.mxu0 0
      %3370 = vmatpush.bf16.msra.mxu0 0
      %3371 = vmatpush.bf16.msra.mxu0 0
      %3372 = vmatpush.bf16.msra.mxu0 0
      %3373 = vmatpush.bf16.msra.mxu0 %v3326
      %3374 = vmatmul.bf16.gmra.mxu0 %v3317
      %v3375 = vpop.f32.mrf.mxu0
      %v3376 = vadd.f32 0.0, %v3375
      %v3377 = vpop.f32.mrf.mxu0
      %3378 = vdwg.mxu0
      %3379 = vmatpush.bf16.msra.mxu0 0
      %3380 = vmatpush.bf16.msra.mxu0 0
      %3381 = vmatpush.bf16.msra.mxu0 0
      %3382 = vmatpush.bf16.msra.mxu0 0
      %3383 = vmatpush.bf16.msra.mxu0 0
      %3384 = vmatpush.bf16.msra.mxu0 0
      %3385 = vmatpush.bf16.msra.mxu0 0
      %3386 = vmatpush.bf16.msra.mxu0 %v3329
      %3387 = vmatmul.bf16.gmra.mxu0 %v3317
      %v3388 = vpop.f32.mrf.mxu0
      %v3389 = vadd.f32 0.0, %v3388
      %v3390 = vpop.f32.mrf.mxu0
      %3391 = vdwg.mxu0
      %3392 = vmatpush.bf16.msra.mxu0 0
      %3393 = vmatpush.bf16.msra.mxu0 0
      %3394 = vmatpush.bf16.msra.mxu0 0
      %3395 = vmatpush.bf16.msra.mxu0 0
      %3396 = vmatpush.bf16.msra.mxu0 0
      %3397 = vmatpush.bf16.msra.mxu0 0
      %3398 = vmatpush.bf16.msra.mxu0 0
      %3399 = vmatpush.bf16.msra.mxu0 %v3332
      %3400 = vmatmul.bf16.gmra.mxu0 %v3317
      %v3401 = vpop.f32.mrf.mxu0
      %v3402 = vadd.f32 0.0, %v3401
      %v3403 = vpop.f32.mrf.mxu0
      %3404 = vdwg.mxu0
      %3405 = vmatpush.bf16.msra.mxu0 0
      %3406 = vmatpush.bf16.msra.mxu0 0
      %3407 = vmatpush.bf16.msra.mxu0 0
      %3408 = vmatpush.bf16.msra.mxu0 0
      %3409 = vmatpush.bf16.msra.mxu0 0
      %3410 = vmatpush.bf16.msra.mxu0 0
      %3411 = vmatpush.bf16.msra.mxu0 0
      %3412 = vmatpush.bf16.msra.mxu0 %v3335
      %3413 = vmatmul.bf16.gmra.mxu0 %v3317
      %v3414 = vpop.f32.mrf.mxu0
      %v3415 = vadd.f32 0.0, %v3414
      %v3416 = vpop.f32.mrf.mxu0
      %3417 = vdwg.mxu0
      %3418 = vmatpush.bf16.msra.mxu0 0
      %3419 = vmatpush.bf16.msra.mxu0 0
      %3420 = vmatpush.bf16.msra.mxu0 0
      %3421 = vmatpush.bf16.msra.mxu0 0
      %3422 = vmatpush.bf16.msra.mxu0 0
      %3423 = vmatpush.bf16.msra.mxu0 0
      %3424 = vmatpush.bf16.msra.mxu0 0
      %3425 = vmatpush.bf16.msra.mxu0 %v3338
      %3426 = vmatmul.bf16.gmra.mxu0 %v3317
      %v3427 = vpop.f32.mrf.mxu0
      %v3428 = vadd.f32 0.0, %v3427
      %v3429 = vpop.f32.mrf.mxu0
      %3430 = vdwg.mxu0
      %v3431 = vadd.f32 %v3283, %v3350
      %v3432 = vadd.f32 %v3284, %v3363
      %v3433 = vadd.f32 %v3285, %v3376
      %v3434 = vadd.f32 %v3286, %v3389
      %v3435 = vadd.f32 %v3287, %v3402
      %v3436 = vadd.f32 %v3288, %v3415
      %v3437 = vadd.f32 %v3289, %v3428
      %s3438 = scalar_lea.vmem %s1, 88
      %v3439 = vld [vmem:[%s3438] sm:$0xf]
      %3440 = vrot.lane.b32.xlu0 %v210, 45
      %v3441 = vpop.permute.xlu0 %3440
      %3442 = vrot.lane.b32.xlu0 %v211, 45
      %v3443 = vpop.permute.xlu0 %3442
      %3444 = vrot.lane.b32.xlu0 %v212, 45
      %v3445 = vpop.permute.xlu0 %3444
      %3446 = vrot.lane.b32.xlu0 %v213, 45
      %v3447 = vpop.permute.xlu0 %3446
      %3448 = vrot.lane.b32.xlu0 %v214, 45
      %v3449 = vpop.permute.xlu0 %3448
      %3450 = vrot.lane.b32.xlu0 %v215, 45
      %v3451 = vpop.permute.xlu0 %3450
      %3452 = vrot.lane.b32.xlu0 %v216, 45
      %v3453 = vpop.permute.xlu0 %3452
      %3454 = vrot.lane.b32.xlu0 %v2847, 45
      %v3455 = vpop.permute.xlu0 %3454
      %vm3456 = vcmask 367616
      %v3457 = vsel %vm3456, %v3441, %v3443
      %v3458 = vsel %vm3456, %v3443, %v3445
      %v3459 = vsel %vm3456, %v3445, %v3447
      %v3460 = vsel %vm3456, %v3447, %v3449
      %v3461 = vsel %vm3456, %v3449, %v3451
      %v3462 = vsel %vm3456, %v3451, %v3453
      %v3463 = vsel %vm3456, %v3453, %v3455
      %v3465 = vsel %vm241, %v3439, 0
      %v3468 = vsel %vm245, %v3457, 0
      %v3471 = vsel %vm245, %v3458, 0
      %v3474 = vsel %vm245, %v3459, 0
      %v3477 = vsel %vm245, %v3460, 0
      %v3480 = vsel %vm245, %v3461, 0
      %v3483 = vsel %vm245, %v3462, 0
      %v3486 = vsel %vm245, %v3463, 0
      %3488 = vmatpush.bf16.msra.mxu0 0
      %3489 = vmatpush.bf16.msra.mxu0 0
      %3490 = vmatpush.bf16.msra.mxu0 0
      %3491 = vmatpush.bf16.msra.mxu0 0
      %3492 = vmatpush.bf16.msra.mxu0 0
      %3493 = vmatpush.bf16.msra.mxu0 0
      %3494 = vmatpush.bf16.msra.mxu0 0
      %3495 = vmatpush.bf16.msra.mxu0 %v3468
      %3496 = vmatmul.bf16.gmra.mxu0 %v3465
      %v3497 = vpop.f32.mrf.mxu0
      %v3498 = vadd.f32 0.0, %v3497
      %v3499 = vpop.f32.mrf.mxu0
      %3500 = vdwg.mxu0
      %3501 = vmatpush.bf16.msra.mxu0 0
      %3502 = vmatpush.bf16.msra.mxu0 0
      %3503 = vmatpush.bf16.msra.mxu0 0
      %3504 = vmatpush.bf16.msra.mxu0 0
      %3505 = vmatpush.bf16.msra.mxu0 0
      %3506 = vmatpush.bf16.msra.mxu0 0
      %3507 = vmatpush.bf16.msra.mxu0 0
      %3508 = vmatpush.bf16.msra.mxu0 %v3471
      %3509 = vmatmul.bf16.gmra.mxu0 %v3465
      %v3510 = vpop.f32.mrf.mxu0
      %v3511 = vadd.f32 0.0, %v3510
      %v3512 = vpop.f32.mrf.mxu0
      %3513 = vdwg.mxu0
      %3514 = vmatpush.bf16.msra.mxu0 0
      %3515 = vmatpush.bf16.msra.mxu0 0
      %3516 = vmatpush.bf16.msra.mxu0 0
      %3517 = vmatpush.bf16.msra.mxu0 0
      %3518 = vmatpush.bf16.msra.mxu0 0
      %3519 = vmatpush.bf16.msra.mxu0 0
      %3520 = vmatpush.bf16.msra.mxu0 0
      %3521 = vmatpush.bf16.msra.mxu0 %v3474
      %3522 = vmatmul.bf16.gmra.mxu0 %v3465
      %v3523 = vpop.f32.mrf.mxu0
      %v3524 = vadd.f32 0.0, %v3523
      %v3525 = vpop.f32.mrf.mxu0
      %3526 = vdwg.mxu0
      %3527 = vmatpush.bf16.msra.mxu0 0
      %3528 = vmatpush.bf16.msra.mxu0 0
      %3529 = vmatpush.bf16.msra.mxu0 0
      %3530 = vmatpush.bf16.msra.mxu0 0
      %3531 = vmatpush.bf16.msra.mxu0 0
      %3532 = vmatpush.bf16.msra.mxu0 0
      %3533 = vmatpush.bf16.msra.mxu0 0
      %3534 = vmatpush.bf16.msra.mxu0 %v3477
      %3535 = vmatmul.bf16.gmra.mxu0 %v3465
      %v3536 = vpop.f32.mrf.mxu0
      %v3537 = vadd.f32 0.0, %v3536
      %v3538 = vpop.f32.mrf.mxu0
      %3539 = vdwg.mxu0
      %3540 = vmatpush.bf16.msra.mxu0 0
      %3541 = vmatpush.bf16.msra.mxu0 0
      %3542 = vmatpush.bf16.msra.mxu0 0
      %3543 = vmatpush.bf16.msra.mxu0 0
      %3544 = vmatpush.bf16.msra.mxu0 0
      %3545 = vmatpush.bf16.msra.mxu0 0
      %3546 = vmatpush.bf16.msra.mxu0 0
      %3547 = vmatpush.bf16.msra.mxu0 %v3480
      %3548 = vmatmul.bf16.gmra.mxu0 %v3465
      %v3549 = vpop.f32.mrf.mxu0
      %v3550 = vadd.f32 0.0, %v3549
      %v3551 = vpop.f32.mrf.mxu0
      %3552 = vdwg.mxu0
      %3553 = vmatpush.bf16.msra.mxu0 0
      %3554 = vmatpush.bf16.msra.mxu0 0
      %3555 = vmatpush.bf16.msra.mxu0 0
      %3556 = vmatpush.bf16.msra.mxu0 0
      %3557 = vmatpush.bf16.msra.mxu0 0
      %3558 = vmatpush.bf16.msra.mxu0 0
      %3559 = vmatpush.bf16.msra.mxu0 0
      %3560 = vmatpush.bf16.msra.mxu0 %v3483
      %3561 = vmatmul.bf16.gmra.mxu0 %v3465
      %v3562 = vpop.f32.mrf.mxu0
      %v3563 = vadd.f32 0.0, %v3562
      %v3564 = vpop.f32.mrf.mxu0
      %3565 = vdwg.mxu0
      %3566 = vmatpush.bf16.msra.mxu0 0
      %3567 = vmatpush.bf16.msra.mxu0 0
      %3568 = vmatpush.bf16.msra.mxu0 0
      %3569 = vmatpush.bf16.msra.mxu0 0
      %3570 = vmatpush.bf16.msra.mxu0 0
      %3571 = vmatpush.bf16.msra.mxu0 0
      %3572 = vmatpush.bf16.msra.mxu0 0
      %3573 = vmatpush.bf16.msra.mxu0 %v3486
      %3574 = vmatmul.bf16.gmra.mxu0 %v3465
      %v3575 = vpop.f32.mrf.mxu0
      %v3576 = vadd.f32 0.0, %v3575
      %v3577 = vpop.f32.mrf.mxu0
      %3578 = vdwg.mxu0
      %v3579 = vadd.f32 %v3431, %v3498
      %v3580 = vadd.f32 %v3432, %v3511
      %v3581 = vadd.f32 %v3433, %v3524
      %v3582 = vadd.f32 %v3434, %v3537
      %v3583 = vadd.f32 %v3435, %v3550
      %v3584 = vadd.f32 %v3436, %v3563
      %v3585 = vadd.f32 %v3437, %v3576
      %s3586 = scalar_lea.vmem %s1, 92
      %v3587 = vld [vmem:[%s3586] sm:$0xf]
      %3588 = vrot.lane.b32.xlu0 %v210, 44
      %v3589 = vpop.permute.xlu0 %3588
      %3590 = vrot.lane.b32.xlu0 %v211, 44
      %v3591 = vpop.permute.xlu0 %3590
      %3592 = vrot.lane.b32.xlu0 %v212, 44
      %v3593 = vpop.permute.xlu0 %3592
      %3594 = vrot.lane.b32.xlu0 %v213, 44
      %v3595 = vpop.permute.xlu0 %3594
      %3596 = vrot.lane.b32.xlu0 %v214, 44
      %v3597 = vpop.permute.xlu0 %3596
      %3598 = vrot.lane.b32.xlu0 %v215, 44
      %v3599 = vpop.permute.xlu0 %3598
      %3600 = vrot.lane.b32.xlu0 %v216, 44
      %v3601 = vpop.permute.xlu0 %3600
      %3602 = vrot.lane.b32.xlu0 %v2847, 44
      %v3603 = vpop.permute.xlu0 %3602
      %vm3604 = vcmask 359424
      %v3605 = vsel %vm3604, %v3589, %v3591
      %v3606 = vsel %vm3604, %v3591, %v3593
      %v3607 = vsel %vm3604, %v3593, %v3595
      %v3608 = vsel %vm3604, %v3595, %v3597
      %v3609 = vsel %vm3604, %v3597, %v3599
      %v3610 = vsel %vm3604, %v3599, %v3601
      %v3611 = vsel %vm3604, %v3601, %v3603
      %v3613 = vsel %vm241, %v3587, 0
      %v3616 = vsel %vm245, %v3605, 0
      %v3619 = vsel %vm245, %v3606, 0
      %v3622 = vsel %vm245, %v3607, 0
      %v3625 = vsel %vm245, %v3608, 0
      %v3628 = vsel %vm245, %v3609, 0
      %v3631 = vsel %vm245, %v3610, 0
      %v3634 = vsel %vm245, %v3611, 0
      %3636 = vmatpush.bf16.msra.mxu0 0
      %3637 = vmatpush.bf16.msra.mxu0 0
      %3638 = vmatpush.bf16.msra.mxu0 0
      %3639 = vmatpush.bf16.msra.mxu0 0
      %3640 = vmatpush.bf16.msra.mxu0 0
      %3641 = vmatpush.bf16.msra.mxu0 0
      %3642 = vmatpush.bf16.msra.mxu0 0
      %3643 = vmatpush.bf16.msra.mxu0 %v3616
      %3644 = vmatmul.bf16.gmra.mxu0 %v3613
      %v3645 = vpop.f32.mrf.mxu0
      %v3646 = vadd.f32 0.0, %v3645
      %v3647 = vpop.f32.mrf.mxu0
      %3648 = vdwg.mxu0
      %3649 = vmatpush.bf16.msra.mxu0 0
      %3650 = vmatpush.bf16.msra.mxu0 0
      %3651 = vmatpush.bf16.msra.mxu0 0
      %3652 = vmatpush.bf16.msra.mxu0 0
      %3653 = vmatpush.bf16.msra.mxu0 0
      %3654 = vmatpush.bf16.msra.mxu0 0
      %3655 = vmatpush.bf16.msra.mxu0 0
      %3656 = vmatpush.bf16.msra.mxu0 %v3619
      %3657 = vmatmul.bf16.gmra.mxu0 %v3613
      %v3658 = vpop.f32.mrf.mxu0
      %v3659 = vadd.f32 0.0, %v3658
      %v3660 = vpop.f32.mrf.mxu0
      %3661 = vdwg.mxu0
      %3662 = vmatpush.bf16.msra.mxu0 0
      %3663 = vmatpush.bf16.msra.mxu0 0
      %3664 = vmatpush.bf16.msra.mxu0 0
      %3665 = vmatpush.bf16.msra.mxu0 0
      %3666 = vmatpush.bf16.msra.mxu0 0
      %3667 = vmatpush.bf16.msra.mxu0 0
      %3668 = vmatpush.bf16.msra.mxu0 0
      %3669 = vmatpush.bf16.msra.mxu0 %v3622
      %3670 = vmatmul.bf16.gmra.mxu0 %v3613
      %v3671 = vpop.f32.mrf.mxu0
      %v3672 = vadd.f32 0.0, %v3671
      %v3673 = vpop.f32.mrf.mxu0
      %3674 = vdwg.mxu0
      %3675 = vmatpush.bf16.msra.mxu0 0
      %3676 = vmatpush.bf16.msra.mxu0 0
      %3677 = vmatpush.bf16.msra.mxu0 0
      %3678 = vmatpush.bf16.msra.mxu0 0
      %3679 = vmatpush.bf16.msra.mxu0 0
      %3680 = vmatpush.bf16.msra.mxu0 0
      %3681 = vmatpush.bf16.msra.mxu0 0
      %3682 = vmatpush.bf16.msra.mxu0 %v3625
      %3683 = vmatmul.bf16.gmra.mxu0 %v3613
      %v3684 = vpop.f32.mrf.mxu0
      %v3685 = vadd.f32 0.0, %v3684
      %v3686 = vpop.f32.mrf.mxu0
      %3687 = vdwg.mxu0
      %3688 = vmatpush.bf16.msra.mxu0 0
      %3689 = vmatpush.bf16.msra.mxu0 0
      %3690 = vmatpush.bf16.msra.mxu0 0
      %3691 = vmatpush.bf16.msra.mxu0 0
      %3692 = vmatpush.bf16.msra.mxu0 0
      %3693 = vmatpush.bf16.msra.mxu0 0
      %3694 = vmatpush.bf16.msra.mxu0 0
      %3695 = vmatpush.bf16.msra.mxu0 %v3628
      %3696 = vmatmul.bf16.gmra.mxu0 %v3613
      %v3697 = vpop.f32.mrf.mxu0
      %v3698 = vadd.f32 0.0, %v3697
      %v3699 = vpop.f32.mrf.mxu0
      %3700 = vdwg.mxu0
      %3701 = vmatpush.bf16.msra.mxu0 0
      %3702 = vmatpush.bf16.msra.mxu0 0
      %3703 = vmatpush.bf16.msra.mxu0 0
      %3704 = vmatpush.bf16.msra.mxu0 0
      %3705 = vmatpush.bf16.msra.mxu0 0
      %3706 = vmatpush.bf16.msra.mxu0 0
      %3707 = vmatpush.bf16.msra.mxu0 0
      %3708 = vmatpush.bf16.msra.mxu0 %v3631
      %3709 = vmatmul.bf16.gmra.mxu0 %v3613
      %v3710 = vpop.f32.mrf.mxu0
      %v3711 = vadd.f32 0.0, %v3710
      %v3712 = vpop.f32.mrf.mxu0
      %3713 = vdwg.mxu0
      %3714 = vmatpush.bf16.msra.mxu0 0
      %3715 = vmatpush.bf16.msra.mxu0 0
      %3716 = vmatpush.bf16.msra.mxu0 0
      %3717 = vmatpush.bf16.msra.mxu0 0
      %3718 = vmatpush.bf16.msra.mxu0 0
      %3719 = vmatpush.bf16.msra.mxu0 0
      %3720 = vmatpush.bf16.msra.mxu0 0
      %3721 = vmatpush.bf16.msra.mxu0 %v3634
      %3722 = vmatmul.bf16.gmra.mxu0 %v3613
      %v3723 = vpop.f32.mrf.mxu0
      %v3724 = vadd.f32 0.0, %v3723
      %v3725 = vpop.f32.mrf.mxu0
      %3726 = vdwg.mxu0
      %v3727 = vadd.f32 %v3579, %v3646
      %v3728 = vadd.f32 %v3580, %v3659
      %v3729 = vadd.f32 %v3581, %v3672
      %v3730 = vadd.f32 %v3582, %v3685
      %v3731 = vadd.f32 %v3583, %v3698
      %v3732 = vadd.f32 %v3584, %v3711
      %v3733 = vadd.f32 %v3585, %v3724
      %s3734 = scalar_lea.vmem %s1, 96
      %v3735 = vld [vmem:[%s3734] sm:$0xf]
      %3736 = vrot.lane.b32.xlu0 %v210, 36
      %v3737 = vpop.permute.xlu0 %3736
      %3738 = vrot.lane.b32.xlu0 %v211, 36
      %v3739 = vpop.permute.xlu0 %3738
      %3740 = vrot.lane.b32.xlu0 %v212, 36
      %v3741 = vpop.permute.xlu0 %3740
      %3742 = vrot.lane.b32.xlu0 %v213, 36
      %v3743 = vpop.permute.xlu0 %3742
      %3744 = vrot.lane.b32.xlu0 %v214, 36
      %v3745 = vpop.permute.xlu0 %3744
      %3746 = vrot.lane.b32.xlu0 %v215, 36
      %v3747 = vpop.permute.xlu0 %3746
      %3748 = vrot.lane.b32.xlu0 %v216, 36
      %v3749 = vpop.permute.xlu0 %3748
      %3750 = vrot.lane.b32.xlu0 %v2847, 36
      %v3751 = vpop.permute.xlu0 %3750
      %vm3752 = vcmask 293888
      %v3753 = vsel %vm3752, %v3737, %v3739
      %v3754 = vsel %vm3752, %v3739, %v3741
      %v3755 = vsel %vm3752, %v3741, %v3743
      %v3756 = vsel %vm3752, %v3743, %v3745
      %v3757 = vsel %vm3752, %v3745, %v3747
      %v3758 = vsel %vm3752, %v3747, %v3749
      %v3759 = vsel %vm3752, %v3749, %v3751
      %v3761 = vsel %vm241, %v3735, 0
      %v3764 = vsel %vm245, %v3753, 0
      %v3767 = vsel %vm245, %v3754, 0
      %v3770 = vsel %vm245, %v3755, 0
      %v3773 = vsel %vm245, %v3756, 0
      %v3776 = vsel %vm245, %v3757, 0
      %v3779 = vsel %vm245, %v3758, 0
      %v3782 = vsel %vm245, %v3759, 0
      %3784 = vmatpush.bf16.msra.mxu0 0
      %3785 = vmatpush.bf16.msra.mxu0 0
      %3786 = vmatpush.bf16.msra.mxu0 0
      %3787 = vmatpush.bf16.msra.mxu0 0
      %3788 = vmatpush.bf16.msra.mxu0 0
      %3789 = vmatpush.bf16.msra.mxu0 0
      %3790 = vmatpush.bf16.msra.mxu0 0
      %3791 = vmatpush.bf16.msra.mxu0 %v3764
      %3792 = vmatmul.bf16.gmra.mxu0 %v3761
      %v3793 = vpop.f32.mrf.mxu0
      %v3794 = vadd.f32 0.0, %v3793
      %v3795 = vpop.f32.mrf.mxu0
      %3796 = vdwg.mxu0
      %3797 = vmatpush.bf16.msra.mxu0 0
      %3798 = vmatpush.bf16.msra.mxu0 0
      %3799 = vmatpush.bf16.msra.mxu0 0
      %3800 = vmatpush.bf16.msra.mxu0 0
      %3801 = vmatpush.bf16.msra.mxu0 0
      %3802 = vmatpush.bf16.msra.mxu0 0
      %3803 = vmatpush.bf16.msra.mxu0 0
      %3804 = vmatpush.bf16.msra.mxu0 %v3767
      %3805 = vmatmul.bf16.gmra.mxu0 %v3761
      %v3806 = vpop.f32.mrf.mxu0
      %v3807 = vadd.f32 0.0, %v3806
      %v3808 = vpop.f32.mrf.mxu0
      %3809 = vdwg.mxu0
      %3810 = vmatpush.bf16.msra.mxu0 0
      %3811 = vmatpush.bf16.msra.mxu0 0
      %3812 = vmatpush.bf16.msra.mxu0 0
      %3813 = vmatpush.bf16.msra.mxu0 0
      %3814 = vmatpush.bf16.msra.mxu0 0
      %3815 = vmatpush.bf16.msra.mxu0 0
      %3816 = vmatpush.bf16.msra.mxu0 0
      %3817 = vmatpush.bf16.msra.mxu0 %v3770
      %3818 = vmatmul.bf16.gmra.mxu0 %v3761
      %v3819 = vpop.f32.mrf.mxu0
      %v3820 = vadd.f32 0.0, %v3819
      %v3821 = vpop.f32.mrf.mxu0
      %3822 = vdwg.mxu0
      %3823 = vmatpush.bf16.msra.mxu0 0
      %3824 = vmatpush.bf16.msra.mxu0 0
      %3825 = vmatpush.bf16.msra.mxu0 0
      %3826 = vmatpush.bf16.msra.mxu0 0
      %3827 = vmatpush.bf16.msra.mxu0 0
      %3828 = vmatpush.bf16.msra.mxu0 0
      %3829 = vmatpush.bf16.msra.mxu0 0
      %3830 = vmatpush.bf16.msra.mxu0 %v3773
      %3831 = vmatmul.bf16.gmra.mxu0 %v3761
      %v3832 = vpop.f32.mrf.mxu0
      %v3833 = vadd.f32 0.0, %v3832
      %v3834 = vpop.f32.mrf.mxu0
      %3835 = vdwg.mxu0
      %3836 = vmatpush.bf16.msra.mxu0 0
      %3837 = vmatpush.bf16.msra.mxu0 0
      %3838 = vmatpush.bf16.msra.mxu0 0
      %3839 = vmatpush.bf16.msra.mxu0 0
      %3840 = vmatpush.bf16.msra.mxu0 0
      %3841 = vmatpush.bf16.msra.mxu0 0
      %3842 = vmatpush.bf16.msra.mxu0 0
      %3843 = vmatpush.bf16.msra.mxu0 %v3776
      %3844 = vmatmul.bf16.gmra.mxu0 %v3761
      %v3845 = vpop.f32.mrf.mxu0
      %v3846 = vadd.f32 0.0, %v3845
      %v3847 = vpop.f32.mrf.mxu0
      %3848 = vdwg.mxu0
      %3849 = vmatpush.bf16.msra.mxu0 0
      %3850 = vmatpush.bf16.msra.mxu0 0
      %3851 = vmatpush.bf16.msra.mxu0 0
      %3852 = vmatpush.bf16.msra.mxu0 0
      %3853 = vmatpush.bf16.msra.mxu0 0
      %3854 = vmatpush.bf16.msra.mxu0 0
      %3855 = vmatpush.bf16.msra.mxu0 0
      %3856 = vmatpush.bf16.msra.mxu0 %v3779
      %3857 = vmatmul.bf16.gmra.mxu0 %v3761
      %v3858 = vpop.f32.mrf.mxu0
      %v3859 = vadd.f32 0.0, %v3858
      %v3860 = vpop.f32.mrf.mxu0
      %3861 = vdwg.mxu0
      %3862 = vmatpush.bf16.msra.mxu0 0
      %3863 = vmatpush.bf16.msra.mxu0 0
      %3864 = vmatpush.bf16.msra.mxu0 0
      %3865 = vmatpush.bf16.msra.mxu0 0
      %3866 = vmatpush.bf16.msra.mxu0 0
      %3867 = vmatpush.bf16.msra.mxu0 0
      %3868 = vmatpush.bf16.msra.mxu0 0
      %3869 = vmatpush.bf16.msra.mxu0 %v3782
      %3870 = vmatmul.bf16.gmra.mxu0 %v3761
      %v3871 = vpop.f32.mrf.mxu0
      %v3872 = vadd.f32 0.0, %v3871
      %v3873 = vpop.f32.mrf.mxu0
      %3874 = vdwg.mxu0
      %v3875 = vadd.f32 %v3727, %v3794
      %v3876 = vadd.f32 %v3728, %v3807
      %v3877 = vadd.f32 %v3729, %v3820
      %v3878 = vadd.f32 %v3730, %v3833
      %v3879 = vadd.f32 %v3731, %v3846
      %v3880 = vadd.f32 %v3732, %v3859
      %v3881 = vadd.f32 %v3733, %v3872
      %s3882 = scalar_lea.vmem %s1, 100
      %v3883 = vld [vmem:[%s3882] sm:$0xf]
      %3884 = vrot.lane.b32.xlu0 %v210, 35
      %v3885 = vpop.permute.xlu0 %3884
      %3886 = vrot.lane.b32.xlu0 %v211, 35
      %v3887 = vpop.permute.xlu0 %3886
      %3888 = vrot.lane.b32.xlu0 %v212, 35
      %v3889 = vpop.permute.xlu0 %3888
      %3890 = vrot.lane.b32.xlu0 %v213, 35
      %v3891 = vpop.permute.xlu0 %3890
      %3892 = vrot.lane.b32.xlu0 %v214, 35
      %v3893 = vpop.permute.xlu0 %3892
      %3894 = vrot.lane.b32.xlu0 %v215, 35
      %v3895 = vpop.permute.xlu0 %3894
      %3896 = vrot.lane.b32.xlu0 %v216, 35
      %v3897 = vpop.permute.xlu0 %3896
      %3898 = vrot.lane.b32.xlu0 %v2847, 35
      %v3899 = vpop.permute.xlu0 %3898
      %vm3900 = vcmask 285696
      %v3901 = vsel %vm3900, %v3885, %v3887
      %v3902 = vsel %vm3900, %v3887, %v3889
      %v3903 = vsel %vm3900, %v3889, %v3891
      %v3904 = vsel %vm3900, %v3891, %v3893
      %v3905 = vsel %vm3900, %v3893, %v3895
      %v3906 = vsel %vm3900, %v3895, %v3897
      %v3907 = vsel %vm3900, %v3897, %v3899
      %v3909 = vsel %vm241, %v3883, 0
      %v3912 = vsel %vm245, %v3901, 0
      %v3915 = vsel %vm245, %v3902, 0
      %v3918 = vsel %vm245, %v3903, 0
      %v3921 = vsel %vm245, %v3904, 0
      %v3924 = vsel %vm245, %v3905, 0
      %v3927 = vsel %vm245, %v3906, 0
      %v3930 = vsel %vm245, %v3907, 0
      %3932 = vmatpush.bf16.msra.mxu0 0
      %3933 = vmatpush.bf16.msra.mxu0 0
      %3934 = vmatpush.bf16.msra.mxu0 0
      %3935 = vmatpush.bf16.msra.mxu0 0
      %3936 = vmatpush.bf16.msra.mxu0 0
      %3937 = vmatpush.bf16.msra.mxu0 0
      %3938 = vmatpush.bf16.msra.mxu0 0
      %3939 = vmatpush.bf16.msra.mxu0 %v3912
      %3940 = vmatmul.bf16.gmra.mxu0 %v3909
      %v3941 = vpop.f32.mrf.mxu0
      %v3942 = vadd.f32 0.0, %v3941
      %v3943 = vpop.f32.mrf.mxu0
      %3944 = vdwg.mxu0
      %3945 = vmatpush.bf16.msra.mxu0 0
      %3946 = vmatpush.bf16.msra.mxu0 0
      %3947 = vmatpush.bf16.msra.mxu0 0
      %3948 = vmatpush.bf16.msra.mxu0 0
      %3949 = vmatpush.bf16.msra.mxu0 0
      %3950 = vmatpush.bf16.msra.mxu0 0
      %3951 = vmatpush.bf16.msra.mxu0 0
      %3952 = vmatpush.bf16.msra.mxu0 %v3915
      %3953 = vmatmul.bf16.gmra.mxu0 %v3909
      %v3954 = vpop.f32.mrf.mxu0
      %v3955 = vadd.f32 0.0, %v3954
      %v3956 = vpop.f32.mrf.mxu0
      %3957 = vdwg.mxu0
      %3958 = vmatpush.bf16.msra.mxu0 0
      %3959 = vmatpush.bf16.msra.mxu0 0
      %3960 = vmatpush.bf16.msra.mxu0 0
      %3961 = vmatpush.bf16.msra.mxu0 0
      %3962 = vmatpush.bf16.msra.mxu0 0
      %3963 = vmatpush.bf16.msra.mxu0 0
      %3964 = vmatpush.bf16.msra.mxu0 0
      %3965 = vmatpush.bf16.msra.mxu0 %v3918
      %3966 = vmatmul.bf16.gmra.mxu0 %v3909
      %v3967 = vpop.f32.mrf.mxu0
      %v3968 = vadd.f32 0.0, %v3967
      %v3969 = vpop.f32.mrf.mxu0
      %3970 = vdwg.mxu0
      %3971 = vmatpush.bf16.msra.mxu0 0
      %3972 = vmatpush.bf16.msra.mxu0 0
      %3973 = vmatpush.bf16.msra.mxu0 0
      %3974 = vmatpush.bf16.msra.mxu0 0
      %3975 = vmatpush.bf16.msra.mxu0 0
      %3976 = vmatpush.bf16.msra.mxu0 0
      %3977 = vmatpush.bf16.msra.mxu0 0
      %3978 = vmatpush.bf16.msra.mxu0 %v3921
      %3979 = vmatmul.bf16.gmra.mxu0 %v3909
      %v3980 = vpop.f32.mrf.mxu0
      %v3981 = vadd.f32 0.0, %v3980
      %v3982 = vpop.f32.mrf.mxu0
      %3983 = vdwg.mxu0
      %3984 = vmatpush.bf16.msra.mxu0 0
      %3985 = vmatpush.bf16.msra.mxu0 0
      %3986 = vmatpush.bf16.msra.mxu0 0
      %3987 = vmatpush.bf16.msra.mxu0 0
      %3988 = vmatpush.bf16.msra.mxu0 0
      %3989 = vmatpush.bf16.msra.mxu0 0
      %3990 = vmatpush.bf16.msra.mxu0 0
      %3991 = vmatpush.bf16.msra.mxu0 %v3924
      %3992 = vmatmul.bf16.gmra.mxu0 %v3909
      %v3993 = vpop.f32.mrf.mxu0
      %v3994 = vadd.f32 0.0, %v3993
      %v3995 = vpop.f32.mrf.mxu0
      %3996 = vdwg.mxu0
      %3997 = vmatpush.bf16.msra.mxu0 0
      %3998 = vmatpush.bf16.msra.mxu0 0
      %3999 = vmatpush.bf16.msra.mxu0 0
      %4000 = vmatpush.bf16.msra.mxu0 0
      %4001 = vmatpush.bf16.msra.mxu0 0
      %4002 = vmatpush.bf16.msra.mxu0 0
      %4003 = vmatpush.bf16.msra.mxu0 0
      %4004 = vmatpush.bf16.msra.mxu0 %v3927
      %4005 = vmatmul.bf16.gmra.mxu0 %v3909
      %v4006 = vpop.f32.mrf.mxu0
      %v4007 = vadd.f32 0.0, %v4006
      %v4008 = vpop.f32.mrf.mxu0
      %4009 = vdwg.mxu0
      %4010 = vmatpush.bf16.msra.mxu0 0
      %4011 = vmatpush.bf16.msra.mxu0 0
      %4012 = vmatpush.bf16.msra.mxu0 0
      %4013 = vmatpush.bf16.msra.mxu0 0
      %4014 = vmatpush.bf16.msra.mxu0 0
      %4015 = vmatpush.bf16.msra.mxu0 0
      %4016 = vmatpush.bf16.msra.mxu0 0
      %4017 = vmatpush.bf16.msra.mxu0 %v3930
      %4018 = vmatmul.bf16.gmra.mxu0 %v3909
      %v4019 = vpop.f32.mrf.mxu0
      %v4020 = vadd.f32 0.0, %v4019
      %v4021 = vpop.f32.mrf.mxu0
      %4022 = vdwg.mxu0
      %v4023 = vadd.f32 %v3875, %v3942
      %v4024 = vadd.f32 %v3876, %v3955
      %v4025 = vadd.f32 %v3877, %v3968
      %v4026 = vadd.f32 %v3878, %v3981
      %v4027 = vadd.f32 %v3879, %v3994
      %v4028 = vadd.f32 %v3880, %v4007
      %v4029 = vadd.f32 %v3881, %v4020
      %s4030 = scalar_lea.vmem %s1, 104
      %v4031 = vld [vmem:[%s4030] sm:$0xf]
      %4032 = vrot.lane.b32.xlu0 %v210, 34
      %v4033 = vpop.permute.xlu0 %4032
      %4034 = vrot.lane.b32.xlu0 %v211, 34
      %v4035 = vpop.permute.xlu0 %4034
      %4036 = vrot.lane.b32.xlu0 %v212, 34
      %v4037 = vpop.permute.xlu0 %4036
      %4038 = vrot.lane.b32.xlu0 %v213, 34
      %v4039 = vpop.permute.xlu0 %4038
      %4040 = vrot.lane.b32.xlu0 %v214, 34
      %v4041 = vpop.permute.xlu0 %4040
      %4042 = vrot.lane.b32.xlu0 %v215, 34
      %v4043 = vpop.permute.xlu0 %4042
      %4044 = vrot.lane.b32.xlu0 %v216, 34
      %v4045 = vpop.permute.xlu0 %4044
      %4046 = vrot.lane.b32.xlu0 %v2847, 34
      %v4047 = vpop.permute.xlu0 %4046
      %vm4048 = vcmask 277504
      %v4049 = vsel %vm4048, %v4033, %v4035
      %v4050 = vsel %vm4048, %v4035, %v4037
      %v4051 = vsel %vm4048, %v4037, %v4039
      %v4052 = vsel %vm4048, %v4039, %v4041
      %v4053 = vsel %vm4048, %v4041, %v4043
      %v4054 = vsel %vm4048, %v4043, %v4045
      %v4055 = vsel %vm4048, %v4045, %v4047
      %v4057 = vsel %vm241, %v4031, 0
      %v4060 = vsel %vm245, %v4049, 0
      %v4063 = vsel %vm245, %v4050, 0
      %v4066 = vsel %vm245, %v4051, 0
      %v4069 = vsel %vm245, %v4052, 0
      %v4072 = vsel %vm245, %v4053, 0
      %v4075 = vsel %vm245, %v4054, 0
      %v4078 = vsel %vm245, %v4055, 0
      %4080 = vmatpush.bf16.msra.mxu0 0
      %4081 = vmatpush.bf16.msra.mxu0 0
      %4082 = vmatpush.bf16.msra.mxu0 0
      %4083 = vmatpush.bf16.msra.mxu0 0
      %4084 = vmatpush.bf16.msra.mxu0 0
      %4085 = vmatpush.bf16.msra.mxu0 0
      %4086 = vmatpush.bf16.msra.mxu0 0
      %4087 = vmatpush.bf16.msra.mxu0 %v4060
      %4088 = vmatmul.bf16.gmra.mxu0 %v4057
      %v4089 = vpop.f32.mrf.mxu0
      %v4090 = vadd.f32 0.0, %v4089
      %v4091 = vpop.f32.mrf.mxu0
      %4092 = vdwg.mxu0
      %4093 = vmatpush.bf16.msra.mxu0 0
      %4094 = vmatpush.bf16.msra.mxu0 0
      %4095 = vmatpush.bf16.msra.mxu0 0
      %4096 = vmatpush.bf16.msra.mxu0 0
      %4097 = vmatpush.bf16.msra.mxu0 0
      %4098 = vmatpush.bf16.msra.mxu0 0
      %4099 = vmatpush.bf16.msra.mxu0 0
      %4100 = vmatpush.bf16.msra.mxu0 %v4063
      %4101 = vmatmul.bf16.gmra.mxu0 %v4057
      %v4102 = vpop.f32.mrf.mxu0
      %v4103 = vadd.f32 0.0, %v4102
      %v4104 = vpop.f32.mrf.mxu0
      %4105 = vdwg.mxu0
      %4106 = vmatpush.bf16.msra.mxu0 0
      %4107 = vmatpush.bf16.msra.mxu0 0
      %4108 = vmatpush.bf16.msra.mxu0 0
      %4109 = vmatpush.bf16.msra.mxu0 0
      %4110 = vmatpush.bf16.msra.mxu0 0
      %4111 = vmatpush.bf16.msra.mxu0 0
      %4112 = vmatpush.bf16.msra.mxu0 0
      %4113 = vmatpush.bf16.msra.mxu0 %v4066
      %4114 = vmatmul.bf16.gmra.mxu0 %v4057
      %v4115 = vpop.f32.mrf.mxu0
      %v4116 = vadd.f32 0.0, %v4115
      %v4117 = vpop.f32.mrf.mxu0
      %4118 = vdwg.mxu0
      %4119 = vmatpush.bf16.msra.mxu0 0
      %4120 = vmatpush.bf16.msra.mxu0 0
      %4121 = vmatpush.bf16.msra.mxu0 0
      %4122 = vmatpush.bf16.msra.mxu0 0
      %4123 = vmatpush.bf16.msra.mxu0 0
      %4124 = vmatpush.bf16.msra.mxu0 0
      %4125 = vmatpush.bf16.msra.mxu0 0
      %4126 = vmatpush.bf16.msra.mxu0 %v4069
      %4127 = vmatmul.bf16.gmra.mxu0 %v4057
      %v4128 = vpop.f32.mrf.mxu0
      %v4129 = vadd.f32 0.0, %v4128
      %v4130 = vpop.f32.mrf.mxu0
      %4131 = vdwg.mxu0
      %4132 = vmatpush.bf16.msra.mxu0 0
      %4133 = vmatpush.bf16.msra.mxu0 0
      %4134 = vmatpush.bf16.msra.mxu0 0
      %4135 = vmatpush.bf16.msra.mxu0 0
      %4136 = vmatpush.bf16.msra.mxu0 0
      %4137 = vmatpush.bf16.msra.mxu0 0
      %4138 = vmatpush.bf16.msra.mxu0 0
      %4139 = vmatpush.bf16.msra.mxu0 %v4072
      %4140 = vmatmul.bf16.gmra.mxu0 %v4057
      %v4141 = vpop.f32.mrf.mxu0
      %v4142 = vadd.f32 0.0, %v4141
      %v4143 = vpop.f32.mrf.mxu0
      %4144 = vdwg.mxu0
      %4145 = vmatpush.bf16.msra.mxu0 0
      %4146 = vmatpush.bf16.msra.mxu0 0
      %4147 = vmatpush.bf16.msra.mxu0 0
      %4148 = vmatpush.bf16.msra.mxu0 0
      %4149 = vmatpush.bf16.msra.mxu0 0
      %4150 = vmatpush.bf16.msra.mxu0 0
      %4151 = vmatpush.bf16.msra.mxu0 0
      %4152 = vmatpush.bf16.msra.mxu0 %v4075
      %4153 = vmatmul.bf16.gmra.mxu0 %v4057
      %v4154 = vpop.f32.mrf.mxu0
      %v4155 = vadd.f32 0.0, %v4154
      %v4156 = vpop.f32.mrf.mxu0
      %4157 = vdwg.mxu0
      %4158 = vmatpush.bf16.msra.mxu0 0
      %4159 = vmatpush.bf16.msra.mxu0 0
      %4160 = vmatpush.bf16.msra.mxu0 0
      %4161 = vmatpush.bf16.msra.mxu0 0
      %4162 = vmatpush.bf16.msra.mxu0 0
      %4163 = vmatpush.bf16.msra.mxu0 0
      %4164 = vmatpush.bf16.msra.mxu0 0
      %4165 = vmatpush.bf16.msra.mxu0 %v4078
      %4166 = vmatmul.bf16.gmra.mxu0 %v4057
      %v4167 = vpop.f32.mrf.mxu0
      %v4168 = vadd.f32 0.0, %v4167
      %v4169 = vpop.f32.mrf.mxu0
      %4170 = vdwg.mxu0
      %v4171 = vadd.f32 %v4023, %v4090
      %v4172 = vadd.f32 %v4024, %v4103
      %v4173 = vadd.f32 %v4025, %v4116
      %v4174 = vadd.f32 %v4026, %v4129
      %v4175 = vadd.f32 %v4027, %v4142
      %v4176 = vadd.f32 %v4028, %v4155
      %v4177 = vadd.f32 %v4029, %v4168
      %v4178 = vld [vmem:[%s2] sm:$0xff]
      %4180 = vset.pattern.permute.xlu0 0
      %4181 = vperm.xlu0 %4180, %v4178
      %v4182 = vpop.permute.xlu0 %4181
      %v4184 = vadd.f32 %v4171, %v4182
      %v4185 = vadd.f32 %v4172, %v4182
      %v4186 = vadd.f32 %v4173, %v4182
      %v4187 = vadd.f32 %v4174, %v4182
      %v4188 = vadd.f32 %v4175, %v4182
      %v4189 = vadd.f32 %v4176, %v4182
      %v4190 = vadd.f32 %v4177, %v4182
      %v4191 = vmax.f32 %v4184, 0.0
      %v4192 = vmax.f32 %v4185, 0.0
      %v4193 = vmax.f32 %v4186, 0.0
      %v4194 = vmax.f32 %v4187, 0.0
      %v4195 = vmax.f32 %v4188, 0.0
      %v4196 = vmax.f32 %v4189, 0.0
      %v4197 = vmax.f32 %v4190, 0.0
      %v4198 = vpack.c.bf16 %v4192, %v4191
      %v4199 = vpack.c.bf16 %v4194, %v4193
      %v4200 = vpack.c.bf16 %v4196, %v4195
      %v4201 = vpack.c.bf16 %v4197, %v4197
      %4202 = vst [vmem:[%s170] sm:$0xff] %v4198
      %4203 = vst [vmem:[%s170 + $0x8] sm:$0xff] %v4199
      %4204 = vst [vmem:[%s170 + $0x10] sm:$0xff] %v4200
      %4205 = vst [vmem:[%s170 + $0x18] sm:$0xf] %v4201
      %p4206 = scmp.lt.s32.totalorder %s14, 1
      %s4207 = scalar_select %p4206, %s14, 1
      %s4208 = smul.addr %s4207, 7
      %s4209 = smul.addr %s4208, 4
      %s4210 = scalar_lea.vmem %s3, %s4209
      // Predicated region
      $region33: #{forward.2} parent=31 // pred_check
        %p4211 = pneg %p100
      $region34: #{forward.2} parent=31 // pred_check_branch
        %4213 = sbr.rel (%p4211) target = $region36
      $region35: #{forward.2} parent=31 // pred_region
        _
      $region36: #{forward.2} parent=31 // pred_fallthru
        _
    $region32: #{forward.2} parent=5 // pred_fallthru
      _
    %p4214 = scmp.le.s32.totalorder 2, %s9
    // Predicated region
    $region37: #{forward.2} parent=5 // pred_check
      %p4215 = pneg %p4214
    $region38: #{forward.2} parent=5 // pred_check_branch
      %4217 = sbr.rel (%p4215) target = $region40
    $region39: #{forward.2} parent=5 // pred_region
      %s4218 = ssub.s32 %s9, 2
      // Predicated region
      $region41: #{forward.2} parent=39 // pred_check
        %p4219 = pneg %p106
      $region42: #{forward.2} parent=39 // pred_check_branch
        %4221 = sbr.rel (%p4219) target = $region44
      $region43: #{forward.2} parent=39 // pred_region
        %p4222 = scmp.lt.s32.totalorder %s15, 1
        %s4223 = scalar_select %p4222, %s15, 1
        %s4224 = smul.addr %s4223, 7
        %s4225 = smul.addr %s4224, 4
        %s4226 = scalar_lea.vmem %s3, %s4225
      $region44: #{forward.2} parent=39 // pred_fallthru
        _
    $region40: #{forward.2} parent=5 // pred_fallthru
      _
  $region6: #{forward.2} parent=0 // loop_footer
    %s13 = sadd.s32 1, %s9
  $region7: #{forward.2} parent=0 // loop_footer_branch
    %8 = sbr.rel target = $region3
  $region8: #{forward.2} parent=0 // loop_exit
    _

// kernel: forward.3
$region0: #{forward.3}
  #allocation0 [shape = 'u32[]', space=smem, size = 0x4, offset = 0x4, fixed_abs, tag = 'smem constant byte address 0x4 - core index']
  #allocation1 [shape = 'u32[72,128]{1,0:T(1,128)}', space=vmem, size = 0x9000, scoped, tag = 'internal scratch']
  %s0 = inlined_call_operand.vmem [shape: bf16[2,4,1152], index: 0, kind: input, shape index: {}]
  %s1 = inlined_call_operand.vmem [shape: bf16[27,8,4], index: 1, kind: input, shape index: {}]
  %s2 = inlined_call_operand.vmem [shape: f32[8,1], index: 2, kind: input, shape index: {}]
  %s3 = inlined_call_operand.vmem [shape: f32[2,8,896], index: 3, kind: output, shape index: {}]
  %s4 = sld [smem:[#allocation0]]
  $region45: #{forward.3} parent=0
    _
  %s6 = ssub.s32 1, %s4
  %s7 = scalar_select 0, %s6, %s4
  loop: start=0, step=1, limit=4
  $region2: #{forward.3} parent=0 // loop_pre_header
    _
  $region3: #{forward.3} parent=0 // loop_header
    %s9 = sphi 0, %s13
    %p10 = scmp.ge.s32.totalorder %s9, 4
    %s19 = sphi 0, %s21
    %s22 = sphi 0, %s19
    %s23 = sphi 0, %s22
    %s39 = sphi 0, %s23
    %s43 = sphi 0, %s43
    %s45 = sphi 0, %s43
    %s46 = sphi 0, %s45
    %s60 = sphi 0, %s46
    %s64 = sphi 0, %s64
    %s66 = sphi 0, %s64
    %s67 = sphi 0, %s66
    %s81 = sphi 0, %s67
    %s87 = sphi 0, %s89
    %s90 = sphi 0, %s87
    %s91 = sphi 0, %s90
    %s107 = sphi 0, %s91
  $region4: #{forward.3} parent=0 // loop_header_branch
    %12 = sbr.rel (%p10) target = $region8
  $region5: #{forward.3} parent=0 // loop_body
    %s14 = ssub.s32 %s9, 1
    %s15 = ssub.s32 %s9, 2
    %s16 = sadd.s32 %s9, 1
    %s17 = ssub.s32 %s9, %s16
    %p18 = scmp.eq.s32.totalorder %s17, 0
    %s20 = sadd.s32 %s19, 1
    %s21 = scalar_select %p18, %s19, %s20
    %p24 = pneg %p18
    %p25 = scmp.eq.s32.totalorder %s9, 1
    %p26 = por %p24, %p25
    %p27 = scmp.ne.s32.totalorder %s19, %s22
    %p28 = scmp.eq.s32.totalorder %s9, 0
    %p29 = por %p27, %p28
    %p30 = scmp.ne.s32.totalorder %s19, %s22
    %p31 = scmp.eq.s32.totalorder %s14, 1
    %p32 = por %p30, %p31
    %p33 = scmp.ne.s32.totalorder %s22, %s23
    %p34 = scmp.eq.s32.totalorder %s14, 0
    %p35 = por %p33, %p34
    %p36 = scmp.ne.s32.totalorder %s22, %s23
    %p37 = scmp.eq.s32.totalorder %s15, 1
    %p38 = por %p36, %p37
    %p40 = scmp.ne.s32.totalorder %s23, %s39
    %p41 = scmp.eq.s32.totalorder %s15, 0
    %p42 = por %p40, %p41
    %s44 = sadd.s32 %s43, 1
    %p47 = scmp.eq.s32.totalorder %s9, 1
    %p48 = scmp.ne.s32.totalorder %s43, %s45
    %p49 = scmp.eq.s32.totalorder %s9, 0
    %p50 = por %p48, %p49
    %p51 = scmp.ne.s32.totalorder %s43, %s45
    %p52 = scmp.eq.s32.totalorder %s14, 1
    %p53 = por %p51, %p52
    %p54 = scmp.ne.s32.totalorder %s45, %s46
    %p55 = scmp.eq.s32.totalorder %s14, 0
    %p56 = por %p54, %p55
    %p57 = scmp.ne.s32.totalorder %s45, %s46
    %p58 = scmp.eq.s32.totalorder %s15, 1
    %p59 = por %p57, %p58
    %p61 = scmp.ne.s32.totalorder %s46, %s60
    %p62 = scmp.eq.s32.totalorder %s15, 0
    %p63 = por %p61, %p62
    %s65 = sadd.s32 %s64, 1
    %p68 = scmp.eq.s32.totalorder %s9, 1
    %p69 = scmp.ne.s32.totalorder %s64, %s66
    %p70 = scmp.eq.s32.totalorder %s9, 0
    %p71 = por %p69, %p70
    %p72 = scmp.ne.s32.totalorder %s64, %s66
    %p73 = scmp.eq.s32.totalorder %s14, 1
    %p74 = por %p72, %p73
    %p75 = scmp.ne.s32.totalorder %s66, %s67
    %p76 = scmp.eq.s32.totalorder %s14, 0
    %p77 = por %p75, %p76
    %p78 = scmp.ne.s32.totalorder %s66, %s67
    %p79 = scmp.eq.s32.totalorder %s15, 1
    %p80 = por %p78, %p79
    %p82 = scmp.ne.s32.totalorder %s67, %s81
    %p83 = scmp.eq.s32.totalorder %s15, 0
    %p84 = por %p82, %p83
    %s85 = ssub.s32 %s9, %s16
    %p86 = scmp.eq.s32.totalorder %s85, 0
    %s88 = sadd.s32 %s87, 1
    %s89 = scalar_select %p86, %s87, %s88
    %p92 = pneg %p86
    %p93 = scmp.eq.s32.totalorder %s9, 1
    %p94 = por %p92, %p93
    %p95 = scmp.ne.s32.totalorder %s87, %s90
    %p96 = scmp.eq.s32.totalorder %s9, 0
    %p97 = por %p95, %p96
    %p98 = scmp.ne.s32.totalorder %s87, %s90
    %p99 = scmp.eq.s32.totalorder %s14, 1
    %p100 = por %p98, %p99
    %p101 = scmp.ne.s32.totalorder %s90, %s91
    %p102 = scmp.eq.s32.totalorder %s14, 0
    %p103 = por %p101, %p102
    %p104 = scmp.ne.s32.totalorder %s90, %s91
    %p105 = scmp.eq.s32.totalorder %s15, 1
    %p106 = por %p104, %p105
    %p108 = scmp.ne.s32.totalorder %s91, %s107
    %p109 = scmp.eq.s32.totalorder %s15, 0
    %p110 = por %p108, %p109
    %p111 = scmp.le.s32.totalorder 1, %s9
    %p112 = scmp.lt.s32.totalorder %s9, 3
    %p113 = pnand %p111, %p112
    %p114 = pneg %p113
    // Predicated region
    $region9: #{forward.3} parent=5 // pred_check
      _
    $region10: #{forward.3} parent=5 // pred_check_branch
      %116 = sbr.rel (%p113) target = $region12
    $region11: #{forward.3} parent=5 // pred_region
      %s117 = ssub.s32 %s9, 1
      // Predicated region
      $region13: #{forward.3} parent=11 // pred_check
        %p118 = pneg %p56
      $region14: #{forward.3} parent=11 // pred_check_branch
        %120 = sbr.rel (%p118) target = $region16
      $region15: #{forward.3} parent=11 // pred_region
        _
      $region16: #{forward.3} parent=11 // pred_fallthru
        _
      // Predicated region
      $region17: #{forward.3} parent=11 // pred_check
        %p121 = pneg %p77
      $region18: #{forward.3} parent=11 // pred_check_branch
        %123 = sbr.rel (%p121) target = $region20
      $region19: #{forward.3} parent=11 // pred_region
        _
      $region20: #{forward.3} parent=11 // pred_fallthru
        _
    $region12: #{forward.3} parent=5 // pred_fallthru
      _
    %p124 = scmp.lt.s32.totalorder %s9, 2
    // Predicated region
    $region21: #{forward.3} parent=5 // pred_check
      %p125 = pneg %p124
    $region22: #{forward.3} parent=5 // pred_check_branch
      %127 = sbr.rel (%p125) target = $region24
    $region23: #{forward.3} parent=5 // pred_region
      // Predicated region
      $region25: #{forward.3} parent=23 // pred_check
        %p128 = pneg %p29
      $region26: #{forward.3} parent=23 // pred_check_branch
        %130 = sbr.rel (%p128) target = $region28
      $region27: #{forward.3} parent=23 // pred_region
        %p131 = scmp.lt.s32.totalorder %s9, 1
        %s132 = scalar_select %p131, %s9, 1
        %s133 = smul.addr %s132, 9
        %s134 = smul.addr %s133, 2
        %s135 = scalar_lea.vmem %s0, %s134
      $region28: #{forward.3} parent=23 // pred_fallthru
        _
    $region24: #{forward.3} parent=5 // pred_fallthru
      _
    %p136 = scmp.le.s32.totalorder 1, %s9
    %p137 = scmp.lt.s32.totalorder %s9, 3
    %p138 = pnand %p136, %p137
    %p139 = pneg %p138
    // Predicated region
    $region29: #{forward.3} parent=5 // pred_check
      _
    $region30: #{forward.3} parent=5 // pred_check_branch
      %141 = sbr.rel (%p138) target = $region32
    $region31: #{forward.3} parent=5 // pred_region
      %s142 = ssub.s32 %s9, 1
      %p143 = scmp.lt.s32.totalorder %s14, 1
      %s144 = scalar_select %p143, %s14, 1
      %s145 = smul.addr %s144, 9
      %s146 = smul.addr %s145, 2
      %s147 = scalar_lea.vmem %s0, %s146
      %p148 = pneg %p35
      %p149 = pneg %p32
      %p150 = pneg %p56
      %p151 = pneg %p53
      %p152 = pneg %p77
      %p153 = pneg %p74
      %p154 = pneg %p103
      %p155 = pneg %p100
      %p156 = scmp.lt.s32.totalorder %s14, 1
      %s157 = scalar_select %p156, %s14, 1
      %s158 = smul.addr %s157, 7
      %s159 = smul.addr %s158, 8
      %s160 = scalar_lea.vmem %s3, %s159
      %p161 = scmp.lt.s32.totalorder %s14, 1
      %s162 = scalar_select %p161, %s14, 1
      %s163 = smul.addr %s162, 9
      %s164 = smul.addr %s163, 2
      %s165 = scalar_lea.vmem %s0, %s164
      %p166 = scmp.lt.s32.totalorder %s14, 1
      %s167 = scalar_select %p166, %s14, 1
      %s168 = smul.addr %s167, 7
      %s169 = smul.addr %s168, 8
      %s170 = scalar_lea.vmem %s3, %s169
      %v172 = vld [vmem:[%s165] sm:$0xff]
      %v173 = vld [vmem:[%s165 + $0x8] sm:$0xff]
      %v174 = vld [vmem:[%s165 + $0x10] sm:$0x3]
      %v175 = vld [vmem:[%s1] sm:$0xf]
      %s176 = scalar_lea.vmem %s1, 4
      %v177 = vld [vmem:[%s176] sm:$0xf]
      %179 = vst [vmem:[#allocation1] ss:$4 sm:$0xff] %v172
      %s181 = scalar_lea.vmem [#allocation1], 32
      %182 = vst [vmem:[%s181] ss:$4 sm:$0xff] %v173
      %v183 = vld.sshfl [vmem:[#allocation1] sm:$0xff pattern:$0x73625140]
      %v185 = vld.sshfl [vmem:[#allocation1 + $0x8] sm:$0xff pattern:$0x73625140]
      %v187 = vld.sshfl [vmem:[#allocation1 + $0x10] sm:$0xff pattern:$0x73625140]
      %v189 = vld.sshfl [vmem:[#allocation1 + $0x18] sm:$0xff pattern:$0x73625140]
      %v191 = vld.sshfl [vmem:[#allocation1 + $0x20] sm:$0xff pattern:$0x73625140]
      %v193 = vld.sshfl [vmem:[#allocation1 + $0x28] sm:$0xff pattern:$0x73625140]
      %v195 = vld.sshfl [vmem:[#allocation1 + $0x30] sm:$0xff pattern:$0x73625140]
      %v197 = vld.sshfl [vmem:[#allocation1 + $0x38] sm:$0xff pattern:$0x73625140]
      %199 = vrot.lane.b32.xlu0 %v183, 127
      %v200 = vpop.permute.xlu0 %199
      %201 = vrot.lane.b32.xlu0 %v185, 127
      %v202 = vpop.permute.xlu0 %201
      %203 = vrot.lane.b32.xlu0 %v187, 127
      %v204 = vpop.permute.xlu0 %203
      %205 = vrot.lane.b32.xlu0 %v189, 127
      %v206 = vpop.permute.xlu0 %205
      %207 = vrot.lane.b32.xlu0 %v191, 127
      %v208 = vpop.permute.xlu0 %207
      %209 = vrot.lane.b32.xlu0 %v193, 127
      %v210 = vpop.permute.xlu0 %209
      %211 = vrot.lane.b32.xlu0 %v195, 127
      %v212 = vpop.permute.xlu0 %211
      %213 = vrot.lane.b32.xlu0 %v197, 127
      %v214 = vpop.permute.xlu0 %213
      %vm215 = vcmask 1039360
      %v216 = vsel %vm215, %v200, %v202
      %v217 = vsel %vm215, %v202, %v204
      %v218 = vsel %vm215, %v204, %v206
      %v219 = vsel %vm215, %v206, %v208
      %v220 = vsel %vm215, %v208, %v210
      %v221 = vsel %vm215, %v210, %v212
      %v222 = vsel %vm215, %v212, %v214
      %vm223 = vcmask 31744
      %v225 = vsel %vm223, %v177, 0
      %vm227 = vcmask 1041408
      %v229 = vsel %vm227, %v216, 0
      %v232 = vsel %vm227, %v217, 0
      %v235 = vsel %vm227, %v218, 0
      %v238 = vsel %vm227, %v219, 0
      %v241 = vsel %vm227, %v220, 0
      %v244 = vsel %vm227, %v221, 0
      %v247 = vsel %vm227, %v222, 0
      %249 = vmatpush.bf16.msra.mxu0 0
      %250 = vmatpush.bf16.msra.mxu0 0
      %251 = vmatpush.bf16.msra.mxu0 0
      %252 = vmatpush.bf16.msra.mxu0 0
      %253 = vmatpush.bf16.msra.mxu0 0
      %254 = vmatpush.bf16.msra.mxu0 0
      %255 = vmatpush.bf16.msra.mxu0 0
      %256 = vmatpush.bf16.msra.mxu0 %v229
      %257 = vmatmul.bf16.gmra.mxu0 %v225
      %v258 = vpop.f32.mrf.mxu0
      %v259 = vadd.f32 0.0, %v258
      %v260 = vpop.f32.mrf.mxu0
      %261 = vdwg.mxu0
      %262 = vmatpush.bf16.msra.mxu0 0
      %263 = vmatpush.bf16.msra.mxu0 0
      %264 = vmatpush.bf16.msra.mxu0 0
      %265 = vmatpush.bf16.msra.mxu0 0
      %266 = vmatpush.bf16.msra.mxu0 0
      %267 = vmatpush.bf16.msra.mxu0 0
      %268 = vmatpush.bf16.msra.mxu0 0
      %269 = vmatpush.bf16.msra.mxu0 %v232
      %270 = vmatmul.bf16.gmra.mxu0 %v225
      %v271 = vpop.f32.mrf.mxu0
      %v272 = vadd.f32 0.0, %v271
      %v273 = vpop.f32.mrf.mxu0
      %274 = vdwg.mxu0
      %275 = vmatpush.bf16.msra.mxu0 0
      %276 = vmatpush.bf16.msra.mxu0 0
      %277 = vmatpush.bf16.msra.mxu0 0
      %278 = vmatpush.bf16.msra.mxu0 0
      %279 = vmatpush.bf16.msra.mxu0 0
      %280 = vmatpush.bf16.msra.mxu0 0
      %281 = vmatpush.bf16.msra.mxu0 0
      %282 = vmatpush.bf16.msra.mxu0 %v235
      %283 = vmatmul.bf16.gmra.mxu0 %v225
      %v284 = vpop.f32.mrf.mxu0
      %v285 = vadd.f32 0.0, %v284
      %v286 = vpop.f32.mrf.mxu0
      %287 = vdwg.mxu0
      %288 = vmatpush.bf16.msra.mxu0 0
      %289 = vmatpush.bf16.msra.mxu0 0
      %290 = vmatpush.bf16.msra.mxu0 0
      %291 = vmatpush.bf16.msra.mxu0 0
      %292 = vmatpush.bf16.msra.mxu0 0
      %293 = vmatpush.bf16.msra.mxu0 0
      %294 = vmatpush.bf16.msra.mxu0 0
      %295 = vmatpush.bf16.msra.mxu0 %v238
      %296 = vmatmul.bf16.gmra.mxu0 %v225
      %v297 = vpop.f32.mrf.mxu0
      %v298 = vadd.f32 0.0, %v297
      %v299 = vpop.f32.mrf.mxu0
      %300 = vdwg.mxu0
      %301 = vmatpush.bf16.msra.mxu0 0
      %302 = vmatpush.bf16.msra.mxu0 0
      %303 = vmatpush.bf16.msra.mxu0 0
      %304 = vmatpush.bf16.msra.mxu0 0
      %305 = vmatpush.bf16.msra.mxu0 0
      %306 = vmatpush.bf16.msra.mxu0 0
      %307 = vmatpush.bf16.msra.mxu0 0
      %308 = vmatpush.bf16.msra.mxu0 %v241
      %309 = vmatmul.bf16.gmra.mxu0 %v225
      %v310 = vpop.f32.mrf.mxu0
      %v311 = vadd.f32 0.0, %v310
      %v312 = vpop.f32.mrf.mxu0
      %313 = vdwg.mxu0
      %314 = vmatpush.bf16.msra.mxu0 0
      %315 = vmatpush.bf16.msra.mxu0 0
      %316 = vmatpush.bf16.msra.mxu0 0
      %317 = vmatpush.bf16.msra.mxu0 0
      %318 = vmatpush.bf16.msra.mxu0 0
      %319 = vmatpush.bf16.msra.mxu0 0
      %320 = vmatpush.bf16.msra.mxu0 0
      %321 = vmatpush.bf16.msra.mxu0 %v244
      %322 = vmatmul.bf16.gmra.mxu0 %v225
      %v323 = vpop.f32.mrf.mxu0
      %v324 = vadd.f32 0.0, %v323
      %v325 = vpop.f32.mrf.mxu0
      %326 = vdwg.mxu0
      %327 = vmatpush.bf16.msra.mxu0 0
      %328 = vmatpush.bf16.msra.mxu0 0
      %329 = vmatpush.bf16.msra.mxu0 0
      %330 = vmatpush.bf16.msra.mxu0 0
      %331 = vmatpush.bf16.msra.mxu0 0
      %332 = vmatpush.bf16.msra.mxu0 0
      %333 = vmatpush.bf16.msra.mxu0 0
      %334 = vmatpush.bf16.msra.mxu0 %v247
      %335 = vmatmul.bf16.gmra.mxu0 %v225
      %v336 = vpop.f32.mrf.mxu0
      %v337 = vadd.f32 0.0, %v336
      %v338 = vpop.f32.mrf.mxu0
      %339 = vdwg.mxu0
      %340 = vst [vmem:[#allocation1] ss:$4 sm:$0xff] %v172
      %s341 = scalar_lea.vmem [#allocation1], 32
      %342 = vst [vmem:[%s341] ss:$4 sm:$0xff] %v173
      %v343 = vld.sshfl [vmem:[#allocation1] sm:$0xff pattern:$0x73625140]
      %v344 = vld.sshfl [vmem:[#allocation1 + $0x8] sm:$0xff pattern:$0x73625140]
      %v345 = vld.sshfl [vmem:[#allocation1 + $0x10] sm:$0xff pattern:$0x73625140]
      %v346 = vld.sshfl [vmem:[#allocation1 + $0x18] sm:$0xff pattern:$0x73625140]
      %v347 = vld.sshfl [vmem:[#allocation1 + $0x20] sm:$0xff pattern:$0x73625140]
      %v348 = vld.sshfl [vmem:[#allocation1 + $0x28] sm:$0xff pattern:$0x73625140]
      %v349 = vld.sshfl [vmem:[#allocation1 + $0x30] sm:$0xff pattern:$0x73625140]
      %v351 = vsel %vm223, %v175, 0
      %v353 = vsel %vm227, %v343, 0
      %v355 = vsel %vm227, %v344, 0
      %v357 = vsel %vm227, %v345, 0
      %v359 = vsel %vm227, %v346, 0
      %v361 = vsel %vm227, %v347, 0
      %v363 = vsel %vm227, %v348, 0
      %v365 = vsel %vm227, %v349, 0
      %367 = vmatpush.bf16.msra.mxu0 0
      %368 = vmatpush.bf16.msra.mxu0 0
      %369 = vmatpush.bf16.msra.mxu0 0
      %370 = vmatpush.bf16.msra.mxu0 0
      %371 = vmatpush.bf16.msra.mxu0 0
      %372 = vmatpush.bf16.msra.mxu0 0
      %373 = vmatpush.bf16.msra.mxu0 0
      %374 = vmatpush.bf16.msra.mxu0 %v353
      %375 = vmatmul.bf16.gmra.mxu0 %v351
      %v376 = vpop.f32.mrf.mxu0
      %v377 = vadd.f32 %v259, %v376
      %v378 = vpop.f32.mrf.mxu0
      %379 = vdwg.mxu0
      %380 = vmatpush.bf16.msra.mxu0 0
      %381 = vmatpush.bf16.msra.mxu0 0
      %382 = vmatpush.bf16.msra.mxu0 0
      %383 = vmatpush.bf16.msra.mxu0 0
      %384 = vmatpush.bf16.msra.mxu0 0
      %385 = vmatpush.bf16.msra.mxu0 0
      %386 = vmatpush.bf16.msra.mxu0 0
      %387 = vmatpush.bf16.msra.mxu0 %v355
      %388 = vmatmul.bf16.gmra.mxu0 %v351
      %v389 = vpop.f32.mrf.mxu0
      %v390 = vadd.f32 %v272, %v389
      %v391 = vpop.f32.mrf.mxu0
      %392 = vdwg.mxu0
      %393 = vmatpush.bf16.msra.mxu0 0
      %394 = vmatpush.bf16.msra.mxu0 0
      %395 = vmatpush.bf16.msra.mxu0 0
      %396 = vmatpush.bf16.msra.mxu0 0
      %397 = vmatpush.bf16.msra.mxu0 0
      %398 = vmatpush.bf16.msra.mxu0 0
      %399 = vmatpush.bf16.msra.mxu0 0
      %400 = vmatpush.bf16.msra.mxu0 %v357
      %401 = vmatmul.bf16.gmra.mxu0 %v351
      %v402 = vpop.f32.mrf.mxu0
      %v403 = vadd.f32 %v285, %v402
      %v404 = vpop.f32.mrf.mxu0
      %405 = vdwg.mxu0
      %406 = vmatpush.bf16.msra.mxu0 0
      %407 = vmatpush.bf16.msra.mxu0 0
      %408 = vmatpush.bf16.msra.mxu0 0
      %409 = vmatpush.bf16.msra.mxu0 0
      %410 = vmatpush.bf16.msra.mxu0 0
      %411 = vmatpush.bf16.msra.mxu0 0
      %412 = vmatpush.bf16.msra.mxu0 0
      %413 = vmatpush.bf16.msra.mxu0 %v359
      %414 = vmatmul.bf16.gmra.mxu0 %v351
      %v415 = vpop.f32.mrf.mxu0
      %v416 = vadd.f32 %v298, %v415
      %v417 = vpop.f32.mrf.mxu0
      %418 = vdwg.mxu0
      %419 = vmatpush.bf16.msra.mxu0 0
      %420 = vmatpush.bf16.msra.mxu0 0
      %421 = vmatpush.bf16.msra.mxu0 0
      %422 = vmatpush.bf16.msra.mxu0 0
      %423 = vmatpush.bf16.msra.mxu0 0
      %424 = vmatpush.bf16.msra.mxu0 0
      %425 = vmatpush.bf16.msra.mxu0 0
      %426 = vmatpush.bf16.msra.mxu0 %v361
      %427 = vmatmul.bf16.gmra.mxu0 %v351
      %v428 = vpop.f32.mrf.mxu0
      %v429 = vadd.f32 %v311, %v428
      %v430 = vpop.f32.mrf.mxu0
      %431 = vdwg.mxu0
      %432 = vmatpush.bf16.msra.mxu0 0
      %433 = vmatpush.bf16.msra.mxu0 0
      %434 = vmatpush.bf16.msra.mxu0 0
      %435 = vmatpush.bf16.msra.mxu0 0
      %436 = vmatpush.bf16.msra.mxu0 0
      %437 = vmatpush.bf16.msra.mxu0 0
      %438 = vmatpush.bf16.msra.mxu0 0
      %439 = vmatpush.bf16.msra.mxu0 %v363
      %440 = vmatmul.bf16.gmra.mxu0 %v351
      %v441 = vpop.f32.mrf.mxu0
      %v442 = vadd.f32 %v324, %v441
      %v443 = vpop.f32.mrf.mxu0
      %444 = vdwg.mxu0
      %445 = vmatpush.bf16.msra.mxu0 0
      %446 = vmatpush.bf16.msra.mxu0 0
      %447 = vmatpush.bf16.msra.mxu0 0
      %448 = vmatpush.bf16.msra.mxu0 0
      %449 = vmatpush.bf16.msra.mxu0 0
      %450 = vmatpush.bf16.msra.mxu0 0
      %451 = vmatpush.bf16.msra.mxu0 0
      %452 = vmatpush.bf16.msra.mxu0 %v365
      %453 = vmatmul.bf16.gmra.mxu0 %v351
      %v454 = vpop.f32.mrf.mxu0
      %v455 = vadd.f32 %v337, %v454
      %v456 = vpop.f32.mrf.mxu0
      %457 = vdwg.mxu0
      %s458 = scalar_lea.vmem %s1, 8
      %v459 = vld [vmem:[%s458] sm:$0xf]
      %460 = vst [vmem:[#allocation1] ss:$4 sm:$0xff] %v172
      %s461 = scalar_lea.vmem [#allocation1], 32
      %462 = vst [vmem:[%s461] ss:$4 sm:$0xff] %v173
      %v463 = vld.sshfl [vmem:[#allocation1] sm:$0xff pattern:$0x73625140]
      %v465 = vld.sshfl [vmem:[#allocation1 + $0x8] sm:$0xff pattern:$0x73625140]
      %v467 = vld.sshfl [vmem:[#allocation1 + $0x10] sm:$0xff pattern:$0x73625140]
      %v469 = vld.sshfl [vmem:[#allocation1 + $0x18] sm:$0xff pattern:$0x73625140]
      %v471 = vld.sshfl [vmem:[#allocation1 + $0x20] sm:$0xff pattern:$0x73625140]
      %v473 = vld.sshfl [vmem:[#allocation1 + $0x28] sm:$0xff pattern:$0x73625140]
      %v475 = vld.sshfl [vmem:[#allocation1 + $0x30] sm:$0xff pattern:$0x73625140]
      %v477 = vld.sshfl [vmem:[#allocation1 + $0x38] sm:$0xff pattern:$0x73625140]
      %479 = vrot.lane.b32.xlu0 %v463, 126
      %v480 = vpop.permute.xlu0 %479
      %481 = vrot.lane.b32.xlu0 %v465, 126
      %v482 = vpop.permute.xlu0 %481
      %483 = vrot.lane.b32.xlu0 %v467, 126
      %v484 = vpop.permute.xlu0 %483
      %485 = vrot.lane.b32.xlu0 %v469, 126
      %v486 = vpop.permute.xlu0 %485
      %487 = vrot.lane.b32.xlu0 %v471, 126
      %v488 = vpop.permute.xlu0 %487
      %489 = vrot.lane.b32.xlu0 %v473, 126
      %v490 = vpop.permute.xlu0 %489
      %491 = vrot.lane.b32.xlu0 %v475, 126
      %v492 = vpop.permute.xlu0 %491
      %493 = vrot.lane.b32.xlu0 %v477, 126
      %v494 = vpop.permute.xlu0 %493
      %vm495 = vcmask 1031168
      %v496 = vsel %vm495, %v480, %v482
      %v497 = vsel %vm495, %v482, %v484
      %v498 = vsel %vm495, %v484, %v486
      %v499 = vsel %vm495, %v486, %v488
      %v500 = vsel %vm495, %v488, %v490
      %v501 = vsel %vm495, %v490, %v492
      %v502 = vsel %vm495, %v492, %v494
      %v504 = vsel %vm223, %v459, 0
      %v507 = vsel %vm227, %v496, 0
      %v510 = vsel %vm227, %v497, 0
      %v513 = vsel %vm227, %v498, 0
      %v516 = vsel %vm227, %v499, 0
      %v519 = vsel %vm227, %v500, 0
      %v522 = vsel %vm227, %v501, 0
      %v525 = vsel %vm227, %v502, 0
      %527 = vmatpush.bf16.msra.mxu0 0
      %528 = vmatpush.bf16.msra.mxu0 0
      %529 = vmatpush.bf16.msra.mxu0 0
      %530 = vmatpush.bf16.msra.mxu0 0
      %531 = vmatpush.bf16.msra.mxu0 0
      %532 = vmatpush.bf16.msra.mxu0 0
      %533 = vmatpush.bf16.msra.mxu0 0
      %534 = vmatpush.bf16.msra.mxu0 %v507
      %535 = vmatmul.bf16.gmra.mxu0 %v504
      %v536 = vpop.f32.mrf.mxu0
      %v537 = vadd.f32 0.0, %v536
      %v538 = vpop.f32.mrf.mxu0
      %539 = vdwg.mxu0
      %540 = vmatpush.bf16.msra.mxu0 0
      %541 = vmatpush.bf16.msra.mxu0 0
      %542 = vmatpush.bf16.msra.mxu0 0
      %543 = vmatpush.bf16.msra.mxu0 0
      %544 = vmatpush.bf16.msra.mxu0 0
      %545 = vmatpush.bf16.msra.mxu0 0
      %546 = vmatpush.bf16.msra.mxu0 0
      %547 = vmatpush.bf16.msra.mxu0 %v510
      %548 = vmatmul.bf16.gmra.mxu0 %v504
      %v549 = vpop.f32.mrf.mxu0
      %v550 = vadd.f32 0.0, %v549
      %v551 = vpop.f32.mrf.mxu0
      %552 = vdwg.mxu0
      %553 = vmatpush.bf16.msra.mxu0 0
      %554 = vmatpush.bf16.msra.mxu0 0
      %555 = vmatpush.bf16.msra.mxu0 0
      %556 = vmatpush.bf16.msra.mxu0 0
      %557 = vmatpush.bf16.msra.mxu0 0
      %558 = vmatpush.bf16.msra.mxu0 0
      %559 = vmatpush.bf16.msra.mxu0 0
      %560 = vmatpush.bf16.msra.mxu0 %v513
      %561 = vmatmul.bf16.gmra.mxu0 %v504
      %v562 = vpop.f32.mrf.mxu0
      %v563 = vadd.f32 0.0, %v562
      %v564 = vpop.f32.mrf.mxu0
      %565 = vdwg.mxu0
      %566 = vmatpush.bf16.msra.mxu0 0
      %567 = vmatpush.bf16.msra.mxu0 0
      %568 = vmatpush.bf16.msra.mxu0 0
      %569 = vmatpush.bf16.msra.mxu0 0
      %570 = vmatpush.bf16.msra.mxu0 0
      %571 = vmatpush.bf16.msra.mxu0 0
      %572 = vmatpush.bf16.msra.mxu0 0
      %573 = vmatpush.bf16.msra.mxu0 %v516
      %574 = vmatmul.bf16.gmra.mxu0 %v504
      %v575 = vpop.f32.mrf.mxu0
      %v576 = vadd.f32 0.0, %v575
      %v577 = vpop.f32.mrf.mxu0
      %578 = vdwg.mxu0
      %579 = vmatpush.bf16.msra.mxu0 0
      %580 = vmatpush.bf16.msra.mxu0 0
      %581 = vmatpush.bf16.msra.mxu0 0
      %582 = vmatpush.bf16.msra.mxu0 0
      %583 = vmatpush.bf16.msra.mxu0 0
      %584 = vmatpush.bf16.msra.mxu0 0
      %585 = vmatpush.bf16.msra.mxu0 0
      %586 = vmatpush.bf16.msra.mxu0 %v519
      %587 = vmatmul.bf16.gmra.mxu0 %v504
      %v588 = vpop.f32.mrf.mxu0
      %v589 = vadd.f32 0.0, %v588
      %v590 = vpop.f32.mrf.mxu0
      %591 = vdwg.mxu0
      %592 = vmatpush.bf16.msra.mxu0 0
      %593 = vmatpush.bf16.msra.mxu0 0
      %594 = vmatpush.bf16.msra.mxu0 0
      %595 = vmatpush.bf16.msra.mxu0 0
      %596 = vmatpush.bf16.msra.mxu0 0
      %597 = vmatpush.bf16.msra.mxu0 0
      %598 = vmatpush.bf16.msra.mxu0 0
      %599 = vmatpush.bf16.msra.mxu0 %v522
      %600 = vmatmul.bf16.gmra.mxu0 %v504
      %v601 = vpop.f32.mrf.mxu0
      %v602 = vadd.f32 0.0, %v601
      %v603 = vpop.f32.mrf.mxu0
      %604 = vdwg.mxu0
      %605 = vmatpush.bf16.msra.mxu0 0
      %606 = vmatpush.bf16.msra.mxu0 0
      %607 = vmatpush.bf16.msra.mxu0 0
      %608 = vmatpush.bf16.msra.mxu0 0
      %609 = vmatpush.bf16.msra.mxu0 0
      %610 = vmatpush.bf16.msra.mxu0 0
      %611 = vmatpush.bf16.msra.mxu0 0
      %612 = vmatpush.bf16.msra.mxu0 %v525
      %613 = vmatmul.bf16.gmra.mxu0 %v504
      %v614 = vpop.f32.mrf.mxu0
      %v615 = vadd.f32 0.0, %v614
      %v616 = vpop.f32.mrf.mxu0
      %617 = vdwg.mxu0
      %v618 = vadd.f32 %v377, %v537
      %v619 = vadd.f32 %v390, %v550
      %v620 = vadd.f32 %v403, %v563
      %v621 = vadd.f32 %v416, %v576
      %v622 = vadd.f32 %v429, %v589
      %v623 = vadd.f32 %v442, %v602
      %v624 = vadd.f32 %v455, %v615
      %s625 = scalar_lea.vmem %s1, 12
      %v626 = vld [vmem:[%s625] sm:$0xf]
      %627 = vst [vmem:[#allocation1] ss:$4 sm:$0xff] %v172
      %s628 = scalar_lea.vmem [#allocation1], 32
      %629 = vst [vmem:[%s628] ss:$4 sm:$0xff] %v173
      %v630 = vld.sshfl [vmem:[#allocation1] sm:$0xff pattern:$0x73625140]
      %v632 = vld.sshfl [vmem:[#allocation1 + $0x8] sm:$0xff pattern:$0x73625140]
      %v634 = vld.sshfl [vmem:[#allocation1 + $0x10] sm:$0xff pattern:$0x73625140]
      %v636 = vld.sshfl [vmem:[#allocation1 + $0x18] sm:$0xff pattern:$0x73625140]
      %v638 = vld.sshfl [vmem:[#allocation1 + $0x20] sm:$0xff pattern:$0x73625140]
      %v640 = vld.sshfl [vmem:[#allocation1 + $0x28] sm:$0xff pattern:$0x73625140]
      %v642 = vld.sshfl [vmem:[#allocation1 + $0x30] sm:$0xff pattern:$0x73625140]
      %v644 = vld.sshfl [vmem:[#allocation1 + $0x38] sm:$0xff pattern:$0x73625140]
      %646 = vrot.lane.b32.xlu0 %v630, 118
      %v647 = vpop.permute.xlu0 %646
      %648 = vrot.lane.b32.xlu0 %v632, 118
      %v649 = vpop.permute.xlu0 %648
      %650 = vrot.lane.b32.xlu0 %v634, 118
      %v651 = vpop.permute.xlu0 %650
      %652 = vrot.lane.b32.xlu0 %v636, 118
      %v653 = vpop.permute.xlu0 %652
      %654 = vrot.lane.b32.xlu0 %v638, 118
      %v655 = vpop.permute.xlu0 %654
      %656 = vrot.lane.b32.xlu0 %v640, 118
      %v657 = vpop.permute.xlu0 %656
      %658 = vrot.lane.b32.xlu0 %v642, 118
      %v659 = vpop.permute.xlu0 %658
      %660 = vrot.lane.b32.xlu0 %v644, 118
      %v661 = vpop.permute.xlu0 %660
      %vm662 = vcmask 965632
      %v663 = vsel %vm662, %v647, %v649
      %v664 = vsel %vm662, %v649, %v651
      %v665 = vsel %vm662, %v651, %v653
      %v666 = vsel %vm662, %v653, %v655
      %v667 = vsel %vm662, %v655, %v657
      %v668 = vsel %vm662, %v657, %v659
      %v669 = vsel %vm662, %v659, %v661
      %v671 = vsel %vm223, %v626, 0
      %v674 = vsel %vm227, %v663, 0
      %v677 = vsel %vm227, %v664, 0
      %v680 = vsel %vm227, %v665, 0
      %v683 = vsel %vm227, %v666, 0
      %v686 = vsel %vm227, %v667, 0
      %v689 = vsel %vm227, %v668, 0
      %v692 = vsel %vm227, %v669, 0
      %694 = vmatpush.bf16.msra.mxu0 0
      %695 = vmatpush.bf16.msra.mxu0 0
      %696 = vmatpush.bf16.msra.mxu0 0
      %697 = vmatpush.bf16.msra.mxu0 0
      %698 = vmatpush.bf16.msra.mxu0 0
      %699 = vmatpush.bf16.msra.mxu0 0
      %700 = vmatpush.bf16.msra.mxu0 0
      %701 = vmatpush.bf16.msra.mxu0 %v674
      %702 = vmatmul.bf16.gmra.mxu0 %v671
      %v703 = vpop.f32.mrf.mxu0
      %v704 = vadd.f32 0.0, %v703
      %v705 = vpop.f32.mrf.mxu0
      %706 = vdwg.mxu0
      %707 = vmatpush.bf16.msra.mxu0 0
      %708 = vmatpush.bf16.msra.mxu0 0
      %709 = vmatpush.bf16.msra.mxu0 0
      %710 = vmatpush.bf16.msra.mxu0 0
      %711 = vmatpush.bf16.msra.mxu0 0
      %712 = vmatpush.bf16.msra.mxu0 0
      %713 = vmatpush.bf16.msra.mxu0 0
      %714 = vmatpush.bf16.msra.mxu0 %v677
      %715 = vmatmul.bf16.gmra.mxu0 %v671
      %v716 = vpop.f32.mrf.mxu0
      %v717 = vadd.f32 0.0, %v716
      %v718 = vpop.f32.mrf.mxu0
      %719 = vdwg.mxu0
      %720 = vmatpush.bf16.msra.mxu0 0
      %721 = vmatpush.bf16.msra.mxu0 0
      %722 = vmatpush.bf16.msra.mxu0 0
      %723 = vmatpush.bf16.msra.mxu0 0
      %724 = vmatpush.bf16.msra.mxu0 0
      %725 = vmatpush.bf16.msra.mxu0 0
      %726 = vmatpush.bf16.msra.mxu0 0
      %727 = vmatpush.bf16.msra.mxu0 %v680
      %728 = vmatmul.bf16.gmra.mxu0 %v671
      %v729 = vpop.f32.mrf.mxu0
      %v730 = vadd.f32 0.0, %v729
      %v731 = vpop.f32.mrf.mxu0
      %732 = vdwg.mxu0
      %733 = vmatpush.bf16.msra.mxu0 0
      %734 = vmatpush.bf16.msra.mxu0 0
      %735 = vmatpush.bf16.msra.mxu0 0
      %736 = vmatpush.bf16.msra.mxu0 0
      %737 = vmatpush.bf16.msra.mxu0 0
      %738 = vmatpush.bf16.msra.mxu0 0
      %739 = vmatpush.bf16.msra.mxu0 0
      %740 = vmatpush.bf16.msra.mxu0 %v683
      %741 = vmatmul.bf16.gmra.mxu0 %v671
      %v742 = vpop.f32.mrf.mxu0
      %v743 = vadd.f32 0.0, %v742
      %v744 = vpop.f32.mrf.mxu0
      %745 = vdwg.mxu0
      %746 = vmatpush.bf16.msra.mxu0 0
      %747 = vmatpush.bf16.msra.mxu0 0
      %748 = vmatpush.bf16.msra.mxu0 0
      %749 = vmatpush.bf16.msra.mxu0 0
      %750 = vmatpush.bf16.msra.mxu0 0
      %751 = vmatpush.bf16.msra.mxu0 0
      %752 = vmatpush.bf16.msra.mxu0 0
      %753 = vmatpush.bf16.msra.mxu0 %v686
      %754 = vmatmul.bf16.gmra.mxu0 %v671
      %v755 = vpop.f32.mrf.mxu0
      %v756 = vadd.f32 0.0, %v755
      %v757 = vpop.f32.mrf.mxu0
      %758 = vdwg.mxu0
      %759 = vmatpush.bf16.msra.mxu0 0
      %760 = vmatpush.bf16.msra.mxu0 0
      %761 = vmatpush.bf16.msra.mxu0 0
      %762 = vmatpush.bf16.msra.mxu0 0
      %763 = vmatpush.bf16.msra.mxu0 0
      %764 = vmatpush.bf16.msra.mxu0 0
      %765 = vmatpush.bf16.msra.mxu0 0
      %766 = vmatpush.bf16.msra.mxu0 %v689
      %767 = vmatmul.bf16.gmra.mxu0 %v671
      %v768 = vpop.f32.mrf.mxu0
      %v769 = vadd.f32 0.0, %v768
      %v770 = vpop.f32.mrf.mxu0
      %771 = vdwg.mxu0
      %772 = vmatpush.bf16.msra.mxu0 0
      %773 = vmatpush.bf16.msra.mxu0 0
      %774 = vmatpush.bf16.msra.mxu0 0
      %775 = vmatpush.bf16.msra.mxu0 0
      %776 = vmatpush.bf16.msra.mxu0 0
      %777 = vmatpush.bf16.msra.mxu0 0
      %778 = vmatpush.bf16.msra.mxu0 0
      %779 = vmatpush.bf16.msra.mxu0 %v692
      %780 = vmatmul.bf16.gmra.mxu0 %v671
      %v781 = vpop.f32.mrf.mxu0
      %v782 = vadd.f32 0.0, %v781
      %v783 = vpop.f32.mrf.mxu0
      %784 = vdwg.mxu0
      %v785 = vadd.f32 %v618, %v704
      %v786 = vadd.f32 %v619, %v717
      %v787 = vadd.f32 %v620, %v730
      %v788 = vadd.f32 %v621, %v743
      %v789 = vadd.f32 %v622, %v756
      %v790 = vadd.f32 %v623, %v769
      %v791 = vadd.f32 %v624, %v782
      %s792 = scalar_lea.vmem %s1, 16
      %v793 = vld [vmem:[%s792] sm:$0xf]
      %794 = vst [vmem:[#allocation1] ss:$4 sm:$0xff] %v172
      %s795 = scalar_lea.vmem [#allocation1], 32
      %796 = vst [vmem:[%s795] ss:$4 sm:$0xff] %v173
      %v797 = vld.sshfl [vmem:[#allocation1] sm:$0xff pattern:$0x73625140]
      %v799 = vld.sshfl [vmem:[#allocation1 + $0x8] sm:$0xff pattern:$0x73625140]
      %v801 = vld.sshfl [vmem:[#allocation1 + $0x10] sm:$0xff pattern:$0x73625140]
      %v803 = vld.sshfl [vmem:[#allocation1 + $0x18] sm:$0xff pattern:$0x73625140]
      %v805 = vld.sshfl [vmem:[#allocation1 + $0x20] sm:$0xff pattern:$0x73625140]
      %v807 = vld.sshfl [vmem:[#allocation1 + $0x28] sm:$0xff pattern:$0x73625140]
      %v809 = vld.sshfl [vmem:[#allocation1 + $0x30] sm:$0xff pattern:$0x73625140]
      %v811 = vld.sshfl [vmem:[#allocation1 + $0x38] sm:$0xff pattern:$0x73625140]
      %813 = vrot.lane.b32.xlu0 %v797, 117
      %v814 = vpop.permute.xlu0 %813
      %815 = vrot.lane.b32.xlu0 %v799, 117
      %v816 = vpop.permute.xlu0 %815
      %817 = vrot.lane.b32.xlu0 %v801, 117
      %v818 = vpop.permute.xlu0 %817
      %819 = vrot.lane.b32.xlu0 %v803, 117
      %v820 = vpop.permute.xlu0 %819
      %821 = vrot.lane.b32.xlu0 %v805, 117
      %v822 = vpop.permute.xlu0 %821
      %823 = vrot.lane.b32.xlu0 %v807, 117
      %v824 = vpop.permute.xlu0 %823
      %825 = vrot.lane.b32.xlu0 %v809, 117
      %v826 = vpop.permute.xlu0 %825
      %827 = vrot.lane.b32.xlu0 %v811, 117
      %v828 = vpop.permute.xlu0 %827
      %vm829 = vcmask 957440
      %v830 = vsel %vm829, %v814, %v816
      %v831 = vsel %vm829, %v816, %v818
      %v832 = vsel %vm829, %v818, %v820
      %v833 = vsel %vm829, %v820, %v822
      %v834 = vsel %vm829, %v822, %v824
      %v835 = vsel %vm829, %v824, %v826
      %v836 = vsel %vm829, %v826, %v828
      %v838 = vsel %vm223, %v793, 0
      %v841 = vsel %vm227, %v830, 0
      %v844 = vsel %vm227, %v831, 0
      %v847 = vsel %vm227, %v832, 0
      %v850 = vsel %vm227, %v833, 0
      %v853 = vsel %vm227, %v834, 0
      %v856 = vsel %vm227, %v835, 0
      %v859 = vsel %vm227, %v836, 0
      %861 = vmatpush.bf16.msra.mxu0 0
      %862 = vmatpush.bf16.msra.mxu0 0
      %863 = vmatpush.bf16.msra.mxu0 0
      %864 = vmatpush.bf16.msra.mxu0 0
      %865 = vmatpush.bf16.msra.mxu0 0
      %866 = vmatpush.bf16.msra.mxu0 0
      %867 = vmatpush.bf16.msra.mxu0 0
      %868 = vmatpush.bf16.msra.mxu0 %v841
      %869 = vmatmul.bf16.gmra.mxu0 %v838
      %v870 = vpop.f32.mrf.mxu0
      %v871 = vadd.f32 0.0, %v870
      %v872 = vpop.f32.mrf.mxu0
      %873 = vdwg.mxu0
      %874 = vmatpush.bf16.msra.mxu0 0
      %875 = vmatpush.bf16.msra.mxu0 0
      %876 = vmatpush.bf16.msra.mxu0 0
      %877 = vmatpush.bf16.msra.mxu0 0
      %878 = vmatpush.bf16.msra.mxu0 0
      %879 = vmatpush.bf16.msra.mxu0 0
      %880 = vmatpush.bf16.msra.mxu0 0
      %881 = vmatpush.bf16.msra.mxu0 %v844
      %882 = vmatmul.bf16.gmra.mxu0 %v838
      %v883 = vpop.f32.mrf.mxu0
      %v884 = vadd.f32 0.0, %v883
      %v885 = vpop.f32.mrf.mxu0
      %886 = vdwg.mxu0
      %887 = vmatpush.bf16.msra.mxu0 0
      %888 = vmatpush.bf16.msra.mxu0 0
      %889 = vmatpush.bf16.msra.mxu0 0
      %890 = vmatpush.bf16.msra.mxu0 0
      %891 = vmatpush.bf16.msra.mxu0 0
      %892 = vmatpush.bf16.msra.mxu0 0
      %893 = vmatpush.bf16.msra.mxu0 0
      %894 = vmatpush.bf16.msra.mxu0 %v847
      %895 = vmatmul.bf16.gmra.mxu0 %v838
      %v896 = vpop.f32.mrf.mxu0
      %v897 = vadd.f32 0.0, %v896
      %v898 = vpop.f32.mrf.mxu0
      %899 = vdwg.mxu0
      %900 = vmatpush.bf16.msra.mxu0 0
      %901 = vmatpush.bf16.msra.mxu0 0
      %902 = vmatpush.bf16.msra.mxu0 0
      %903 = vmatpush.bf16.msra.mxu0 0
      %904 = vmatpush.bf16.msra.mxu0 0
      %905 = vmatpush.bf16.msra.mxu0 0
      %906 = vmatpush.bf16.msra.mxu0 0
      %907 = vmatpush.bf16.msra.mxu0 %v850
      %908 = vmatmul.bf16.gmra.mxu0 %v838
      %v909 = vpop.f32.mrf.mxu0
      %v910 = vadd.f32 0.0, %v909
      %v911 = vpop.f32.mrf.mxu0
      %912 = vdwg.mxu0
      %913 = vmatpush.bf16.msra.mxu0 0
      %914 = vmatpush.bf16.msra.mxu0 0
      %915 = vmatpush.bf16.msra.mxu0 0
      %916 = vmatpush.bf16.msra.mxu0 0
      %917 = vmatpush.bf16.msra.mxu0 0
      %918 = vmatpush.bf16.msra.mxu0 0
      %919 = vmatpush.bf16.msra.mxu0 0
      %920 = vmatpush.bf16.msra.mxu0 %v853
      %921 = vmatmul.bf16.gmra.mxu0 %v838
      %v922 = vpop.f32.mrf.mxu0
      %v923 = vadd.f32 0.0, %v922
      %v924 = vpop.f32.mrf.mxu0
      %925 = vdwg.mxu0
      %926 = vmatpush.bf16.msra.mxu0 0
      %927 = vmatpush.bf16.msra.mxu0 0
      %928 = vmatpush.bf16.msra.mxu0 0
      %929 = vmatpush.bf16.msra.mxu0 0
      %930 = vmatpush.bf16.msra.mxu0 0
      %931 = vmatpush.bf16.msra.mxu0 0
      %932 = vmatpush.bf16.msra.mxu0 0
      %933 = vmatpush.bf16.msra.mxu0 %v856
      %934 = vmatmul.bf16.gmra.mxu0 %v838
      %v935 = vpop.f32.mrf.mxu0
      %v936 = vadd.f32 0.0, %v935
      %v937 = vpop.f32.mrf.mxu0
      %938 = vdwg.mxu0
      %939 = vmatpush.bf16.msra.mxu0 0
      %940 = vmatpush.bf16.msra.mxu0 0
      %941 = vmatpush.bf16.msra.mxu0 0
      %942 = vmatpush.bf16.msra.mxu0 0
      %943 = vmatpush.bf16.msra.mxu0 0
      %944 = vmatpush.bf16.msra.mxu0 0
      %945 = vmatpush.bf16.msra.mxu0 0
      %946 = vmatpush.bf16.msra.mxu0 %v859
      %947 = vmatmul.bf16.gmra.mxu0 %v838
      %v948 = vpop.f32.mrf.mxu0
      %v949 = vadd.f32 0.0, %v948
      %v950 = vpop.f32.mrf.mxu0
      %951 = vdwg.mxu0
      %v952 = vadd.f32 %v785, %v871
      %v953 = vadd.f32 %v786, %v884
      %v954 = vadd.f32 %v787, %v897
      %v955 = vadd.f32 %v788, %v910
      %v956 = vadd.f32 %v789, %v923
      %v957 = vadd.f32 %v790, %v936
      %v958 = vadd.f32 %v791, %v949
      %s959 = scalar_lea.vmem %s1, 20
      %v960 = vld [vmem:[%s959] sm:$0xf]
      %961 = vst [vmem:[#allocation1] ss:$4 sm:$0xff] %v172
      %s962 = scalar_lea.vmem [#allocation1], 32
      %963 = vst [vmem:[%s962] ss:$4 sm:$0xff] %v173
      %v964 = vld.sshfl [vmem:[#allocation1] sm:$0xff pattern:$0x73625140]
      %v966 = vld.sshfl [vmem:[#allocation1 + $0x8] sm:$0xff pattern:$0x73625140]
      %v968 = vld.sshfl [vmem:[#allocation1 + $0x10] sm:$0xff pattern:$0x73625140]
      %v970 = vld.sshfl [vmem:[#allocation1 + $0x18] sm:$0xff pattern:$0x73625140]
      %v972 = vld.sshfl [vmem:[#allocation1 + $0x20] sm:$0xff pattern:$0x73625140]
      %v974 = vld.sshfl [vmem:[#allocation1 + $0x28] sm:$0xff pattern:$0x73625140]
      %v976 = vld.sshfl [vmem:[#allocation1 + $0x30] sm:$0xff pattern:$0x73625140]
      %v978 = vld.sshfl [vmem:[#allocation1 + $0x38] sm:$0xff pattern:$0x73625140]
      %980 = vrot.lane.b32.xlu0 %v964, 116
      %v981 = vpop.permute.xlu0 %980
      %982 = vrot.lane.b32.xlu0 %v966, 116
      %v983 = vpop.permute.xlu0 %982
      %984 = vrot.lane.b32.xlu0 %v968, 116
      %v985 = vpop.permute.xlu0 %984
      %986 = vrot.lane.b32.xlu0 %v970, 116
      %v987 = vpop.permute.xlu0 %986
      %988 = vrot.lane.b32.xlu0 %v972, 116
      %v989 = vpop.permute.xlu0 %988
      %990 = vrot.lane.b32.xlu0 %v974, 116
      %v991 = vpop.permute.xlu0 %990
      %992 = vrot.lane.b32.xlu0 %v976, 116
      %v993 = vpop.permute.xlu0 %992
      %994 = vrot.lane.b32.xlu0 %v978, 116
      %v995 = vpop.permute.xlu0 %994
      %vm996 = vcmask 949248
      %v997 = vsel %vm996, %v981, %v983
      %v998 = vsel %vm996, %v983, %v985
      %v999 = vsel %vm996, %v985, %v987
      %v1000 = vsel %vm996, %v987, %v989
      %v1001 = vsel %vm996, %v989, %v991
      %v1002 = vsel %vm996, %v991, %v993
      %v1003 = vsel %vm996, %v993, %v995
      %v1005 = vsel %vm223, %v960, 0
      %v1008 = vsel %vm227, %v997, 0
      %v1011 = vsel %vm227, %v998, 0
      %v1014 = vsel %vm227, %v999, 0
      %v1017 = vsel %vm227, %v1000, 0
      %v1020 = vsel %vm227, %v1001, 0
      %v1023 = vsel %vm227, %v1002, 0
      %v1026 = vsel %vm227, %v1003, 0
      %1028 = vmatpush.bf16.msra.mxu0 0
      %1029 = vmatpush.bf16.msra.mxu0 0
      %1030 = vmatpush.bf16.msra.mxu0 0
      %1031 = vmatpush.bf16.msra.mxu0 0
      %1032 = vmatpush.bf16.msra.mxu0 0
      %1033 = vmatpush.bf16.msra.mxu0 0
      %1034 = vmatpush.bf16.msra.mxu0 0
      %1035 = vmatpush.bf16.msra.mxu0 %v1008
      %1036 = vmatmul.bf16.gmra.mxu0 %v1005
      %v1037 = vpop.f32.mrf.mxu0
      %v1038 = vadd.f32 0.0, %v1037
      %v1039 = vpop.f32.mrf.mxu0
      %1040 = vdwg.mxu0
      %1041 = vmatpush.bf16.msra.mxu0 0
      %1042 = vmatpush.bf16.msra.mxu0 0
      %1043 = vmatpush.bf16.msra.mxu0 0
      %1044 = vmatpush.bf16.msra.mxu0 0
      %1045 = vmatpush.bf16.msra.mxu0 0
      %1046 = vmatpush.bf16.msra.mxu0 0
      %1047 = vmatpush.bf16.msra.mxu0 0
      %1048 = vmatpush.bf16.msra.mxu0 %v1011
      %1049 = vmatmul.bf16.gmra.mxu0 %v1005
      %v1050 = vpop.f32.mrf.mxu0
      %v1051 = vadd.f32 0.0, %v1050
      %v1052 = vpop.f32.mrf.mxu0
      %1053 = vdwg.mxu0
      %1054 = vmatpush.bf16.msra.mxu0 0
      %1055 = vmatpush.bf16.msra.mxu0 0
      %1056 = vmatpush.bf16.msra.mxu0 0
      %1057 = vmatpush.bf16.msra.mxu0 0
      %1058 = vmatpush.bf16.msra.mxu0 0
      %1059 = vmatpush.bf16.msra.mxu0 0
      %1060 = vmatpush.bf16.msra.mxu0 0
      %1061 = vmatpush.bf16.msra.mxu0 %v1014
      %1062 = vmatmul.bf16.gmra.mxu0 %v1005
      %v1063 = vpop.f32.mrf.mxu0
      %v1064 = vadd.f32 0.0, %v1063
      %v1065 = vpop.f32.mrf.mxu0
      %1066 = vdwg.mxu0
      %1067 = vmatpush.bf16.msra.mxu0 0
      %1068 = vmatpush.bf16.msra.mxu0 0
      %1069 = vmatpush.bf16.msra.mxu0 0
      %1070 = vmatpush.bf16.msra.mxu0 0
      %1071 = vmatpush.bf16.msra.mxu0 0
      %1072 = vmatpush.bf16.msra.mxu0 0
      %1073 = vmatpush.bf16.msra.mxu0 0
      %1074 = vmatpush.bf16.msra.mxu0 %v1017
      %1075 = vmatmul.bf16.gmra.mxu0 %v1005
      %v1076 = vpop.f32.mrf.mxu0
      %v1077 = vadd.f32 0.0, %v1076
      %v1078 = vpop.f32.mrf.mxu0
      %1079 = vdwg.mxu0
      %1080 = vmatpush.bf16.msra.mxu0 0
      %1081 = vmatpush.bf16.msra.mxu0 0
      %1082 = vmatpush.bf16.msra.mxu0 0
      %1083 = vmatpush.bf16.msra.mxu0 0
      %1084 = vmatpush.bf16.msra.mxu0 0
      %1085 = vmatpush.bf16.msra.mxu0 0
      %1086 = vmatpush.bf16.msra.mxu0 0
      %1087 = vmatpush.bf16.msra.mxu0 %v1020
      %1088 = vmatmul.bf16.gmra.mxu0 %v1005
      %v1089 = vpop.f32.mrf.mxu0
      %v1090 = vadd.f32 0.0, %v1089
      %v1091 = vpop.f32.mrf.mxu0
      %1092 = vdwg.mxu0
      %1093 = vmatpush.bf16.msra.mxu0 0
      %1094 = vmatpush.bf16.msra.mxu0 0
      %1095 = vmatpush.bf16.msra.mxu0 0
      %1096 = vmatpush.bf16.msra.mxu0 0
      %1097 = vmatpush.bf16.msra.mxu0 0
      %1098 = vmatpush.bf16.msra.mxu0 0
      %1099 = vmatpush.bf16.msra.mxu0 0
      %1100 = vmatpush.bf16.msra.mxu0 %v1023
      %1101 = vmatmul.bf16.gmra.mxu0 %v1005
      %v1102 = vpop.f32.mrf.mxu0
      %v1103 = vadd.f32 0.0, %v1102
      %v1104 = vpop.f32.mrf.mxu0
      %1105 = vdwg.mxu0
      %1106 = vmatpush.bf16.msra.mxu0 0
      %1107 = vmatpush.bf16.msra.mxu0 0
      %1108 = vmatpush.bf16.msra.mxu0 0
      %1109 = vmatpush.bf16.msra.mxu0 0
      %1110 = vmatpush.bf16.msra.mxu0 0
      %1111 = vmatpush.bf16.msra.mxu0 0
      %1112 = vmatpush.bf16.msra.mxu0 0
      %1113 = vmatpush.bf16.msra.mxu0 %v1026
      %1114 = vmatmul.bf16.gmra.mxu0 %v1005
      %v1115 = vpop.f32.mrf.mxu0
      %v1116 = vadd.f32 0.0, %v1115
      %v1117 = vpop.f32.mrf.mxu0
      %1118 = vdwg.mxu0
      %v1119 = vadd.f32 %v952, %v1038
      %v1120 = vadd.f32 %v953, %v1051
      %v1121 = vadd.f32 %v954, %v1064
      %v1122 = vadd.f32 %v955, %v1077
      %v1123 = vadd.f32 %v956, %v1090
      %v1124 = vadd.f32 %v957, %v1103
      %v1125 = vadd.f32 %v958, %v1116
      %s1126 = scalar_lea.vmem %s1, 24
      %v1127 = vld [vmem:[%s1126] sm:$0xf]
      %1128 = vst [vmem:[#allocation1] ss:$4 sm:$0xff] %v172
      %s1129 = scalar_lea.vmem [#allocation1], 32
      %1130 = vst [vmem:[%s1129] ss:$4 sm:$0xff] %v173
      %v1131 = vld.sshfl [vmem:[#allocation1] sm:$0xff pattern:$0x73625140]
      %v1133 = vld.sshfl [vmem:[#allocation1 + $0x8] sm:$0xff pattern:$0x73625140]
      %v1135 = vld.sshfl [vmem:[#allocation1 + $0x10] sm:$0xff pattern:$0x73625140]
      %v1137 = vld.sshfl [vmem:[#allocation1 + $0x18] sm:$0xff pattern:$0x73625140]
      %v1139 = vld.sshfl [vmem:[#allocation1 + $0x20] sm:$0xff pattern:$0x73625140]
      %v1141 = vld.sshfl [vmem:[#allocation1 + $0x28] sm:$0xff pattern:$0x73625140]
      %v1143 = vld.sshfl [vmem:[#allocation1 + $0x30] sm:$0xff pattern:$0x73625140]
      %v1145 = vld.sshfl [vmem:[#allocation1 + $0x38] sm:$0xff pattern:$0x73625140]
      %1147 = vrot.lane.b32.xlu0 %v1131, 108
      %v1148 = vpop.permute.xlu0 %1147
      %1149 = vrot.lane.b32.xlu0 %v1133, 108
      %v1150 = vpop.permute.xlu0 %1149
      %1151 = vrot.lane.b32.xlu0 %v1135, 108
      %v1152 = vpop.permute.xlu0 %1151
      %1153 = vrot.lane.b32.xlu0 %v1137, 108
      %v1154 = vpop.permute.xlu0 %1153
      %1155 = vrot.lane.b32.xlu0 %v1139, 108
      %v1156 = vpop.permute.xlu0 %1155
      %1157 = vrot.lane.b32.xlu0 %v1141, 108
      %v1158 = vpop.permute.xlu0 %1157
      %1159 = vrot.lane.b32.xlu0 %v1143, 108
      %v1160 = vpop.permute.xlu0 %1159
      %1161 = vrot.lane.b32.xlu0 %v1145, 108
      %v1162 = vpop.permute.xlu0 %1161
      %vm1163 = vcmask 883712
      %v1164 = vsel %vm1163, %v1148, %v1150
      %v1165 = vsel %vm1163, %v1150, %v1152
      %v1166 = vsel %vm1163, %v1152, %v1154
      %v1167 = vsel %vm1163, %v1154, %v1156
      %v1168 = vsel %vm1163, %v1156, %v1158
      %v1169 = vsel %vm1163, %v1158, %v1160
      %v1170 = vsel %vm1163, %v1160, %v1162
      %v1172 = vsel %vm223, %v1127, 0
      %v1175 = vsel %vm227, %v1164, 0
      %v1178 = vsel %vm227, %v1165, 0
      %v1181 = vsel %vm227, %v1166, 0
      %v1184 = vsel %vm227, %v1167, 0
      %v1187 = vsel %vm227, %v1168, 0
      %v1190 = vsel %vm227, %v1169, 0
      %v1193 = vsel %vm227, %v1170, 0
      %1195 = vmatpush.bf16.msra.mxu0 0
      %1196 = vmatpush.bf16.msra.mxu0 0
      %1197 = vmatpush.bf16.msra.mxu0 0
      %1198 = vmatpush.bf16.msra.mxu0 0
      %1199 = vmatpush.bf16.msra.mxu0 0
      %1200 = vmatpush.bf16.msra.mxu0 0
      %1201 = vmatpush.bf16.msra.mxu0 0
      %1202 = vmatpush.bf16.msra.mxu0 %v1175
      %1203 = vmatmul.bf16.gmra.mxu0 %v1172
      %v1204 = vpop.f32.mrf.mxu0
      %v1205 = vadd.f32 0.0, %v1204
      %v1206 = vpop.f32.mrf.mxu0
      %1207 = vdwg.mxu0
      %1208 = vmatpush.bf16.msra.mxu0 0
      %1209 = vmatpush.bf16.msra.mxu0 0
      %1210 = vmatpush.bf16.msra.mxu0 0
      %1211 = vmatpush.bf16.msra.mxu0 0
      %1212 = vmatpush.bf16.msra.mxu0 0
      %1213 = vmatpush.bf16.msra.mxu0 0
      %1214 = vmatpush.bf16.msra.mxu0 0
      %1215 = vmatpush.bf16.msra.mxu0 %v1178
      %1216 = vmatmul.bf16.gmra.mxu0 %v1172
      %v1217 = vpop.f32.mrf.mxu0
      %v1218 = vadd.f32 0.0, %v1217
      %v1219 = vpop.f32.mrf.mxu0
      %1220 = vdwg.mxu0
      %1221 = vmatpush.bf16.msra.mxu0 0
      %1222 = vmatpush.bf16.msra.mxu0 0
      %1223 = vmatpush.bf16.msra.mxu0 0
      %1224 = vmatpush.bf16.msra.mxu0 0
      %1225 = vmatpush.bf16.msra.mxu0 0
      %1226 = vmatpush.bf16.msra.mxu0 0
      %1227 = vmatpush.bf16.msra.mxu0 0
      %1228 = vmatpush.bf16.msra.mxu0 %v1181
      %1229 = vmatmul.bf16.gmra.mxu0 %v1172
      %v1230 = vpop.f32.mrf.mxu0
      %v1231 = vadd.f32 0.0, %v1230
      %v1232 = vpop.f32.mrf.mxu0
      %1233 = vdwg.mxu0
      %1234 = vmatpush.bf16.msra.mxu0 0
      %1235 = vmatpush.bf16.msra.mxu0 0
      %1236 = vmatpush.bf16.msra.mxu0 0
      %1237 = vmatpush.bf16.msra.mxu0 0
      %1238 = vmatpush.bf16.msra.mxu0 0
      %1239 = vmatpush.bf16.msra.mxu0 0
      %1240 = vmatpush.bf16.msra.mxu0 0
      %1241 = vmatpush.bf16.msra.mxu0 %v1184
      %1242 = vmatmul.bf16.gmra.mxu0 %v1172
      %v1243 = vpop.f32.mrf.mxu0
      %v1244 = vadd.f32 0.0, %v1243
      %v1245 = vpop.f32.mrf.mxu0
      %1246 = vdwg.mxu0
      %1247 = vmatpush.bf16.msra.mxu0 0
      %1248 = vmatpush.bf16.msra.mxu0 0
      %1249 = vmatpush.bf16.msra.mxu0 0
      %1250 = vmatpush.bf16.msra.mxu0 0
      %1251 = vmatpush.bf16.msra.mxu0 0
      %1252 = vmatpush.bf16.msra.mxu0 0
      %1253 = vmatpush.bf16.msra.mxu0 0
      %1254 = vmatpush.bf16.msra.mxu0 %v1187
      %1255 = vmatmul.bf16.gmra.mxu0 %v1172
      %v1256 = vpop.f32.mrf.mxu0
      %v1257 = vadd.f32 0.0, %v1256
      %v1258 = vpop.f32.mrf.mxu0
      %1259 = vdwg.mxu0
      %1260 = vmatpush.bf16.msra.mxu0 0
      %1261 = vmatpush.bf16.msra.mxu0 0
      %1262 = vmatpush.bf16.msra.mxu0 0
      %1263 = vmatpush.bf16.msra.mxu0 0
      %1264 = vmatpush.bf16.msra.mxu0 0
      %1265 = vmatpush.bf16.msra.mxu0 0
      %1266 = vmatpush.bf16.msra.mxu0 0
      %1267 = vmatpush.bf16.msra.mxu0 %v1190
      %1268 = vmatmul.bf16.gmra.mxu0 %v1172
      %v1269 = vpop.f32.mrf.mxu0
      %v1270 = vadd.f32 0.0, %v1269
      %v1271 = vpop.f32.mrf.mxu0
      %1272 = vdwg.mxu0
      %1273 = vmatpush.bf16.msra.mxu0 0
      %1274 = vmatpush.bf16.msra.mxu0 0
      %1275 = vmatpush.bf16.msra.mxu0 0
      %1276 = vmatpush.bf16.msra.mxu0 0
      %1277 = vmatpush.bf16.msra.mxu0 0
      %1278 = vmatpush.bf16.msra.mxu0 0
      %1279 = vmatpush.bf16.msra.mxu0 0
      %1280 = vmatpush.bf16.msra.mxu0 %v1193
      %1281 = vmatmul.bf16.gmra.mxu0 %v1172
      %v1282 = vpop.f32.mrf.mxu0
      %v1283 = vadd.f32 0.0, %v1282
      %v1284 = vpop.f32.mrf.mxu0
      %1285 = vdwg.mxu0
      %v1286 = vadd.f32 %v1119, %v1205
      %v1287 = vadd.f32 %v1120, %v1218
      %v1288 = vadd.f32 %v1121, %v1231
      %v1289 = vadd.f32 %v1122, %v1244
      %v1290 = vadd.f32 %v1123, %v1257
      %v1291 = vadd.f32 %v1124, %v1270
      %v1292 = vadd.f32 %v1125, %v1283
      %s1293 = scalar_lea.vmem %s1, 28
      %v1294 = vld [vmem:[%s1293] sm:$0xf]
      %1295 = vst [vmem:[#allocation1] ss:$4 sm:$0xff] %v172
      %s1296 = scalar_lea.vmem [#allocation1], 32
      %1297 = vst [vmem:[%s1296] ss:$4 sm:$0xff] %v173
      %v1298 = vld.sshfl [vmem:[#allocation1] sm:$0xff pattern:$0x73625140]
      %v1300 = vld.sshfl [vmem:[#allocation1 + $0x8] sm:$0xff pattern:$0x73625140]
      %v1302 = vld.sshfl [vmem:[#allocation1 + $0x10] sm:$0xff pattern:$0x73625140]
      %v1304 = vld.sshfl [vmem:[#allocation1 + $0x18] sm:$0xff pattern:$0x73625140]
      %v1306 = vld.sshfl [vmem:[#allocation1 + $0x20] sm:$0xff pattern:$0x73625140]
      %v1308 = vld.sshfl [vmem:[#allocation1 + $0x28] sm:$0xff pattern:$0x73625140]
      %v1310 = vld.sshfl [vmem:[#allocation1 + $0x30] sm:$0xff pattern:$0x73625140]
      %v1312 = vld.sshfl [vmem:[#allocation1 + $0x38] sm:$0xff pattern:$0x73625140]
      %1314 = vrot.lane.b32.xlu0 %v1298, 107
      %v1315 = vpop.permute.xlu0 %1314
      %1316 = vrot.lane.b32.xlu0 %v1300, 107
      %v1317 = vpop.permute.xlu0 %1316
      %1318 = vrot.lane.b32.xlu0 %v1302, 107
      %v1319 = vpop.permute.xlu0 %1318
      %1320 = vrot.lane.b32.xlu0 %v1304, 107
      %v1321 = vpop.permute.xlu0 %1320
      %1322 = vrot.lane.b32.xlu0 %v1306, 107
      %v1323 = vpop.permute.xlu0 %1322
      %1324 = vrot.lane.b32.xlu0 %v1308, 107
      %v1325 = vpop.permute.xlu0 %1324
      %1326 = vrot.lane.b32.xlu0 %v1310, 107
      %v1327 = vpop.permute.xlu0 %1326
      %1328 = vrot.lane.b32.xlu0 %v1312, 107
      %v1329 = vpop.permute.xlu0 %1328
      %vm1330 = vcmask 875520
      %v1331 = vsel %vm1330, %v1315, %v1317
      %v1332 = vsel %vm1330, %v1317, %v1319
      %v1333 = vsel %vm1330, %v1319, %v1321
      %v1334 = vsel %vm1330, %v1321, %v1323
      %v1335 = vsel %vm1330, %v1323, %v1325
      %v1336 = vsel %vm1330, %v1325, %v1327
      %v1337 = vsel %vm1330, %v1327, %v1329
      %v1339 = vsel %vm223, %v1294, 0
      %v1342 = vsel %vm227, %v1331, 0
      %v1345 = vsel %vm227, %v1332, 0
      %v1348 = vsel %vm227, %v1333, 0
      %v1351 = vsel %vm227, %v1334, 0
      %v1354 = vsel %vm227, %v1335, 0
      %v1357 = vsel %vm227, %v1336, 0
      %v1360 = vsel %vm227, %v1337, 0
      %1362 = vmatpush.bf16.msra.mxu0 0
      %1363 = vmatpush.bf16.msra.mxu0 0
      %1364 = vmatpush.bf16.msra.mxu0 0
      %1365 = vmatpush.bf16.msra.mxu0 0
      %1366 = vmatpush.bf16.msra.mxu0 0
      %1367 = vmatpush.bf16.msra.mxu0 0
      %1368 = vmatpush.bf16.msra.mxu0 0
      %1369 = vmatpush.bf16.msra.mxu0 %v1342
      %1370 = vmatmul.bf16.gmra.mxu0 %v1339
      %v1371 = vpop.f32.mrf.mxu0
      %v1372 = vadd.f32 0.0, %v1371
      %v1373 = vpop.f32.mrf.mxu0
      %1374 = vdwg.mxu0
      %1375 = vmatpush.bf16.msra.mxu0 0
      %1376 = vmatpush.bf16.msra.mxu0 0
      %1377 = vmatpush.bf16.msra.mxu0 0
      %1378 = vmatpush.bf16.msra.mxu0 0
      %1379 = vmatpush.bf16.msra.mxu0 0
      %1380 = vmatpush.bf16.msra.mxu0 0
      %1381 = vmatpush.bf16.msra.mxu0 0
      %1382 = vmatpush.bf16.msra.mxu0 %v1345
      %1383 = vmatmul.bf16.gmra.mxu0 %v1339
      %v1384 = vpop.f32.mrf.mxu0
      %v1385 = vadd.f32 0.0, %v1384
      %v1386 = vpop.f32.mrf.mxu0
      %1387 = vdwg.mxu0
      %1388 = vmatpush.bf16.msra.mxu0 0
      %1389 = vmatpush.bf16.msra.mxu0 0
      %1390 = vmatpush.bf16.msra.mxu0 0
      %1391 = vmatpush.bf16.msra.mxu0 0
      %1392 = vmatpush.bf16.msra.mxu0 0
      %1393 = vmatpush.bf16.msra.mxu0 0
      %1394 = vmatpush.bf16.msra.mxu0 0
      %1395 = vmatpush.bf16.msra.mxu0 %v1348
      %1396 = vmatmul.bf16.gmra.mxu0 %v1339
      %v1397 = vpop.f32.mrf.mxu0
      %v1398 = vadd.f32 0.0, %v1397
      %v1399 = vpop.f32.mrf.mxu0
      %1400 = vdwg.mxu0
      %1401 = vmatpush.bf16.msra.mxu0 0
      %1402 = vmatpush.bf16.msra.mxu0 0
      %1403 = vmatpush.bf16.msra.mxu0 0
      %1404 = vmatpush.bf16.msra.mxu0 0
      %1405 = vmatpush.bf16.msra.mxu0 0
      %1406 = vmatpush.bf16.msra.mxu0 0
      %1407 = vmatpush.bf16.msra.mxu0 0
      %1408 = vmatpush.bf16.msra.mxu0 %v1351
      %1409 = vmatmul.bf16.gmra.mxu0 %v1339
      %v1410 = vpop.f32.mrf.mxu0
      %v1411 = vadd.f32 0.0, %v1410
      %v1412 = vpop.f32.mrf.mxu0
      %1413 = vdwg.mxu0
      %1414 = vmatpush.bf16.msra.mxu0 0
      %1415 = vmatpush.bf16.msra.mxu0 0
      %1416 = vmatpush.bf16.msra.mxu0 0
      %1417 = vmatpush.bf16.msra.mxu0 0
      %1418 = vmatpush.bf16.msra.mxu0 0
      %1419 = vmatpush.bf16.msra.mxu0 0
      %1420 = vmatpush.bf16.msra.mxu0 0
      %1421 = vmatpush.bf16.msra.mxu0 %v1354
      %1422 = vmatmul.bf16.gmra.mxu0 %v1339
      %v1423 = vpop.f32.mrf.mxu0
      %v1424 = vadd.f32 0.0, %v1423
      %v1425 = vpop.f32.mrf.mxu0
      %1426 = vdwg.mxu0
      %1427 = vmatpush.bf16.msra.mxu0 0
      %1428 = vmatpush.bf16.msra.mxu0 0
      %1429 = vmatpush.bf16.msra.mxu0 0
      %1430 = vmatpush.bf16.msra.mxu0 0
      %1431 = vmatpush.bf16.msra.mxu0 0
      %1432 = vmatpush.bf16.msra.mxu0 0
      %1433 = vmatpush.bf16.msra.mxu0 0
      %1434 = vmatpush.bf16.msra.mxu0 %v1357
      %1435 = vmatmul.bf16.gmra.mxu0 %v1339
      %v1436 = vpop.f32.mrf.mxu0
      %v1437 = vadd.f32 0.0, %v1436
      %v1438 = vpop.f32.mrf.mxu0
      %1439 = vdwg.mxu0
      %1440 = vmatpush.bf16.msra.mxu0 0
      %1441 = vmatpush.bf16.msra.mxu0 0
      %1442 = vmatpush.bf16.msra.mxu0 0
      %1443 = vmatpush.bf16.msra.mxu0 0
      %1444 = vmatpush.bf16.msra.mxu0 0
      %1445 = vmatpush.bf16.msra.mxu0 0
      %1446 = vmatpush.bf16.msra.mxu0 0
      %1447 = vmatpush.bf16.msra.mxu0 %v1360
      %1448 = vmatmul.bf16.gmra.mxu0 %v1339
      %v1449 = vpop.f32.mrf.mxu0
      %v1450 = vadd.f32 0.0, %v1449
      %v1451 = vpop.f32.mrf.mxu0
      %1452 = vdwg.mxu0
      %v1453 = vadd.f32 %v1286, %v1372
      %v1454 = vadd.f32 %v1287, %v1385
      %v1455 = vadd.f32 %v1288, %v1398
      %v1456 = vadd.f32 %v1289, %v1411
      %v1457 = vadd.f32 %v1290, %v1424
      %v1458 = vadd.f32 %v1291, %v1437
      %v1459 = vadd.f32 %v1292, %v1450
      %s1460 = scalar_lea.vmem %s1, 32
      %v1461 = vld [vmem:[%s1460] sm:$0xf]
      %1462 = vst [vmem:[#allocation1] ss:$4 sm:$0xff] %v172
      %s1463 = scalar_lea.vmem [#allocation1], 32
      %1464 = vst [vmem:[%s1463] ss:$4 sm:$0xff] %v173
      %v1465 = vld.sshfl [vmem:[#allocation1] sm:$0xff pattern:$0x73625140]
      %v1467 = vld.sshfl [vmem:[#allocation1 + $0x8] sm:$0xff pattern:$0x73625140]
      %v1469 = vld.sshfl [vmem:[#allocation1 + $0x10] sm:$0xff pattern:$0x73625140]
      %v1471 = vld.sshfl [vmem:[#allocation1 + $0x18] sm:$0xff pattern:$0x73625140]
      %v1473 = vld.sshfl [vmem:[#allocation1 + $0x20] sm:$0xff pattern:$0x73625140]
      %v1475 = vld.sshfl [vmem:[#allocation1 + $0x28] sm:$0xff pattern:$0x73625140]
      %v1477 = vld.sshfl [vmem:[#allocation1 + $0x30] sm:$0xff pattern:$0x73625140]
      %v1479 = vld.sshfl [vmem:[#allocation1 + $0x38] sm:$0xff pattern:$0x73625140]
      %1481 = vrot.lane.b32.xlu0 %v1465, 106
      %v1482 = vpop.permute.xlu0 %1481
      %1483 = vrot.lane.b32.xlu0 %v1467, 106
      %v1484 = vpop.permute.xlu0 %1483
      %1485 = vrot.lane.b32.xlu0 %v1469, 106
      %v1486 = vpop.permute.xlu0 %1485
      %1487 = vrot.lane.b32.xlu0 %v1471, 106
      %v1488 = vpop.permute.xlu0 %1487
      %1489 = vrot.lane.b32.xlu0 %v1473, 106
      %v1490 = vpop.permute.xlu0 %1489
      %1491 = vrot.lane.b32.xlu0 %v1475, 106
      %v1492 = vpop.permute.xlu0 %1491
      %1493 = vrot.lane.b32.xlu0 %v1477, 106
      %v1494 = vpop.permute.xlu0 %1493
      %1495 = vrot.lane.b32.xlu0 %v1479, 106
      %v1496 = vpop.permute.xlu0 %1495
      %vm1497 = vcmask 867328
      %v1498 = vsel %vm1497, %v1482, %v1484
      %v1499 = vsel %vm1497, %v1484, %v1486
      %v1500 = vsel %vm1497, %v1486, %v1488
      %v1501 = vsel %vm1497, %v1488, %v1490
      %v1502 = vsel %vm1497, %v1490, %v1492
      %v1503 = vsel %vm1497, %v1492, %v1494
      %v1504 = vsel %vm1497, %v1494, %v1496
      %v1506 = vsel %vm223, %v1461, 0
      %v1509 = vsel %vm227, %v1498, 0
      %v1512 = vsel %vm227, %v1499, 0
      %v1515 = vsel %vm227, %v1500, 0
      %v1518 = vsel %vm227, %v1501, 0
      %v1521 = vsel %vm227, %v1502, 0
      %v1524 = vsel %vm227, %v1503, 0
      %v1527 = vsel %vm227, %v1504, 0
      %1529 = vmatpush.bf16.msra.mxu0 0
      %1530 = vmatpush.bf16.msra.mxu0 0
      %1531 = vmatpush.bf16.msra.mxu0 0
      %1532 = vmatpush.bf16.msra.mxu0 0
      %1533 = vmatpush.bf16.msra.mxu0 0
      %1534 = vmatpush.bf16.msra.mxu0 0
      %1535 = vmatpush.bf16.msra.mxu0 0
      %1536 = vmatpush.bf16.msra.mxu0 %v1509
      %1537 = vmatmul.bf16.gmra.mxu0 %v1506
      %v1538 = vpop.f32.mrf.mxu0
      %v1539 = vadd.f32 0.0, %v1538
      %v1540 = vpop.f32.mrf.mxu0
      %1541 = vdwg.mxu0
      %1542 = vmatpush.bf16.msra.mxu0 0
      %1543 = vmatpush.bf16.msra.mxu0 0
      %1544 = vmatpush.bf16.msra.mxu0 0
      %1545 = vmatpush.bf16.msra.mxu0 0
      %1546 = vmatpush.bf16.msra.mxu0 0
      %1547 = vmatpush.bf16.msra.mxu0 0
      %1548 = vmatpush.bf16.msra.mxu0 0
      %1549 = vmatpush.bf16.msra.mxu0 %v1512
      %1550 = vmatmul.bf16.gmra.mxu0 %v1506
      %v1551 = vpop.f32.mrf.mxu0
      %v1552 = vadd.f32 0.0, %v1551
      %v1553 = vpop.f32.mrf.mxu0
      %1554 = vdwg.mxu0
      %1555 = vmatpush.bf16.msra.mxu0 0
      %1556 = vmatpush.bf16.msra.mxu0 0
      %1557 = vmatpush.bf16.msra.mxu0 0
      %1558 = vmatpush.bf16.msra.mxu0 0
      %1559 = vmatpush.bf16.msra.mxu0 0
      %1560 = vmatpush.bf16.msra.mxu0 0
      %1561 = vmatpush.bf16.msra.mxu0 0
      %1562 = vmatpush.bf16.msra.mxu0 %v1515
      %1563 = vmatmul.bf16.gmra.mxu0 %v1506
      %v1564 = vpop.f32.mrf.mxu0
      %v1565 = vadd.f32 0.0, %v1564
      %v1566 = vpop.f32.mrf.mxu0
      %1567 = vdwg.mxu0
      %1568 = vmatpush.bf16.msra.mxu0 0
      %1569 = vmatpush.bf16.msra.mxu0 0
      %1570 = vmatpush.bf16.msra.mxu0 0
      %1571 = vmatpush.bf16.msra.mxu0 0
      %1572 = vmatpush.bf16.msra.mxu0 0
      %1573 = vmatpush.bf16.msra.mxu0 0
      %1574 = vmatpush.bf16.msra.mxu0 0
      %1575 = vmatpush.bf16.msra.mxu0 %v1518
      %1576 = vmatmul.bf16.gmra.mxu0 %v1506
      %v1577 = vpop.f32.mrf.mxu0
      %v1578 = vadd.f32 0.0, %v1577
      %v1579 = vpop.f32.mrf.mxu0
      %1580 = vdwg.mxu0
      %1581 = vmatpush.bf16.msra.mxu0 0
      %1582 = vmatpush.bf16.msra.mxu0 0
      %1583 = vmatpush.bf16.msra.mxu0 0
      %1584 = vmatpush.bf16.msra.mxu0 0
      %1585 = vmatpush.bf16.msra.mxu0 0
      %1586 = vmatpush.bf16.msra.mxu0 0
      %1587 = vmatpush.bf16.msra.mxu0 0
      %1588 = vmatpush.bf16.msra.mxu0 %v1521
      %1589 = vmatmul.bf16.gmra.mxu0 %v1506
      %v1590 = vpop.f32.mrf.mxu0
      %v1591 = vadd.f32 0.0, %v1590
      %v1592 = vpop.f32.mrf.mxu0
      %1593 = vdwg.mxu0
      %1594 = vmatpush.bf16.msra.mxu0 0
      %1595 = vmatpush.bf16.msra.mxu0 0
      %1596 = vmatpush.bf16.msra.mxu0 0
      %1597 = vmatpush.bf16.msra.mxu0 0
      %1598 = vmatpush.bf16.msra.mxu0 0
      %1599 = vmatpush.bf16.msra.mxu0 0
      %1600 = vmatpush.bf16.msra.mxu0 0
      %1601 = vmatpush.bf16.msra.mxu0 %v1524
      %1602 = vmatmul.bf16.gmra.mxu0 %v1506
      %v1603 = vpop.f32.mrf.mxu0
      %v1604 = vadd.f32 0.0, %v1603
      %v1605 = vpop.f32.mrf.mxu0
      %1606 = vdwg.mxu0
      %1607 = vmatpush.bf16.msra.mxu0 0
      %1608 = vmatpush.bf16.msra.mxu0 0
      %1609 = vmatpush.bf16.msra.mxu0 0
      %1610 = vmatpush.bf16.msra.mxu0 0
      %1611 = vmatpush.bf16.msra.mxu0 0
      %1612 = vmatpush.bf16.msra.mxu0 0
      %1613 = vmatpush.bf16.msra.mxu0 0
      %1614 = vmatpush.bf16.msra.mxu0 %v1527
      %1615 = vmatmul.bf16.gmra.mxu0 %v1506
      %v1616 = vpop.f32.mrf.mxu0
      %v1617 = vadd.f32 0.0, %v1616
      %v1618 = vpop.f32.mrf.mxu0
      %1619 = vdwg.mxu0
      %v1620 = vadd.f32 %v1453, %v1539
      %v1621 = vadd.f32 %v1454, %v1552
      %v1622 = vadd.f32 %v1455, %v1565
      %v1623 = vadd.f32 %v1456, %v1578
      %v1624 = vadd.f32 %v1457, %v1591
      %v1625 = vadd.f32 %v1458, %v1604
      %v1626 = vadd.f32 %v1459, %v1617
      %s1627 = scalar_lea.vmem %s1, 36
      %v1628 = vld [vmem:[%s1627] sm:$0xf]
      %1629 = vst [vmem:[#allocation1] ss:$4 sm:$0xff] %v172
      %s1630 = scalar_lea.vmem [#allocation1], 32
      %1631 = vst [vmem:[%s1630] ss:$4 sm:$0xff] %v173
      %v1632 = vld.sshfl [vmem:[#allocation1] sm:$0xff pattern:$0x73625140]
      %v1634 = vld.sshfl [vmem:[#allocation1 + $0x8] sm:$0xff pattern:$0x73625140]
      %v1636 = vld.sshfl [vmem:[#allocation1 + $0x10] sm:$0xff pattern:$0x73625140]
      %v1638 = vld.sshfl [vmem:[#allocation1 + $0x18] sm:$0xff pattern:$0x73625140]
      %v1640 = vld.sshfl [vmem:[#allocation1 + $0x20] sm:$0xff pattern:$0x73625140]
      %v1642 = vld.sshfl [vmem:[#allocation1 + $0x28] sm:$0xff pattern:$0x73625140]
      %v1644 = vld.sshfl [vmem:[#allocation1 + $0x30] sm:$0xff pattern:$0x73625140]
      %v1646 = vld.sshfl [vmem:[#allocation1 + $0x38] sm:$0xff pattern:$0x73625140]
      %1648 = vrot.lane.b32.xlu0 %v1632, 28
      %v1649 = vpop.permute.xlu0 %1648
      %1650 = vrot.lane.b32.xlu0 %v1634, 28
      %v1651 = vpop.permute.xlu0 %1650
      %1652 = vrot.lane.b32.xlu0 %v1636, 28
      %v1653 = vpop.permute.xlu0 %1652
      %1654 = vrot.lane.b32.xlu0 %v1638, 28
      %v1655 = vpop.permute.xlu0 %1654
      %1656 = vrot.lane.b32.xlu0 %v1640, 28
      %v1657 = vpop.permute.xlu0 %1656
      %1658 = vrot.lane.b32.xlu0 %v1642, 28
      %v1659 = vpop.permute.xlu0 %1658
      %1660 = vrot.lane.b32.xlu0 %v1644, 28
      %v1661 = vpop.permute.xlu0 %1660
      %1662 = vrot.lane.b32.xlu0 %v1646, 28
      %v1663 = vpop.permute.xlu0 %1662
      %vm1664 = vcmask 228352
      %v1665 = vsel %vm1664, %v1649, %v1651
      %v1666 = vsel %vm1664, %v1651, %v1653
      %v1667 = vsel %vm1664, %v1653, %v1655
      %v1668 = vsel %vm1664, %v1655, %v1657
      %v1669 = vsel %vm1664, %v1657, %v1659
      %v1670 = vsel %vm1664, %v1659, %v1661
      %v1671 = vsel %vm1664, %v1661, %v1663
      %v1673 = vsel %vm223, %v1628, 0
      %v1676 = vsel %vm227, %v1665, 0
      %v1679 = vsel %vm227, %v1666, 0
      %v1682 = vsel %vm227, %v1667, 0
      %v1685 = vsel %vm227, %v1668, 0
      %v1688 = vsel %vm227, %v1669, 0
      %v1691 = vsel %vm227, %v1670, 0
      %v1694 = vsel %vm227, %v1671, 0
      %1696 = vmatpush.bf16.msra.mxu0 0
      %1697 = vmatpush.bf16.msra.mxu0 0
      %1698 = vmatpush.bf16.msra.mxu0 0
      %1699 = vmatpush.bf16.msra.mxu0 0
      %1700 = vmatpush.bf16.msra.mxu0 0
      %1701 = vmatpush.bf16.msra.mxu0 0
      %1702 = vmatpush.bf16.msra.mxu0 0
      %1703 = vmatpush.bf16.msra.mxu0 %v1676
      %1704 = vmatmul.bf16.gmra.mxu0 %v1673
      %v1705 = vpop.f32.mrf.mxu0
      %v1706 = vadd.f32 0.0, %v1705
      %v1707 = vpop.f32.mrf.mxu0
      %1708 = vdwg.mxu0
      %1709 = vmatpush.bf16.msra.mxu0 0
      %1710 = vmatpush.bf16.msra.mxu0 0
      %1711 = vmatpush.bf16.msra.mxu0 0
      %1712 = vmatpush.bf16.msra.mxu0 0
      %1713 = vmatpush.bf16.msra.mxu0 0
      %1714 = vmatpush.bf16.msra.mxu0 0
      %1715 = vmatpush.bf16.msra.mxu0 0
      %1716 = vmatpush.bf16.msra.mxu0 %v1679
      %1717 = vmatmul.bf16.gmra.mxu0 %v1673
      %v1718 = vpop.f32.mrf.mxu0
      %v1719 = vadd.f32 0.0, %v1718
      %v1720 = vpop.f32.mrf.mxu0
      %1721 = vdwg.mxu0
      %1722 = vmatpush.bf16.msra.mxu0 0
      %1723 = vmatpush.bf16.msra.mxu0 0
      %1724 = vmatpush.bf16.msra.mxu0 0
      %1725 = vmatpush.bf16.msra.mxu0 0
      %1726 = vmatpush.bf16.msra.mxu0 0
      %1727 = vmatpush.bf16.msra.mxu0 0
      %1728 = vmatpush.bf16.msra.mxu0 0
      %1729 = vmatpush.bf16.msra.mxu0 %v1682
      %1730 = vmatmul.bf16.gmra.mxu0 %v1673
      %v1731 = vpop.f32.mrf.mxu0
      %v1732 = vadd.f32 0.0, %v1731
      %v1733 = vpop.f32.mrf.mxu0
      %1734 = vdwg.mxu0
      %1735 = vmatpush.bf16.msra.mxu0 0
      %1736 = vmatpush.bf16.msra.mxu0 0
      %1737 = vmatpush.bf16.msra.mxu0 0
      %1738 = vmatpush.bf16.msra.mxu0 0
      %1739 = vmatpush.bf16.msra.mxu0 0
      %1740 = vmatpush.bf16.msra.mxu0 0
      %1741 = vmatpush.bf16.msra.mxu0 0
      %1742 = vmatpush.bf16.msra.mxu0 %v1685
      %1743 = vmatmul.bf16.gmra.mxu0 %v1673
      %v1744 = vpop.f32.mrf.mxu0
      %v1745 = vadd.f32 0.0, %v1744
      %v1746 = vpop.f32.mrf.mxu0
      %1747 = vdwg.mxu0
      %1748 = vmatpush.bf16.msra.mxu0 0
      %1749 = vmatpush.bf16.msra.mxu0 0
      %1750 = vmatpush.bf16.msra.mxu0 0
      %1751 = vmatpush.bf16.msra.mxu0 0
      %1752 = vmatpush.bf16.msra.mxu0 0
      %1753 = vmatpush.bf16.msra.mxu0 0
      %1754 = vmatpush.bf16.msra.mxu0 0
      %1755 = vmatpush.bf16.msra.mxu0 %v1688
      %1756 = vmatmul.bf16.gmra.mxu0 %v1673
      %v1757 = vpop.f32.mrf.mxu0
      %v1758 = vadd.f32 0.0, %v1757
      %v1759 = vpop.f32.mrf.mxu0
      %1760 = vdwg.mxu0
      %1761 = vmatpush.bf16.msra.mxu0 0
      %1762 = vmatpush.bf16.msra.mxu0 0
      %1763 = vmatpush.bf16.msra.mxu0 0
      %1764 = vmatpush.bf16.msra.mxu0 0
      %1765 = vmatpush.bf16.msra.mxu0 0
      %1766 = vmatpush.bf16.msra.mxu0 0
      %1767 = vmatpush.bf16.msra.mxu0 0
      %1768 = vmatpush.bf16.msra.mxu0 %v1691
      %1769 = vmatmul.bf16.gmra.mxu0 %v1673
      %v1770 = vpop.f32.mrf.mxu0
      %v1771 = vadd.f32 0.0, %v1770
      %v1772 = vpop.f32.mrf.mxu0
      %1773 = vdwg.mxu0
      %1774 = vmatpush.bf16.msra.mxu0 0
      %1775 = vmatpush.bf16.msra.mxu0 0
      %1776 = vmatpush.bf16.msra.mxu0 0
      %1777 = vmatpush.bf16.msra.mxu0 0
      %1778 = vmatpush.bf16.msra.mxu0 0
      %1779 = vmatpush.bf16.msra.mxu0 0
      %1780 = vmatpush.bf16.msra.mxu0 0
      %1781 = vmatpush.bf16.msra.mxu0 %v1694
      %1782 = vmatmul.bf16.gmra.mxu0 %v1673
      %v1783 = vpop.f32.mrf.mxu0
      %v1784 = vadd.f32 0.0, %v1783
      %v1785 = vpop.f32.mrf.mxu0
      %1786 = vdwg.mxu0
      %v1787 = vadd.f32 %v1620, %v1706
      %v1788 = vadd.f32 %v1621, %v1719
      %v1789 = vadd.f32 %v1622, %v1732
      %v1790 = vadd.f32 %v1623, %v1745
      %v1791 = vadd.f32 %v1624, %v1758
      %v1792 = vadd.f32 %v1625, %v1771
      %v1793 = vadd.f32 %v1626, %v1784
      %s1794 = scalar_lea.vmem %s1, 40
      %v1795 = vld [vmem:[%s1794] sm:$0xf]
      %1796 = vst [vmem:[#allocation1] ss:$4 sm:$0xff] %v172
      %s1797 = scalar_lea.vmem [#allocation1], 32
      %1798 = vst [vmem:[%s1797] ss:$4 sm:$0xff] %v173
      %v1799 = vld.sshfl [vmem:[#allocation1] sm:$0xff pattern:$0x73625140]
      %v1801 = vld.sshfl [vmem:[#allocation1 + $0x8] sm:$0xff pattern:$0x73625140]
      %v1803 = vld.sshfl [vmem:[#allocation1 + $0x10] sm:$0xff pattern:$0x73625140]
      %v1805 = vld.sshfl [vmem:[#allocation1 + $0x18] sm:$0xff pattern:$0x73625140]
      %v1807 = vld.sshfl [vmem:[#allocation1 + $0x20] sm:$0xff pattern:$0x73625140]
      %v1809 = vld.sshfl [vmem:[#allocation1 + $0x28] sm:$0xff pattern:$0x73625140]
      %v1811 = vld.sshfl [vmem:[#allocation1 + $0x30] sm:$0xff pattern:$0x73625140]
      %v1813 = vld.sshfl [vmem:[#allocation1 + $0x38] sm:$0xff pattern:$0x73625140]
      %1815 = vrot.lane.b32.xlu0 %v1799, 27
      %v1816 = vpop.permute.xlu0 %1815
      %1817 = vrot.lane.b32.xlu0 %v1801, 27
      %v1818 = vpop.permute.xlu0 %1817
      %1819 = vrot.lane.b32.xlu0 %v1803, 27
      %v1820 = vpop.permute.xlu0 %1819
      %1821 = vrot.lane.b32.xlu0 %v1805, 27
      %v1822 = vpop.permute.xlu0 %1821
      %1823 = vrot.lane.b32.xlu0 %v1807, 27
      %v1824 = vpop.permute.xlu0 %1823
      %1825 = vrot.lane.b32.xlu0 %v1809, 27
      %v1826 = vpop.permute.xlu0 %1825
      %1827 = vrot.lane.b32.xlu0 %v1811, 27
      %v1828 = vpop.permute.xlu0 %1827
      %1829 = vrot.lane.b32.xlu0 %v1813, 27
      %v1830 = vpop.permute.xlu0 %1829
      %vm1831 = vcmask 220160
      %v1832 = vsel %vm1831, %v1816, %v1818
      %v1833 = vsel %vm1831, %v1818, %v1820
      %v1834 = vsel %vm1831, %v1820, %v1822
      %v1835 = vsel %vm1831, %v1822, %v1824
      %v1836 = vsel %vm1831, %v1824, %v1826
      %v1837 = vsel %vm1831, %v1826, %v1828
      %v1838 = vsel %vm1831, %v1828, %v1830
      %v1840 = vsel %vm223, %v1795, 0
      %v1843 = vsel %vm227, %v1832, 0
      %v1846 = vsel %vm227, %v1833, 0
      %v1849 = vsel %vm227, %v1834, 0
      %v1852 = vsel %vm227, %v1835, 0
      %v1855 = vsel %vm227, %v1836, 0
      %v1858 = vsel %vm227, %v1837, 0
      %v1861 = vsel %vm227, %v1838, 0
      %1863 = vmatpush.bf16.msra.mxu0 0
      %1864 = vmatpush.bf16.msra.mxu0 0
      %1865 = vmatpush.bf16.msra.mxu0 0
      %1866 = vmatpush.bf16.msra.mxu0 0
      %1867 = vmatpush.bf16.msra.mxu0 0
      %1868 = vmatpush.bf16.msra.mxu0 0
      %1869 = vmatpush.bf16.msra.mxu0 0
      %1870 = vmatpush.bf16.msra.mxu0 %v1843
      %1871 = vmatmul.bf16.gmra.mxu0 %v1840
      %v1872 = vpop.f32.mrf.mxu0
      %v1873 = vadd.f32 0.0, %v1872
      %v1874 = vpop.f32.mrf.mxu0
      %1875 = vdwg.mxu0
      %1876 = vmatpush.bf16.msra.mxu0 0
      %1877 = vmatpush.bf16.msra.mxu0 0
      %1878 = vmatpush.bf16.msra.mxu0 0
      %1879 = vmatpush.bf16.msra.mxu0 0
      %1880 = vmatpush.bf16.msra.mxu0 0
      %1881 = vmatpush.bf16.msra.mxu0 0
      %1882 = vmatpush.bf16.msra.mxu0 0
      %1883 = vmatpush.bf16.msra.mxu0 %v1846
      %1884 = vmatmul.bf16.gmra.mxu0 %v1840
      %v1885 = vpop.f32.mrf.mxu0
      %v1886 = vadd.f32 0.0, %v1885
      %v1887 = vpop.f32.mrf.mxu0
      %1888 = vdwg.mxu0
      %1889 = vmatpush.bf16.msra.mxu0 0
      %1890 = vmatpush.bf16.msra.mxu0 0
      %1891 = vmatpush.bf16.msra.mxu0 0
      %1892 = vmatpush.bf16.msra.mxu0 0
      %1893 = vmatpush.bf16.msra.mxu0 0
      %1894 = vmatpush.bf16.msra.mxu0 0
      %1895 = vmatpush.bf16.msra.mxu0 0
      %1896 = vmatpush.bf16.msra.mxu0 %v1849
      %1897 = vmatmul.bf16.gmra.mxu0 %v1840
      %v1898 = vpop.f32.mrf.mxu0
      %v1899 = vadd.f32 0.0, %v1898
      %v1900 = vpop.f32.mrf.mxu0
      %1901 = vdwg.mxu0
      %1902 = vmatpush.bf16.msra.mxu0 0
      %1903 = vmatpush.bf16.msra.mxu0 0
      %1904 = vmatpush.bf16.msra.mxu0 0
      %1905 = vmatpush.bf16.msra.mxu0 0
      %1906 = vmatpush.bf16.msra.mxu0 0
      %1907 = vmatpush.bf16.msra.mxu0 0
      %1908 = vmatpush.bf16.msra.mxu0 0
      %1909 = vmatpush.bf16.msra.mxu0 %v1852
      %1910 = vmatmul.bf16.gmra.mxu0 %v1840
      %v1911 = vpop.f32.mrf.mxu0
      %v1912 = vadd.f32 0.0, %v1911
      %v1913 = vpop.f32.mrf.mxu0
      %1914 = vdwg.mxu0
      %1915 = vmatpush.bf16.msra.mxu0 0
      %1916 = vmatpush.bf16.msra.mxu0 0
      %1917 = vmatpush.bf16.msra.mxu0 0
      %1918 = vmatpush.bf16.msra.mxu0 0
      %1919 = vmatpush.bf16.msra.mxu0 0
      %1920 = vmatpush.bf16.msra.mxu0 0
      %1921 = vmatpush.bf16.msra.mxu0 0
      %1922 = vmatpush.bf16.msra.mxu0 %v1855
      %1923 = vmatmul.bf16.gmra.mxu0 %v1840
      %v1924 = vpop.f32.mrf.mxu0
      %v1925 = vadd.f32 0.0, %v1924
      %v1926 = vpop.f32.mrf.mxu0
      %1927 = vdwg.mxu0
      %1928 = vmatpush.bf16.msra.mxu0 0
      %1929 = vmatpush.bf16.msra.mxu0 0
      %1930 = vmatpush.bf16.msra.mxu0 0
      %1931 = vmatpush.bf16.msra.mxu0 0
      %1932 = vmatpush.bf16.msra.mxu0 0
      %1933 = vmatpush.bf16.msra.mxu0 0
      %1934 = vmatpush.bf16.msra.mxu0 0
      %1935 = vmatpush.bf16.msra.mxu0 %v1858
      %1936 = vmatmul.bf16.gmra.mxu0 %v1840
      %v1937 = vpop.f32.mrf.mxu0
      %v1938 = vadd.f32 0.0, %v1937
      %v1939 = vpop.f32.mrf.mxu0
      %1940 = vdwg.mxu0
      %1941 = vmatpush.bf16.msra.mxu0 0
      %1942 = vmatpush.bf16.msra.mxu0 0
      %1943 = vmatpush.bf16.msra.mxu0 0
      %1944 = vmatpush.bf16.msra.mxu0 0
      %1945 = vmatpush.bf16.msra.mxu0 0
      %1946 = vmatpush.bf16.msra.mxu0 0
      %1947 = vmatpush.bf16.msra.mxu0 0
      %1948 = vmatpush.bf16.msra.mxu0 %v1861
      %1949 = vmatmul.bf16.gmra.mxu0 %v1840
      %v1950 = vpop.f32.mrf.mxu0
      %v1951 = vadd.f32 0.0, %v1950
      %v1952 = vpop.f32.mrf.mxu0
      %1953 = vdwg.mxu0
      %v1954 = vadd.f32 %v1787, %v1873
      %v1955 = vadd.f32 %v1788, %v1886
      %v1956 = vadd.f32 %v1789, %v1899
      %v1957 = vadd.f32 %v1790, %v1912
      %v1958 = vadd.f32 %v1791, %v1925
      %v1959 = vadd.f32 %v1792, %v1938
      %v1960 = vadd.f32 %v1793, %v1951
      %s1961 = scalar_lea.vmem %s1, 44
      %v1962 = vld [vmem:[%s1961] sm:$0xf]
      %1963 = vst [vmem:[#allocation1] ss:$4 sm:$0xff] %v172
      %s1964 = scalar_lea.vmem [#allocation1], 32
      %1965 = vst [vmem:[%s1964] ss:$4 sm:$0xff] %v173
      %v1966 = vld.sshfl [vmem:[#allocation1] sm:$0xff pattern:$0x73625140]
      %v1968 = vld.sshfl [vmem:[#allocation1 + $0x8] sm:$0xff pattern:$0x73625140]
      %v1970 = vld.sshfl [vmem:[#allocation1 + $0x10] sm:$0xff pattern:$0x73625140]
      %v1972 = vld.sshfl [vmem:[#allocation1 + $0x18] sm:$0xff pattern:$0x73625140]
      %v1974 = vld.sshfl [vmem:[#allocation1 + $0x20] sm:$0xff pattern:$0x73625140]
      %v1976 = vld.sshfl [vmem:[#allocation1 + $0x28] sm:$0xff pattern:$0x73625140]
      %v1978 = vld.sshfl [vmem:[#allocation1 + $0x30] sm:$0xff pattern:$0x73625140]
      %v1980 = vld.sshfl [vmem:[#allocation1 + $0x38] sm:$0xff pattern:$0x73625140]
      %1982 = vrot.lane.b32.xlu0 %v1966, 26
      %v1983 = vpop.permute.xlu0 %1982
      %1984 = vrot.lane.b32.xlu0 %v1968, 26
      %v1985 = vpop.permute.xlu0 %1984
      %1986 = vrot.lane.b32.xlu0 %v1970, 26
      %v1987 = vpop.permute.xlu0 %1986
      %1988 = vrot.lane.b32.xlu0 %v1972, 26
      %v1989 = vpop.permute.xlu0 %1988
      %1990 = vrot.lane.b32.xlu0 %v1974, 26
      %v1991 = vpop.permute.xlu0 %1990
      %1992 = vrot.lane.b32.xlu0 %v1976, 26
      %v1993 = vpop.permute.xlu0 %1992
      %1994 = vrot.lane.b32.xlu0 %v1978, 26
      %v1995 = vpop.permute.xlu0 %1994
      %1996 = vrot.lane.b32.xlu0 %v1980, 26
      %v1997 = vpop.permute.xlu0 %1996
      %vm1998 = vcmask 211968
      %v1999 = vsel %vm1998, %v1983, %v1985
      %v2000 = vsel %vm1998, %v1985, %v1987
      %v2001 = vsel %vm1998, %v1987, %v1989
      %v2002 = vsel %vm1998, %v1989, %v1991
      %v2003 = vsel %vm1998, %v1991, %v1993
      %v2004 = vsel %vm1998, %v1993, %v1995
      %v2005 = vsel %vm1998, %v1995, %v1997
      %v2007 = vsel %vm223, %v1962, 0
      %v2010 = vsel %vm227, %v1999, 0
      %v2013 = vsel %vm227, %v2000, 0
      %v2016 = vsel %vm227, %v2001, 0
      %v2019 = vsel %vm227, %v2002, 0
      %v2022 = vsel %vm227, %v2003, 0
      %v2025 = vsel %vm227, %v2004, 0
      %v2028 = vsel %vm227, %v2005, 0
      %2030 = vmatpush.bf16.msra.mxu0 0
      %2031 = vmatpush.bf16.msra.mxu0 0
      %2032 = vmatpush.bf16.msra.mxu0 0
      %2033 = vmatpush.bf16.msra.mxu0 0
      %2034 = vmatpush.bf16.msra.mxu0 0
      %2035 = vmatpush.bf16.msra.mxu0 0
      %2036 = vmatpush.bf16.msra.mxu0 0
      %2037 = vmatpush.bf16.msra.mxu0 %v2010
      %2038 = vmatmul.bf16.gmra.mxu0 %v2007
      %v2039 = vpop.f32.mrf.mxu0
      %v2040 = vadd.f32 0.0, %v2039
      %v2041 = vpop.f32.mrf.mxu0
      %2042 = vdwg.mxu0
      %2043 = vmatpush.bf16.msra.mxu0 0
      %2044 = vmatpush.bf16.msra.mxu0 0
      %2045 = vmatpush.bf16.msra.mxu0 0
      %2046 = vmatpush.bf16.msra.mxu0 0
      %2047 = vmatpush.bf16.msra.mxu0 0
      %2048 = vmatpush.bf16.msra.mxu0 0
      %2049 = vmatpush.bf16.msra.mxu0 0
      %2050 = vmatpush.bf16.msra.mxu0 %v2013
      %2051 = vmatmul.bf16.gmra.mxu0 %v2007
      %v2052 = vpop.f32.mrf.mxu0
      %v2053 = vadd.f32 0.0, %v2052
      %v2054 = vpop.f32.mrf.mxu0
      %2055 = vdwg.mxu0
      %2056 = vmatpush.bf16.msra.mxu0 0
      %2057 = vmatpush.bf16.msra.mxu0 0
      %2058 = vmatpush.bf16.msra.mxu0 0
      %2059 = vmatpush.bf16.msra.mxu0 0
      %2060 = vmatpush.bf16.msra.mxu0 0
      %2061 = vmatpush.bf16.msra.mxu0 0
      %2062 = vmatpush.bf16.msra.mxu0 0
      %2063 = vmatpush.bf16.msra.mxu0 %v2016
      %2064 = vmatmul.bf16.gmra.mxu0 %v2007
      %v2065 = vpop.f32.mrf.mxu0
      %v2066 = vadd.f32 0.0, %v2065
      %v2067 = vpop.f32.mrf.mxu0
      %2068 = vdwg.mxu0
      %2069 = vmatpush.bf16.msra.mxu0 0
      %2070 = vmatpush.bf16.msra.mxu0 0
      %2071 = vmatpush.bf16.msra.mxu0 0
      %2072 = vmatpush.bf16.msra.mxu0 0
      %2073 = vmatpush.bf16.msra.mxu0 0
      %2074 = vmatpush.bf16.msra.mxu0 0
      %2075 = vmatpush.bf16.msra.mxu0 0
      %2076 = vmatpush.bf16.msra.mxu0 %v2019
      %2077 = vmatmul.bf16.gmra.mxu0 %v2007
      %v2078 = vpop.f32.mrf.mxu0
      %v2079 = vadd.f32 0.0, %v2078
      %v2080 = vpop.f32.mrf.mxu0
      %2081 = vdwg.mxu0
      %2082 = vmatpush.bf16.msra.mxu0 0
      %2083 = vmatpush.bf16.msra.mxu0 0
      %2084 = vmatpush.bf16.msra.mxu0 0
      %2085 = vmatpush.bf16.msra.mxu0 0
      %2086 = vmatpush.bf16.msra.mxu0 0
      %2087 = vmatpush.bf16.msra.mxu0 0
      %2088 = vmatpush.bf16.msra.mxu0 0
      %2089 = vmatpush.bf16.msra.mxu0 %v2022
      %2090 = vmatmul.bf16.gmra.mxu0 %v2007
      %v2091 = vpop.f32.mrf.mxu0
      %v2092 = vadd.f32 0.0, %v2091
      %v2093 = vpop.f32.mrf.mxu0
      %2094 = vdwg.mxu0
      %2095 = vmatpush.bf16.msra.mxu0 0
      %2096 = vmatpush.bf16.msra.mxu0 0
      %2097 = vmatpush.bf16.msra.mxu0 0
      %2098 = vmatpush.bf16.msra.mxu0 0
      %2099 = vmatpush.bf16.msra.mxu0 0
      %2100 = vmatpush.bf16.msra.mxu0 0
      %2101 = vmatpush.bf16.msra.mxu0 0
      %2102 = vmatpush.bf16.msra.mxu0 %v2025
      %2103 = vmatmul.bf16.gmra.mxu0 %v2007
      %v2104 = vpop.f32.mrf.mxu0
      %v2105 = vadd.f32 0.0, %v2104
      %v2106 = vpop.f32.mrf.mxu0
      %2107 = vdwg.mxu0
      %2108 = vmatpush.bf16.msra.mxu0 0
      %2109 = vmatpush.bf16.msra.mxu0 0
      %2110 = vmatpush.bf16.msra.mxu0 0
      %2111 = vmatpush.bf16.msra.mxu0 0
      %2112 = vmatpush.bf16.msra.mxu0 0
      %2113 = vmatpush.bf16.msra.mxu0 0
      %2114 = vmatpush.bf16.msra.mxu0 0
      %2115 = vmatpush.bf16.msra.mxu0 %v2028
      %2116 = vmatmul.bf16.gmra.mxu0 %v2007
      %v2117 = vpop.f32.mrf.mxu0
      %v2118 = vadd.f32 0.0, %v2117
      %v2119 = vpop.f32.mrf.mxu0
      %2120 = vdwg.mxu0
      %v2121 = vadd.f32 %v1954, %v2040
      %v2122 = vadd.f32 %v1955, %v2053
      %v2123 = vadd.f32 %v1956, %v2066
      %v2124 = vadd.f32 %v1957, %v2079
      %v2125 = vadd.f32 %v1958, %v2092
      %v2126 = vadd.f32 %v1959, %v2105
      %v2127 = vadd.f32 %v1960, %v2118
      %s2128 = scalar_lea.vmem %s1, 48
      %v2129 = vld [vmem:[%s2128] sm:$0xf]
      %2130 = vst [vmem:[#allocation1] ss:$4 sm:$0xff] %v172
      %s2131 = scalar_lea.vmem [#allocation1], 32
      %2132 = vst [vmem:[%s2131] ss:$4 sm:$0xff] %v173
      %v2133 = vld.sshfl [vmem:[#allocation1] sm:$0xff pattern:$0x73625140]
      %v2135 = vld.sshfl [vmem:[#allocation1 + $0x8] sm:$0xff pattern:$0x73625140]
      %v2137 = vld.sshfl [vmem:[#allocation1 + $0x10] sm:$0xff pattern:$0x73625140]
      %v2139 = vld.sshfl [vmem:[#allocation1 + $0x18] sm:$0xff pattern:$0x73625140]
      %v2141 = vld.sshfl [vmem:[#allocation1 + $0x20] sm:$0xff pattern:$0x73625140]
      %v2143 = vld.sshfl [vmem:[#allocation1 + $0x28] sm:$0xff pattern:$0x73625140]
      %v2145 = vld.sshfl [vmem:[#allocation1 + $0x30] sm:$0xff pattern:$0x73625140]
      %v2147 = vld.sshfl [vmem:[#allocation1 + $0x38] sm:$0xff pattern:$0x73625140]
      %2149 = vrot.lane.b32.xlu0 %v2133, 18
      %v2150 = vpop.permute.xlu0 %2149
      %2151 = vrot.lane.b32.xlu0 %v2135, 18
      %v2152 = vpop.permute.xlu0 %2151
      %2153 = vrot.lane.b32.xlu0 %v2137, 18
      %v2154 = vpop.permute.xlu0 %2153
      %2155 = vrot.lane.b32.xlu0 %v2139, 18
      %v2156 = vpop.permute.xlu0 %2155
      %2157 = vrot.lane.b32.xlu0 %v2141, 18
      %v2158 = vpop.permute.xlu0 %2157
      %2159 = vrot.lane.b32.xlu0 %v2143, 18
      %v2160 = vpop.permute.xlu0 %2159
      %2161 = vrot.lane.b32.xlu0 %v2145, 18
      %v2162 = vpop.permute.xlu0 %2161
      %2163 = vrot.lane.b32.xlu0 %v2147, 18
      %v2164 = vpop.permute.xlu0 %2163
      %vm2165 = vcmask 146432
      %v2166 = vsel %vm2165, %v2150, %v2152
      %v2167 = vsel %vm2165, %v2152, %v2154
      %v2168 = vsel %vm2165, %v2154, %v2156
      %v2169 = vsel %vm2165, %v2156, %v2158
      %v2170 = vsel %vm2165, %v2158, %v2160
      %v2171 = vsel %vm2165, %v2160, %v2162
      %v2172 = vsel %vm2165, %v2162, %v2164
      %v2174 = vsel %vm223, %v2129, 0
      %v2177 = vsel %vm227, %v2166, 0
      %v2180 = vsel %vm227, %v2167, 0
      %v2183 = vsel %vm227, %v2168, 0
      %v2186 = vsel %vm227, %v2169, 0
      %v2189 = vsel %vm227, %v2170, 0
      %v2192 = vsel %vm227, %v2171, 0
      %v2195 = vsel %vm227, %v2172, 0
      %2197 = vmatpush.bf16.msra.mxu0 0
      %2198 = vmatpush.bf16.msra.mxu0 0
      %2199 = vmatpush.bf16.msra.mxu0 0
      %2200 = vmatpush.bf16.msra.mxu0 0
      %2201 = vmatpush.bf16.msra.mxu0 0
      %2202 = vmatpush.bf16.msra.mxu0 0
      %2203 = vmatpush.bf16.msra.mxu0 0
      %2204 = vmatpush.bf16.msra.mxu0 %v2177
      %2205 = vmatmul.bf16.gmra.mxu0 %v2174
      %v2206 = vpop.f32.mrf.mxu0
      %v2207 = vadd.f32 0.0, %v2206
      %v2208 = vpop.f32.mrf.mxu0
      %2209 = vdwg.mxu0
      %2210 = vmatpush.bf16.msra.mxu0 0
      %2211 = vmatpush.bf16.msra.mxu0 0
      %2212 = vmatpush.bf16.msra.mxu0 0
      %2213 = vmatpush.bf16.msra.mxu0 0
      %2214 = vmatpush.bf16.msra.mxu0 0
      %2215 = vmatpush.bf16.msra.mxu0 0
      %2216 = vmatpush.bf16.msra.mxu0 0
      %2217 = vmatpush.bf16.msra.mxu0 %v2180
      %2218 = vmatmul.bf16.gmra.mxu0 %v2174
      %v2219 = vpop.f32.mrf.mxu0
      %v2220 = vadd.f32 0.0, %v2219
      %v2221 = vpop.f32.mrf.mxu0
      %2222 = vdwg.mxu0
      %2223 = vmatpush.bf16.msra.mxu0 0
      %2224 = vmatpush.bf16.msra.mxu0 0
      %2225 = vmatpush.bf16.msra.mxu0 0
      %2226 = vmatpush.bf16.msra.mxu0 0
      %2227 = vmatpush.bf16.msra.mxu0 0
      %2228 = vmatpush.bf16.msra.mxu0 0
      %2229 = vmatpush.bf16.msra.mxu0 0
      %2230 = vmatpush.bf16.msra.mxu0 %v2183
      %2231 = vmatmul.bf16.gmra.mxu0 %v2174
      %v2232 = vpop.f32.mrf.mxu0
      %v2233 = vadd.f32 0.0, %v2232
      %v2234 = vpop.f32.mrf.mxu0
      %2235 = vdwg.mxu0
      %2236 = vmatpush.bf16.msra.mxu0 0
      %2237 = vmatpush.bf16.msra.mxu0 0
      %2238 = vmatpush.bf16.msra.mxu0 0
      %2239 = vmatpush.bf16.msra.mxu0 0
      %2240 = vmatpush.bf16.msra.mxu0 0
      %2241 = vmatpush.bf16.msra.mxu0 0
      %2242 = vmatpush.bf16.msra.mxu0 0
      %2243 = vmatpush.bf16.msra.mxu0 %v2186
      %2244 = vmatmul.bf16.gmra.mxu0 %v2174
      %v2245 = vpop.f32.mrf.mxu0
      %v2246 = vadd.f32 0.0, %v2245
      %v2247 = vpop.f32.mrf.mxu0
      %2248 = vdwg.mxu0
      %2249 = vmatpush.bf16.msra.mxu0 0
      %2250 = vmatpush.bf16.msra.mxu0 0
      %2251 = vmatpush.bf16.msra.mxu0 0
      %2252 = vmatpush.bf16.msra.mxu0 0
      %2253 = vmatpush.bf16.msra.mxu0 0
      %2254 = vmatpush.bf16.msra.mxu0 0
      %2255 = vmatpush.bf16.msra.mxu0 0
      %2256 = vmatpush.bf16.msra.mxu0 %v2189
      %2257 = vmatmul.bf16.gmra.mxu0 %v2174
      %v2258 = vpop.f32.mrf.mxu0
      %v2259 = vadd.f32 0.0, %v2258
      %v2260 = vpop.f32.mrf.mxu0
      %2261 = vdwg.mxu0
      %2262 = vmatpush.bf16.msra.mxu0 0
      %2263 = vmatpush.bf16.msra.mxu0 0
      %2264 = vmatpush.bf16.msra.mxu0 0
      %2265 = vmatpush.bf16.msra.mxu0 0
      %2266 = vmatpush.bf16.msra.mxu0 0
      %2267 = vmatpush.bf16.msra.mxu0 0
      %2268 = vmatpush.bf16.msra.mxu0 0
      %2269 = vmatpush.bf16.msra.mxu0 %v2192
      %2270 = vmatmul.bf16.gmra.mxu0 %v2174
      %v2271 = vpop.f32.mrf.mxu0
      %v2272 = vadd.f32 0.0, %v2271
      %v2273 = vpop.f32.mrf.mxu0
      %2274 = vdwg.mxu0
      %2275 = vmatpush.bf16.msra.mxu0 0
      %2276 = vmatpush.bf16.msra.mxu0 0
      %2277 = vmatpush.bf16.msra.mxu0 0
      %2278 = vmatpush.bf16.msra.mxu0 0
      %2279 = vmatpush.bf16.msra.mxu0 0
      %2280 = vmatpush.bf16.msra.mxu0 0
      %2281 = vmatpush.bf16.msra.mxu0 0
      %2282 = vmatpush.bf16.msra.mxu0 %v2195
      %2283 = vmatmul.bf16.gmra.mxu0 %v2174
      %v2284 = vpop.f32.mrf.mxu0
      %v2285 = vadd.f32 0.0, %v2284
      %v2286 = vpop.f32.mrf.mxu0
      %2287 = vdwg.mxu0
      %v2288 = vadd.f32 %v2121, %v2207
      %v2289 = vadd.f32 %v2122, %v2220
      %v2290 = vadd.f32 %v2123, %v2233
      %v2291 = vadd.f32 %v2124, %v2246
      %v2292 = vadd.f32 %v2125, %v2259
      %v2293 = vadd.f32 %v2126, %v2272
      %v2294 = vadd.f32 %v2127, %v2285
      %s2295 = scalar_lea.vmem %s1, 52
      %v2296 = vld [vmem:[%s2295] sm:$0xf]
      %2297 = vst [vmem:[#allocation1] ss:$4 sm:$0xff] %v172
      %s2298 = scalar_lea.vmem [#allocation1], 32
      %2299 = vst [vmem:[%s2298] ss:$4 sm:$0xff] %v173
      %v2300 = vld.sshfl [vmem:[#allocation1] sm:$0xff pattern:$0x73625140]
      %v2302 = vld.sshfl [vmem:[#allocation1 + $0x8] sm:$0xff pattern:$0x73625140]
      %v2304 = vld.sshfl [vmem:[#allocation1 + $0x10] sm:$0xff pattern:$0x73625140]
      %v2306 = vld.sshfl [vmem:[#allocation1 + $0x18] sm:$0xff pattern:$0x73625140]
      %v2308 = vld.sshfl [vmem:[#allocation1 + $0x20] sm:$0xff pattern:$0x73625140]
      %v2310 = vld.sshfl [vmem:[#allocation1 + $0x28] sm:$0xff pattern:$0x73625140]
      %v2312 = vld.sshfl [vmem:[#allocation1 + $0x30] sm:$0xff pattern:$0x73625140]
      %v2314 = vld.sshfl [vmem:[#allocation1 + $0x38] sm:$0xff pattern:$0x73625140]
      %2316 = vrot.lane.b32.xlu0 %v2300, 17
      %v2317 = vpop.permute.xlu0 %2316
      %2318 = vrot.lane.b32.xlu0 %v2302, 17
      %v2319 = vpop.permute.xlu0 %2318
      %2320 = vrot.lane.b32.xlu0 %v2304, 17
      %v2321 = vpop.permute.xlu0 %2320
      %2322 = vrot.lane.b32.xlu0 %v2306, 17
      %v2323 = vpop.permute.xlu0 %2322
      %2324 = vrot.lane.b32.xlu0 %v2308, 17
      %v2325 = vpop.permute.xlu0 %2324
      %2326 = vrot.lane.b32.xlu0 %v2310, 17
      %v2327 = vpop.permute.xlu0 %2326
      %2328 = vrot.lane.b32.xlu0 %v2312, 17
      %v2329 = vpop.permute.xlu0 %2328
      %2330 = vrot.lane.b32.xlu0 %v2314, 17
      %v2331 = vpop.permute.xlu0 %2330
      %vm2332 = vcmask 138240
      %v2333 = vsel %vm2332, %v2317, %v2319
      %v2334 = vsel %vm2332, %v2319, %v2321
      %v2335 = vsel %vm2332, %v2321, %v2323
      %v2336 = vsel %vm2332, %v2323, %v2325
      %v2337 = vsel %vm2332, %v2325, %v2327
      %v2338 = vsel %vm2332, %v2327, %v2329
      %v2339 = vsel %vm2332, %v2329, %v2331
      %v2341 = vsel %vm223, %v2296, 0
      %v2344 = vsel %vm227, %v2333, 0
      %v2347 = vsel %vm227, %v2334, 0
      %v2350 = vsel %vm227, %v2335, 0
      %v2353 = vsel %vm227, %v2336, 0
      %v2356 = vsel %vm227, %v2337, 0
      %v2359 = vsel %vm227, %v2338, 0
      %v2362 = vsel %vm227, %v2339, 0
      %2364 = vmatpush.bf16.msra.mxu0 0
      %2365 = vmatpush.bf16.msra.mxu0 0
      %2366 = vmatpush.bf16.msra.mxu0 0
      %2367 = vmatpush.bf16.msra.mxu0 0
      %2368 = vmatpush.bf16.msra.mxu0 0
      %2369 = vmatpush.bf16.msra.mxu0 0
      %2370 = vmatpush.bf16.msra.mxu0 0
      %2371 = vmatpush.bf16.msra.mxu0 %v2344
      %2372 = vmatmul.bf16.gmra.mxu0 %v2341
      %v2373 = vpop.f32.mrf.mxu0
      %v2374 = vadd.f32 0.0, %v2373
      %v2375 = vpop.f32.mrf.mxu0
      %2376 = vdwg.mxu0
      %2377 = vmatpush.bf16.msra.mxu0 0
      %2378 = vmatpush.bf16.msra.mxu0 0
      %2379 = vmatpush.bf16.msra.mxu0 0
      %2380 = vmatpush.bf16.msra.mxu0 0
      %2381 = vmatpush.bf16.msra.mxu0 0
      %2382 = vmatpush.bf16.msra.mxu0 0
      %2383 = vmatpush.bf16.msra.mxu0 0
      %2384 = vmatpush.bf16.msra.mxu0 %v2347
      %2385 = vmatmul.bf16.gmra.mxu0 %v2341
      %v2386 = vpop.f32.mrf.mxu0
      %v2387 = vadd.f32 0.0, %v2386
      %v2388 = vpop.f32.mrf.mxu0
      %2389 = vdwg.mxu0
      %2390 = vmatpush.bf16.msra.mxu0 0
      %2391 = vmatpush.bf16.msra.mxu0 0
      %2392 = vmatpush.bf16.msra.mxu0 0
      %2393 = vmatpush.bf16.msra.mxu0 0
      %2394 = vmatpush.bf16.msra.mxu0 0
      %2395 = vmatpush.bf16.msra.mxu0 0
      %2396 = vmatpush.bf16.msra.mxu0 0
      %2397 = vmatpush.bf16.msra.mxu0 %v2350
      %2398 = vmatmul.bf16.gmra.mxu0 %v2341
      %v2399 = vpop.f32.mrf.mxu0
      %v2400 = vadd.f32 0.0, %v2399
      %v2401 = vpop.f32.mrf.mxu0
      %2402 = vdwg.mxu0
      %2403 = vmatpush.bf16.msra.mxu0 0
      %2404 = vmatpush.bf16.msra.mxu0 0
      %2405 = vmatpush.bf16.msra.mxu0 0
      %2406 = vmatpush.bf16.msra.mxu0 0
      %2407 = vmatpush.bf16.msra.mxu0 0
      %2408 = vmatpush.bf16.msra.mxu0 0
      %2409 = vmatpush.bf16.msra.mxu0 0
      %2410 = vmatpush.bf16.msra.mxu0 %v2353
      %2411 = vmatmul.bf16.gmra.mxu0 %v2341
      %v2412 = vpop.f32.mrf.mxu0
      %v2413 = vadd.f32 0.0, %v2412
      %v2414 = vpop.f32.mrf.mxu0
      %2415 = vdwg.mxu0
      %2416 = vmatpush.bf16.msra.mxu0 0
      %2417 = vmatpush.bf16.msra.mxu0 0
      %2418 = vmatpush.bf16.msra.mxu0 0
      %2419 = vmatpush.bf16.msra.mxu0 0
      %2420 = vmatpush.bf16.msra.mxu0 0
      %2421 = vmatpush.bf16.msra.mxu0 0
      %2422 = vmatpush.bf16.msra.mxu0 0
      %2423 = vmatpush.bf16.msra.mxu0 %v2356
      %2424 = vmatmul.bf16.gmra.mxu0 %v2341
      %v2425 = vpop.f32.mrf.mxu0
      %v2426 = vadd.f32 0.0, %v2425
      %v2427 = vpop.f32.mrf.mxu0
      %2428 = vdwg.mxu0
      %2429 = vmatpush.bf16.msra.mxu0 0
      %2430 = vmatpush.bf16.msra.mxu0 0
      %2431 = vmatpush.bf16.msra.mxu0 0
      %2432 = vmatpush.bf16.msra.mxu0 0
      %2433 = vmatpush.bf16.msra.mxu0 0
      %2434 = vmatpush.bf16.msra.mxu0 0
      %2435 = vmatpush.bf16.msra.mxu0 0
      %2436 = vmatpush.bf16.msra.mxu0 %v2359
      %2437 = vmatmul.bf16.gmra.mxu0 %v2341
      %v2438 = vpop.f32.mrf.mxu0
      %v2439 = vadd.f32 0.0, %v2438
      %v2440 = vpop.f32.mrf.mxu0
      %2441 = vdwg.mxu0
      %2442 = vmatpush.bf16.msra.mxu0 0
      %2443 = vmatpush.bf16.msra.mxu0 0
      %2444 = vmatpush.bf16.msra.mxu0 0
      %2445 = vmatpush.bf16.msra.mxu0 0
      %2446 = vmatpush.bf16.msra.mxu0 0
      %2447 = vmatpush.bf16.msra.mxu0 0
      %2448 = vmatpush.bf16.msra.mxu0 0
      %2449 = vmatpush.bf16.msra.mxu0 %v2362
      %2450 = vmatmul.bf16.gmra.mxu0 %v2341
      %v2451 = vpop.f32.mrf.mxu0
      %v2452 = vadd.f32 0.0, %v2451
      %v2453 = vpop.f32.mrf.mxu0
      %2454 = vdwg.mxu0
      %v2455 = vadd.f32 %v2288, %v2374
      %v2456 = vadd.f32 %v2289, %v2387
      %v2457 = vadd.f32 %v2290, %v2400
      %v2458 = vadd.f32 %v2291, %v2413
      %v2459 = vadd.f32 %v2292, %v2426
      %v2460 = vadd.f32 %v2293, %v2439
      %v2461 = vadd.f32 %v2294, %v2452
      %s2462 = scalar_lea.vmem %s1, 56
      %v2463 = vld [vmem:[%s2462] sm:$0xf]
      %2464 = vst [vmem:[#allocation1] ss:$4 sm:$0xff] %v172
      %s2465 = scalar_lea.vmem [#allocation1], 32
      %2466 = vst [vmem:[%s2465] ss:$4 sm:$0xff] %v173
      %v2467 = vld.sshfl [vmem:[#allocation1] sm:$0xff pattern:$0x73625140]
      %v2469 = vld.sshfl [vmem:[#allocation1 + $0x8] sm:$0xff pattern:$0x73625140]
      %v2471 = vld.sshfl [vmem:[#allocation1 + $0x10] sm:$0xff pattern:$0x73625140]
      %v2473 = vld.sshfl [vmem:[#allocation1 + $0x18] sm:$0xff pattern:$0x73625140]
      %v2475 = vld.sshfl [vmem:[#allocation1 + $0x20] sm:$0xff pattern:$0x73625140]
      %v2477 = vld.sshfl [vmem:[#allocation1 + $0x28] sm:$0xff pattern:$0x73625140]
      %v2479 = vld.sshfl [vmem:[#allocation1 + $0x30] sm:$0xff pattern:$0x73625140]
      %v2481 = vld.sshfl [vmem:[#allocation1 + $0x38] sm:$0xff pattern:$0x73625140]
      %2483 = vrot.lane.b32.xlu0 %v2467, 16
      %v2484 = vpop.permute.xlu0 %2483
      %2485 = vrot.lane.b32.xlu0 %v2469, 16
      %v2486 = vpop.permute.xlu0 %2485
      %2487 = vrot.lane.b32.xlu0 %v2471, 16
      %v2488 = vpop.permute.xlu0 %2487
      %2489 = vrot.lane.b32.xlu0 %v2473, 16
      %v2490 = vpop.permute.xlu0 %2489
      %2491 = vrot.lane.b32.xlu0 %v2475, 16
      %v2492 = vpop.permute.xlu0 %2491
      %2493 = vrot.lane.b32.xlu0 %v2477, 16
      %v2494 = vpop.permute.xlu0 %2493
      %2495 = vrot.lane.b32.xlu0 %v2479, 16
      %v2496 = vpop.permute.xlu0 %2495
      %2497 = vrot.lane.b32.xlu0 %v2481, 16
      %v2498 = vpop.permute.xlu0 %2497
      %vm2499 = vcmask 130048
      %v2500 = vsel %vm2499, %v2484, %v2486
      %v2501 = vsel %vm2499, %v2486, %v2488
      %v2502 = vsel %vm2499, %v2488, %v2490
      %v2503 = vsel %vm2499, %v2490, %v2492
      %v2504 = vsel %vm2499, %v2492, %v2494
      %v2505 = vsel %vm2499, %v2494, %v2496
      %v2506 = vsel %vm2499, %v2496, %v2498
      %v2508 = vsel %vm223, %v2463, 0
      %v2511 = vsel %vm227, %v2500, 0
      %v2514 = vsel %vm227, %v2501, 0
      %v2517 = vsel %vm227, %v2502, 0
      %v2520 = vsel %vm227, %v2503, 0
      %v2523 = vsel %vm227, %v2504, 0
      %v2526 = vsel %vm227, %v2505, 0
      %v2529 = vsel %vm227, %v2506, 0
      %2531 = vmatpush.bf16.msra.mxu0 0
      %2532 = vmatpush.bf16.msra.mxu0 0
      %2533 = vmatpush.bf16.msra.mxu0 0
      %2534 = vmatpush.bf16.msra.mxu0 0
      %2535 = vmatpush.bf16.msra.mxu0 0
      %2536 = vmatpush.bf16.msra.mxu0 0
      %2537 = vmatpush.bf16.msra.mxu0 0
      %2538 = vmatpush.bf16.msra.mxu0 %v2511
      %2539 = vmatmul.bf16.gmra.mxu0 %v2508
      %v2540 = vpop.f32.mrf.mxu0
      %v2541 = vadd.f32 0.0, %v2540
      %v2542 = vpop.f32.mrf.mxu0
      %2543 = vdwg.mxu0
      %2544 = vmatpush.bf16.msra.mxu0 0
      %2545 = vmatpush.bf16.msra.mxu0 0
      %2546 = vmatpush.bf16.msra.mxu0 0
      %2547 = vmatpush.bf16.msra.mxu0 0
      %2548 = vmatpush.bf16.msra.mxu0 0
      %2549 = vmatpush.bf16.msra.mxu0 0
      %2550 = vmatpush.bf16.msra.mxu0 0
      %2551 = vmatpush.bf16.msra.mxu0 %v2514
      %2552 = vmatmul.bf16.gmra.mxu0 %v2508
      %v2553 = vpop.f32.mrf.mxu0
      %v2554 = vadd.f32 0.0, %v2553
      %v2555 = vpop.f32.mrf.mxu0
      %2556 = vdwg.mxu0
      %2557 = vmatpush.bf16.msra.mxu0 0
      %2558 = vmatpush.bf16.msra.mxu0 0
      %2559 = vmatpush.bf16.msra.mxu0 0
      %2560 = vmatpush.bf16.msra.mxu0 0
      %2561 = vmatpush.bf16.msra.mxu0 0
      %2562 = vmatpush.bf16.msra.mxu0 0
      %2563 = vmatpush.bf16.msra.mxu0 0
      %2564 = vmatpush.bf16.msra.mxu0 %v2517
      %2565 = vmatmul.bf16.gmra.mxu0 %v2508
      %v2566 = vpop.f32.mrf.mxu0
      %v2567 = vadd.f32 0.0, %v2566
      %v2568 = vpop.f32.mrf.mxu0
      %2569 = vdwg.mxu0
      %2570 = vmatpush.bf16.msra.mxu0 0
      %2571 = vmatpush.bf16.msra.mxu0 0
      %2572 = vmatpush.bf16.msra.mxu0 0
      %2573 = vmatpush.bf16.msra.mxu0 0
      %2574 = vmatpush.bf16.msra.mxu0 0
      %2575 = vmatpush.bf16.msra.mxu0 0
      %2576 = vmatpush.bf16.msra.mxu0 0
      %2577 = vmatpush.bf16.msra.mxu0 %v2520
      %2578 = vmatmul.bf16.gmra.mxu0 %v2508
      %v2579 = vpop.f32.mrf.mxu0
      %v2580 = vadd.f32 0.0, %v2579
      %v2581 = vpop.f32.mrf.mxu0
      %2582 = vdwg.mxu0
      %2583 = vmatpush.bf16.msra.mxu0 0
      %2584 = vmatpush.bf16.msra.mxu0 0
      %2585 = vmatpush.bf16.msra.mxu0 0
      %2586 = vmatpush.bf16.msra.mxu0 0
      %2587 = vmatpush.bf16.msra.mxu0 0
      %2588 = vmatpush.bf16.msra.mxu0 0
      %2589 = vmatpush.bf16.msra.mxu0 0
      %2590 = vmatpush.bf16.msra.mxu0 %v2523
      %2591 = vmatmul.bf16.gmra.mxu0 %v2508
      %v2592 = vpop.f32.mrf.mxu0
      %v2593 = vadd.f32 0.0, %v2592
      %v2594 = vpop.f32.mrf.mxu0
      %2595 = vdwg.mxu0
      %2596 = vmatpush.bf16.msra.mxu0 0
      %2597 = vmatpush.bf16.msra.mxu0 0
      %2598 = vmatpush.bf16.msra.mxu0 0
      %2599 = vmatpush.bf16.msra.mxu0 0
      %2600 = vmatpush.bf16.msra.mxu0 0
      %2601 = vmatpush.bf16.msra.mxu0 0
      %2602 = vmatpush.bf16.msra.mxu0 0
      %2603 = vmatpush.bf16.msra.mxu0 %v2526
      %2604 = vmatmul.bf16.gmra.mxu0 %v2508
      %v2605 = vpop.f32.mrf.mxu0
      %v2606 = vadd.f32 0.0, %v2605
      %v2607 = vpop.f32.mrf.mxu0
      %2608 = vdwg.mxu0
      %2609 = vmatpush.bf16.msra.mxu0 0
      %2610 = vmatpush.bf16.msra.mxu0 0
      %2611 = vmatpush.bf16.msra.mxu0 0
      %2612 = vmatpush.bf16.msra.mxu0 0
      %2613 = vmatpush.bf16.msra.mxu0 0
      %2614 = vmatpush.bf16.msra.mxu0 0
      %2615 = vmatpush.bf16.msra.mxu0 0
      %2616 = vmatpush.bf16.msra.mxu0 %v2529
      %2617 = vmatmul.bf16.gmra.mxu0 %v2508
      %v2618 = vpop.f32.mrf.mxu0
      %v2619 = vadd.f32 0.0, %v2618
      %v2620 = vpop.f32.mrf.mxu0
      %2621 = vdwg.mxu0
      %v2622 = vadd.f32 %v2455, %v2541
      %v2623 = vadd.f32 %v2456, %v2554
      %v2624 = vadd.f32 %v2457, %v2567
      %v2625 = vadd.f32 %v2458, %v2580
      %v2626 = vadd.f32 %v2459, %v2593
      %v2627 = vadd.f32 %v2460, %v2606
      %v2628 = vadd.f32 %v2461, %v2619
      %s2629 = scalar_lea.vmem %s1, 60
      %v2630 = vld [vmem:[%s2629] sm:$0xf]
      %2631 = vst [vmem:[#allocation1] ss:$4 sm:$0xff] %v172
      %s2632 = scalar_lea.vmem [#allocation1], 32
      %2633 = vst [vmem:[%s2632] ss:$4 sm:$0xff] %v173
      %v2634 = vld.sshfl [vmem:[#allocation1] sm:$0xff pattern:$0x73625140]
      %v2636 = vld.sshfl [vmem:[#allocation1 + $0x8] sm:$0xff pattern:$0x73625140]
      %v2638 = vld.sshfl [vmem:[#allocation1 + $0x10] sm:$0xff pattern:$0x73625140]
      %v2640 = vld.sshfl [vmem:[#allocation1 + $0x18] sm:$0xff pattern:$0x73625140]
      %v2642 = vld.sshfl [vmem:[#allocation1 + $0x20] sm:$0xff pattern:$0x73625140]
      %v2644 = vld.sshfl [vmem:[#allocation1 + $0x28] sm:$0xff pattern:$0x73625140]
      %v2646 = vld.sshfl [vmem:[#allocation1 + $0x30] sm:$0xff pattern:$0x73625140]
      %v2648 = vld.sshfl [vmem:[#allocation1 + $0x38] sm:$0xff pattern:$0x73625140]
      %2650 = vrot.lane.b32.xlu0 %v2634, 8
      %v2651 = vpop.permute.xlu0 %2650
      %2652 = vrot.lane.b32.xlu0 %v2636, 8
      %v2653 = vpop.permute.xlu0 %2652
      %2654 = vrot.lane.b32.xlu0 %v2638, 8
      %v2655 = vpop.permute.xlu0 %2654
      %2656 = vrot.lane.b32.xlu0 %v2640, 8
      %v2657 = vpop.permute.xlu0 %2656
      %2658 = vrot.lane.b32.xlu0 %v2642, 8
      %v2659 = vpop.permute.xlu0 %2658
      %2660 = vrot.lane.b32.xlu0 %v2644, 8
      %v2661 = vpop.permute.xlu0 %2660
      %2662 = vrot.lane.b32.xlu0 %v2646, 8
      %v2663 = vpop.permute.xlu0 %2662
      %2664 = vrot.lane.b32.xlu0 %v2648, 8
      %v2665 = vpop.permute.xlu0 %2664
      %vm2666 = vcmask 64512
      %v2667 = vsel %vm2666, %v2651, %v2653
      %v2668 = vsel %vm2666, %v2653, %v2655
      %v2669 = vsel %vm2666, %v2655, %v2657
      %v2670 = vsel %vm2666, %v2657, %v2659
      %v2671 = vsel %vm2666, %v2659, %v2661
      %v2672 = vsel %vm2666, %v2661, %v2663
      %v2673 = vsel %vm2666, %v2663, %v2665
      %v2675 = vsel %vm223, %v2630, 0
      %v2678 = vsel %vm227, %v2667, 0
      %v2681 = vsel %vm227, %v2668, 0
      %v2684 = vsel %vm227, %v2669, 0
      %v2687 = vsel %vm227, %v2670, 0
      %v2690 = vsel %vm227, %v2671, 0
      %v2693 = vsel %vm227, %v2672, 0
      %v2696 = vsel %vm227, %v2673, 0
      %2698 = vmatpush.bf16.msra.mxu0 0
      %2699 = vmatpush.bf16.msra.mxu0 0
      %2700 = vmatpush.bf16.msra.mxu0 0
      %2701 = vmatpush.bf16.msra.mxu0 0
      %2702 = vmatpush.bf16.msra.mxu0 0
      %2703 = vmatpush.bf16.msra.mxu0 0
      %2704 = vmatpush.bf16.msra.mxu0 0
      %2705 = vmatpush.bf16.msra.mxu0 %v2678
      %2706 = vmatmul.bf16.gmra.mxu0 %v2675
      %v2707 = vpop.f32.mrf.mxu0
      %v2708 = vadd.f32 0.0, %v2707
      %v2709 = vpop.f32.mrf.mxu0
      %2710 = vdwg.mxu0
      %2711 = vmatpush.bf16.msra.mxu0 0
      %2712 = vmatpush.bf16.msra.mxu0 0
      %2713 = vmatpush.bf16.msra.mxu0 0
      %2714 = vmatpush.bf16.msra.mxu0 0
      %2715 = vmatpush.bf16.msra.mxu0 0
      %2716 = vmatpush.bf16.msra.mxu0 0
      %2717 = vmatpush.bf16.msra.mxu0 0
      %2718 = vmatpush.bf16.msra.mxu0 %v2681
      %2719 = vmatmul.bf16.gmra.mxu0 %v2675
      %v2720 = vpop.f32.mrf.mxu0
      %v2721 = vadd.f32 0.0, %v2720
      %v2722 = vpop.f32.mrf.mxu0
      %2723 = vdwg.mxu0
      %2724 = vmatpush.bf16.msra.mxu0 0
      %2725 = vmatpush.bf16.msra.mxu0 0
      %2726 = vmatpush.bf16.msra.mxu0 0
      %2727 = vmatpush.bf16.msra.mxu0 0
      %2728 = vmatpush.bf16.msra.mxu0 0
      %2729 = vmatpush.bf16.msra.mxu0 0
      %2730 = vmatpush.bf16.msra.mxu0 0
      %2731 = vmatpush.bf16.msra.mxu0 %v2684
      %2732 = vmatmul.bf16.gmra.mxu0 %v2675
      %v2733 = vpop.f32.mrf.mxu0
      %v2734 = vadd.f32 0.0, %v2733
      %v2735 = vpop.f32.mrf.mxu0
      %2736 = vdwg.mxu0
      %2737 = vmatpush.bf16.msra.mxu0 0
      %2738 = vmatpush.bf16.msra.mxu0 0
      %2739 = vmatpush.bf16.msra.mxu0 0
      %2740 = vmatpush.bf16.msra.mxu0 0
      %2741 = vmatpush.bf16.msra.mxu0 0
      %2742 = vmatpush.bf16.msra.mxu0 0
      %2743 = vmatpush.bf16.msra.mxu0 0
      %2744 = vmatpush.bf16.msra.mxu0 %v2687
      %2745 = vmatmul.bf16.gmra.mxu0 %v2675
      %v2746 = vpop.f32.mrf.mxu0
      %v2747 = vadd.f32 0.0, %v2746
      %v2748 = vpop.f32.mrf.mxu0
      %2749 = vdwg.mxu0
      %2750 = vmatpush.bf16.msra.mxu0 0
      %2751 = vmatpush.bf16.msra.mxu0 0
      %2752 = vmatpush.bf16.msra.mxu0 0
      %2753 = vmatpush.bf16.msra.mxu0 0
      %2754 = vmatpush.bf16.msra.mxu0 0
      %2755 = vmatpush.bf16.msra.mxu0 0
      %2756 = vmatpush.bf16.msra.mxu0 0
      %2757 = vmatpush.bf16.msra.mxu0 %v2690
      %2758 = vmatmul.bf16.gmra.mxu0 %v2675
      %v2759 = vpop.f32.mrf.mxu0
      %v2760 = vadd.f32 0.0, %v2759
      %v2761 = vpop.f32.mrf.mxu0
      %2762 = vdwg.mxu0
      %2763 = vmatpush.bf16.msra.mxu0 0
      %2764 = vmatpush.bf16.msra.mxu0 0
      %2765 = vmatpush.bf16.msra.mxu0 0
      %2766 = vmatpush.bf16.msra.mxu0 0
      %2767 = vmatpush.bf16.msra.mxu0 0
      %2768 = vmatpush.bf16.msra.mxu0 0
      %2769 = vmatpush.bf16.msra.mxu0 0
      %2770 = vmatpush.bf16.msra.mxu0 %v2693
      %2771 = vmatmul.bf16.gmra.mxu0 %v2675
      %v2772 = vpop.f32.mrf.mxu0
      %v2773 = vadd.f32 0.0, %v2772
      %v2774 = vpop.f32.mrf.mxu0
      %2775 = vdwg.mxu0
      %2776 = vmatpush.bf16.msra.mxu0 0
      %2777 = vmatpush.bf16.msra.mxu0 0
      %2778 = vmatpush.bf16.msra.mxu0 0
      %2779 = vmatpush.bf16.msra.mxu0 0
      %2780 = vmatpush.bf16.msra.mxu0 0
      %2781 = vmatpush.bf16.msra.mxu0 0
      %2782 = vmatpush.bf16.msra.mxu0 0
      %2783 = vmatpush.bf16.msra.mxu0 %v2696
      %2784 = vmatmul.bf16.gmra.mxu0 %v2675
      %v2785 = vpop.f32.mrf.mxu0
      %v2786 = vadd.f32 0.0, %v2785
      %v2787 = vpop.f32.mrf.mxu0
      %2788 = vdwg.mxu0
      %v2789 = vadd.f32 %v2622, %v2708
      %v2790 = vadd.f32 %v2623, %v2721
      %v2791 = vadd.f32 %v2624, %v2734
      %v2792 = vadd.f32 %v2625, %v2747
      %v2793 = vadd.f32 %v2626, %v2760
      %v2794 = vadd.f32 %v2627, %v2773
      %v2795 = vadd.f32 %v2628, %v2786
      %s2796 = scalar_lea.vmem %s1, 64
      %v2797 = vld [vmem:[%s2796] sm:$0xf]
      %2798 = vst [vmem:[#allocation1] ss:$4 sm:$0xff] %v172
      %s2799 = scalar_lea.vmem [#allocation1], 32
      %2800 = vst [vmem:[%s2799] ss:$4 sm:$0xff] %v173
      %v2801 = vld.sshfl [vmem:[#allocation1] sm:$0xff pattern:$0x73625140]
      %v2803 = vld.sshfl [vmem:[#allocation1 + $0x8] sm:$0xff pattern:$0x73625140]
      %v2805 = vld.sshfl [vmem:[#allocation1 + $0x10] sm:$0xff pattern:$0x73625140]
      %v2807 = vld.sshfl [vmem:[#allocation1 + $0x18] sm:$0xff pattern:$0x73625140]
      %v2809 = vld.sshfl [vmem:[#allocation1 + $0x20] sm:$0xff pattern:$0x73625140]
      %v2811 = vld.sshfl [vmem:[#allocation1 + $0x28] sm:$0xff pattern:$0x73625140]
      %v2813 = vld.sshfl [vmem:[#allocation1 + $0x30] sm:$0xff pattern:$0x73625140]
      %v2815 = vld.sshfl [vmem:[#allocation1 + $0x38] sm:$0xff pattern:$0x73625140]
      %2817 = vrot.lane.b32.xlu0 %v2801, 7
      %v2818 = vpop.permute.xlu0 %2817
      %2819 = vrot.lane.b32.xlu0 %v2803, 7
      %v2820 = vpop.permute.xlu0 %2819
      %2821 = vrot.lane.b32.xlu0 %v2805, 7
      %v2822 = vpop.permute.xlu0 %2821
      %2823 = vrot.lane.b32.xlu0 %v2807, 7
      %v2824 = vpop.permute.xlu0 %2823
      %2825 = vrot.lane.b32.xlu0 %v2809, 7
      %v2826 = vpop.permute.xlu0 %2825
      %2827 = vrot.lane.b32.xlu0 %v2811, 7
      %v2828 = vpop.permute.xlu0 %2827
      %2829 = vrot.lane.b32.xlu0 %v2813, 7
      %v2830 = vpop.permute.xlu0 %2829
      %2831 = vrot.lane.b32.xlu0 %v2815, 7
      %v2832 = vpop.permute.xlu0 %2831
      %vm2833 = vcmask 56320
      %v2834 = vsel %vm2833, %v2818, %v2820
      %v2835 = vsel %vm2833, %v2820, %v2822
      %v2836 = vsel %vm2833, %v2822, %v2824
      %v2837 = vsel %vm2833, %v2824, %v2826
      %v2838 = vsel %vm2833, %v2826, %v2828
      %v2839 = vsel %vm2833, %v2828, %v2830
      %v2840 = vsel %vm2833, %v2830, %v2832
      %v2842 = vsel %vm223, %v2797, 0
      %v2845 = vsel %vm227, %v2834, 0
      %v2848 = vsel %vm227, %v2835, 0
      %v2851 = vsel %vm227, %v2836, 0
      %v2854 = vsel %vm227, %v2837, 0
      %v2857 = vsel %vm227, %v2838, 0
      %v2860 = vsel %vm227, %v2839, 0
      %v2863 = vsel %vm227, %v2840, 0
      %2865 = vmatpush.bf16.msra.mxu0 0
      %2866 = vmatpush.bf16.msra.mxu0 0
      %2867 = vmatpush.bf16.msra.mxu0 0
      %2868 = vmatpush.bf16.msra.mxu0 0
      %2869 = vmatpush.bf16.msra.mxu0 0
      %2870 = vmatpush.bf16.msra.mxu0 0
      %2871 = vmatpush.bf16.msra.mxu0 0
      %2872 = vmatpush.bf16.msra.mxu0 %v2845
      %2873 = vmatmul.bf16.gmra.mxu0 %v2842
      %v2874 = vpop.f32.mrf.mxu0
      %v2875 = vadd.f32 0.0, %v2874
      %v2876 = vpop.f32.mrf.mxu0
      %2877 = vdwg.mxu0
      %2878 = vmatpush.bf16.msra.mxu0 0
      %2879 = vmatpush.bf16.msra.mxu0 0
      %2880 = vmatpush.bf16.msra.mxu0 0
      %2881 = vmatpush.bf16.msra.mxu0 0
      %2882 = vmatpush.bf16.msra.mxu0 0
      %2883 = vmatpush.bf16.msra.mxu0 0
      %2884 = vmatpush.bf16.msra.mxu0 0
      %2885 = vmatpush.bf16.msra.mxu0 %v2848
      %2886 = vmatmul.bf16.gmra.mxu0 %v2842
      %v2887 = vpop.f32.mrf.mxu0
      %v2888 = vadd.f32 0.0, %v2887
      %v2889 = vpop.f32.mrf.mxu0
      %2890 = vdwg.mxu0
      %2891 = vmatpush.bf16.msra.mxu0 0
      %2892 = vmatpush.bf16.msra.mxu0 0
      %2893 = vmatpush.bf16.msra.mxu0 0
      %2894 = vmatpush.bf16.msra.mxu0 0
      %2895 = vmatpush.bf16.msra.mxu0 0
      %2896 = vmatpush.bf16.msra.mxu0 0
      %2897 = vmatpush.bf16.msra.mxu0 0
      %2898 = vmatpush.bf16.msra.mxu0 %v2851
      %2899 = vmatmul.bf16.gmra.mxu0 %v2842
      %v2900 = vpop.f32.mrf.mxu0
      %v2901 = vadd.f32 0.0, %v2900
      %v2902 = vpop.f32.mrf.mxu0
      %2903 = vdwg.mxu0
      %2904 = vmatpush.bf16.msra.mxu0 0
      %2905 = vmatpush.bf16.msra.mxu0 0
      %2906 = vmatpush.bf16.msra.mxu0 0
      %2907 = vmatpush.bf16.msra.mxu0 0
      %2908 = vmatpush.bf16.msra.mxu0 0
      %2909 = vmatpush.bf16.msra.mxu0 0
      %2910 = vmatpush.bf16.msra.mxu0 0
      %2911 = vmatpush.bf16.msra.mxu0 %v2854
      %2912 = vmatmul.bf16.gmra.mxu0 %v2842
      %v2913 = vpop.f32.mrf.mxu0
      %v2914 = vadd.f32 0.0, %v2913
      %v2915 = vpop.f32.mrf.mxu0
      %2916 = vdwg.mxu0
      %2917 = vmatpush.bf16.msra.mxu0 0
      %2918 = vmatpush.bf16.msra.mxu0 0
      %2919 = vmatpush.bf16.msra.mxu0 0
      %2920 = vmatpush.bf16.msra.mxu0 0
      %2921 = vmatpush.bf16.msra.mxu0 0
      %2922 = vmatpush.bf16.msra.mxu0 0
      %2923 = vmatpush.bf16.msra.mxu0 0
      %2924 = vmatpush.bf16.msra.mxu0 %v2857
      %2925 = vmatmul.bf16.gmra.mxu0 %v2842
      %v2926 = vpop.f32.mrf.mxu0
      %v2927 = vadd.f32 0.0, %v2926
      %v2928 = vpop.f32.mrf.mxu0
      %2929 = vdwg.mxu0
      %2930 = vmatpush.bf16.msra.mxu0 0
      %2931 = vmatpush.bf16.msra.mxu0 0
      %2932 = vmatpush.bf16.msra.mxu0 0
      %2933 = vmatpush.bf16.msra.mxu0 0
      %2934 = vmatpush.bf16.msra.mxu0 0
      %2935 = vmatpush.bf16.msra.mxu0 0
      %2936 = vmatpush.bf16.msra.mxu0 0
      %2937 = vmatpush.bf16.msra.mxu0 %v2860
      %2938 = vmatmul.bf16.gmra.mxu0 %v2842
      %v2939 = vpop.f32.mrf.mxu0
      %v2940 = vadd.f32 0.0, %v2939
      %v2941 = vpop.f32.mrf.mxu0
      %2942 = vdwg.mxu0
      %2943 = vmatpush.bf16.msra.mxu0 0
      %2944 = vmatpush.bf16.msra.mxu0 0
      %2945 = vmatpush.bf16.msra.mxu0 0
      %2946 = vmatpush.bf16.msra.mxu0 0
      %2947 = vmatpush.bf16.msra.mxu0 0
      %2948 = vmatpush.bf16.msra.mxu0 0
      %2949 = vmatpush.bf16.msra.mxu0 0
      %2950 = vmatpush.bf16.msra.mxu0 %v2863
      %2951 = vmatmul.bf16.gmra.mxu0 %v2842
      %v2952 = vpop.f32.mrf.mxu0
      %v2953 = vadd.f32 0.0, %v2952
      %v2954 = vpop.f32.mrf.mxu0
      %2955 = vdwg.mxu0
      %v2956 = vadd.f32 %v2789, %v2875
      %v2957 = vadd.f32 %v2790, %v2888
      %v2958 = vadd.f32 %v2791, %v2901
      %v2959 = vadd.f32 %v2792, %v2914
      %v2960 = vadd.f32 %v2793, %v2927
      %v2961 = vadd.f32 %v2794, %v2940
      %v2962 = vadd.f32 %v2795, %v2953
      %s2963 = scalar_lea.vmem %s1, 68
      %v2964 = vld [vmem:[%s2963] sm:$0xf]
      %2965 = vst [vmem:[#allocation1] ss:$4 sm:$0xff] %v172
      %s2966 = scalar_lea.vmem [#allocation1], 32
      %2967 = vst [vmem:[%s2966] ss:$4 sm:$0xff] %v173
      %v2968 = vld.sshfl [vmem:[#allocation1] sm:$0xff pattern:$0x73625140]
      %v2970 = vld.sshfl [vmem:[#allocation1 + $0x8] sm:$0xff pattern:$0x73625140]
      %v2972 = vld.sshfl [vmem:[#allocation1 + $0x10] sm:$0xff pattern:$0x73625140]
      %v2974 = vld.sshfl [vmem:[#allocation1 + $0x18] sm:$0xff pattern:$0x73625140]
      %v2976 = vld.sshfl [vmem:[#allocation1 + $0x20] sm:$0xff pattern:$0x73625140]
      %v2978 = vld.sshfl [vmem:[#allocation1 + $0x28] sm:$0xff pattern:$0x73625140]
      %v2980 = vld.sshfl [vmem:[#allocation1 + $0x30] sm:$0xff pattern:$0x73625140]
      %v2982 = vld.sshfl [vmem:[#allocation1 + $0x38] sm:$0xff pattern:$0x73625140]
      %2984 = vrot.lane.b32.xlu0 %v2968, 6
      %v2985 = vpop.permute.xlu0 %2984
      %2986 = vrot.lane.b32.xlu0 %v2970, 6
      %v2987 = vpop.permute.xlu0 %2986
      %2988 = vrot.lane.b32.xlu0 %v2972, 6
      %v2989 = vpop.permute.xlu0 %2988
      %2990 = vrot.lane.b32.xlu0 %v2974, 6
      %v2991 = vpop.permute.xlu0 %2990
      %2992 = vrot.lane.b32.xlu0 %v2976, 6
      %v2993 = vpop.permute.xlu0 %2992
      %2994 = vrot.lane.b32.xlu0 %v2978, 6
      %v2995 = vpop.permute.xlu0 %2994
      %2996 = vrot.lane.b32.xlu0 %v2980, 6
      %v2997 = vpop.permute.xlu0 %2996
      %2998 = vrot.lane.b32.xlu0 %v2982, 6
      %v2999 = vpop.permute.xlu0 %2998
      %vm3000 = vcmask 48128
      %v3001 = vsel %vm3000, %v2985, %v2987
      %v3002 = vsel %vm3000, %v2987, %v2989
      %v3003 = vsel %vm3000, %v2989, %v2991
      %v3004 = vsel %vm3000, %v2991, %v2993
      %v3005 = vsel %vm3000, %v2993, %v2995
      %v3006 = vsel %vm3000, %v2995, %v2997
      %v3007 = vsel %vm3000, %v2997, %v2999
      %v3009 = vsel %vm223, %v2964, 0
      %v3012 = vsel %vm227, %v3001, 0
      %v3015 = vsel %vm227, %v3002, 0
      %v3018 = vsel %vm227, %v3003, 0
      %v3021 = vsel %vm227, %v3004, 0
      %v3024 = vsel %vm227, %v3005, 0
      %v3027 = vsel %vm227, %v3006, 0
      %v3030 = vsel %vm227, %v3007, 0
      %3032 = vmatpush.bf16.msra.mxu0 0
      %3033 = vmatpush.bf16.msra.mxu0 0
      %3034 = vmatpush.bf16.msra.mxu0 0
      %3035 = vmatpush.bf16.msra.mxu0 0
      %3036 = vmatpush.bf16.msra.mxu0 0
      %3037 = vmatpush.bf16.msra.mxu0 0
      %3038 = vmatpush.bf16.msra.mxu0 0
      %3039 = vmatpush.bf16.msra.mxu0 %v3012
      %3040 = vmatmul.bf16.gmra.mxu0 %v3009
      %v3041 = vpop.f32.mrf.mxu0
      %v3042 = vadd.f32 0.0, %v3041
      %v3043 = vpop.f32.mrf.mxu0
      %3044 = vdwg.mxu0
      %3045 = vmatpush.bf16.msra.mxu0 0
      %3046 = vmatpush.bf16.msra.mxu0 0
      %3047 = vmatpush.bf16.msra.mxu0 0
      %3048 = vmatpush.bf16.msra.mxu0 0
      %3049 = vmatpush.bf16.msra.mxu0 0
      %3050 = vmatpush.bf16.msra.mxu0 0
      %3051 = vmatpush.bf16.msra.mxu0 0
      %3052 = vmatpush.bf16.msra.mxu0 %v3015
      %3053 = vmatmul.bf16.gmra.mxu0 %v3009
      %v3054 = vpop.f32.mrf.mxu0
      %v3055 = vadd.f32 0.0, %v3054
      %v3056 = vpop.f32.mrf.mxu0
      %3057 = vdwg.mxu0
      %3058 = vmatpush.bf16.msra.mxu0 0
      %3059 = vmatpush.bf16.msra.mxu0 0
      %3060 = vmatpush.bf16.msra.mxu0 0
      %3061 = vmatpush.bf16.msra.mxu0 0
      %3062 = vmatpush.bf16.msra.mxu0 0
      %3063 = vmatpush.bf16.msra.mxu0 0
      %3064 = vmatpush.bf16.msra.mxu0 0
      %3065 = vmatpush.bf16.msra.mxu0 %v3018
      %3066 = vmatmul.bf16.gmra.mxu0 %v3009
      %v3067 = vpop.f32.mrf.mxu0
      %v3068 = vadd.f32 0.0, %v3067
      %v3069 = vpop.f32.mrf.mxu0
      %3070 = vdwg.mxu0
      %3071 = vmatpush.bf16.msra.mxu0 0
      %3072 = vmatpush.bf16.msra.mxu0 0
      %3073 = vmatpush.bf16.msra.mxu0 0
      %3074 = vmatpush.bf16.msra.mxu0 0
      %3075 = vmatpush.bf16.msra.mxu0 0
      %3076 = vmatpush.bf16.msra.mxu0 0
      %3077 = vmatpush.bf16.msra.mxu0 0
      %3078 = vmatpush.bf16.msra.mxu0 %v3021
      %3079 = vmatmul.bf16.gmra.mxu0 %v3009
      %v3080 = vpop.f32.mrf.mxu0
      %v3081 = vadd.f32 0.0, %v3080
      %v3082 = vpop.f32.mrf.mxu0
      %3083 = vdwg.mxu0
      %3084 = vmatpush.bf16.msra.mxu0 0
      %3085 = vmatpush.bf16.msra.mxu0 0
      %3086 = vmatpush.bf16.msra.mxu0 0
      %3087 = vmatpush.bf16.msra.mxu0 0
      %3088 = vmatpush.bf16.msra.mxu0 0
      %3089 = vmatpush.bf16.msra.mxu0 0
      %3090 = vmatpush.bf16.msra.mxu0 0
      %3091 = vmatpush.bf16.msra.mxu0 %v3024
      %3092 = vmatmul.bf16.gmra.mxu0 %v3009
      %v3093 = vpop.f32.mrf.mxu0
      %v3094 = vadd.f32 0.0, %v3093
      %v3095 = vpop.f32.mrf.mxu0
      %3096 = vdwg.mxu0
      %3097 = vmatpush.bf16.msra.mxu0 0
      %3098 = vmatpush.bf16.msra.mxu0 0
      %3099 = vmatpush.bf16.msra.mxu0 0
      %3100 = vmatpush.bf16.msra.mxu0 0
      %3101 = vmatpush.bf16.msra.mxu0 0
      %3102 = vmatpush.bf16.msra.mxu0 0
      %3103 = vmatpush.bf16.msra.mxu0 0
      %3104 = vmatpush.bf16.msra.mxu0 %v3027
      %3105 = vmatmul.bf16.gmra.mxu0 %v3009
      %v3106 = vpop.f32.mrf.mxu0
      %v3107 = vadd.f32 0.0, %v3106
      %v3108 = vpop.f32.mrf.mxu0
      %3109 = vdwg.mxu0
      %3110 = vmatpush.bf16.msra.mxu0 0
      %3111 = vmatpush.bf16.msra.mxu0 0
      %3112 = vmatpush.bf16.msra.mxu0 0
      %3113 = vmatpush.bf16.msra.mxu0 0
      %3114 = vmatpush.bf16.msra.mxu0 0
      %3115 = vmatpush.bf16.msra.mxu0 0
      %3116 = vmatpush.bf16.msra.mxu0 0
      %3117 = vmatpush.bf16.msra.mxu0 %v3030
      %3118 = vmatmul.bf16.gmra.mxu0 %v3009
      %v3119 = vpop.f32.mrf.mxu0
      %v3120 = vadd.f32 0.0, %v3119
      %v3121 = vpop.f32.mrf.mxu0
      %3122 = vdwg.mxu0
      %v3123 = vadd.f32 %v2956, %v3042
      %v3124 = vadd.f32 %v2957, %v3055
      %v3125 = vadd.f32 %v2958, %v3068
      %v3126 = vadd.f32 %v2959, %v3081
      %v3127 = vadd.f32 %v2960, %v3094
      %v3128 = vadd.f32 %v2961, %v3107
      %v3129 = vadd.f32 %v2962, %v3120
      %s3130 = scalar_lea.vmem %s1, 72
      %v3131 = vld [vmem:[%s3130] sm:$0xf]
      %3132 = vst [vmem:[#allocation1] ss:$4 sm:$0xff] %v172
      %s3133 = scalar_lea.vmem [#allocation1], 32
      %3134 = vst [vmem:[%s3133] ss:$4 sm:$0xff] %v173
      %v3135 = vld.sshfl [vmem:[#allocation1 + $0x8] sm:$0xff pattern:$0x73625140]
      %v3137 = vld.sshfl [vmem:[#allocation1 + $0x10] sm:$0xff pattern:$0x73625140]
      %v3139 = vld.sshfl [vmem:[#allocation1 + $0x18] sm:$0xff pattern:$0x73625140]
      %v3141 = vld.sshfl [vmem:[#allocation1 + $0x20] sm:$0xff pattern:$0x73625140]
      %v3143 = vld.sshfl [vmem:[#allocation1 + $0x28] sm:$0xff pattern:$0x73625140]
      %v3145 = vld.sshfl [vmem:[#allocation1 + $0x30] sm:$0xff pattern:$0x73625140]
      %v3147 = vld.sshfl [vmem:[#allocation1 + $0x38] sm:$0xff pattern:$0x73625140]
      %3150 = vst [vmem:[#allocation1] ss:$4 sm:$0xff] %v174
      %v3151 = vld.sshfl [vmem:[#allocation1] sm:$0xff pattern:$0x73625140]
      %3153 = vrot.lane.b32.xlu0 %v3135, 56
      %v3154 = vpop.permute.xlu0 %3153
      %3155 = vrot.lane.b32.xlu0 %v3137, 56
      %v3156 = vpop.permute.xlu0 %3155
      %3157 = vrot.lane.b32.xlu0 %v3139, 56
      %v3158 = vpop.permute.xlu0 %3157
      %3159 = vrot.lane.b32.xlu0 %v3141, 56
      %v3160 = vpop.permute.xlu0 %3159
      %3161 = vrot.lane.b32.xlu0 %v3143, 56
      %v3162 = vpop.permute.xlu0 %3161
      %3163 = vrot.lane.b32.xlu0 %v3145, 56
      %v3164 = vpop.permute.xlu0 %3163
      %3165 = vrot.lane.b32.xlu0 %v3147, 56
      %v3166 = vpop.permute.xlu0 %3165
      %3167 = vrot.lane.b32.xlu0 %v3151, 56
      %v3168 = vpop.permute.xlu0 %3167
      %vm3169 = vcmask 457728
      %v3170 = vsel %vm3169, %v3154, %v3156
      %v3171 = vsel %vm3169, %v3156, %v3158
      %v3172 = vsel %vm3169, %v3158, %v3160
      %v3173 = vsel %vm3169, %v3160, %v3162
      %v3174 = vsel %vm3169, %v3162, %v3164
      %v3175 = vsel %vm3169, %v3164, %v3166
      %v3176 = vsel %vm3169, %v3166, %v3168
      %v3178 = vsel %vm223, %v3131, 0
      %v3181 = vsel %vm227, %v3170, 0
      %v3184 = vsel %vm227, %v3171, 0
      %v3187 = vsel %vm227, %v3172, 0
      %v3190 = vsel %vm227, %v3173, 0
      %v3193 = vsel %vm227, %v3174, 0
      %v3196 = vsel %vm227, %v3175, 0
      %v3199 = vsel %vm227, %v3176, 0
      %3201 = vmatpush.bf16.msra.mxu0 0
      %3202 = vmatpush.bf16.msra.mxu0 0
      %3203 = vmatpush.bf16.msra.mxu0 0
      %3204 = vmatpush.bf16.msra.mxu0 0
      %3205 = vmatpush.bf16.msra.mxu0 0
      %3206 = vmatpush.bf16.msra.mxu0 0
      %3207 = vmatpush.bf16.msra.mxu0 0
      %3208 = vmatpush.bf16.msra.mxu0 %v3181
      %3209 = vmatmul.bf16.gmra.mxu0 %v3178
      %v3210 = vpop.f32.mrf.mxu0
      %v3211 = vadd.f32 0.0, %v3210
      %v3212 = vpop.f32.mrf.mxu0
      %3213 = vdwg.mxu0
      %3214 = vmatpush.bf16.msra.mxu0 0
      %3215 = vmatpush.bf16.msra.mxu0 0
      %3216 = vmatpush.bf16.msra.mxu0 0
      %3217 = vmatpush.bf16.msra.mxu0 0
      %3218 = vmatpush.bf16.msra.mxu0 0
      %3219 = vmatpush.bf16.msra.mxu0 0
      %3220 = vmatpush.bf16.msra.mxu0 0
      %3221 = vmatpush.bf16.msra.mxu0 %v3184
      %3222 = vmatmul.bf16.gmra.mxu0 %v3178
      %v3223 = vpop.f32.mrf.mxu0
      %v3224 = vadd.f32 0.0, %v3223
      %v3225 = vpop.f32.mrf.mxu0
      %3226 = vdwg.mxu0
      %3227 = vmatpush.bf16.msra.mxu0 0
      %3228 = vmatpush.bf16.msra.mxu0 0
      %3229 = vmatpush.bf16.msra.mxu0 0
      %3230 = vmatpush.bf16.msra.mxu0 0
      %3231 = vmatpush.bf16.msra.mxu0 0
      %3232 = vmatpush.bf16.msra.mxu0 0
      %3233 = vmatpush.bf16.msra.mxu0 0
      %3234 = vmatpush.bf16.msra.mxu0 %v3187
      %3235 = vmatmul.bf16.gmra.mxu0 %v3178
      %v3236 = vpop.f32.mrf.mxu0
      %v3237 = vadd.f32 0.0, %v3236
      %v3238 = vpop.f32.mrf.mxu0
      %3239 = vdwg.mxu0
      %3240 = vmatpush.bf16.msra.mxu0 0
      %3241 = vmatpush.bf16.msra.mxu0 0
      %3242 = vmatpush.bf16.msra.mxu0 0
      %3243 = vmatpush.bf16.msra.mxu0 0
      %3244 = vmatpush.bf16.msra.mxu0 0
      %3245 = vmatpush.bf16.msra.mxu0 0
      %3246 = vmatpush.bf16.msra.mxu0 0
      %3247 = vmatpush.bf16.msra.mxu0 %v3190
      %3248 = vmatmul.bf16.gmra.mxu0 %v3178
      %v3249 = vpop.f32.mrf.mxu0
      %v3250 = vadd.f32 0.0, %v3249
      %v3251 = vpop.f32.mrf.mxu0
      %3252 = vdwg.mxu0
      %3253 = vmatpush.bf16.msra.mxu0 0
      %3254 = vmatpush.bf16.msra.mxu0 0
      %3255 = vmatpush.bf16.msra.mxu0 0
      %3256 = vmatpush.bf16.msra.mxu0 0
      %3257 = vmatpush.bf16.msra.mxu0 0
      %3258 = vmatpush.bf16.msra.mxu0 0
      %3259 = vmatpush.bf16.msra.mxu0 0
      %3260 = vmatpush.bf16.msra.mxu0 %v3193
      %3261 = vmatmul.bf16.gmra.mxu0 %v3178
      %v3262 = vpop.f32.mrf.mxu0
      %v3263 = vadd.f32 0.0, %v3262
      %v3264 = vpop.f32.mrf.mxu0
      %3265 = vdwg.mxu0
      %3266 = vmatpush.bf16.msra.mxu0 0
      %3267 = vmatpush.bf16.msra.mxu0 0
      %3268 = vmatpush.bf16.msra.mxu0 0
      %3269 = vmatpush.bf16.msra.mxu0 0
      %3270 = vmatpush.bf16.msra.mxu0 0
      %3271 = vmatpush.bf16.msra.mxu0 0
      %3272 = vmatpush.bf16.msra.mxu0 0
      %3273 = vmatpush.bf16.msra.mxu0 %v3196
      %3274 = vmatmul.bf16.gmra.mxu0 %v3178
      %v3275 = vpop.f32.mrf.mxu0
      %v3276 = vadd.f32 0.0, %v3275
      %v3277 = vpop.f32.mrf.mxu0
      %3278 = vdwg.mxu0
      %3279 = vmatpush.bf16.msra.mxu0 0
      %3280 = vmatpush.bf16.msra.mxu0 0
      %3281 = vmatpush.bf16.msra.mxu0 0
      %3282 = vmatpush.bf16.msra.mxu0 0
      %3283 = vmatpush.bf16.msra.mxu0 0
      %3284 = vmatpush.bf16.msra.mxu0 0
      %3285 = vmatpush.bf16.msra.mxu0 0
      %3286 = vmatpush.bf16.msra.mxu0 %v3199
      %3287 = vmatmul.bf16.gmra.mxu0 %v3178
      %v3288 = vpop.f32.mrf.mxu0
      %v3289 = vadd.f32 0.0, %v3288
      %v3290 = vpop.f32.mrf.mxu0
      %3291 = vdwg.mxu0
      %v3292 = vadd.f32 %v3123, %v3211
      %v3293 = vadd.f32 %v3124, %v3224
      %v3294 = vadd.f32 %v3125, %v3237
      %v3295 = vadd.f32 %v3126, %v3250
      %v3296 = vadd.f32 %v3127, %v3263
      %v3297 = vadd.f32 %v3128, %v3276
      %v3298 = vadd.f32 %v3129, %v3289
      %s3299 = scalar_lea.vmem %s1, 76
      %v3300 = vld [vmem:[%s3299] sm:$0xf]
      %3301 = vst [vmem:[#allocation1] ss:$4 sm:$0xff] %v172
      %s3302 = scalar_lea.vmem [#allocation1], 32
      %3303 = vst [vmem:[%s3302] ss:$4 sm:$0xff] %v173
      %v3304 = vld.sshfl [vmem:[#allocation1 + $0x8] sm:$0xff pattern:$0x73625140]
      %v3306 = vld.sshfl [vmem:[#allocation1 + $0x10] sm:$0xff pattern:$0x73625140]
      %v3308 = vld.sshfl [vmem:[#allocation1 + $0x18] sm:$0xff pattern:$0x73625140]
      %v3310 = vld.sshfl [vmem:[#allocation1 + $0x20] sm:$0xff pattern:$0x73625140]
      %v3312 = vld.sshfl [vmem:[#allocation1 + $0x28] sm:$0xff pattern:$0x73625140]
      %v3314 = vld.sshfl [vmem:[#allocation1 + $0x30] sm:$0xff pattern:$0x73625140]
      %v3316 = vld.sshfl [vmem:[#allocation1 + $0x38] sm:$0xff pattern:$0x73625140]
      %3318 = vst [vmem:[#allocation1] ss:$4 sm:$0xff] %v174
      %v3319 = vld.sshfl [vmem:[#allocation1] sm:$0xff pattern:$0x73625140]
      %3321 = vrot.lane.b32.xlu0 %v3304, 55
      %v3322 = vpop.permute.xlu0 %3321
      %3323 = vrot.lane.b32.xlu0 %v3306, 55
      %v3324 = vpop.permute.xlu0 %3323
      %3325 = vrot.lane.b32.xlu0 %v3308, 55
      %v3326 = vpop.permute.xlu0 %3325
      %3327 = vrot.lane.b32.xlu0 %v3310, 55
      %v3328 = vpop.permute.xlu0 %3327
      %3329 = vrot.lane.b32.xlu0 %v3312, 55
      %v3330 = vpop.permute.xlu0 %3329
      %3331 = vrot.lane.b32.xlu0 %v3314, 55
      %v3332 = vpop.permute.xlu0 %3331
      %3333 = vrot.lane.b32.xlu0 %v3316, 55
      %v3334 = vpop.permute.xlu0 %3333
      %3335 = vrot.lane.b32.xlu0 %v3319, 55
      %v3336 = vpop.permute.xlu0 %3335
      %vm3337 = vcmask 449536
      %v3338 = vsel %vm3337, %v3322, %v3324
      %v3339 = vsel %vm3337, %v3324, %v3326
      %v3340 = vsel %vm3337, %v3326, %v3328
      %v3341 = vsel %vm3337, %v3328, %v3330
      %v3342 = vsel %vm3337, %v3330, %v3332
      %v3343 = vsel %vm3337, %v3332, %v3334
      %v3344 = vsel %vm3337, %v3334, %v3336
      %v3346 = vsel %vm223, %v3300, 0
      %v3349 = vsel %vm227, %v3338, 0
      %v3352 = vsel %vm227, %v3339, 0
      %v3355 = vsel %vm227, %v3340, 0
      %v3358 = vsel %vm227, %v3341, 0
      %v3361 = vsel %vm227, %v3342, 0
      %v3364 = vsel %vm227, %v3343, 0
      %v3367 = vsel %vm227, %v3344, 0
      %3369 = vmatpush.bf16.msra.mxu0 0
      %3370 = vmatpush.bf16.msra.mxu0 0
      %3371 = vmatpush.bf16.msra.mxu0 0
      %3372 = vmatpush.bf16.msra.mxu0 0
      %3373 = vmatpush.bf16.msra.mxu0 0
      %3374 = vmatpush.bf16.msra.mxu0 0
      %3375 = vmatpush.bf16.msra.mxu0 0
      %3376 = vmatpush.bf16.msra.mxu0 %v3349
      %3377 = vmatmul.bf16.gmra.mxu0 %v3346
      %v3378 = vpop.f32.mrf.mxu0
      %v3379 = vadd.f32 0.0, %v3378
      %v3380 = vpop.f32.mrf.mxu0
      %3381 = vdwg.mxu0
      %3382 = vmatpush.bf16.msra.mxu0 0
      %3383 = vmatpush.bf16.msra.mxu0 0
      %3384 = vmatpush.bf16.msra.mxu0 0
      %3385 = vmatpush.bf16.msra.mxu0 0
      %3386 = vmatpush.bf16.msra.mxu0 0
      %3387 = vmatpush.bf16.msra.mxu0 0
      %3388 = vmatpush.bf16.msra.mxu0 0
      %3389 = vmatpush.bf16.msra.mxu0 %v3352
      %3390 = vmatmul.bf16.gmra.mxu0 %v3346
      %v3391 = vpop.f32.mrf.mxu0
      %v3392 = vadd.f32 0.0, %v3391
      %v3393 = vpop.f32.mrf.mxu0
      %3394 = vdwg.mxu0
      %3395 = vmatpush.bf16.msra.mxu0 0
      %3396 = vmatpush.bf16.msra.mxu0 0
      %3397 = vmatpush.bf16.msra.mxu0 0
      %3398 = vmatpush.bf16.msra.mxu0 0
      %3399 = vmatpush.bf16.msra.mxu0 0
      %3400 = vmatpush.bf16.msra.mxu0 0
      %3401 = vmatpush.bf16.msra.mxu0 0
      %3402 = vmatpush.bf16.msra.mxu0 %v3355
      %3403 = vmatmul.bf16.gmra.mxu0 %v3346
      %v3404 = vpop.f32.mrf.mxu0
      %v3405 = vadd.f32 0.0, %v3404
      %v3406 = vpop.f32.mrf.mxu0
      %3407 = vdwg.mxu0
      %3408 = vmatpush.bf16.msra.mxu0 0
      %3409 = vmatpush.bf16.msra.mxu0 0
      %3410 = vmatpush.bf16.msra.mxu0 0
      %3411 = vmatpush.bf16.msra.mxu0 0
      %3412 = vmatpush.bf16.msra.mxu0 0
      %3413 = vmatpush.bf16.msra.mxu0 0
      %3414 = vmatpush.bf16.msra.mxu0 0
      %3415 = vmatpush.bf16.msra.mxu0 %v3358
      %3416 = vmatmul.bf16.gmra.mxu0 %v3346
      %v3417 = vpop.f32.mrf.mxu0
      %v3418 = vadd.f32 0.0, %v3417
      %v3419 = vpop.f32.mrf.mxu0
      %3420 = vdwg.mxu0
      %3421 = vmatpush.bf16.msra.mxu0 0
      %3422 = vmatpush.bf16.msra.mxu0 0
      %3423 = vmatpush.bf16.msra.mxu0 0
      %3424 = vmatpush.bf16.msra.mxu0 0
      %3425 = vmatpush.bf16.msra.mxu0 0
      %3426 = vmatpush.bf16.msra.mxu0 0
      %3427 = vmatpush.bf16.msra.mxu0 0
      %3428 = vmatpush.bf16.msra.mxu0 %v3361
      %3429 = vmatmul.bf16.gmra.mxu0 %v3346
      %v3430 = vpop.f32.mrf.mxu0
      %v3431 = vadd.f32 0.0, %v3430
      %v3432 = vpop.f32.mrf.mxu0
      %3433 = vdwg.mxu0
      %3434 = vmatpush.bf16.msra.mxu0 0
      %3435 = vmatpush.bf16.msra.mxu0 0
      %3436 = vmatpush.bf16.msra.mxu0 0
      %3437 = vmatpush.bf16.msra.mxu0 0
      %3438 = vmatpush.bf16.msra.mxu0 0
      %3439 = vmatpush.bf16.msra.mxu0 0
      %3440 = vmatpush.bf16.msra.mxu0 0
      %3441 = vmatpush.bf16.msra.mxu0 %v3364
      %3442 = vmatmul.bf16.gmra.mxu0 %v3346
      %v3443 = vpop.f32.mrf.mxu0
      %v3444 = vadd.f32 0.0, %v3443
      %v3445 = vpop.f32.mrf.mxu0
      %3446 = vdwg.mxu0
      %3447 = vmatpush.bf16.msra.mxu0 0
      %3448 = vmatpush.bf16.msra.mxu0 0
      %3449 = vmatpush.bf16.msra.mxu0 0
      %3450 = vmatpush.bf16.msra.mxu0 0
      %3451 = vmatpush.bf16.msra.mxu0 0
      %3452 = vmatpush.bf16.msra.mxu0 0
      %3453 = vmatpush.bf16.msra.mxu0 0
      %3454 = vmatpush.bf16.msra.mxu0 %v3367
      %3455 = vmatmul.bf16.gmra.mxu0 %v3346
      %v3456 = vpop.f32.mrf.mxu0
      %v3457 = vadd.f32 0.0, %v3456
      %v3458 = vpop.f32.mrf.mxu0
      %3459 = vdwg.mxu0
      %v3460 = vadd.f32 %v3292, %v3379
      %v3461 = vadd.f32 %v3293, %v3392
      %v3462 = vadd.f32 %v3294, %v3405
      %v3463 = vadd.f32 %v3295, %v3418
      %v3464 = vadd.f32 %v3296, %v3431
      %v3465 = vadd.f32 %v3297, %v3444
      %v3466 = vadd.f32 %v3298, %v3457
      %s3467 = scalar_lea.vmem %s1, 80
      %v3468 = vld [vmem:[%s3467] sm:$0xf]
      %3469 = vst [vmem:[#allocation1] ss:$4 sm:$0xff] %v172
      %s3470 = scalar_lea.vmem [#allocation1], 32
      %3471 = vst [vmem:[%s3470] ss:$4 sm:$0xff] %v173
      %v3472 = vld.sshfl [vmem:[#allocation1 + $0x8] sm:$0xff pattern:$0x73625140]
      %v3474 = vld.sshfl [vmem:[#allocation1 + $0x10] sm:$0xff pattern:$0x73625140]
      %v3476 = vld.sshfl [vmem:[#allocation1 + $0x18] sm:$0xff pattern:$0x73625140]
      %v3478 = vld.sshfl [vmem:[#allocation1 + $0x20] sm:$0xff pattern:$0x73625140]
      %v3480 = vld.sshfl [vmem:[#allocation1 + $0x28] sm:$0xff pattern:$0x73625140]
      %v3482 = vld.sshfl [vmem:[#allocation1 + $0x30] sm:$0xff pattern:$0x73625140]
      %v3484 = vld.sshfl [vmem:[#allocation1 + $0x38] sm:$0xff pattern:$0x73625140]
      %3486 = vst [vmem:[#allocation1] ss:$4 sm:$0xff] %v174
      %v3487 = vld.sshfl [vmem:[#allocation1] sm:$0xff pattern:$0x73625140]
      %3489 = vrot.lane.b32.xlu0 %v3472, 54
      %v3490 = vpop.permute.xlu0 %3489
      %3491 = vrot.lane.b32.xlu0 %v3474, 54
      %v3492 = vpop.permute.xlu0 %3491
      %3493 = vrot.lane.b32.xlu0 %v3476, 54
      %v3494 = vpop.permute.xlu0 %3493
      %3495 = vrot.lane.b32.xlu0 %v3478, 54
      %v3496 = vpop.permute.xlu0 %3495
      %3497 = vrot.lane.b32.xlu0 %v3480, 54
      %v3498 = vpop.permute.xlu0 %3497
      %3499 = vrot.lane.b32.xlu0 %v3482, 54
      %v3500 = vpop.permute.xlu0 %3499
      %3501 = vrot.lane.b32.xlu0 %v3484, 54
      %v3502 = vpop.permute.xlu0 %3501
      %3503 = vrot.lane.b32.xlu0 %v3487, 54
      %v3504 = vpop.permute.xlu0 %3503
      %vm3505 = vcmask 441344
      %v3506 = vsel %vm3505, %v3490, %v3492
      %v3507 = vsel %vm3505, %v3492, %v3494
      %v3508 = vsel %vm3505, %v3494, %v3496
      %v3509 = vsel %vm3505, %v3496, %v3498
      %v3510 = vsel %vm3505, %v3498, %v3500
      %v3511 = vsel %vm3505, %v3500, %v3502
      %v3512 = vsel %vm3505, %v3502, %v3504
      %v3514 = vsel %vm223, %v3468, 0
      %v3517 = vsel %vm227, %v3506, 0
      %v3520 = vsel %vm227, %v3507, 0
      %v3523 = vsel %vm227, %v3508, 0
      %v3526 = vsel %vm227, %v3509, 0
      %v3529 = vsel %vm227, %v3510, 0
      %v3532 = vsel %vm227, %v3511, 0
      %v3535 = vsel %vm227, %v3512, 0
      %3537 = vmatpush.bf16.msra.mxu0 0
      %3538 = vmatpush.bf16.msra.mxu0 0
      %3539 = vmatpush.bf16.msra.mxu0 0
      %3540 = vmatpush.bf16.msra.mxu0 0
      %3541 = vmatpush.bf16.msra.mxu0 0
      %3542 = vmatpush.bf16.msra.mxu0 0
      %3543 = vmatpush.bf16.msra.mxu0 0
      %3544 = vmatpush.bf16.msra.mxu0 %v3517
      %3545 = vmatmul.bf16.gmra.mxu0 %v3514
      %v3546 = vpop.f32.mrf.mxu0
      %v3547 = vadd.f32 0.0, %v3546
      %v3548 = vpop.f32.mrf.mxu0
      %3549 = vdwg.mxu0
      %3550 = vmatpush.bf16.msra.mxu0 0
      %3551 = vmatpush.bf16.msra.mxu0 0
      %3552 = vmatpush.bf16.msra.mxu0 0
      %3553 = vmatpush.bf16.msra.mxu0 0
      %3554 = vmatpush.bf16.msra.mxu0 0
      %3555 = vmatpush.bf16.msra.mxu0 0
      %3556 = vmatpush.bf16.msra.mxu0 0
      %3557 = vmatpush.bf16.msra.mxu0 %v3520
      %3558 = vmatmul.bf16.gmra.mxu0 %v3514
      %v3559 = vpop.f32.mrf.mxu0
      %v3560 = vadd.f32 0.0, %v3559
      %v3561 = vpop.f32.mrf.mxu0
      %3562 = vdwg.mxu0
      %3563 = vmatpush.bf16.msra.mxu0 0
      %3564 = vmatpush.bf16.msra.mxu0 0
      %3565 = vmatpush.bf16.msra.mxu0 0
      %3566 = vmatpush.bf16.msra.mxu0 0
      %3567 = vmatpush.bf16.msra.mxu0 0
      %3568 = vmatpush.bf16.msra.mxu0 0
      %3569 = vmatpush.bf16.msra.mxu0 0
      %3570 = vmatpush.bf16.msra.mxu0 %v3523
      %3571 = vmatmul.bf16.gmra.mxu0 %v3514
      %v3572 = vpop.f32.mrf.mxu0
      %v3573 = vadd.f32 0.0, %v3572
      %v3574 = vpop.f32.mrf.mxu0
      %3575 = vdwg.mxu0
      %3576 = vmatpush.bf16.msra.mxu0 0
      %3577 = vmatpush.bf16.msra.mxu0 0
      %3578 = vmatpush.bf16.msra.mxu0 0
      %3579 = vmatpush.bf16.msra.mxu0 0
      %3580 = vmatpush.bf16.msra.mxu0 0
      %3581 = vmatpush.bf16.msra.mxu0 0
      %3582 = vmatpush.bf16.msra.mxu0 0
      %3583 = vmatpush.bf16.msra.mxu0 %v3526
      %3584 = vmatmul.bf16.gmra.mxu0 %v3514
      %v3585 = vpop.f32.mrf.mxu0
      %v3586 = vadd.f32 0.0, %v3585
      %v3587 = vpop.f32.mrf.mxu0
      %3588 = vdwg.mxu0
      %3589 = vmatpush.bf16.msra.mxu0 0
      %3590 = vmatpush.bf16.msra.mxu0 0
      %3591 = vmatpush.bf16.msra.mxu0 0
      %3592 = vmatpush.bf16.msra.mxu0 0
      %3593 = vmatpush.bf16.msra.mxu0 0
      %3594 = vmatpush.bf16.msra.mxu0 0
      %3595 = vmatpush.bf16.msra.mxu0 0
      %3596 = vmatpush.bf16.msra.mxu0 %v3529
      %3597 = vmatmul.bf16.gmra.mxu0 %v3514
      %v3598 = vpop.f32.mrf.mxu0
      %v3599 = vadd.f32 0.0, %v3598
      %v3600 = vpop.f32.mrf.mxu0
      %3601 = vdwg.mxu0
      %3602 = vmatpush.bf16.msra.mxu0 0
      %3603 = vmatpush.bf16.msra.mxu0 0
      %3604 = vmatpush.bf16.msra.mxu0 0
      %3605 = vmatpush.bf16.msra.mxu0 0
      %3606 = vmatpush.bf16.msra.mxu0 0
      %3607 = vmatpush.bf16.msra.mxu0 0
      %3608 = vmatpush.bf16.msra.mxu0 0
      %3609 = vmatpush.bf16.msra.mxu0 %v3532
      %3610 = vmatmul.bf16.gmra.mxu0 %v3514
      %v3611 = vpop.f32.mrf.mxu0
      %v3612 = vadd.f32 0.0, %v3611
      %v3613 = vpop.f32.mrf.mxu0
      %3614 = vdwg.mxu0
      %3615 = vmatpush.bf16.msra.mxu0 0
      %3616 = vmatpush.bf16.msra.mxu0 0
      %3617 = vmatpush.bf16.msra.mxu0 0
      %3618 = vmatpush.bf16.msra.mxu0 0
      %3619 = vmatpush.bf16.msra.mxu0 0
      %3620 = vmatpush.bf16.msra.mxu0 0
      %3621 = vmatpush.bf16.msra.mxu0 0
      %3622 = vmatpush.bf16.msra.mxu0 %v3535
      %3623 = vmatmul.bf16.gmra.mxu0 %v3514
      %v3624 = vpop.f32.mrf.mxu0
      %v3625 = vadd.f32 0.0, %v3624
      %v3626 = vpop.f32.mrf.mxu0
      %3627 = vdwg.mxu0
      %v3628 = vadd.f32 %v3460, %v3547
      %v3629 = vadd.f32 %v3461, %v3560
      %v3630 = vadd.f32 %v3462, %v3573
      %v3631 = vadd.f32 %v3463, %v3586
      %v3632 = vadd.f32 %v3464, %v3599
      %v3633 = vadd.f32 %v3465, %v3612
      %v3634 = vadd.f32 %v3466, %v3625
      %s3635 = scalar_lea.vmem %s1, 84
      %v3636 = vld [vmem:[%s3635] sm:$0xf]
      %3637 = vst [vmem:[#allocation1] ss:$4 sm:$0xff] %v172
      %s3638 = scalar_lea.vmem [#allocation1], 32
      %3639 = vst [vmem:[%s3638] ss:$4 sm:$0xff] %v173
      %v3640 = vld.sshfl [vmem:[#allocation1 + $0x8] sm:$0xff pattern:$0x73625140]
      %v3642 = vld.sshfl [vmem:[#allocation1 + $0x10] sm:$0xff pattern:$0x73625140]
      %v3644 = vld.sshfl [vmem:[#allocation1 + $0x18] sm:$0xff pattern:$0x73625140]
      %v3646 = vld.sshfl [vmem:[#allocation1 + $0x20] sm:$0xff pattern:$0x73625140]
      %v3648 = vld.sshfl [vmem:[#allocation1 + $0x28] sm:$0xff pattern:$0x73625140]
      %v3650 = vld.sshfl [vmem:[#allocation1 + $0x30] sm:$0xff pattern:$0x73625140]
      %v3652 = vld.sshfl [vmem:[#allocation1 + $0x38] sm:$0xff pattern:$0x73625140]
      %3654 = vst [vmem:[#allocation1] ss:$4 sm:$0xff] %v174
      %v3655 = vld.sshfl [vmem:[#allocation1] sm:$0xff pattern:$0x73625140]
      %3657 = vrot.lane.b32.xlu0 %v3640, 46
      %v3658 = vpop.permute.xlu0 %3657
      %3659 = vrot.lane.b32.xlu0 %v3642, 46
      %v3660 = vpop.permute.xlu0 %3659
      %3661 = vrot.lane.b32.xlu0 %v3644, 46
      %v3662 = vpop.permute.xlu0 %3661
      %3663 = vrot.lane.b32.xlu0 %v3646, 46
      %v3664 = vpop.permute.xlu0 %3663
      %3665 = vrot.lane.b32.xlu0 %v3648, 46
      %v3666 = vpop.permute.xlu0 %3665
      %3667 = vrot.lane.b32.xlu0 %v3650, 46
      %v3668 = vpop.permute.xlu0 %3667
      %3669 = vrot.lane.b32.xlu0 %v3652, 46
      %v3670 = vpop.permute.xlu0 %3669
      %3671 = vrot.lane.b32.xlu0 %v3655, 46
      %v3672 = vpop.permute.xlu0 %3671
      %vm3673 = vcmask 375808
      %v3674 = vsel %vm3673, %v3658, %v3660
      %v3675 = vsel %vm3673, %v3660, %v3662
      %v3676 = vsel %vm3673, %v3662, %v3664
      %v3677 = vsel %vm3673, %v3664, %v3666
      %v3678 = vsel %vm3673, %v3666, %v3668
      %v3679 = vsel %vm3673, %v3668, %v3670
      %v3680 = vsel %vm3673, %v3670, %v3672
      %v3682 = vsel %vm223, %v3636, 0
      %v3685 = vsel %vm227, %v3674, 0
      %v3688 = vsel %vm227, %v3675, 0
      %v3691 = vsel %vm227, %v3676, 0
      %v3694 = vsel %vm227, %v3677, 0
      %v3697 = vsel %vm227, %v3678, 0
      %v3700 = vsel %vm227, %v3679, 0
      %v3703 = vsel %vm227, %v3680, 0
      %3705 = vmatpush.bf16.msra.mxu0 0
      %3706 = vmatpush.bf16.msra.mxu0 0
      %3707 = vmatpush.bf16.msra.mxu0 0
      %3708 = vmatpush.bf16.msra.mxu0 0
      %3709 = vmatpush.bf16.msra.mxu0 0
      %3710 = vmatpush.bf16.msra.mxu0 0
      %3711 = vmatpush.bf16.msra.mxu0 0
      %3712 = vmatpush.bf16.msra.mxu0 %v3685
      %3713 = vmatmul.bf16.gmra.mxu0 %v3682
      %v3714 = vpop.f32.mrf.mxu0
      %v3715 = vadd.f32 0.0, %v3714
      %v3716 = vpop.f32.mrf.mxu0
      %3717 = vdwg.mxu0
      %3718 = vmatpush.bf16.msra.mxu0 0
      %3719 = vmatpush.bf16.msra.mxu0 0
      %3720 = vmatpush.bf16.msra.mxu0 0
      %3721 = vmatpush.bf16.msra.mxu0 0
      %3722 = vmatpush.bf16.msra.mxu0 0
      %3723 = vmatpush.bf16.msra.mxu0 0
      %3724 = vmatpush.bf16.msra.mxu0 0
      %3725 = vmatpush.bf16.msra.mxu0 %v3688
      %3726 = vmatmul.bf16.gmra.mxu0 %v3682
      %v3727 = vpop.f32.mrf.mxu0
      %v3728 = vadd.f32 0.0, %v3727
      %v3729 = vpop.f32.mrf.mxu0
      %3730 = vdwg.mxu0
      %3731 = vmatpush.bf16.msra.mxu0 0
      %3732 = vmatpush.bf16.msra.mxu0 0
      %3733 = vmatpush.bf16.msra.mxu0 0
      %3734 = vmatpush.bf16.msra.mxu0 0
      %3735 = vmatpush.bf16.msra.mxu0 0
      %3736 = vmatpush.bf16.msra.mxu0 0
      %3737 = vmatpush.bf16.msra.mxu0 0
      %3738 = vmatpush.bf16.msra.mxu0 %v3691
      %3739 = vmatmul.bf16.gmra.mxu0 %v3682
      %v3740 = vpop.f32.mrf.mxu0
      %v3741 = vadd.f32 0.0, %v3740
      %v3742 = vpop.f32.mrf.mxu0
      %3743 = vdwg.mxu0
      %3744 = vmatpush.bf16.msra.mxu0 0
      %3745 = vmatpush.bf16.msra.mxu0 0
      %3746 = vmatpush.bf16.msra.mxu0 0
      %3747 = vmatpush.bf16.msra.mxu0 0
      %3748 = vmatpush.bf16.msra.mxu0 0
      %3749 = vmatpush.bf16.msra.mxu0 0
      %3750 = vmatpush.bf16.msra.mxu0 0
      %3751 = vmatpush.bf16.msra.mxu0 %v3694
      %3752 = vmatmul.bf16.gmra.mxu0 %v3682
      %v3753 = vpop.f32.mrf.mxu0
      %v3754 = vadd.f32 0.0, %v3753
      %v3755 = vpop.f32.mrf.mxu0
      %3756 = vdwg.mxu0
      %3757 = vmatpush.bf16.msra.mxu0 0
      %3758 = vmatpush.bf16.msra.mxu0 0
      %3759 = vmatpush.bf16.msra.mxu0 0
      %3760 = vmatpush.bf16.msra.mxu0 0
      %3761 = vmatpush.bf16.msra.mxu0 0
      %3762 = vmatpush.bf16.msra.mxu0 0
      %3763 = vmatpush.bf16.msra.mxu0 0
      %3764 = vmatpush.bf16.msra.mxu0 %v3697
      %3765 = vmatmul.bf16.gmra.mxu0 %v3682
      %v3766 = vpop.f32.mrf.mxu0
      %v3767 = vadd.f32 0.0, %v3766
      %v3768 = vpop.f32.mrf.mxu0
      %3769 = vdwg.mxu0
      %3770 = vmatpush.bf16.msra.mxu0 0
      %3771 = vmatpush.bf16.msra.mxu0 0
      %3772 = vmatpush.bf16.msra.mxu0 0
      %3773 = vmatpush.bf16.msra.mxu0 0
      %3774 = vmatpush.bf16.msra.mxu0 0
      %3775 = vmatpush.bf16.msra.mxu0 0
      %3776 = vmatpush.bf16.msra.mxu0 0
      %3777 = vmatpush.bf16.msra.mxu0 %v3700
      %3778 = vmatmul.bf16.gmra.mxu0 %v3682
      %v3779 = vpop.f32.mrf.mxu0
      %v3780 = vadd.f32 0.0, %v3779
      %v3781 = vpop.f32.mrf.mxu0
      %3782 = vdwg.mxu0
      %3783 = vmatpush.bf16.msra.mxu0 0
      %3784 = vmatpush.bf16.msra.mxu0 0
      %3785 = vmatpush.bf16.msra.mxu0 0
      %3786 = vmatpush.bf16.msra.mxu0 0
      %3787 = vmatpush.bf16.msra.mxu0 0
      %3788 = vmatpush.bf16.msra.mxu0 0
      %3789 = vmatpush.bf16.msra.mxu0 0
      %3790 = vmatpush.bf16.msra.mxu0 %v3703
      %3791 = vmatmul.bf16.gmra.mxu0 %v3682
      %v3792 = vpop.f32.mrf.mxu0
      %v3793 = vadd.f32 0.0, %v3792
      %v3794 = vpop.f32.mrf.mxu0
      %3795 = vdwg.mxu0
      %v3796 = vadd.f32 %v3628, %v3715
      %v3797 = vadd.f32 %v3629, %v3728
      %v3798 = vadd.f32 %v3630, %v3741
      %v3799 = vadd.f32 %v3631, %v3754
      %v3800 = vadd.f32 %v3632, %v3767
      %v3801 = vadd.f32 %v3633, %v3780
      %v3802 = vadd.f32 %v3634, %v3793
      %s3803 = scalar_lea.vmem %s1, 88
      %v3804 = vld [vmem:[%s3803] sm:$0xf]
      %3805 = vst [vmem:[#allocation1] ss:$4 sm:$0xff] %v172
      %s3806 = scalar_lea.vmem [#allocation1], 32
      %3807 = vst [vmem:[%s3806] ss:$4 sm:$0xff] %v173
      %v3808 = vld.sshfl [vmem:[#allocation1 + $0x8] sm:$0xff pattern:$0x73625140]
      %v3810 = vld.sshfl [vmem:[#allocation1 + $0x10] sm:$0xff pattern:$0x73625140]
      %v3812 = vld.sshfl [vmem:[#allocation1 + $0x18] sm:$0xff pattern:$0x73625140]
      %v3814 = vld.sshfl [vmem:[#allocation1 + $0x20] sm:$0xff pattern:$0x73625140]
      %v3816 = vld.sshfl [vmem:[#allocation1 + $0x28] sm:$0xff pattern:$0x73625140]
      %v3818 = vld.sshfl [vmem:[#allocation1 + $0x30] sm:$0xff pattern:$0x73625140]
      %v3820 = vld.sshfl [vmem:[#allocation1 + $0x38] sm:$0xff pattern:$0x73625140]
      %3822 = vst [vmem:[#allocation1] ss:$4 sm:$0xff] %v174
      %v3823 = vld.sshfl [vmem:[#allocation1] sm:$0xff pattern:$0x73625140]
      %3825 = vrot.lane.b32.xlu0 %v3808, 45
      %v3826 = vpop.permute.xlu0 %3825
      %3827 = vrot.lane.b32.xlu0 %v3810, 45
      %v3828 = vpop.permute.xlu0 %3827
      %3829 = vrot.lane.b32.xlu0 %v3812, 45
      %v3830 = vpop.permute.xlu0 %3829
      %3831 = vrot.lane.b32.xlu0 %v3814, 45
      %v3832 = vpop.permute.xlu0 %3831
      %3833 = vrot.lane.b32.xlu0 %v3816, 45
      %v3834 = vpop.permute.xlu0 %3833
      %3835 = vrot.lane.b32.xlu0 %v3818, 45
      %v3836 = vpop.permute.xlu0 %3835
      %3837 = vrot.lane.b32.xlu0 %v3820, 45
      %v3838 = vpop.permute.xlu0 %3837
      %3839 = vrot.lane.b32.xlu0 %v3823, 45
      %v3840 = vpop.permute.xlu0 %3839
      %vm3841 = vcmask 367616
      %v3842 = vsel %vm3841, %v3826, %v3828
      %v3843 = vsel %vm3841, %v3828, %v3830
      %v3844 = vsel %vm3841, %v3830, %v3832
      %v3845 = vsel %vm3841, %v3832, %v3834
      %v3846 = vsel %vm3841, %v3834, %v3836
      %v3847 = vsel %vm3841, %v3836, %v3838
      %v3848 = vsel %vm3841, %v3838, %v3840
      %v3850 = vsel %vm223, %v3804, 0
      %v3853 = vsel %vm227, %v3842, 0
      %v3856 = vsel %vm227, %v3843, 0
      %v3859 = vsel %vm227, %v3844, 0
      %v3862 = vsel %vm227, %v3845, 0
      %v3865 = vsel %vm227, %v3846, 0
      %v3868 = vsel %vm227, %v3847, 0
      %v3871 = vsel %vm227, %v3848, 0
      %3873 = vmatpush.bf16.msra.mxu0 0
      %3874 = vmatpush.bf16.msra.mxu0 0
      %3875 = vmatpush.bf16.msra.mxu0 0
      %3876 = vmatpush.bf16.msra.mxu0 0
      %3877 = vmatpush.bf16.msra.mxu0 0
      %3878 = vmatpush.bf16.msra.mxu0 0
      %3879 = vmatpush.bf16.msra.mxu0 0
      %3880 = vmatpush.bf16.msra.mxu0 %v3853
      %3881 = vmatmul.bf16.gmra.mxu0 %v3850
      %v3882 = vpop.f32.mrf.mxu0
      %v3883 = vadd.f32 0.0, %v3882
      %v3884 = vpop.f32.mrf.mxu0
      %3885 = vdwg.mxu0
      %3886 = vmatpush.bf16.msra.mxu0 0
      %3887 = vmatpush.bf16.msra.mxu0 0
      %3888 = vmatpush.bf16.msra.mxu0 0
      %3889 = vmatpush.bf16.msra.mxu0 0
      %3890 = vmatpush.bf16.msra.mxu0 0
      %3891 = vmatpush.bf16.msra.mxu0 0
      %3892 = vmatpush.bf16.msra.mxu0 0
      %3893 = vmatpush.bf16.msra.mxu0 %v3856
      %3894 = vmatmul.bf16.gmra.mxu0 %v3850
      %v3895 = vpop.f32.mrf.mxu0
      %v3896 = vadd.f32 0.0, %v3895
      %v3897 = vpop.f32.mrf.mxu0
      %3898 = vdwg.mxu0
      %3899 = vmatpush.bf16.msra.mxu0 0
      %3900 = vmatpush.bf16.msra.mxu0 0
      %3901 = vmatpush.bf16.msra.mxu0 0
      %3902 = vmatpush.bf16.msra.mxu0 0
      %3903 = vmatpush.bf16.msra.mxu0 0
      %3904 = vmatpush.bf16.msra.mxu0 0
      %3905 = vmatpush.bf16.msra.mxu0 0
      %3906 = vmatpush.bf16.msra.mxu0 %v3859
      %3907 = vmatmul.bf16.gmra.mxu0 %v3850
      %v3908 = vpop.f32.mrf.mxu0
      %v3909 = vadd.f32 0.0, %v3908
      %v3910 = vpop.f32.mrf.mxu0
      %3911 = vdwg.mxu0
      %3912 = vmatpush.bf16.msra.mxu0 0
      %3913 = vmatpush.bf16.msra.mxu0 0
      %3914 = vmatpush.bf16.msra.mxu0 0
      %3915 = vmatpush.bf16.msra.mxu0 0
      %3916 = vmatpush.bf16.msra.mxu0 0
      %3917 = vmatpush.bf16.msra.mxu0 0
      %3918 = vmatpush.bf16.msra.mxu0 0
      %3919 = vmatpush.bf16.msra.mxu0 %v3862
      %3920 = vmatmul.bf16.gmra.mxu0 %v3850
      %v3921 = vpop.f32.mrf.mxu0
      %v3922 = vadd.f32 0.0, %v3921
      %v3923 = vpop.f32.mrf.mxu0
      %3924 = vdwg.mxu0
      %3925 = vmatpush.bf16.msra.mxu0 0
      %3926 = vmatpush.bf16.msra.mxu0 0
      %3927 = vmatpush.bf16.msra.mxu0 0
      %3928 = vmatpush.bf16.msra.mxu0 0
      %3929 = vmatpush.bf16.msra.mxu0 0
      %3930 = vmatpush.bf16.msra.mxu0 0
      %3931 = vmatpush.bf16.msra.mxu0 0
      %3932 = vmatpush.bf16.msra.mxu0 %v3865
      %3933 = vmatmul.bf16.gmra.mxu0 %v3850
      %v3934 = vpop.f32.mrf.mxu0
      %v3935 = vadd.f32 0.0, %v3934
      %v3936 = vpop.f32.mrf.mxu0
      %3937 = vdwg.mxu0
      %3938 = vmatpush.bf16.msra.mxu0 0
      %3939 = vmatpush.bf16.msra.mxu0 0
      %3940 = vmatpush.bf16.msra.mxu0 0
      %3941 = vmatpush.bf16.msra.mxu0 0
      %3942 = vmatpush.bf16.msra.mxu0 0
      %3943 = vmatpush.bf16.msra.mxu0 0
      %3944 = vmatpush.bf16.msra.mxu0 0
      %3945 = vmatpush.bf16.msra.mxu0 %v3868
      %3946 = vmatmul.bf16.gmra.mxu0 %v3850
      %v3947 = vpop.f32.mrf.mxu0
      %v3948 = vadd.f32 0.0, %v3947
      %v3949 = vpop.f32.mrf.mxu0
      %3950 = vdwg.mxu0
      %3951 = vmatpush.bf16.msra.mxu0 0
      %3952 = vmatpush.bf16.msra.mxu0 0
      %3953 = vmatpush.bf16.msra.mxu0 0
      %3954 = vmatpush.bf16.msra.mxu0 0
      %3955 = vmatpush.bf16.msra.mxu0 0
      %3956 = vmatpush.bf16.msra.mxu0 0
      %3957 = vmatpush.bf16.msra.mxu0 0
      %3958 = vmatpush.bf16.msra.mxu0 %v3871
      %3959 = vmatmul.bf16.gmra.mxu0 %v3850
      %v3960 = vpop.f32.mrf.mxu0
      %v3961 = vadd.f32 0.0, %v3960
      %v3962 = vpop.f32.mrf.mxu0
      %3963 = vdwg.mxu0
      %v3964 = vadd.f32 %v3796, %v3883
      %v3965 = vadd.f32 %v3797, %v3896
      %v3966 = vadd.f32 %v3798, %v3909
      %v3967 = vadd.f32 %v3799, %v3922
      %v3968 = vadd.f32 %v3800, %v3935
      %v3969 = vadd.f32 %v3801, %v3948
      %v3970 = vadd.f32 %v3802, %v3961
      %s3971 = scalar_lea.vmem %s1, 92
      %v3972 = vld [vmem:[%s3971] sm:$0xf]
      %3973 = vst [vmem:[#allocation1] ss:$4 sm:$0xff] %v172
      %s3974 = scalar_lea.vmem [#allocation1], 32
      %3975 = vst [vmem:[%s3974] ss:$4 sm:$0xff] %v173
      %v3976 = vld.sshfl [vmem:[#allocation1 + $0x8] sm:$0xff pattern:$0x73625140]
      %v3978 = vld.sshfl [vmem:[#allocation1 + $0x10] sm:$0xff pattern:$0x73625140]
      %v3980 = vld.sshfl [vmem:[#allocation1 + $0x18] sm:$0xff pattern:$0x73625140]
      %v3982 = vld.sshfl [vmem:[#allocation1 + $0x20] sm:$0xff pattern:$0x73625140]
      %v3984 = vld.sshfl [vmem:[#allocation1 + $0x28] sm:$0xff pattern:$0x73625140]
      %v3986 = vld.sshfl [vmem:[#allocation1 + $0x30] sm:$0xff pattern:$0x73625140]
      %v3988 = vld.sshfl [vmem:[#allocation1 + $0x38] sm:$0xff pattern:$0x73625140]
      %3990 = vst [vmem:[#allocation1] ss:$4 sm:$0xff] %v174
      %v3991 = vld.sshfl [vmem:[#allocation1] sm:$0xff pattern:$0x73625140]
      %3993 = vrot.lane.b32.xlu0 %v3976, 44
      %v3994 = vpop.permute.xlu0 %3993
      %3995 = vrot.lane.b32.xlu0 %v3978, 44
      %v3996 = vpop.permute.xlu0 %3995
      %3997 = vrot.lane.b32.xlu0 %v3980, 44
      %v3998 = vpop.permute.xlu0 %3997
      %3999 = vrot.lane.b32.xlu0 %v3982, 44
      %v4000 = vpop.permute.xlu0 %3999
      %4001 = vrot.lane.b32.xlu0 %v3984, 44
      %v4002 = vpop.permute.xlu0 %4001
      %4003 = vrot.lane.b32.xlu0 %v3986, 44
      %v4004 = vpop.permute.xlu0 %4003
      %4005 = vrot.lane.b32.xlu0 %v3988, 44
      %v4006 = vpop.permute.xlu0 %4005
      %4007 = vrot.lane.b32.xlu0 %v3991, 44
      %v4008 = vpop.permute.xlu0 %4007
      %vm4009 = vcmask 359424
      %v4010 = vsel %vm4009, %v3994, %v3996
      %v4011 = vsel %vm4009, %v3996, %v3998
      %v4012 = vsel %vm4009, %v3998, %v4000
      %v4013 = vsel %vm4009, %v4000, %v4002
      %v4014 = vsel %vm4009, %v4002, %v4004
      %v4015 = vsel %vm4009, %v4004, %v4006
      %v4016 = vsel %vm4009, %v4006, %v4008
      %v4018 = vsel %vm223, %v3972, 0
      %v4021 = vsel %vm227, %v4010, 0
      %v4024 = vsel %vm227, %v4011, 0
      %v4027 = vsel %vm227, %v4012, 0
      %v4030 = vsel %vm227, %v4013, 0
      %v4033 = vsel %vm227, %v4014, 0
      %v4036 = vsel %vm227, %v4015, 0
      %v4039 = vsel %vm227, %v4016, 0
      %4041 = vmatpush.bf16.msra.mxu0 0
      %4042 = vmatpush.bf16.msra.mxu0 0
      %4043 = vmatpush.bf16.msra.mxu0 0
      %4044 = vmatpush.bf16.msra.mxu0 0
      %4045 = vmatpush.bf16.msra.mxu0 0
      %4046 = vmatpush.bf16.msra.mxu0 0
      %4047 = vmatpush.bf16.msra.mxu0 0
      %4048 = vmatpush.bf16.msra.mxu0 %v4021
      %4049 = vmatmul.bf16.gmra.mxu0 %v4018
      %v4050 = vpop.f32.mrf.mxu0
      %v4051 = vadd.f32 0.0, %v4050
      %v4052 = vpop.f32.mrf.mxu0
      %4053 = vdwg.mxu0
      %4054 = vmatpush.bf16.msra.mxu0 0
      %4055 = vmatpush.bf16.msra.mxu0 0
      %4056 = vmatpush.bf16.msra.mxu0 0
      %4057 = vmatpush.bf16.msra.mxu0 0
      %4058 = vmatpush.bf16.msra.mxu0 0
      %4059 = vmatpush.bf16.msra.mxu0 0
      %4060 = vmatpush.bf16.msra.mxu0 0
      %4061 = vmatpush.bf16.msra.mxu0 %v4024
      %4062 = vmatmul.bf16.gmra.mxu0 %v4018
      %v4063 = vpop.f32.mrf.mxu0
      %v4064 = vadd.f32 0.0, %v4063
      %v4065 = vpop.f32.mrf.mxu0
      %4066 = vdwg.mxu0
      %4067 = vmatpush.bf16.msra.mxu0 0
      %4068 = vmatpush.bf16.msra.mxu0 0
      %4069 = vmatpush.bf16.msra.mxu0 0
      %4070 = vmatpush.bf16.msra.mxu0 0
      %4071 = vmatpush.bf16.msra.mxu0 0
      %4072 = vmatpush.bf16.msra.mxu0 0
      %4073 = vmatpush.bf16.msra.mxu0 0
      %4074 = vmatpush.bf16.msra.mxu0 %v4027
      %4075 = vmatmul.bf16.gmra.mxu0 %v4018
      %v4076 = vpop.f32.mrf.mxu0
      %v4077 = vadd.f32 0.0, %v4076
      %v4078 = vpop.f32.mrf.mxu0
      %4079 = vdwg.mxu0
      %4080 = vmatpush.bf16.msra.mxu0 0
      %4081 = vmatpush.bf16.msra.mxu0 0
      %4082 = vmatpush.bf16.msra.mxu0 0
      %4083 = vmatpush.bf16.msra.mxu0 0
      %4084 = vmatpush.bf16.msra.mxu0 0
      %4085 = vmatpush.bf16.msra.mxu0 0
      %4086 = vmatpush.bf16.msra.mxu0 0
      %4087 = vmatpush.bf16.msra.mxu0 %v4030
      %4088 = vmatmul.bf16.gmra.mxu0 %v4018
      %v4089 = vpop.f32.mrf.mxu0
      %v4090 = vadd.f32 0.0, %v4089
      %v4091 = vpop.f32.mrf.mxu0
      %4092 = vdwg.mxu0
      %4093 = vmatpush.bf16.msra.mxu0 0
      %4094 = vmatpush.bf16.msra.mxu0 0
      %4095 = vmatpush.bf16.msra.mxu0 0
      %4096 = vmatpush.bf16.msra.mxu0 0
      %4097 = vmatpush.bf16.msra.mxu0 0
      %4098 = vmatpush.bf16.msra.mxu0 0
      %4099 = vmatpush.bf16.msra.mxu0 0
      %4100 = vmatpush.bf16.msra.mxu0 %v4033
      %4101 = vmatmul.bf16.gmra.mxu0 %v4018
      %v4102 = vpop.f32.mrf.mxu0
      %v4103 = vadd.f32 0.0, %v4102
      %v4104 = vpop.f32.mrf.mxu0
      %4105 = vdwg.mxu0
      %4106 = vmatpush.bf16.msra.mxu0 0
      %4107 = vmatpush.bf16.msra.mxu0 0
      %4108 = vmatpush.bf16.msra.mxu0 0
      %4109 = vmatpush.bf16.msra.mxu0 0
      %4110 = vmatpush.bf16.msra.mxu0 0
      %4111 = vmatpush.bf16.msra.mxu0 0
      %4112 = vmatpush.bf16.msra.mxu0 0
      %4113 = vmatpush.bf16.msra.mxu0 %v4036
      %4114 = vmatmul.bf16.gmra.mxu0 %v4018
      %v4115 = vpop.f32.mrf.mxu0
      %v4116 = vadd.f32 0.0, %v4115
      %v4117 = vpop.f32.mrf.mxu0
      %4118 = vdwg.mxu0
      %4119 = vmatpush.bf16.msra.mxu0 0
      %4120 = vmatpush.bf16.msra.mxu0 0
      %4121 = vmatpush.bf16.msra.mxu0 0
      %4122 = vmatpush.bf16.msra.mxu0 0
      %4123 = vmatpush.bf16.msra.mxu0 0
      %4124 = vmatpush.bf16.msra.mxu0 0
      %4125 = vmatpush.bf16.msra.mxu0 0
      %4126 = vmatpush.bf16.msra.mxu0 %v4039
      %4127 = vmatmul.bf16.gmra.mxu0 %v4018
      %v4128 = vpop.f32.mrf.mxu0
      %v4129 = vadd.f32 0.0, %v4128
      %v4130 = vpop.f32.mrf.mxu0
      %4131 = vdwg.mxu0
      %v4132 = vadd.f32 %v3964, %v4051
      %v4133 = vadd.f32 %v3965, %v4064
      %v4134 = vadd.f32 %v3966, %v4077
      %v4135 = vadd.f32 %v3967, %v4090
      %v4136 = vadd.f32 %v3968, %v4103
      %v4137 = vadd.f32 %v3969, %v4116
      %v4138 = vadd.f32 %v3970, %v4129
      %s4139 = scalar_lea.vmem %s1, 96
      %v4140 = vld [vmem:[%s4139] sm:$0xf]
      %4141 = vst [vmem:[#allocation1] ss:$4 sm:$0xff] %v172
      %s4142 = scalar_lea.vmem [#allocation1], 32
      %4143 = vst [vmem:[%s4142] ss:$4 sm:$0xff] %v173
      %v4144 = vld.sshfl [vmem:[#allocation1 + $0x8] sm:$0xff pattern:$0x73625140]
      %v4146 = vld.sshfl [vmem:[#allocation1 + $0x10] sm:$0xff pattern:$0x73625140]
      %v4148 = vld.sshfl [vmem:[#allocation1 + $0x18] sm:$0xff pattern:$0x73625140]
      %v4150 = vld.sshfl [vmem:[#allocation1 + $0x20] sm:$0xff pattern:$0x73625140]
      %v4152 = vld.sshfl [vmem:[#allocation1 + $0x28] sm:$0xff pattern:$0x73625140]
      %v4154 = vld.sshfl [vmem:[#allocation1 + $0x30] sm:$0xff pattern:$0x73625140]
      %v4156 = vld.sshfl [vmem:[#allocation1 + $0x38] sm:$0xff pattern:$0x73625140]
      %4158 = vst [vmem:[#allocation1] ss:$4 sm:$0xff] %v174
      %v4159 = vld.sshfl [vmem:[#allocation1] sm:$0xff pattern:$0x73625140]
      %4161 = vrot.lane.b32.xlu0 %v4144, 36
      %v4162 = vpop.permute.xlu0 %4161
      %4163 = vrot.lane.b32.xlu0 %v4146, 36
      %v4164 = vpop.permute.xlu0 %4163
      %4165 = vrot.lane.b32.xlu0 %v4148, 36
      %v4166 = vpop.permute.xlu0 %4165
      %4167 = vrot.lane.b32.xlu0 %v4150, 36
      %v4168 = vpop.permute.xlu0 %4167
      %4169 = vrot.lane.b32.xlu0 %v4152, 36
      %v4170 = vpop.permute.xlu0 %4169
      %4171 = vrot.lane.b32.xlu0 %v4154, 36
      %v4172 = vpop.permute.xlu0 %4171
      %4173 = vrot.lane.b32.xlu0 %v4156, 36
      %v4174 = vpop.permute.xlu0 %4173
      %4175 = vrot.lane.b32.xlu0 %v4159, 36
      %v4176 = vpop.permute.xlu0 %4175
      %vm4177 = vcmask 293888
      %v4178 = vsel %vm4177, %v4162, %v4164
      %v4179 = vsel %vm4177, %v4164, %v4166
      %v4180 = vsel %vm4177, %v4166, %v4168
      %v4181 = vsel %vm4177, %v4168, %v4170
      %v4182 = vsel %vm4177, %v4170, %v4172
      %v4183 = vsel %vm4177, %v4172, %v4174
      %v4184 = vsel %vm4177, %v4174, %v4176
      %v4186 = vsel %vm223, %v4140, 0
      %v4189 = vsel %vm227, %v4178, 0
      %v4192 = vsel %vm227, %v4179, 0
      %v4195 = vsel %vm227, %v4180, 0
      %v4198 = vsel %vm227, %v4181, 0
      %v4201 = vsel %vm227, %v4182, 0
      %v4204 = vsel %vm227, %v4183, 0
      %v4207 = vsel %vm227, %v4184, 0
      %4209 = vmatpush.bf16.msra.mxu0 0
      %4210 = vmatpush.bf16.msra.mxu0 0
      %4211 = vmatpush.bf16.msra.mxu0 0
      %4212 = vmatpush.bf16.msra.mxu0 0
      %4213 = vmatpush.bf16.msra.mxu0 0
      %4214 = vmatpush.bf16.msra.mxu0 0
      %4215 = vmatpush.bf16.msra.mxu0 0
      %4216 = vmatpush.bf16.msra.mxu0 %v4189
      %4217 = vmatmul.bf16.gmra.mxu0 %v4186
      %v4218 = vpop.f32.mrf.mxu0
      %v4219 = vadd.f32 0.0, %v4218
      %v4220 = vpop.f32.mrf.mxu0
      %4221 = vdwg.mxu0
      %4222 = vmatpush.bf16.msra.mxu0 0
      %4223 = vmatpush.bf16.msra.mxu0 0
      %4224 = vmatpush.bf16.msra.mxu0 0
      %4225 = vmatpush.bf16.msra.mxu0 0
      %4226 = vmatpush.bf16.msra.mxu0 0
      %4227 = vmatpush.bf16.msra.mxu0 0
      %4228 = vmatpush.bf16.msra.mxu0 0
      %4229 = vmatpush.bf16.msra.mxu0 %v4192
      %4230 = vmatmul.bf16.gmra.mxu0 %v4186
      %v4231 = vpop.f32.mrf.mxu0
      %v4232 = vadd.f32 0.0, %v4231
      %v4233 = vpop.f32.mrf.mxu0
      %4234 = vdwg.mxu0
      %4235 = vmatpush.bf16.msra.mxu0 0
      %4236 = vmatpush.bf16.msra.mxu0 0
      %4237 = vmatpush.bf16.msra.mxu0 0
      %4238 = vmatpush.bf16.msra.mxu0 0
      %4239 = vmatpush.bf16.msra.mxu0 0
      %4240 = vmatpush.bf16.msra.mxu0 0
      %4241 = vmatpush.bf16.msra.mxu0 0
      %4242 = vmatpush.bf16.msra.mxu0 %v4195
      %4243 = vmatmul.bf16.gmra.mxu0 %v4186
      %v4244 = vpop.f32.mrf.mxu0
      %v4245 = vadd.f32 0.0, %v4244
      %v4246 = vpop.f32.mrf.mxu0
      %4247 = vdwg.mxu0
      %4248 = vmatpush.bf16.msra.mxu0 0
      %4249 = vmatpush.bf16.msra.mxu0 0
      %4250 = vmatpush.bf16.msra.mxu0 0
      %4251 = vmatpush.bf16.msra.mxu0 0
      %4252 = vmatpush.bf16.msra.mxu0 0
      %4253 = vmatpush.bf16.msra.mxu0 0
      %4254 = vmatpush.bf16.msra.mxu0 0
      %4255 = vmatpush.bf16.msra.mxu0 %v4198
      %4256 = vmatmul.bf16.gmra.mxu0 %v4186
      %v4257 = vpop.f32.mrf.mxu0
      %v4258 = vadd.f32 0.0, %v4257
      %v4259 = vpop.f32.mrf.mxu0
      %4260 = vdwg.mxu0
      %4261 = vmatpush.bf16.msra.mxu0 0
      %4262 = vmatpush.bf16.msra.mxu0 0
      %4263 = vmatpush.bf16.msra.mxu0 0
      %4264 = vmatpush.bf16.msra.mxu0 0
      %4265 = vmatpush.bf16.msra.mxu0 0
      %4266 = vmatpush.bf16.msra.mxu0 0
      %4267 = vmatpush.bf16.msra.mxu0 0
      %4268 = vmatpush.bf16.msra.mxu0 %v4201
      %4269 = vmatmul.bf16.gmra.mxu0 %v4186
      %v4270 = vpop.f32.mrf.mxu0
      %v4271 = vadd.f32 0.0, %v4270
      %v4272 = vpop.f32.mrf.mxu0
      %4273 = vdwg.mxu0
      %4274 = vmatpush.bf16.msra.mxu0 0
      %4275 = vmatpush.bf16.msra.mxu0 0
      %4276 = vmatpush.bf16.msra.mxu0 0
      %4277 = vmatpush.bf16.msra.mxu0 0
      %4278 = vmatpush.bf16.msra.mxu0 0
      %4279 = vmatpush.bf16.msra.mxu0 0
      %4280 = vmatpush.bf16.msra.mxu0 0
      %4281 = vmatpush.bf16.msra.mxu0 %v4204
      %4282 = vmatmul.bf16.gmra.mxu0 %v4186
      %v4283 = vpop.f32.mrf.mxu0
      %v4284 = vadd.f32 0.0, %v4283
      %v4285 = vpop.f32.mrf.mxu0
      %4286 = vdwg.mxu0
      %4287 = vmatpush.bf16.msra.mxu0 0
      %4288 = vmatpush.bf16.msra.mxu0 0
      %4289 = vmatpush.bf16.msra.mxu0 0
      %4290 = vmatpush.bf16.msra.mxu0 0
      %4291 = vmatpush.bf16.msra.mxu0 0
      %4292 = vmatpush.bf16.msra.mxu0 0
      %4293 = vmatpush.bf16.msra.mxu0 0
      %4294 = vmatpush.bf16.msra.mxu0 %v4207
      %4295 = vmatmul.bf16.gmra.mxu0 %v4186
      %v4296 = vpop.f32.mrf.mxu0
      %v4297 = vadd.f32 0.0, %v4296
      %v4298 = vpop.f32.mrf.mxu0
      %4299 = vdwg.mxu0
      %v4300 = vadd.f32 %v4132, %v4219
      %v4301 = vadd.f32 %v4133, %v4232
      %v4302 = vadd.f32 %v4134, %v4245
      %v4303 = vadd.f32 %v4135, %v4258
      %v4304 = vadd.f32 %v4136, %v4271
      %v4305 = vadd.f32 %v4137, %v4284
      %v4306 = vadd.f32 %v4138, %v4297
      %s4307 = scalar_lea.vmem %s1, 100
      %v4308 = vld [vmem:[%s4307] sm:$0xf]
      %4309 = vst [vmem:[#allocation1] ss:$4 sm:$0xff] %v172
      %s4310 = scalar_lea.vmem [#allocation1], 32
      %4311 = vst [vmem:[%s4310] ss:$4 sm:$0xff] %v173
      %v4312 = vld.sshfl [vmem:[#allocation1 + $0x8] sm:$0xff pattern:$0x73625140]
      %v4314 = vld.sshfl [vmem:[#allocation1 + $0x10] sm:$0xff pattern:$0x73625140]
      %v4316 = vld.sshfl [vmem:[#allocation1 + $0x18] sm:$0xff pattern:$0x73625140]
      %v4318 = vld.sshfl [vmem:[#allocation1 + $0x20] sm:$0xff pattern:$0x73625140]
      %v4320 = vld.sshfl [vmem:[#allocation1 + $0x28] sm:$0xff pattern:$0x73625140]
      %v4322 = vld.sshfl [vmem:[#allocation1 + $0x30] sm:$0xff pattern:$0x73625140]
      %v4324 = vld.sshfl [vmem:[#allocation1 + $0x38] sm:$0xff pattern:$0x73625140]
      %4326 = vst [vmem:[#allocation1] ss:$4 sm:$0xff] %v174
      %v4327 = vld.sshfl [vmem:[#allocation1] sm:$0xff pattern:$0x73625140]
      %4329 = vrot.lane.b32.xlu0 %v4312, 35
      %v4330 = vpop.permute.xlu0 %4329
      %4331 = vrot.lane.b32.xlu0 %v4314, 35
      %v4332 = vpop.permute.xlu0 %4331
      %4333 = vrot.lane.b32.xlu0 %v4316, 35
      %v4334 = vpop.permute.xlu0 %4333
      %4335 = vrot.lane.b32.xlu0 %v4318, 35
      %v4336 = vpop.permute.xlu0 %4335
      %4337 = vrot.lane.b32.xlu0 %v4320, 35
      %v4338 = vpop.permute.xlu0 %4337
      %4339 = vrot.lane.b32.xlu0 %v4322, 35
      %v4340 = vpop.permute.xlu0 %4339
      %4341 = vrot.lane.b32.xlu0 %v4324, 35
      %v4342 = vpop.permute.xlu0 %4341
      %4343 = vrot.lane.b32.xlu0 %v4327, 35
      %v4344 = vpop.permute.xlu0 %4343
      %vm4345 = vcmask 285696
      %v4346 = vsel %vm4345, %v4330, %v4332
      %v4347 = vsel %vm4345, %v4332, %v4334
      %v4348 = vsel %vm4345, %v4334, %v4336
      %v4349 = vsel %vm4345, %v4336, %v4338
      %v4350 = vsel %vm4345, %v4338, %v4340
      %v4351 = vsel %vm4345, %v4340, %v4342
      %v4352 = vsel %vm4345, %v4342, %v4344
      %v4354 = vsel %vm223, %v4308, 0
      %v4357 = vsel %vm227, %v4346, 0
      %v4360 = vsel %vm227, %v4347, 0
      %v4363 = vsel %vm227, %v4348, 0
      %v4366 = vsel %vm227, %v4349, 0
      %v4369 = vsel %vm227, %v4350, 0
      %v4372 = vsel %vm227, %v4351, 0
      %v4375 = vsel %vm227, %v4352, 0
      %4377 = vmatpush.bf16.msra.mxu0 0
      %4378 = vmatpush.bf16.msra.mxu0 0
      %4379 = vmatpush.bf16.msra.mxu0 0
      %4380 = vmatpush.bf16.msra.mxu0 0
      %4381 = vmatpush.bf16.msra.mxu0 0
      %4382 = vmatpush.bf16.msra.mxu0 0
      %4383 = vmatpush.bf16.msra.mxu0 0
      %4384 = vmatpush.bf16.msra.mxu0 %v4357
      %4385 = vmatmul.bf16.gmra.mxu0 %v4354
      %v4386 = vpop.f32.mrf.mxu0
      %v4387 = vadd.f32 0.0, %v4386
      %v4388 = vpop.f32.mrf.mxu0
      %4389 = vdwg.mxu0
      %4390 = vmatpush.bf16.msra.mxu0 0
      %4391 = vmatpush.bf16.msra.mxu0 0
      %4392 = vmatpush.bf16.msra.mxu0 0
      %4393 = vmatpush.bf16.msra.mxu0 0
      %4394 = vmatpush.bf16.msra.mxu0 0
      %4395 = vmatpush.bf16.msra.mxu0 0
      %4396 = vmatpush.bf16.msra.mxu0 0
      %4397 = vmatpush.bf16.msra.mxu0 %v4360
      %4398 = vmatmul.bf16.gmra.mxu0 %v4354
      %v4399 = vpop.f32.mrf.mxu0
      %v4400 = vadd.f32 0.0, %v4399
      %v4401 = vpop.f32.mrf.mxu0
      %4402 = vdwg.mxu0
      %4403 = vmatpush.bf16.msra.mxu0 0
      %4404 = vmatpush.bf16.msra.mxu0 0
      %4405 = vmatpush.bf16.msra.mxu0 0
      %4406 = vmatpush.bf16.msra.mxu0 0
      %4407 = vmatpush.bf16.msra.mxu0 0
      %4408 = vmatpush.bf16.msra.mxu0 0
      %4409 = vmatpush.bf16.msra.mxu0 0
      %4410 = vmatpush.bf16.msra.mxu0 %v4363
      %4411 = vmatmul.bf16.gmra.mxu0 %v4354
      %v4412 = vpop.f32.mrf.mxu0
      %v4413 = vadd.f32 0.0, %v4412
      %v4414 = vpop.f32.mrf.mxu0
      %4415 = vdwg.mxu0
      %4416 = vmatpush.bf16.msra.mxu0 0
      %4417 = vmatpush.bf16.msra.mxu0 0
      %4418 = vmatpush.bf16.msra.mxu0 0
      %4419 = vmatpush.bf16.msra.mxu0 0
      %4420 = vmatpush.bf16.msra.mxu0 0
      %4421 = vmatpush.bf16.msra.mxu0 0
      %4422 = vmatpush.bf16.msra.mxu0 0
      %4423 = vmatpush.bf16.msra.mxu0 %v4366
      %4424 = vmatmul.bf16.gmra.mxu0 %v4354
      %v4425 = vpop.f32.mrf.mxu0
      %v4426 = vadd.f32 0.0, %v4425
      %v4427 = vpop.f32.mrf.mxu0
      %4428 = vdwg.mxu0
      %4429 = vmatpush.bf16.msra.mxu0 0
      %4430 = vmatpush.bf16.msra.mxu0 0
      %4431 = vmatpush.bf16.msra.mxu0 0
      %4432 = vmatpush.bf16.msra.mxu0 0
      %4433 = vmatpush.bf16.msra.mxu0 0
      %4434 = vmatpush.bf16.msra.mxu0 0
      %4435 = vmatpush.bf16.msra.mxu0 0
      %4436 = vmatpush.bf16.msra.mxu0 %v4369
      %4437 = vmatmul.bf16.gmra.mxu0 %v4354
      %v4438 = vpop.f32.mrf.mxu0
      %v4439 = vadd.f32 0.0, %v4438
      %v4440 = vpop.f32.mrf.mxu0
      %4441 = vdwg.mxu0
      %4442 = vmatpush.bf16.msra.mxu0 0
      %4443 = vmatpush.bf16.msra.mxu0 0
      %4444 = vmatpush.bf16.msra.mxu0 0
      %4445 = vmatpush.bf16.msra.mxu0 0
      %4446 = vmatpush.bf16.msra.mxu0 0
      %4447 = vmatpush.bf16.msra.mxu0 0
      %4448 = vmatpush.bf16.msra.mxu0 0
      %4449 = vmatpush.bf16.msra.mxu0 %v4372
      %4450 = vmatmul.bf16.gmra.mxu0 %v4354
      %v4451 = vpop.f32.mrf.mxu0
      %v4452 = vadd.f32 0.0, %v4451
      %v4453 = vpop.f32.mrf.mxu0
      %4454 = vdwg.mxu0
      %4455 = vmatpush.bf16.msra.mxu0 0
      %4456 = vmatpush.bf16.msra.mxu0 0
      %4457 = vmatpush.bf16.msra.mxu0 0
      %4458 = vmatpush.bf16.msra.mxu0 0
      %4459 = vmatpush.bf16.msra.mxu0 0
      %4460 = vmatpush.bf16.msra.mxu0 0
      %4461 = vmatpush.bf16.msra.mxu0 0
      %4462 = vmatpush.bf16.msra.mxu0 %v4375
      %4463 = vmatmul.bf16.gmra.mxu0 %v4354
      %v4464 = vpop.f32.mrf.mxu0
      %v4465 = vadd.f32 0.0, %v4464
      %v4466 = vpop.f32.mrf.mxu0
      %4467 = vdwg.mxu0
      %v4468 = vadd.f32 %v4300, %v4387
      %v4469 = vadd.f32 %v4301, %v4400
      %v4470 = vadd.f32 %v4302, %v4413
      %v4471 = vadd.f32 %v4303, %v4426
      %v4472 = vadd.f32 %v4304, %v4439
      %v4473 = vadd.f32 %v4305, %v4452
      %v4474 = vadd.f32 %v4306, %v4465
      %s4475 = scalar_lea.vmem %s1, 104
      %v4476 = vld [vmem:[%s4475] sm:$0xf]
      %4477 = vst [vmem:[#allocation1] ss:$4 sm:$0xff] %v172
      %s4478 = scalar_lea.vmem [#allocation1], 32
      %4479 = vst [vmem:[%s4478] ss:$4 sm:$0xff] %v173
      %v4480 = vld.sshfl [vmem:[#allocation1 + $0x8] sm:$0xff pattern:$0x73625140]
      %v4482 = vld.sshfl [vmem:[#allocation1 + $0x10] sm:$0xff pattern:$0x73625140]
      %v4484 = vld.sshfl [vmem:[#allocation1 + $0x18] sm:$0xff pattern:$0x73625140]
      %v4486 = vld.sshfl [vmem:[#allocation1 + $0x20] sm:$0xff pattern:$0x73625140]
      %v4488 = vld.sshfl [vmem:[#allocation1 + $0x28] sm:$0xff pattern:$0x73625140]
      %v4490 = vld.sshfl [vmem:[#allocation1 + $0x30] sm:$0xff pattern:$0x73625140]
      %v4492 = vld.sshfl [vmem:[#allocation1 + $0x38] sm:$0xff pattern:$0x73625140]
      %4494 = vst [vmem:[#allocation1] ss:$4 sm:$0xff] %v174
      %v4495 = vld.sshfl [vmem:[#allocation1] sm:$0xff pattern:$0x73625140]
      %4497 = vrot.lane.b32.xlu0 %v4480, 34
      %v4498 = vpop.permute.xlu0 %4497
      %4499 = vrot.lane.b32.xlu0 %v4482, 34
      %v4500 = vpop.permute.xlu0 %4499
      %4501 = vrot.lane.b32.xlu0 %v4484, 34
      %v4502 = vpop.permute.xlu0 %4501
      %4503 = vrot.lane.b32.xlu0 %v4486, 34
      %v4504 = vpop.permute.xlu0 %4503
      %4505 = vrot.lane.b32.xlu0 %v4488, 34
      %v4506 = vpop.permute.xlu0 %4505
      %4507 = vrot.lane.b32.xlu0 %v4490, 34
      %v4508 = vpop.permute.xlu0 %4507
      %4509 = vrot.lane.b32.xlu0 %v4492, 34
      %v4510 = vpop.permute.xlu0 %4509
      %4511 = vrot.lane.b32.xlu0 %v4495, 34
      %v4512 = vpop.permute.xlu0 %4511
      %vm4513 = vcmask 277504
      %v4514 = vsel %vm4513, %v4498, %v4500
      %v4515 = vsel %vm4513, %v4500, %v4502
      %v4516 = vsel %vm4513, %v4502, %v4504
      %v4517 = vsel %vm4513, %v4504, %v4506
      %v4518 = vsel %vm4513, %v4506, %v4508
      %v4519 = vsel %vm4513, %v4508, %v4510
      %v4520 = vsel %vm4513, %v4510, %v4512
      %v4522 = vsel %vm223, %v4476, 0
      %v4525 = vsel %vm227, %v4514, 0
      %v4528 = vsel %vm227, %v4515, 0
      %v4531 = vsel %vm227, %v4516, 0
      %v4534 = vsel %vm227, %v4517, 0
      %v4537 = vsel %vm227, %v4518, 0
      %v4540 = vsel %vm227, %v4519, 0
      %v4543 = vsel %vm227, %v4520, 0
      %4545 = vmatpush.bf16.msra.mxu0 0
      %4546 = vmatpush.bf16.msra.mxu0 0
      %4547 = vmatpush.bf16.msra.mxu0 0
      %4548 = vmatpush.bf16.msra.mxu0 0
      %4549 = vmatpush.bf16.msra.mxu0 0
      %4550 = vmatpush.bf16.msra.mxu0 0
      %4551 = vmatpush.bf16.msra.mxu0 0
      %4552 = vmatpush.bf16.msra.mxu0 %v4525
      %4553 = vmatmul.bf16.gmra.mxu0 %v4522
      %v4554 = vpop.f32.mrf.mxu0
      %v4555 = vadd.f32 0.0, %v4554
      %v4556 = vpop.f32.mrf.mxu0
      %4557 = vdwg.mxu0
      %4558 = vmatpush.bf16.msra.mxu0 0
      %4559 = vmatpush.bf16.msra.mxu0 0
      %4560 = vmatpush.bf16.msra.mxu0 0
      %4561 = vmatpush.bf16.msra.mxu0 0
      %4562 = vmatpush.bf16.msra.mxu0 0
      %4563 = vmatpush.bf16.msra.mxu0 0
      %4564 = vmatpush.bf16.msra.mxu0 0
      %4565 = vmatpush.bf16.msra.mxu0 %v4528
      %4566 = vmatmul.bf16.gmra.mxu0 %v4522
      %v4567 = vpop.f32.mrf.mxu0
      %v4568 = vadd.f32 0.0, %v4567
      %v4569 = vpop.f32.mrf.mxu0
      %4570 = vdwg.mxu0
      %4571 = vmatpush.bf16.msra.mxu0 0
      %4572 = vmatpush.bf16.msra.mxu0 0
      %4573 = vmatpush.bf16.msra.mxu0 0
      %4574 = vmatpush.bf16.msra.mxu0 0
      %4575 = vmatpush.bf16.msra.mxu0 0
      %4576 = vmatpush.bf16.msra.mxu0 0
      %4577 = vmatpush.bf16.msra.mxu0 0
      %4578 = vmatpush.bf16.msra.mxu0 %v4531
      %4579 = vmatmul.bf16.gmra.mxu0 %v4522
      %v4580 = vpop.f32.mrf.mxu0
      %v4581 = vadd.f32 0.0, %v4580
      %v4582 = vpop.f32.mrf.mxu0
      %4583 = vdwg.mxu0
      %4584 = vmatpush.bf16.msra.mxu0 0
      %4585 = vmatpush.bf16.msra.mxu0 0
      %4586 = vmatpush.bf16.msra.mxu0 0
      %4587 = vmatpush.bf16.msra.mxu0 0
      %4588 = vmatpush.bf16.msra.mxu0 0
      %4589 = vmatpush.bf16.msra.mxu0 0
      %4590 = vmatpush.bf16.msra.mxu0 0
      %4591 = vmatpush.bf16.msra.mxu0 %v4534
      %4592 = vmatmul.bf16.gmra.mxu0 %v4522
      %v4593 = vpop.f32.mrf.mxu0
      %v4594 = vadd.f32 0.0, %v4593
      %v4595 = vpop.f32.mrf.mxu0
      %4596 = vdwg.mxu0
      %4597 = vmatpush.bf16.msra.mxu0 0
      %4598 = vmatpush.bf16.msra.mxu0 0
      %4599 = vmatpush.bf16.msra.mxu0 0
      %4600 = vmatpush.bf16.msra.mxu0 0
      %4601 = vmatpush.bf16.msra.mxu0 0
      %4602 = vmatpush.bf16.msra.mxu0 0
      %4603 = vmatpush.bf16.msra.mxu0 0
      %4604 = vmatpush.bf16.msra.mxu0 %v4537
      %4605 = vmatmul.bf16.gmra.mxu0 %v4522
      %v4606 = vpop.f32.mrf.mxu0
      %v4607 = vadd.f32 0.0, %v4606
      %v4608 = vpop.f32.mrf.mxu0
      %4609 = vdwg.mxu0
      %4610 = vmatpush.bf16.msra.mxu0 0
      %4611 = vmatpush.bf16.msra.mxu0 0
      %4612 = vmatpush.bf16.msra.mxu0 0
      %4613 = vmatpush.bf16.msra.mxu0 0
      %4614 = vmatpush.bf16.msra.mxu0 0
      %4615 = vmatpush.bf16.msra.mxu0 0
      %4616 = vmatpush.bf16.msra.mxu0 0
      %4617 = vmatpush.bf16.msra.mxu0 %v4540
      %4618 = vmatmul.bf16.gmra.mxu0 %v4522
      %v4619 = vpop.f32.mrf.mxu0
      %v4620 = vadd.f32 0.0, %v4619
      %v4621 = vpop.f32.mrf.mxu0
      %4622 = vdwg.mxu0
      %4623 = vmatpush.bf16.msra.mxu0 0
      %4624 = vmatpush.bf16.msra.mxu0 0
      %4625 = vmatpush.bf16.msra.mxu0 0
      %4626 = vmatpush.bf16.msra.mxu0 0
      %4627 = vmatpush.bf16.msra.mxu0 0
      %4628 = vmatpush.bf16.msra.mxu0 0
      %4629 = vmatpush.bf16.msra.mxu0 0
      %4630 = vmatpush.bf16.msra.mxu0 %v4543
      %4631 = vmatmul.bf16.gmra.mxu0 %v4522
      %v4632 = vpop.f32.mrf.mxu0
      %v4633 = vadd.f32 0.0, %v4632
      %v4634 = vpop.f32.mrf.mxu0
      %4635 = vdwg.mxu0
      %v4636 = vadd.f32 %v4468, %v4555
      %v4637 = vadd.f32 %v4469, %v4568
      %v4638 = vadd.f32 %v4470, %v4581
      %v4639 = vadd.f32 %v4471, %v4594
      %v4640 = vadd.f32 %v4472, %v4607
      %v4641 = vadd.f32 %v4473, %v4620
      %v4642 = vadd.f32 %v4474, %v4633
      %v4643 = vld [vmem:[%s2] sm:$0xff]
      %4645 = vset.pattern.permute.xlu0 0
      %4646 = vperm.xlu0 %4645, %v4643
      %v4647 = vpop.permute.xlu0 %4646
      %v4649 = vadd.f32 %v4636, %v4647
      %v4650 = vadd.f32 %v4637, %v4647
      %v4651 = vadd.f32 %v4638, %v4647
      %v4652 = vadd.f32 %v4639, %v4647
      %v4653 = vadd.f32 %v4640, %v4647
      %v4654 = vadd.f32 %v4641, %v4647
      %v4655 = vadd.f32 %v4642, %v4647
      %v4656 = vmax.f32 %v4649, 0.0
      %v4657 = vmax.f32 %v4650, 0.0
      %v4658 = vmax.f32 %v4651, 0.0
      %v4659 = vmax.f32 %v4652, 0.0
      %v4660 = vmax.f32 %v4653, 0.0
      %v4661 = vmax.f32 %v4654, 0.0
      %v4662 = vmax.f32 %v4655, 0.0
      %4663 = vst [vmem:[%s170] sm:$0xff] %v4656
      %4664 = vst [vmem:[%s170 + $0x8] sm:$0xff] %v4657
      %4665 = vst [vmem:[%s170 + $0x10] sm:$0xff] %v4658
      %4666 = vst [vmem:[%s170 + $0x18] sm:$0xff] %v4659
      %4667 = vst [vmem:[%s170 + $0x20] sm:$0xff] %v4660
      %4668 = vst [vmem:[%s170 + $0x28] sm:$0xff] %v4661
      %4669 = vst [vmem:[%s170 + $0x30] sm:$0xff] %v4662
      %p4670 = scmp.lt.s32.totalorder %s14, 1
      %s4671 = scalar_select %p4670, %s14, 1
      %s4672 = smul.addr %s4671, 7
      %s4673 = smul.addr %s4672, 8
      %s4674 = scalar_lea.vmem %s3, %s4673
      // Predicated region
      $region33: #{forward.3} parent=31 // pred_check
        %p4675 = pneg %p100
      $region34: #{forward.3} parent=31 // pred_check_branch
        %4677 = sbr.rel (%p4675) target = $region36
      $region35: #{forward.3} parent=31 // pred_region
        _
      $region36: #{forward.3} parent=31 // pred_fallthru
        _
    $region32: #{forward.3} parent=5 // pred_fallthru
      _
    %p4678 = scmp.le.s32.totalorder 2, %s9
    // Predicated region
    $region37: #{forward.3} parent=5 // pred_check
      %p4679 = pneg %p4678
    $region38: #{forward.3} parent=5 // pred_check_branch
      %4681 = sbr.rel (%p4679) target = $region40
    $region39: #{forward.3} parent=5 // pred_region
      %s4682 = ssub.s32 %s9, 2
      // Predicated region
      $region41: #{forward.3} parent=39 // pred_check
        %p4683 = pneg %p106
      $region42: #{forward.3} parent=39 // pred_check_branch
        %4685 = sbr.rel (%p4683) target = $region44
      $region43: #{forward.3} parent=39 // pred_region
        %p4686 = scmp.lt.s32.totalorder %s15, 1
        %s4687 = scalar_select %p4686, %s15, 1
        %s4688 = smul.addr %s4687, 7
        %s4689 = smul.addr %s4688, 8
        %s4690 = scalar_lea.vmem %s3, %s4689
      $region44: #{forward.3} parent=39 // pred_fallthru
        _
    $region40: #{forward.3} parent=5 // pred_fallthru
      _
  $region6: #{forward.3} parent=0 // loop_footer
    %s13 = sadd.s32 1, %s9
  $region7: #{forward.3} parent=0 // loop_footer_branch
    %8 = sbr.rel target = $region3
  $region8: #{forward.3} parent=0 // loop_exit
    _

</llo_original>
